<compile_context>
chip_gen: v6e
topology: v6e:2x2x1
jax: 0.10.0
libtpu: 0.0.40
codegen_flags: <defaults>
</compile_context>

<pallas_src>
import functools

import jax
import jax.numpy as jnp
from jax.experimental import pallas as pl
from jax.experimental.pallas import tpu as pltpu


_EPS = 1e-5          # nn.InstanceNorm2d default eps
_LANE = 128          # TPU lane width: Cout / K padded to multiples of this


def _round_up(v, m):
    return ((v + m - 1) // m) * m


@functools.lru_cache(maxsize=1)
def _vmem_limit_bytes():
    """Generation-aware VMEM budget (v5e/v6e: 128 MiB physical, v7x: 64 MiB)."""
    try:
        info = pltpu.get_tpu_info()
        cap = int(getattr(info, "vmem_capacity_bytes", 0) or 0)
        if cap > 0:
            return int(max(32 << 20, min(100 << 20, (cap * 3) // 4)))
    except Exception:
        pass
    return 32 << 20   # conservative fallback (safe on v7x)


def _compiler_params():
    return pltpu.CompilerParams(dimension_semantics=("parallel",),
                                vmem_limit_bytes=_vmem_limit_bytes())


# ---------------------------------------------------------------------------
# Pallas kernels (one launch per U-Net layer; grid iterates batch images)
# ---------------------------------------------------------------------------

def _down_inorm_kernel(a_ref, w_ref, o_ref):
    """Per-image conv GEMM with fused InstanceNorm2d(affine=False).

    a_ref: (1, M, K)   im2col rows of one image, bf16 (M = Ho*Wo)
    w_ref: (K, Cp)     GEMM weights, bf16 (Cp = Cout padded to 128: lane dense)
    o_ref: (1, M, Cp)  normalized output, bf16
    Bias is intentionally omitted: with affine-free InstanceNorm the mean
    subtraction cancels it exactly.
    """
    y = jnp.dot(a_ref[0], w_ref[...], preferred_element_type=jnp.float32)
    mean = jnp.mean(y, axis=0, keepdims=True)
    var = jnp.mean(jnp.square(y - mean), axis=0, keepdims=True)   # biased var
    o_ref[0] = ((y - mean) * jax.lax.rsqrt(var + _EPS)).astype(o_ref.dtype)


def _down_bias_kernel(a_ref, w_ref, b_ref, o_ref):
    """Per-image conv GEMM + bias (layers without a trailing norm)."""
    y = jnp.dot(a_ref[0], w_ref[...], preferred_element_type=jnp.float32)
    o_ref[0] = (y + b_ref[...]).astype(o_ref.dtype)


def _up_inorm_kernel(a_ref, w_ref, o_ref):
    """Per-image ConvTranspose (subpixel form) with fused InstanceNorm.

    a_ref: (1, 4, M, K)   per-parity 2x2 im2col rows of one image, bf16
    w_ref: (4, K, Cp)     per-parity GEMM weights, bf16
    o_ref: (1, 4, M, Cp)  normalized per-parity outputs, bf16
    The 4 output parities tile the 2H x 2W transposed-conv output exactly, so
    statistics accumulated over all parities are the exact InstanceNorm stats.
    """
    m = a_ref.shape[2]
    ys = [jnp.dot(a_ref[0, t], w_ref[t], preferred_element_type=jnp.float32)
          for t in range(4)]
    count = 4.0 * m
    mean = sum(jnp.sum(y, axis=0, keepdims=True) for y in ys) / count
    var = sum(jnp.sum(jnp.square(y - mean), axis=0, keepdims=True)
              for y in ys) / count
    inv = jax.lax.rsqrt(var + _EPS)
    for t in range(4):
        o_ref[0, t] = ((ys[t] - mean) * inv).astype(o_ref.dtype)


def _up_bias_kernel(a_ref, w_ref, b_ref, o_ref):
    """Per-image ConvTranspose (subpixel form) + bias (outermost layer)."""
    for t in range(4):
        y = jnp.dot(a_ref[0, t], w_ref[t], preferred_element_type=jnp.float32)
        o_ref[0, t] = (y + b_ref[...]).astype(o_ref.dtype)


# ---------------------------------------------------------------------------
# pallas_call dispatch
# ---------------------------------------------------------------------------

def _down_gemm(cols, wm, bias, norm, out_dtype):
    """cols:(N,M,K) bf16, wm:(K,Cp) bf16, bias:(1,Cp) f32 -> (N,M,Cp)."""
    n, m, k = cols.shape
    cp = wm.shape[1]
    cost = pl.CostEstimate(
        flops=2 * n * m * k * cp, transcendentals=0,
        bytes_accessed=cols.size * 2 + wm.size * 2 + bias.size * 4
        + n * m * cp * jnp.dtype(out_dtype).itemsize)
    if norm:
        return pl.pallas_call(
            _down_inorm_kernel,
            out_shape=jax.ShapeDtypeStruct((n, m, cp), out_dtype),
            grid=(n,),
            in_specs=[pl.BlockSpec((1, m, k), lambda i: (i, 0, 0)),
                      pl.BlockSpec((k, cp), lambda i: (0, 0))],
            out_specs=pl.BlockSpec((1, m, cp), lambda i: (i, 0, 0)),
            compiler_params=_compiler_params(), cost_estimate=cost,
        )(cols, wm)
    return pl.pallas_call(
        _down_bias_kernel,
        out_shape=jax.ShapeDtypeStruct((n, m, cp), out_dtype),
        grid=(n,),
        in_specs=[pl.BlockSpec((1, m, k), lambda i: (i, 0, 0)),
                  pl.BlockSpec((k, cp), lambda i: (0, 0)),
                  pl.BlockSpec((1, cp), lambda i: (0, 0))],
        out_specs=pl.BlockSpec((1, m, cp), lambda i: (i, 0, 0)),
        compiler_params=_compiler_params(), cost_estimate=cost,
    )(cols, wm, bias)


def _up_gemm(cols, wm, bias, norm, out_dtype):
    """cols:(N,4,M,K) bf16, wm:(4,K,Cp) bf16, bias:(1,Cp) f32 -> (N,4,M,Cp)."""
    n, t, m, k = cols.shape
    cp = wm.shape[2]
    cost = pl.CostEstimate(
        flops=2 * n * t * m * k * cp, transcendentals=0,
        bytes_accessed=cols.size * 2 + wm.size * 2 + bias.size * 4
        + n * t * m * cp * jnp.dtype(out_dtype).itemsize)
    if norm:
        return pl.pallas_call(
            _up_inorm_kernel,
            out_shape=jax.ShapeDtypeStruct((n, 4, m, cp), out_dtype),
            grid=(n,),
            in_specs=[pl.BlockSpec((1, 4, m, k), lambda i: (i, 0, 0, 0)),
                      pl.BlockSpec((4, k, cp), lambda i: (0, 0, 0))],
            out_specs=pl.BlockSpec((1, 4, m, cp), lambda i: (i, 0, 0, 0)),
            compiler_params=_compiler_params(), cost_estimate=cost,
        )(cols, wm)
    return pl.pallas_call(
        _up_bias_kernel,
        out_shape=jax.ShapeDtypeStruct((n, 4, m, cp), out_dtype),
        grid=(n,),
        in_specs=[pl.BlockSpec((1, 4, m, k), lambda i: (i, 0, 0, 0)),
                  pl.BlockSpec((4, k, cp), lambda i: (0, 0, 0)),
                  pl.BlockSpec((1, cp), lambda i: (0, 0))],
        out_specs=pl.BlockSpec((1, 4, m, cp), lambda i: (i, 0, 0, 0)),
        compiler_params=_compiler_params(), cost_estimate=cost,
    )(cols, wm, bias)


# ---------------------------------------------------------------------------
# NHWC lowering glue (JAX side; all fused by XLA into the im2col gathers)
# ---------------------------------------------------------------------------

def _pad_channels(x, c_pad):
    c = x.shape[-1]
    if c_pad > c:
        x = jnp.pad(x, ((0, 0), (0, 0), (0, 0), (0, c_pad - c)))
    return x


def _space_to_depth2(x):
    """(N, H, W, C) -> (N, H/2, W/2, 4C); channel index = (p*2+q)*C + c."""
    n, h, w, c = x.shape
    x = x.reshape(n, h // 2, 2, w // 2, 2, c)
    x = x.transpose(0, 1, 3, 2, 4, 5)
    return x.reshape(n, h // 2, w // 2, 4 * c)


def _im2col_2x2(xs):
    """2x2 stride-1 patches: (N,Hs,Ws,C) -> (N,(Hs-1)*(Ws-1), 4C), order (u,v,c)."""
    n, hs, ws, c = xs.shape
    ho, wo = hs - 1, ws - 1
    taps = [xs[:, u:u + ho, v:v + wo, :] for u in (0, 1) for v in (0, 1)]
    p = jnp.stack(taps, axis=3)                     # (N, Ho, Wo, 4, C)
    return p.reshape(n, ho * wo, 4 * c), ho, wo


def conv_down(a, p, cfg):
    """Conv2d(k=4, s=2, p=1) on NHWC as space-to-depth + stride-1 2x2 conv."""
    n, h, w, _ = a.shape
    assert h % 2 == 0 and w % 2 == 0
    norm = not (cfg["outermost"] or cfg["innermost"])
    cout = cfg["cout_down"]
    xb = _pad_channels(a.astype(jnp.bfloat16), cfg["cin_down_pad"])
    xp = jnp.pad(xb, ((0, 0), (1, 1), (1, 1), (0, 0)))
    xs = _space_to_depth2(xp)                       # (N,(H+2)/2,(W+2)/2,4Cin_p)
    cols, ho, wo = _im2col_2x2(xs)                  # (N, Ho*Wo, 16*Cin_p)
    y = _down_gemm(cols, p["down_wm"], p["down_b"], norm, jnp.bfloat16)
    return y[..., :cout].reshape(n, ho, wo, cout)


def conv_up(a, p, cfg):
    """ConvTranspose2d(k=4, s=2, p=1) on NHWC via subpixel decomposition."""
    n, h, w, _ = a.shape
    norm = not cfg["outermost"]
    out_dtype = jnp.float32 if cfg["outermost"] else jnp.bfloat16
    cout = cfg["cout_up"]
    xb = _pad_channels(a.astype(jnp.bfloat16), cfg["cin_up_pad"])
    xp = jnp.pad(xb, ((0, 0), (1, 1), (1, 1), (0, 0)))     # (N, H+2, W+2, Cp)
    cols = []
    for pa in (0, 1):
        for pb in (0, 1):
            c, _, _ = _im2col_2x2(xp[:, pa:pa + h + 1, pb:pb + w + 1, :])
            cols.append(c)                          # (N, H*W, 4*Cin_p)
    cols = jnp.stack(cols, axis=1)                  # (N, 4, H*W, 4*Cin_p)
    y = _up_gemm(cols, p["up_wm"], p["up_b"], norm, out_dtype)
    y = y[..., :cout].reshape(n, 2, 2, h, w, cout)  # (N, a, b, m, j, C)
    return y.transpose(0, 3, 1, 4, 2, 5).reshape(n, 2 * h, 2 * w, cout)


# ---------------------------------------------------------------------------
# Weight transforms (init-time, once)
# ---------------------------------------------------------------------------

def _down_w_to_gemm(w, cin_pad, cout_pad):
    """Conv2d weight (Cout,Cin,4,4) -> (16*Cin_p, Cout_p) bf16.

    K order is (u, v, p, q, c) with tap kh = 2u+p, kw = 2v+q, matching the
    space-to-depth im2col column order.
    """
    cout, cin = w.shape[0], w.shape[1]
    w = jnp.pad(w, ((0, cout_pad - cout), (0, cin_pad - cin), (0, 0), (0, 0)))
    w6 = w.reshape(cout_pad, cin_pad, 2, 2, 2, 2)      # (co, c, u, p, v, q)
    wt = w6.transpose(2, 4, 3, 5, 1, 0)                # (u, v, p, q, c, co)
    return wt.reshape(16 * cin_pad, cout_pad).astype(jnp.bfloat16)


_KIDX = ((3, 1), (2, 0))   # ConvTranspose tap index: [output parity][window offset]


def _up_w_to_gemm(wt, cin_pad, cout_pad):
    """ConvTranspose2d weight (Cin,Cout,4,4) -> (4, 4*Cin_p, Cout_p) bf16.

    Exact subpixel decomposition of ConvTranspose2d(k=4, s=2, p=1):
      out[2m+a, 2n+b] = sum_{di,dj} xpad[m+a+di, n+b+dj] . W[:,:,KIDX[a][di],KIDX[b][dj]]
    """
    cin, cout = wt.shape[0], wt.shape[1]
    w = jnp.pad(wt, ((0, cin_pad - cin), (0, cout_pad - cout), (0, 0), (0, 0)))
    mats = []
    for a in (0, 1):
        for b in (0, 1):
            sub = jnp.stack(
                [jnp.stack([w[:, :, _KIDX[a][di], _KIDX[b][dj]]
                            for dj in (0, 1)], axis=0)
                 for di in (0, 1)], axis=0)            # (di, dj, Cin_p, Cout_p)
            mats.append(sub.reshape(4 * cin_pad, cout_pad))
    return jnp.stack(mats, axis=0).astype(jnp.bfloat16)


# ---------------------------------------------------------------------------
# U-Net construction (structure is static Python metadata, params arrays only)
# ---------------------------------------------------------------------------

def _make_cfgs(channels, ngf, image_size):
    if image_size == 32:
        n_mid8 = 1
    elif image_size == 16:
        n_mid8 = 0
    else:
        n_mid8 = 2
    cfgs = [dict(outer=ngf * 8, inner=ngf * 8, input=ngf * 8,
                 innermost=True, outermost=False)]
    for _ in range(n_mid8):
        cfgs.append(dict(outer=ngf * 8, inner=ngf * 8, input=ngf * 8,
                         innermost=False, outermost=False))
    cfgs.append(dict(outer=ngf * 4, inner=ngf * 8, input=ngf * 4,
                     innermost=False, outermost=False))
    cfgs.append(dict(outer=ngf * 2, inner=ngf * 4, input=ngf * 2,
                     innermost=False, outermost=False))
    cfgs.append(dict(outer=channels, inner=ngf * 2, input=channels,
                     innermost=False, outermost=True))
    return cfgs[::-1]           # outermost first


def init_unet_score(key, channels, ngf, image_size):
    """Returns (structure, params, raw_params).

    structure : static metadata (flags, pad/true channel counts), closed over
                by the jitted forward (never traced).
    params    : GEMM-ready bf16 weights (lane-padded) + f32 biases.
    raw_params: original f32 PyTorch-layout weights, used only by the
                pure-JAX reference in __main__.
    """
    cfgs = _make_cfgs(channels, ngf, image_size)
    keys = jax.random.split(key, 4 * len(cfgs))
    structure, params, raw_params = [], [], []
    for i, c in enumerate(cfgs):
        kdw, kdb, kuw, kub = keys[4 * i:4 * i + 4]
        up_in = c["inner"] if c["innermost"] else 2 * c["inner"]
        # InstanceNorm => use_bias=True for both convs in the reference module.
        dw = 0.02 * jax.random.normal(kdw, (c["inner"], c["input"], 4, 4),
                                      jnp.float32)
        db = 0.02 * jax.random.normal(kdb, (c["inner"],), jnp.float32)
        uw = 0.02 * jax.random.normal(kuw, (up_in, c["outer"], 4, 4),
                                      jnp.float32)
        ub = 0.02 * jax.random.normal(kub, (c["outer"],), jnp.float32)

        cin_d_pad = _round_up(c["input"], 8)    # K = 16*Cin_p  % 128 == 0
        cout_d_pad = _round_up(c["inner"], _LANE)
        cin_u_pad = _round_up(up_in, 32)        # K = 4*Cin_p   % 128 == 0
        cout_u_pad = _round_up(c["outer"], _LANE)

        params.append({
            "down_wm": _down_w_to_gemm(dw, cin_d_pad, cout_d_pad),
            "down_b": jnp.pad(db, (0, cout_d_pad - c["inner"])
                              ).reshape(1, cout_d_pad).astype(jnp.float32),
            "up_wm": _up_w_to_gemm(uw, cin_u_pad, cout_u_pad),
            "up_b": jnp.pad(ub, (0, cout_u_pad - c["outer"])
                            ).reshape(1, cout_u_pad).astype(jnp.float32),
        })
        raw_params.append({"down_w": dw, "down_b": db, "up_w": uw, "up_b": ub})
        structure.append(dict(
            outermost=c["outermost"], innermost=c["innermost"],
            cout_down=c["inner"], cin_down_pad=cin_d_pad,
            cout_up=c["outer"], cin_up_pad=cin_u_pad))
    return tuple(structure), params, raw_params


def unet_score_forward(structure, params, x, logit_transform=False):
    """x: NCHW float32; structure is static; params is an array-only pytree."""
    h = jnp.transpose(x, (0, 2, 3, 1)).astype(jnp.float32)    # NCHW -> NHWC
    if not logit_transform:
        h = 2.0 * h - 1.0

    skips = []
    # down path (outermost -> innermost)
    for cfg, p in zip(structure, params):
        skips.append(h)
        a = h if cfg["outermost"] else jax.nn.leaky_relu(h, 0.2)
        h = conv_down(a, p, cfg)

    # up path (innermost -> outermost)
    for cfg, p, skip in zip(reversed(structure), reversed(params),
                            reversed(skips)):
        a = jax.nn.relu(h)
        u = conv_up(a, p, cfg)
        if cfg["outermost"]:
            # TODO(synk): the original pix2pix block appends nn.Tanh() on the
            # outermost up path; the score-network variant leaves the output
            # unbounded, so it is intentionally omitted (as in prior version).
            h = u
        else:
            h = jnp.concatenate([skip, u], axis=-1)

    return jnp.transpose(h, (0, 3, 1, 2))                      # NHWC -> NCHW


# ---------------------------------------------------------------------------
# Pure-JAX reference (lax.conv) with matched bf16 operand policy
# ---------------------------------------------------------------------------

def _ref_instance_norm(y):
    mean = jnp.mean(y, axis=(1, 2), keepdims=True)
    var = jnp.mean(jnp.square(y - mean), axis=(1, 2), keepdims=True)
    return (y - mean) * jax.lax.rsqrt(var + _EPS)


def _ref_conv_down(x, w, b, norm):
    xb = x.astype(jnp.bfloat16)
    wf = jnp.transpose(w, (2, 3, 1, 0)).astype(jnp.bfloat16)      # HWIO
    y = jax.lax.conv_general_dilated(
        xb, wf, (2, 2), ((1, 1), (1, 1)),
        dimension_numbers=("NHWC", "HWIO", "NHWC"),
        preferred_element_type=jnp.float32)
    y = y + b.reshape(1, 1, 1, -1)
    if norm:
        y = _ref_instance_norm(y)
    return y.astype(jnp.bfloat16)


def _ref_conv_up(x, w, b, norm, out_dtype):
    xb = x.astype(jnp.bfloat16)
    wf = jnp.transpose(jnp.flip(w, (2, 3)), (2, 3, 0, 1)).astype(jnp.bfloat16)
    y = jax.lax.conv_general_dilated(
        xb, wf, (1, 1), ((2, 2), (2, 2)), lhs_dilation=(2, 2),
        dimension_numbers=("NHWC", "HWIO", "NHWC"),
        preferred_element_type=jnp.float32)
    y = y + b.reshape(1, 1, 1, -1)
    if norm:
        y = _ref_instance_norm(y)
    return y.astype(out_dtype)


def reference_forward(structure, raw_params, x, logit_transform=False):
    h = jnp.transpose(x, (0, 2, 3, 1)).astype(jnp.float32)
    if not logit_transform:
        h = 2.0 * h - 1.0
    skips = []
    for cfg, p in zip(structure, raw_params):
        skips.append(h)
        a = h if cfg["outermost"] else jax.nn.leaky_relu(h, 0.2)
        norm = not (cfg["outermost"] or cfg["innermost"])
        h = _ref_conv_down(a, p["down_w"], p["down_b"], norm)
    for cfg, p, skip in zip(reversed(structure), reversed(raw_params),
                            reversed(skips)):
        a = jax.nn.relu(h)
        u = _ref_conv_up(a, p["up_w"], p["up_b"], norm=not cfg["outermost"],
                         out_dtype=jnp.float32 if cfg["outermost"]
                         else jnp.bfloat16)
        h = u if cfg["outermost"] else jnp.concatenate([skip, u], axis=-1)
    return jnp.transpose(h, (0, 3, 1, 2))


# ---------------------------------------------------------------------------
# main
# ---------------------------------------------------------------------------

if __name__ == "__main__":
    batch, channels, ngf, image_size = 2, 4, 8, 16

    key = jax.random.PRNGKey(0)
    k_x, k_params = jax.random.split(key)
    x = jax.random.uniform(k_x, (batch, channels, image_size, image_size),
                           jnp.float32)

    structure, params, raw_params = init_unet_score(k_params, channels, ngf,
                                                    image_size)

    # structure is closed over (static); only arrays flow through jit.
    fwd = jax.jit(lambda p, inp: unet_score_forward(structure, p, inp,
                                                    logit_transform=False))
    out = jax.block_until_ready(fwd(params, x))

    assert out.shape == (batch, channels, image_size, image_size), out.shape
    assert out.dtype == jnp.float32
    assert bool(jnp.all(jnp.isfinite(out)))

    # Pure-JAX reference with the same bf16 operand policy; loose tolerance
    # accounts for bf16 GEMM operands + small-extent InstanceNorm.
    ref_fwd = jax.jit(lambda p, inp: reference_forward(structure, p, inp,
                                                       logit_transform=False))
    ref = jax.block_until_ready(ref_fwd(raw_params, x))
    max_err = float(jnp.max(jnp.abs(out - ref)))
    assert max_err < 5e-2, f"max abs error vs lax.conv reference: {max_err}"

    print("KERNEL_OK")
</pallas_src>

<mosaic_0001>
module attributes {stable_mosaic.version = 11 : i64} {
  func.func @_down_bias_kernel(%arg0: i32, %arg1: memref<1x64x128xbf16, #tpu.memory_space<vmem>>, %arg2: memref<128x128xbf16, #tpu.memory_space<vmem>>, %arg3: memref<1x128xf32, #tpu.memory_space<vmem>>, %arg4: memref<1x64x128xbf16, #tpu.memory_space<vmem>>) attributes {dimension_semantics = [#tpu.dimension_semantics<parallel>], iteration_bounds = array<i64: 2>, scalar_prefetch = 0 : i64, scratch_operands = 0 : i64, tpu.core_type = #tpu.core_type<tc>, window_params = [{transform_indices = @transform_0, window_bounds = array<i64: 1, 64, 128>}, {pipeline_mode = #tpu.pipeline_mode<synchronous>, transform_indices = @transform_1, window_bounds = array<i64: 128, 128>}, {pipeline_mode = #tpu.pipeline_mode<synchronous>, transform_indices = @transform_2, window_bounds = array<i64: 1, 128>}, {transform_indices = @transform_3, window_bounds = array<i64: 1, 64, 128>}]} {
    %c0 = arith.constant 0 : index
    %c0_0 = arith.constant 0 : index
    %c0_1 = arith.constant 0 : index
    %0 = vector.load %arg1[%c0, %c0_0, %c0_1] : memref<1x64x128xbf16, #tpu.memory_space<vmem>>, vector<1x64x128xbf16>
    %1 = vector.shape_cast %0 : vector<1x64x128xbf16> to vector<64x128xbf16>
    %c0_2 = arith.constant 0 : index
    %c0_3 = arith.constant 0 : index
    %2 = vector.load %arg2[%c0_2, %c0_3] : memref<128x128xbf16, #tpu.memory_space<vmem>>, vector<128x128xbf16>
    %cst = arith.constant dense<0.000000e+00> : vector<64x128xf32>
    %3 = tpu.matmul %1, %2, %cst {dimension_numbers = #tpu.dot_dimension_numbers<[1], [0], [0], [1], [0, 0, 1, 1], [], []>} : vector<64x128xbf16>, vector<128x128xbf16>, vector<64x128xf32> -> vector<64x128xf32>
    %c0_4 = arith.constant 0 : index
    %c0_5 = arith.constant 0 : index
    %4 = vector.load %arg3[%c0_4, %c0_5] : memref<1x128xf32, #tpu.memory_space<vmem>>, vector<1x128xf32>
    %5 = vector.broadcast %4 : vector<1x128xf32> to vector<64x128xf32>
    %6 = arith.addf %3, %5 : vector<64x128xf32>
    %7 = arith.truncf %6 : vector<64x128xf32> to vector<64x128xbf16>
    %c0_6 = arith.constant 0 : index
    %c0_7 = arith.constant 0 : index
    %c0_8 = arith.constant 0 : index
    %8 = vector.load %arg4[%c0_6, %c0_7, %c0_8] : memref<1x64x128xbf16, #tpu.memory_space<vmem>>, vector<1x64x128xbf16>
    %9 = vector.shape_cast %8 : vector<1x64x128xbf16> to vector<64x128xbf16>
    %10 = vector.shape_cast %7 : vector<64x128xbf16> to vector<1x64x128xbf16>
    tpu.vector_store %arg4[%c0_6, %c0_7, %c0_8], %10 {strides = array<i32>} : memref<1x64x128xbf16, #tpu.memory_space<vmem>>, vector<1x64x128xbf16>,
    return
  }
  func.func @transform_0(%arg0: i32) -> (i32, i32, i32) {
    %c0_i32 = arith.constant 0 : i32
    %c0_i32_0 = arith.constant 0 : i32
    %c0_i32_1 = arith.constant 0 : i32
    return %arg0, %c0_i32, %c0_i32_0 : i32, i32, i32
  }
  func.func @transform_1(%arg0: i32) -> (i32, i32) {
    %c0_i32 = arith.constant 0 : i32
    %c0_i32_0 = arith.constant 0 : i32
    %c0_i32_1 = arith.constant 0 : i32
    return %c0_i32, %c0_i32_0 : i32, i32
  }
  func.func @transform_2(%arg0: i32) -> (i32, i32) {
    %c0_i32 = arith.constant 0 : i32
    %c0_i32_0 = arith.constant 0 : i32
    %c0_i32_1 = arith.constant 0 : i32
    return %c0_i32, %c0_i32_0 : i32, i32
  }
  func.func @transform_3(%arg0: i32) -> (i32, i32, i32) {
    %c0_i32 = arith.constant 0 : i32
    %c0_i32_0 = arith.constant 0 : i32
    %c0_i32_1 = arith.constant 0 : i32
    return %arg0, %c0_i32, %c0_i32_0 : i32, i32, i32
  }
}

module attributes {stable_mosaic.version = 11 : i64} {
  func.func @_down_inorm_kernel(%arg0: i32, %arg1: memref<1x16x256xbf16, #tpu.memory_space<vmem>>, %arg2: memref<256x128xbf16, #tpu.memory_space<vmem>>, %arg3: memref<1x16x128xbf16, #tpu.memory_space<vmem>>) attributes {dimension_semantics = [#tpu.dimension_semantics<parallel>], iteration_bounds = array<i64: 2>, scalar_prefetch = 0 : i64, scratch_operands = 0 : i64, tpu.core_type = #tpu.core_type<tc>, window_params = [{transform_indices = @transform_0, window_bounds = array<i64: 1, 16, 256>}, {pipeline_mode = #tpu.pipeline_mode<synchronous>, transform_indices = @transform_1, window_bounds = array<i64: 256, 128>}, {transform_indices = @transform_2, window_bounds = array<i64: 1, 16, 128>}]} {
    %c0 = arith.constant 0 : index
    %c0_0 = arith.constant 0 : index
    %c0_1 = arith.constant 0 : index
    %0 = vector.load %arg1[%c0, %c0_0, %c0_1] : memref<1x16x256xbf16, #tpu.memory_space<vmem>>, vector<1x16x256xbf16>
    %1 = vector.shape_cast %0 : vector<1x16x256xbf16> to vector<16x256xbf16>
    %c0_2 = arith.constant 0 : index
    %c0_3 = arith.constant 0 : index
    %2 = vector.load %arg2[%c0_2, %c0_3] : memref<256x128xbf16, #tpu.memory_space<vmem>>, vector<256x128xbf16>
    %cst = arith.constant dense<0.000000e+00> : vector<16x128xf32>
    %3 = tpu.matmul %1, %2, %cst {dimension_numbers = #tpu.dot_dimension_numbers<[1], [0], [0], [1], [0, 0, 1, 1], [], []>} : vector<16x256xbf16>, vector<256x128xbf16>, vector<16x128xf32> -> vector<16x128xf32>
    %cst_4 = arith.constant dense<0.000000e+00> : vector<128xf32>
    %4 = vector.multi_reduction <add>, %3, %cst_4 [0] : vector<16x128xf32> to vector<128xf32>
    %5 = vector.shape_cast %4 : vector<128xf32> to vector<1x128xf32>
    %cst_5 = arith.constant 1.600000e+01 : f32
    %6 = vector.broadcast %cst_5 : f32 to vector<1x128xf32>
    %7 = arith.divf %5, %6 : vector<1x128xf32>
    %8 = vector.broadcast %7 : vector<1x128xf32> to vector<16x128xf32>
    %9 = arith.subf %3, %8 : vector<16x128xf32>
    %10 = arith.mulf %9, %9 : vector<16x128xf32>
    %cst_6 = arith.constant dense<0.000000e+00> : vector<128xf32>
    %11 = vector.multi_reduction <add>, %10, %cst_6 [0] : vector<16x128xf32> to vector<128xf32>
    %12 = vector.shape_cast %11 : vector<128xf32> to vector<1x128xf32>
    %cst_7 = arith.constant 1.600000e+01 : f32
    %13 = vector.broadcast %cst_7 : f32 to vector<1x128xf32>
    %14 = arith.divf %12, %13 : vector<1x128xf32>
    %15 = vector.broadcast %7 : vector<1x128xf32> to vector<16x128xf32>
    %16 = arith.subf %3, %15 : vector<16x128xf32>
    %cst_8 = arith.constant 9.99999974E-6 : f32
    %17 = vector.broadcast %cst_8 : f32 to vector<1x128xf32>
    %18 = arith.addf %14, %17 : vector<1x128xf32>
    %19 = math.rsqrt %18 : vector<1x128xf32>
    %20 = vector.broadcast %19 : vector<1x128xf32> to vector<16x128xf32>
    %21 = arith.mulf %16, %20 : vector<16x128xf32>
    %22 = arith.truncf %21 : vector<16x128xf32> to vector<16x128xbf16>
    %c0_9 = arith.constant 0 : index
    %c0_10 = arith.constant 0 : index
    %c0_11 = arith.constant 0 : index
    %23 = vector.load %arg3[%c0_9, %c0_10, %c0_11] : memref<1x16x128xbf16, #tpu.memory_space<vmem>>, vector<1x16x128xbf16>
    %24 = vector.shape_cast %23 : vector<1x16x128xbf16> to vector<16x128xbf16>
    %25 = vector.shape_cast %22 : vector<16x128xbf16> to vector<1x16x128xbf16>
    tpu.vector_store %arg3[%c0_9, %c0_10, %c0_11], %25 {strides = array<i32>} : memref<1x16x128xbf16, #tpu.memory_space<vmem>>, vector<1x16x128xbf16>,
    return
  }
  func.func @transform_0(%arg0: i32) -> (i32, i32, i32) {
    %c0_i32 = arith.constant 0 : i32
    %c0_i32_0 = arith.constant 0 : i32
    %c0_i32_1 = arith.constant 0 : i32
    return %arg0, %c0_i32, %c0_i32_0 : i32, i32, i32
  }
  func.func @transform_1(%arg0: i32) -> (i32, i32) {
    %c0_i32 = arith.constant 0 : i32
    %c0_i32_0 = arith.constant 0 : i32
    %c0_i32_1 = arith.constant 0 : i32
    return %c0_i32, %c0_i32_0 : i32, i32
  }
  func.func @transform_2(%arg0: i32) -> (i32, i32, i32) {
    %c0_i32 = arith.constant 0 : i32
    %c0_i32_0 = arith.constant 0 : i32
    %c0_i32_1 = arith.constant 0 : i32
    return %arg0, %c0_i32, %c0_i32_0 : i32, i32, i32
  }
}

module attributes {stable_mosaic.version = 11 : i64} {
  func.func @_down_inorm_kernel(%arg0: i32, %arg1: memref<1x4x512xbf16, #tpu.memory_space<vmem>>, %arg2: memref<512x128xbf16, #tpu.memory_space<vmem>>, %arg3: memref<1x4x128xbf16, #tpu.memory_space<vmem>>) attributes {dimension_semantics = [#tpu.dimension_semantics<parallel>], iteration_bounds = array<i64: 2>, scalar_prefetch = 0 : i64, scratch_operands = 0 : i64, tpu.core_type = #tpu.core_type<tc>, window_params = [{transform_indices = @transform_0, window_bounds = array<i64: 1, 4, 512>}, {pipeline_mode = #tpu.pipeline_mode<synchronous>, transform_indices = @transform_1, window_bounds = array<i64: 512, 128>}, {transform_indices = @transform_2, window_bounds = array<i64: 1, 4, 128>}]} {
    %c0 = arith.constant 0 : index
    %c0_0 = arith.constant 0 : index
    %c0_1 = arith.constant 0 : index
    %0 = vector.load %arg1[%c0, %c0_0, %c0_1] : memref<1x4x512xbf16, #tpu.memory_space<vmem>>, vector<1x4x512xbf16>
    %1 = vector.shape_cast %0 : vector<1x4x512xbf16> to vector<4x512xbf16>
    %c0_2 = arith.constant 0 : index
    %c0_3 = arith.constant 0 : index
    %2 = vector.load %arg2[%c0_2, %c0_3] : memref<512x128xbf16, #tpu.memory_space<vmem>>, vector<512x128xbf16>
    %cst = arith.constant dense<0.000000e+00> : vector<4x128xf32>
    %3 = tpu.matmul %1, %2, %cst {dimension_numbers = #tpu.dot_dimension_numbers<[1], [0], [0], [1], [0, 0, 1, 1], [], []>} : vector<4x512xbf16>, vector<512x128xbf16>, vector<4x128xf32> -> vector<4x128xf32>
    %cst_4 = arith.constant dense<0.000000e+00> : vector<128xf32>
    %4 = vector.multi_reduction <add>, %3, %cst_4 [0] : vector<4x128xf32> to vector<128xf32>
    %5 = vector.shape_cast %4 : vector<128xf32> to vector<1x128xf32>
    %cst_5 = arith.constant 4.000000e+00 : f32
    %6 = vector.broadcast %cst_5 : f32 to vector<1x128xf32>
    %7 = arith.divf %5, %6 : vector<1x128xf32>
    %8 = vector.broadcast %7 : vector<1x128xf32> to vector<4x128xf32>
    %9 = arith.subf %3, %8 : vector<4x128xf32>
    %10 = arith.mulf %9, %9 : vector<4x128xf32>
    %cst_6 = arith.constant dense<0.000000e+00> : vector<128xf32>
    %11 = vector.multi_reduction <add>, %10, %cst_6 [0] : vector<4x128xf32> to vector<128xf32>
    %12 = vector.shape_cast %11 : vector<128xf32> to vector<1x128xf32>
    %cst_7 = arith.constant 4.000000e+00 : f32
    %13 = vector.broadcast %cst_7 : f32 to vector<1x128xf32>
    %14 = arith.divf %12, %13 : vector<1x128xf32>
    %15 = vector.broadcast %7 : vector<1x128xf32> to vector<4x128xf32>
    %16 = arith.subf %3, %15 : vector<4x128xf32>
    %cst_8 = arith.constant 9.99999974E-6 : f32
    %17 = vector.broadcast %cst_8 : f32 to vector<1x128xf32>
    %18 = arith.addf %14, %17 : vector<1x128xf32>
    %19 = math.rsqrt %18 : vector<1x128xf32>
    %20 = vector.broadcast %19 : vector<1x128xf32> to vector<4x128xf32>
    %21 = arith.mulf %16, %20 : vector<4x128xf32>
    %22 = arith.truncf %21 : vector<4x128xf32> to vector<4x128xbf16>
    %c0_9 = arith.constant 0 : index
    %c0_10 = arith.constant 0 : index
    %c0_11 = arith.constant 0 : index
    %23 = vector.load %arg3[%c0_9, %c0_10, %c0_11] : memref<1x4x128xbf16, #tpu.memory_space<vmem>>, vector<1x4x128xbf16>
    %24 = vector.shape_cast %23 : vector<1x4x128xbf16> to vector<4x128xbf16>
    %25 = vector.shape_cast %22 : vector<4x128xbf16> to vector<1x4x128xbf16>
    tpu.vector_store %arg3[%c0_9, %c0_10, %c0_11], %25 {strides = array<i32>} : memref<1x4x128xbf16, #tpu.memory_space<vmem>>, vector<1x4x128xbf16>,
    return
  }
  func.func @transform_0(%arg0: i32) -> (i32, i32, i32) {
    %c0_i32 = arith.constant 0 : i32
    %c0_i32_0 = arith.constant 0 : i32
    %c0_i32_1 = arith.constant 0 : i32
    return %arg0, %c0_i32, %c0_i32_0 : i32, i32, i32
  }
  func.func @transform_1(%arg0: i32) -> (i32, i32) {
    %c0_i32 = arith.constant 0 : i32
    %c0_i32_0 = arith.constant 0 : i32
    %c0_i32_1 = arith.constant 0 : i32
    return %c0_i32, %c0_i32_0 : i32, i32
  }
  func.func @transform_2(%arg0: i32) -> (i32, i32, i32) {
    %c0_i32 = arith.constant 0 : i32
    %c0_i32_0 = arith.constant 0 : i32
    %c0_i32_1 = arith.constant 0 : i32
    return %arg0, %c0_i32, %c0_i32_0 : i32, i32, i32
  }
}

module attributes {stable_mosaic.version = 11 : i64} {
  func.func @_down_bias_kernel(%arg0: i32, %arg1: memref<1x1x1024xbf16, #tpu.memory_space<vmem>>, %arg2: memref<1024x128xbf16, #tpu.memory_space<vmem>>, %arg3: memref<1x128xf32, #tpu.memory_space<vmem>>, %arg4: memref<1x1x128xbf16, #tpu.memory_space<vmem>>) attributes {dimension_semantics = [#tpu.dimension_semantics<parallel>], iteration_bounds = array<i64: 2>, scalar_prefetch = 0 : i64, scratch_operands = 0 : i64, tpu.core_type = #tpu.core_type<tc>, window_params = [{transform_indices = @transform_0, window_bounds = array<i64: 1, 1, 1024>}, {pipeline_mode = #tpu.pipeline_mode<synchronous>, transform_indices = @transform_1, window_bounds = array<i64: 1024, 128>}, {pipeline_mode = #tpu.pipeline_mode<synchronous>, transform_indices = @transform_2, window_bounds = array<i64: 1, 128>}, {transform_indices = @transform_3, window_bounds = array<i64: 1, 1, 128>}]} {
    %c0 = arith.constant 0 : index
    %c0_0 = arith.constant 0 : index
    %c0_1 = arith.constant 0 : index
    %0 = vector.load %arg1[%c0, %c0_0, %c0_1] : memref<1x1x1024xbf16, #tpu.memory_space<vmem>>, vector<1x1x1024xbf16>
    %1 = vector.shape_cast %0 : vector<1x1x1024xbf16> to vector<1x1024xbf16>
    %c0_2 = arith.constant 0 : index
    %c0_3 = arith.constant 0 : index
    %2 = vector.load %arg2[%c0_2, %c0_3] : memref<1024x128xbf16, #tpu.memory_space<vmem>>, vector<1024x128xbf16>
    %cst = arith.constant dense<0.000000e+00> : vector<1x128xf32>
    %3 = tpu.matmul %1, %2, %cst {dimension_numbers = #tpu.dot_dimension_numbers<[1], [0], [0], [1], [0, 0, 1, 1], [], []>} : vector<1x1024xbf16>, vector<1024x128xbf16>, vector<1x128xf32> -> vector<1x128xf32>
    %c0_4 = arith.constant 0 : index
    %c0_5 = arith.constant 0 : index
    %4 = vector.load %arg3[%c0_4, %c0_5] : memref<1x128xf32, #tpu.memory_space<vmem>>, vector<1x128xf32>
    %5 = arith.addf %3, %4 : vector<1x128xf32>
    %6 = arith.truncf %5 : vector<1x128xf32> to vector<1x128xbf16>
    %c0_6 = arith.constant 0 : index
    %c0_7 = arith.constant 0 : index
    %c0_8 = arith.constant 0 : index
    %7 = vector.load %arg4[%c0_6, %c0_7, %c0_8] : memref<1x1x128xbf16, #tpu.memory_space<vmem>>, vector<1x1x128xbf16>
    %8 = vector.shape_cast %7 : vector<1x1x128xbf16> to vector<1x128xbf16>
    %9 = vector.shape_cast %6 : vector<1x128xbf16> to vector<1x1x128xbf16>
    tpu.vector_store %arg4[%c0_6, %c0_7, %c0_8], %9 {strides = array<i32>} : memref<1x1x128xbf16, #tpu.memory_space<vmem>>, vector<1x1x128xbf16>,
    return
  }
  func.func @transform_0(%arg0: i32) -> (i32, i32, i32) {
    %c0_i32 = arith.constant 0 : i32
    %c0_i32_0 = arith.constant 0 : i32
    %c0_i32_1 = arith.constant 0 : i32
    return %arg0, %c0_i32, %c0_i32_0 : i32, i32, i32
  }
  func.func @transform_1(%arg0: i32) -> (i32, i32) {
    %c0_i32 = arith.constant 0 : i32
    %c0_i32_0 = arith.constant 0 : i32
    %c0_i32_1 = arith.constant 0 : i32
    return %c0_i32, %c0_i32_0 : i32, i32
  }
  func.func @transform_2(%arg0: i32) -> (i32, i32) {
    %c0_i32 = arith.constant 0 : i32
    %c0_i32_0 = arith.constant 0 : i32
    %c0_i32_1 = arith.constant 0 : i32
    return %c0_i32, %c0_i32_0 : i32, i32
  }
  func.func @transform_3(%arg0: i32) -> (i32, i32, i32) {
    %c0_i32 = arith.constant 0 : i32
    %c0_i32_0 = arith.constant 0 : i32
    %c0_i32_1 = arith.constant 0 : i32
    return %arg0, %c0_i32, %c0_i32_0 : i32, i32, i32
  }
}

module attributes {stable_mosaic.version = 11 : i64} {
  func.func @_up_inorm_kernel(%arg0: i32, %arg1: memref<1x4x1x256xbf16, #tpu.memory_space<vmem>>, %arg2: memref<4x256x128xbf16, #tpu.memory_space<vmem>>, %arg3: memref<1x4x1x128xbf16, #tpu.memory_space<vmem>>) attributes {dimension_semantics = [#tpu.dimension_semantics<parallel>], iteration_bounds = array<i64: 2>, scalar_prefetch = 0 : i64, scratch_operands = 0 : i64, tpu.core_type = #tpu.core_type<tc>, window_params = [{transform_indices = @transform_0, window_bounds = array<i64: 1, 4, 1, 256>}, {pipeline_mode = #tpu.pipeline_mode<synchronous>, transform_indices = @transform_1, window_bounds = array<i64: 4, 256, 128>}, {transform_indices = @transform_2, window_bounds = array<i64: 1, 4, 1, 128>}]} {
    %c0 = arith.constant 0 : index
    %c0_0 = arith.constant 0 : index
    %c0_1 = arith.constant 0 : index
    %c0_2 = arith.constant 0 : index
    %0 = vector.load %arg1[%c0, %c0_0, %c0_1, %c0_2] : memref<1x4x1x256xbf16, #tpu.memory_space<vmem>>, vector<1x1x1x256xbf16>
    %1 = vector.shape_cast %0 : vector<1x1x1x256xbf16> to vector<1x256xbf16>
    %c0_3 = arith.constant 0 : index
    %c0_4 = arith.constant 0 : index
    %c0_5 = arith.constant 0 : index
    %2 = vector.load %arg2[%c0_3, %c0_4, %c0_5] : memref<4x256x128xbf16, #tpu.memory_space<vmem>>, vector<1x256x128xbf16>
    %3 = vector.shape_cast %2 : vector<1x256x128xbf16> to vector<256x128xbf16>
    %cst = arith.constant dense<0.000000e+00> : vector<1x128xf32>
    %4 = tpu.matmul %1, %3, %cst {dimension_numbers = #tpu.dot_dimension_numbers<[1], [0], [0], [1], [0, 0, 1, 1], [], []>} : vector<1x256xbf16>, vector<256x128xbf16>, vector<1x128xf32> -> vector<1x128xf32>
    %c0_6 = arith.constant 0 : index
    %c1 = arith.constant 1 : index
    %c0_7 = arith.constant 0 : index
    %c0_8 = arith.constant 0 : index
    %5 = vector.load %arg1[%c0_6, %c1, %c0_7, %c0_8] : memref<1x4x1x256xbf16, #tpu.memory_space<vmem>>, vector<1x1x1x256xbf16>
    %6 = vector.shape_cast %5 : vector<1x1x1x256xbf16> to vector<1x256xbf16>
    %c1_9 = arith.constant 1 : index
    %c0_10 = arith.constant 0 : index
    %c0_11 = arith.constant 0 : index
    %7 = vector.load %arg2[%c1_9, %c0_10, %c0_11] : memref<4x256x128xbf16, #tpu.memory_space<vmem>>, vector<1x256x128xbf16>
    %8 = vector.shape_cast %7 : vector<1x256x128xbf16> to vector<256x128xbf16>
    %cst_12 = arith.constant dense<0.000000e+00> : vector<1x128xf32>
    %9 = tpu.matmul %6, %8, %cst_12 {dimension_numbers = #tpu.dot_dimension_numbers<[1], [0], [0], [1], [0, 0, 1, 1], [], []>} : vector<1x256xbf16>, vector<256x128xbf16>, vector<1x128xf32> -> vector<1x128xf32>
    %c0_13 = arith.constant 0 : index
    %c2 = arith.constant 2 : index
    %c0_14 = arith.constant 0 : index
    %c0_15 = arith.constant 0 : index
    %10 = vector.load %arg1[%c0_13, %c2, %c0_14, %c0_15] : memref<1x4x1x256xbf16, #tpu.memory_space<vmem>>, vector<1x1x1x256xbf16>
    %11 = vector.shape_cast %10 : vector<1x1x1x256xbf16> to vector<1x256xbf16>
    %c2_16 = arith.constant 2 : index
    %c0_17 = arith.constant 0 : index
    %c0_18 = arith.constant 0 : index
    %12 = vector.load %arg2[%c2_16, %c0_17, %c0_18] : memref<4x256x128xbf16, #tpu.memory_space<vmem>>, vector<1x256x128xbf16>
    %13 = vector.shape_cast %12 : vector<1x256x128xbf16> to vector<256x128xbf16>
    %cst_19 = arith.constant dense<0.000000e+00> : vector<1x128xf32>
    %14 = tpu.matmul %11, %13, %cst_19 {dimension_numbers = #tpu.dot_dimension_numbers<[1], [0], [0], [1], [0, 0, 1, 1], [], []>} : vector<1x256xbf16>, vector<256x128xbf16>, vector<1x128xf32> -> vector<1x128xf32>
    %c0_20 = arith.constant 0 : index
    %c3 = arith.constant 3 : index
    %c0_21 = arith.constant 0 : index
    %c0_22 = arith.constant 0 : index
    %15 = vector.load %arg1[%c0_20, %c3, %c0_21, %c0_22] : memref<1x4x1x256xbf16, #tpu.memory_space<vmem>>, vector<1x1x1x256xbf16>
    %16 = vector.shape_cast %15 : vector<1x1x1x256xbf16> to vector<1x256xbf16>
    %c3_23 = arith.constant 3 : index
    %c0_24 = arith.constant 0 : index
    %c0_25 = arith.constant 0 : index
    %17 = vector.load %arg2[%c3_23, %c0_24, %c0_25] : memref<4x256x128xbf16, #tpu.memory_space<vmem>>, vector<1x256x128xbf16>
    %18 = vector.shape_cast %17 : vector<1x256x128xbf16> to vector<256x128xbf16>
    %cst_26 = arith.constant dense<0.000000e+00> : vector<1x128xf32>
    %19 = tpu.matmul %16, %18, %cst_26 {dimension_numbers = #tpu.dot_dimension_numbers<[1], [0], [0], [1], [0, 0, 1, 1], [], []>} : vector<1x256xbf16>, vector<256x128xbf16>, vector<1x128xf32> -> vector<1x128xf32>
    %cst_27 = arith.constant dense<0.000000e+00> : vector<128xf32>
    %20 = vector.multi_reduction <add>, %4, %cst_27 [0] : vector<1x128xf32> to vector<128xf32>
    %21 = vector.shape_cast %20 : vector<128xf32> to vector<1x128xf32>
    %cst_28 = arith.constant 0.000000e+00 : f32
    %22 = vector.broadcast %cst_28 : f32 to vector<1x128xf32>
    %23 = arith.addf %22, %21 : vector<1x128xf32>
    %cst_29 = arith.constant dense<0.000000e+00> : vector<128xf32>
    %24 = vector.multi_reduction <add>, %9, %cst_29 [0] : vector<1x128xf32> to vector<128xf32>
    %25 = vector.shape_cast %24 : vector<128xf32> to vector<1x128xf32>
    %26 = arith.addf %23, %25 : vector<1x128xf32>
    %cst_30 = arith.constant dense<0.000000e+00> : vector<128xf32>
    %27 = vector.multi_reduction <add>, %14, %cst_30 [0] : vector<1x128xf32> to vector<128xf32>
    %28 = vector.shape_cast %27 : vector<128xf32> to vector<1x128xf32>
    %29 = arith.addf %26, %28 : vector<1x128xf32>
    %cst_31 = arith.constant dense<0.000000e+00> : vector<128xf32>
    %30 = vector.multi_reduction <add>, %19, %cst_31 [0] : vector<1x128xf32> to vector<128xf32>
    %31 = vector.shape_cast %30 : vector<128xf32> to vector<1x128xf32>
    %32 = arith.addf %29, %31 : vector<1x128xf32>
    %cst_32 = arith.constant 4.000000e+00 : f32
    %33 = vector.broadcast %cst_32 : f32 to vector<1x128xf32>
    %34 = arith.divf %32, %33 : vector<1x128xf32>
    %35 = arith.subf %4, %34 : vector<1x128xf32>
    %36 = arith.mulf %35, %35 : vector<1x128xf32>
    %cst_33 = arith.constant dense<0.000000e+00> : vector<128xf32>
    %37 = vector.multi_reduction <add>, %36, %cst_33 [0] : vector<1x128xf32> to vector<128xf32>
    %38 = vector.shape_cast %37 : vector<128xf32> to vector<1x128xf32>
    %cst_34 = arith.constant 0.000000e+00 : f32
    %39 = vector.broadcast %cst_34 : f32 to vector<1x128xf32>
    %40 = arith.addf %39, %38 : vector<1x128xf32>
    %41 = arith.subf %9, %34 : vector<1x128xf32>
    %42 = arith.mulf %41, %41 : vector<1x128xf32>
    %cst_35 = arith.constant dense<0.000000e+00> : vector<128xf32>
    %43 = vector.multi_reduction <add>, %42, %cst_35 [0] : vector<1x128xf32> to vector<128xf32>
    %44 = vector.shape_cast %43 : vector<128xf32> to vector<1x128xf32>
    %45 = arith.addf %40, %44 : vector<1x128xf32>
    %46 = arith.subf %14, %34 : vector<1x128xf32>
    %47 = arith.mulf %46, %46 : vector<1x128xf32>
    %cst_36 = arith.constant dense<0.000000e+00> : vector<128xf32>
    %48 = vector.multi_reduction <add>, %47, %cst_36 [0] : vector<1x128xf32> to vector<128xf32>
    %49 = vector.shape_cast %48 : vector<128xf32> to vector<1x128xf32>
    %50 = arith.addf %45, %49 : vector<1x128xf32>
    %51 = arith.subf %19, %34 : vector<1x128xf32>
    %52 = arith.mulf %51, %51 : vector<1x128xf32>
    %cst_37 = arith.constant dense<0.000000e+00> : vector<128xf32>
    %53 = vector.multi_reduction <add>, %52, %cst_37 [0] : vector<1x128xf32> to vector<128xf32>
    %54 = vector.shape_cast %53 : vector<128xf32> to vector<1x128xf32>
    %55 = arith.addf %50, %54 : vector<1x128xf32>
    %cst_38 = arith.constant 4.000000e+00 : f32
    %56 = vector.broadcast %cst_38 : f32 to vector<1x128xf32>
    %57 = arith.divf %55, %56 : vector<1x128xf32>
    %cst_39 = arith.constant 9.99999974E-6 : f32
    %58 = vector.broadcast %cst_39 : f32 to vector<1x128xf32>
    %59 = arith.addf %57, %58 : vector<1x128xf32>
    %60 = math.rsqrt %59 : vector<1x128xf32>
    %61 = arith.subf %4, %34 : vector<1x128xf32>
    %62 = arith.mulf %61, %60 : vector<1x128xf32>
    %63 = arith.truncf %62 : vector<1x128xf32> to vector<1x128xbf16>
    %c0_40 = arith.constant 0 : index
    %c0_41 = arith.constant 0 : index
    %c0_42 = arith.constant 0 : index
    %c0_43 = arith.constant 0 : index
    %64 = vector.load %arg3[%c0_40, %c0_41, %c0_42, %c0_43] : memref<1x4x1x128xbf16, #tpu.memory_space<vmem>>, vector<1x1x1x128xbf16>
    %65 = vector.shape_cast %64 : vector<1x1x1x128xbf16> to vector<1x128xbf16>
    %66 = vector.shape_cast %63 : vector<1x128xbf16> to vector<1x1x1x128xbf16>
    tpu.vector_store %arg3[%c0_40, %c0_41, %c0_42, %c0_43], %66 {strides = array<i32>} : memref<1x4x1x128xbf16, #tpu.memory_space<vmem>>, vector<1x1x1x128xbf16>,
    %67 = arith.subf %9, %34 : vector<1x128xf32>
    %68 = arith.mulf %67, %60 : vector<1x128xf32>
    %69 = arith.truncf %68 : vector<1x128xf32> to vector<1x128xbf16>
    %c0_44 = arith.constant 0 : index
    %c1_45 = arith.constant 1 : index
    %c0_46 = arith.constant 0 : index
    %c0_47 = arith.constant 0 : index
    %70 = vector.load %arg3[%c0_44, %c1_45, %c0_46, %c0_47] : memref<1x4x1x128xbf16, #tpu.memory_space<vmem>>, vector<1x1x1x128xbf16>
    %71 = vector.shape_cast %70 : vector<1x1x1x128xbf16> to vector<1x128xbf16>
    %72 = vector.shape_cast %69 : vector<1x128xbf16> to vector<1x1x1x128xbf16>
    tpu.vector_store %arg3[%c0_44, %c1_45, %c0_46, %c0_47], %72 {strides = array<i32>} : memref<1x4x1x128xbf16, #tpu.memory_space<vmem>>, vector<1x1x1x128xbf16>,
    %73 = arith.subf %14, %34 : vector<1x128xf32>
    %74 = arith.mulf %73, %60 : vector<1x128xf32>
    %75 = arith.truncf %74 : vector<1x128xf32> to vector<1x128xbf16>
    %c0_48 = arith.constant 0 : index
    %c2_49 = arith.constant 2 : index
    %c0_50 = arith.constant 0 : index
    %c0_51 = arith.constant 0 : index
    %76 = vector.load %arg3[%c0_48, %c2_49, %c0_50, %c0_51] : memref<1x4x1x128xbf16, #tpu.memory_space<vmem>>, vector<1x1x1x128xbf16>
    %77 = vector.shape_cast %76 : vector<1x1x1x128xbf16> to vector<1x128xbf16>
    %78 = vector.shape_cast %75 : vector<1x128xbf16> to vector<1x1x1x128xbf16>
    tpu.vector_store %arg3[%c0_48, %c2_49, %c0_50, %c0_51], %78 {strides = array<i32>} : memref<1x4x1x128xbf16, #tpu.memory_space<vmem>>, vector<1x1x1x128xbf16>,
    %79 = arith.subf %19, %34 : vector<1x128xf32>
    %80 = arith.mulf %79, %60 : vector<1x128xf32>
    %81 = arith.truncf %80 : vector<1x128xf32> to vector<1x128xbf16>
    %c0_52 = arith.constant 0 : index
    %c3_53 = arith.constant 3 : index
    %c0_54 = arith.constant 0 : index
    %c0_55 = arith.constant 0 : index
    %82 = vector.load %arg3[%c0_52, %c3_53, %c0_54, %c0_55] : memref<1x4x1x128xbf16, #tpu.memory_space<vmem>>, vector<1x1x1x128xbf16>
    %83 = vector.shape_cast %82 : vector<1x1x1x128xbf16> to vector<1x128xbf16>
    %84 = vector.shape_cast %81 : vector<1x128xbf16> to vector<1x1x1x128xbf16>
    tpu.vector_store %arg3[%c0_52, %c3_53, %c0_54, %c0_55], %84 {strides = array<i32>} : memref<1x4x1x128xbf16, #tpu.memory_space<vmem>>, vector<1x1x1x128xbf16>,
    return
  }
  func.func @transform_0(%arg0: i32) -> (i32, i32, i32, i32) {
    %c0_i32 = arith.constant 0 : i32
    %c0_i32_0 = arith.constant 0 : i32
    %c0_i32_1 = arith.constant 0 : i32
    %c0_i32_2 = arith.constant 0 : i32
    return %arg0, %c0_i32, %c0_i32_0, %c0_i32_1 : i32, i32, i32, i32
  }
  func.func @transform_1(%arg0: i32) -> (i32, i32, i32) {
    %c0_i32 = arith.constant 0 : i32
    %c0_i32_0 = arith.constant 0 : i32
    %c0_i32_1 = arith.constant 0 : i32
    %c0_i32_2 = arith.constant 0 : i32
    return %c0_i32, %c0_i32_0, %c0_i32_1 : i32, i32, i32
  }
  func.func @transform_2(%arg0: i32) -> (i32, i32, i32, i32) {
    %c0_i32 = arith.constant 0 : i32
    %c0_i32_0 = arith.constant 0 : i32
    %c0_i32_1 = arith.constant 0 : i32
    %c0_i32_2 = arith.constant 0 : i32
    return %arg0, %c0_i32, %c0_i32_0, %c0_i32_1 : i32, i32, i32, i32
  }
}

module attributes {stable_mosaic.version = 11 : i64} {
  func.func @_up_inorm_kernel(%arg0: i32, %arg1: memref<1x4x4x512xbf16, #tpu.memory_space<vmem>>, %arg2: memref<4x512x128xbf16, #tpu.memory_space<vmem>>, %arg3: memref<1x4x4x128xbf16, #tpu.memory_space<vmem>>) attributes {dimension_semantics = [#tpu.dimension_semantics<parallel>], iteration_bounds = array<i64: 2>, scalar_prefetch = 0 : i64, scratch_operands = 0 : i64, tpu.core_type = #tpu.core_type<tc>, window_params = [{transform_indices = @transform_0, window_bounds = array<i64: 1, 4, 4, 512>}, {pipeline_mode = #tpu.pipeline_mode<synchronous>, transform_indices = @transform_1, window_bounds = array<i64: 4, 512, 128>}, {transform_indices = @transform_2, window_bounds = array<i64: 1, 4, 4, 128>}]} {
    %c0 = arith.constant 0 : index
    %c0_0 = arith.constant 0 : index
    %c0_1 = arith.constant 0 : index
    %c0_2 = arith.constant 0 : index
    %0 = vector.load %arg1[%c0, %c0_0, %c0_1, %c0_2] : memref<1x4x4x512xbf16, #tpu.memory_space<vmem>>, vector<1x1x4x512xbf16>
    %1 = vector.shape_cast %0 : vector<1x1x4x512xbf16> to vector<4x512xbf16>
    %c0_3 = arith.constant 0 : index
    %c0_4 = arith.constant 0 : index
    %c0_5 = arith.constant 0 : index
    %2 = vector.load %arg2[%c0_3, %c0_4, %c0_5] : memref<4x512x128xbf16, #tpu.memory_space<vmem>>, vector<1x512x128xbf16>
    %3 = vector.shape_cast %2 : vector<1x512x128xbf16> to vector<512x128xbf16>
    %cst = arith.constant dense<0.000000e+00> : vector<4x128xf32>
    %4 = tpu.matmul %1, %3, %cst {dimension_numbers = #tpu.dot_dimension_numbers<[1], [0], [0], [1], [0, 0, 1, 1], [], []>} : vector<4x512xbf16>, vector<512x128xbf16>, vector<4x128xf32> -> vector<4x128xf32>
    %c0_6 = arith.constant 0 : index
    %c1 = arith.constant 1 : index
    %c0_7 = arith.constant 0 : index
    %c0_8 = arith.constant 0 : index
    %5 = vector.load %arg1[%c0_6, %c1, %c0_7, %c0_8] : memref<1x4x4x512xbf16, #tpu.memory_space<vmem>>, vector<1x1x4x512xbf16>
    %6 = vector.shape_cast %5 : vector<1x1x4x512xbf16> to vector<4x512xbf16>
    %c1_9 = arith.constant 1 : index
    %c0_10 = arith.constant 0 : index
    %c0_11 = arith.constant 0 : index
    %7 = vector.load %arg2[%c1_9, %c0_10, %c0_11] : memref<4x512x128xbf16, #tpu.memory_space<vmem>>, vector<1x512x128xbf16>
    %8 = vector.shape_cast %7 : vector<1x512x128xbf16> to vector<512x128xbf16>
    %cst_12 = arith.constant dense<0.000000e+00> : vector<4x128xf32>
    %9 = tpu.matmul %6, %8, %cst_12 {dimension_numbers = #tpu.dot_dimension_numbers<[1], [0], [0], [1], [0, 0, 1, 1], [], []>} : vector<4x512xbf16>, vector<512x128xbf16>, vector<4x128xf32> -> vector<4x128xf32>
    %c0_13 = arith.constant 0 : index
    %c2 = arith.constant 2 : index
    %c0_14 = arith.constant 0 : index
    %c0_15 = arith.constant 0 : index
    %10 = vector.load %arg1[%c0_13, %c2, %c0_14, %c0_15] : memref<1x4x4x512xbf16, #tpu.memory_space<vmem>>, vector<1x1x4x512xbf16>
    %11 = vector.shape_cast %10 : vector<1x1x4x512xbf16> to vector<4x512xbf16>
    %c2_16 = arith.constant 2 : index
    %c0_17 = arith.constant 0 : index
    %c0_18 = arith.constant 0 : index
    %12 = vector.load %arg2[%c2_16, %c0_17, %c0_18] : memref<4x512x128xbf16, #tpu.memory_space<vmem>>, vector<1x512x128xbf16>
    %13 = vector.shape_cast %12 : vector<1x512x128xbf16> to vector<512x128xbf16>
    %cst_19 = arith.constant dense<0.000000e+00> : vector<4x128xf32>
    %14 = tpu.matmul %11, %13, %cst_19 {dimension_numbers = #tpu.dot_dimension_numbers<[1], [0], [0], [1], [0, 0, 1, 1], [], []>} : vector<4x512xbf16>, vector<512x128xbf16>, vector<4x128xf32> -> vector<4x128xf32>
    %c0_20 = arith.constant 0 : index
    %c3 = arith.constant 3 : index
    %c0_21 = arith.constant 0 : index
    %c0_22 = arith.constant 0 : index
    %15 = vector.load %arg1[%c0_20, %c3, %c0_21, %c0_22] : memref<1x4x4x512xbf16, #tpu.memory_space<vmem>>, vector<1x1x4x512xbf16>
    %16 = vector.shape_cast %15 : vector<1x1x4x512xbf16> to vector<4x512xbf16>
    %c3_23 = arith.constant 3 : index
    %c0_24 = arith.constant 0 : index
    %c0_25 = arith.constant 0 : index
    %17 = vector.load %arg2[%c3_23, %c0_24, %c0_25] : memref<4x512x128xbf16, #tpu.memory_space<vmem>>, vector<1x512x128xbf16>
    %18 = vector.shape_cast %17 : vector<1x512x128xbf16> to vector<512x128xbf16>
    %cst_26 = arith.constant dense<0.000000e+00> : vector<4x128xf32>
    %19 = tpu.matmul %16, %18, %cst_26 {dimension_numbers = #tpu.dot_dimension_numbers<[1], [0], [0], [1], [0, 0, 1, 1], [], []>} : vector<4x512xbf16>, vector<512x128xbf16>, vector<4x128xf32> -> vector<4x128xf32>
    %cst_27 = arith.constant dense<0.000000e+00> : vector<128xf32>
    %20 = vector.multi_reduction <add>, %4, %cst_27 [0] : vector<4x128xf32> to vector<128xf32>
    %21 = vector.shape_cast %20 : vector<128xf32> to vector<1x128xf32>
    %cst_28 = arith.constant 0.000000e+00 : f32
    %22 = vector.broadcast %cst_28 : f32 to vector<1x128xf32>
    %23 = arith.addf %22, %21 : vector<1x128xf32>
    %cst_29 = arith.constant dense<0.000000e+00> : vector<128xf32>
    %24 = vector.multi_reduction <add>, %9, %cst_29 [0] : vector<4x128xf32> to vector<128xf32>
    %25 = vector.shape_cast %24 : vector<128xf32> to vector<1x128xf32>
    %26 = arith.addf %23, %25 : vector<1x128xf32>
    %cst_30 = arith.constant dense<0.000000e+00> : vector<128xf32>
    %27 = vector.multi_reduction <add>, %14, %cst_30 [0] : vector<4x128xf32> to vector<128xf32>
    %28 = vector.shape_cast %27 : vector<128xf32> to vector<1x128xf32>
    %29 = arith.addf %26, %28 : vector<1x128xf32>
    %cst_31 = arith.constant dense<0.000000e+00> : vector<128xf32>
    %30 = vector.multi_reduction <add>, %19, %cst_31 [0] : vector<4x128xf32> to vector<128xf32>
    %31 = vector.shape_cast %30 : vector<128xf32> to vector<1x128xf32>
    %32 = arith.addf %29, %31 : vector<1x128xf32>
    %cst_32 = arith.constant 1.600000e+01 : f32
    %33 = vector.broadcast %cst_32 : f32 to vector<1x128xf32>
    %34 = arith.divf %32, %33 : vector<1x128xf32>
    %35 = vector.broadcast %34 : vector<1x128xf32> to vector<4x128xf32>
    %36 = arith.subf %4, %35 : vector<4x128xf32>
    %37 = arith.mulf %36, %36 : vector<4x128xf32>
    %cst_33 = arith.constant dense<0.000000e+00> : vector<128xf32>
    %38 = vector.multi_reduction <add>, %37, %cst_33 [0] : vector<4x128xf32> to vector<128xf32>
    %39 = vector.shape_cast %38 : vector<128xf32> to vector<1x128xf32>
    %cst_34 = arith.constant 0.000000e+00 : f32
    %40 = vector.broadcast %cst_34 : f32 to vector<1x128xf32>
    %41 = arith.addf %40, %39 : vector<1x128xf32>
    %42 = vector.broadcast %34 : vector<1x128xf32> to vector<4x128xf32>
    %43 = arith.subf %9, %42 : vector<4x128xf32>
    %44 = arith.mulf %43, %43 : vector<4x128xf32>
    %cst_35 = arith.constant dense<0.000000e+00> : vector<128xf32>
    %45 = vector.multi_reduction <add>, %44, %cst_35 [0] : vector<4x128xf32> to vector<128xf32>
    %46 = vector.shape_cast %45 : vector<128xf32> to vector<1x128xf32>
    %47 = arith.addf %41, %46 : vector<1x128xf32>
    %48 = vector.broadcast %34 : vector<1x128xf32> to vector<4x128xf32>
    %49 = arith.subf %14, %48 : vector<4x128xf32>
    %50 = arith.mulf %49, %49 : vector<4x128xf32>
    %cst_36 = arith.constant dense<0.000000e+00> : vector<128xf32>
    %51 = vector.multi_reduction <add>, %50, %cst_36 [0] : vector<4x128xf32> to vector<128xf32>
    %52 = vector.shape_cast %51 : vector<128xf32> to vector<1x128xf32>
    %53 = arith.addf %47, %52 : vector<1x128xf32>
    %54 = vector.broadcast %34 : vector<1x128xf32> to vector<4x128xf32>
    %55 = arith.subf %19, %54 : vector<4x128xf32>
    %56 = arith.mulf %55, %55 : vector<4x128xf32>
    %cst_37 = arith.constant dense<0.000000e+00> : vector<128xf32>
    %57 = vector.multi_reduction <add>, %56, %cst_37 [0] : vector<4x128xf32> to vector<128xf32>
    %58 = vector.shape_cast %57 : vector<128xf32> to vector<1x128xf32>
    %59 = arith.addf %53, %58 : vector<1x128xf32>
    %cst_38 = arith.constant 1.600000e+01 : f32
    %60 = vector.broadcast %cst_38 : f32 to vector<1x128xf32>
    %61 = arith.divf %59, %60 : vector<1x128xf32>
    %cst_39 = arith.constant 9.99999974E-6 : f32
    %62 = vector.broadcast %cst_39 : f32 to vector<1x128xf32>
    %63 = arith.addf %61, %62 : vector<1x128xf32>
    %64 = math.rsqrt %63 : vector<1x128xf32>
    %65 = vector.broadcast %34 : vector<1x128xf32> to vector<4x128xf32>
    %66 = arith.subf %4, %65 : vector<4x128xf32>
    %67 = vector.broadcast %64 : vector<1x128xf32> to vector<4x128xf32>
    %68 = arith.mulf %66, %67 : vector<4x128xf32>
    %69 = arith.truncf %68 : vector<4x128xf32> to vector<4x128xbf16>
    %c0_40 = arith.constant 0 : index
    %c0_41 = arith.constant 0 : index
    %c0_42 = arith.constant 0 : index
    %c0_43 = arith.constant 0 : index
    %70 = vector.load %arg3[%c0_40, %c0_41, %c0_42, %c0_43] : memref<1x4x4x128xbf16, #tpu.memory_space<vmem>>, vector<1x1x4x128xbf16>
    %71 = vector.shape_cast %70 : vector<1x1x4x128xbf16> to vector<4x128xbf16>
    %72 = vector.shape_cast %69 : vector<4x128xbf16> to vector<1x1x4x128xbf16>
    tpu.vector_store %arg3[%c0_40, %c0_41, %c0_42, %c0_43], %72 {strides = array<i32>} : memref<1x4x4x128xbf16, #tpu.memory_space<vmem>>, vector<1x1x4x128xbf16>,
    %73 = vector.broadcast %34 : vector<1x128xf32> to vector<4x128xf32>
    %74 = arith.subf %9, %73 : vector<4x128xf32>
    %75 = vector.broadcast %64 : vector<1x128xf32> to vector<4x128xf32>
    %76 = arith.mulf %74, %75 : vector<4x128xf32>
    %77 = arith.truncf %76 : vector<4x128xf32> to vector<4x128xbf16>
    %c0_44 = arith.constant 0 : index
    %c1_45 = arith.constant 1 : index
    %c0_46 = arith.constant 0 : index
    %c0_47 = arith.constant 0 : index
    %78 = vector.load %arg3[%c0_44, %c1_45, %c0_46, %c0_47] : memref<1x4x4x128xbf16, #tpu.memory_space<vmem>>, vector<1x1x4x128xbf16>
    %79 = vector.shape_cast %78 : vector<1x1x4x128xbf16> to vector<4x128xbf16>
    %80 = vector.shape_cast %77 : vector<4x128xbf16> to vector<1x1x4x128xbf16>
    tpu.vector_store %arg3[%c0_44, %c1_45, %c0_46, %c0_47], %80 {strides = array<i32>} : memref<1x4x4x128xbf16, #tpu.memory_space<vmem>>, vector<1x1x4x128xbf16>,
    %81 = vector.broadcast %34 : vector<1x128xf32> to vector<4x128xf32>
    %82 = arith.subf %14, %81 : vector<4x128xf32>
    %83 = vector.broadcast %64 : vector<1x128xf32> to vector<4x128xf32>
    %84 = arith.mulf %82, %83 : vector<4x128xf32>
    %85 = arith.truncf %84 : vector<4x128xf32> to vector<4x128xbf16>
    %c0_48 = arith.constant 0 : index
    %c2_49 = arith.constant 2 : index
    %c0_50 = arith.constant 0 : index
    %c0_51 = arith.constant 0 : index
    %86 = vector.load %arg3[%c0_48, %c2_49, %c0_50, %c0_51] : memref<1x4x4x128xbf16, #tpu.memory_space<vmem>>, vector<1x1x4x128xbf16>
    %87 = vector.shape_cast %86 : vector<1x1x4x128xbf16> to vector<4x128xbf16>
    %88 = vector.shape_cast %85 : vector<4x128xbf16> to vector<1x1x4x128xbf16>
    tpu.vector_store %arg3[%c0_48, %c2_49, %c0_50, %c0_51], %88 {strides = array<i32>} : memref<1x4x4x128xbf16, #tpu.memory_space<vmem>>, vector<1x1x4x128xbf16>,
    %89 = vector.broadcast %34 : vector<1x128xf32> to vector<4x128xf32>
    %90 = arith.subf %19, %89 : vector<4x128xf32>
    %91 = vector.broadcast %64 : vector<1x128xf32> to vector<4x128xf32>
    %92 = arith.mulf %90, %91 : vector<4x128xf32>
    %93 = arith.truncf %92 : vector<4x128xf32> to vector<4x128xbf16>
    %c0_52 = arith.constant 0 : index
    %c3_53 = arith.constant 3 : index
    %c0_54 = arith.constant 0 : index
    %c0_55 = arith.constant 0 : index
    %94 = vector.load %arg3[%c0_52, %c3_53, %c0_54, %c0_55] : memref<1x4x4x128xbf16, #tpu.memory_space<vmem>>, vector<1x1x4x128xbf16>
    %95 = vector.shape_cast %94 : vector<1x1x4x128xbf16> to vector<4x128xbf16>
    %96 = vector.shape_cast %93 : vector<4x128xbf16> to vector<1x1x4x128xbf16>
    tpu.vector_store %arg3[%c0_52, %c3_53, %c0_54, %c0_55], %96 {strides = array<i32>} : memref<1x4x4x128xbf16, #tpu.memory_space<vmem>>, vector<1x1x4x128xbf16>,
    return
  }
  func.func @transform_0(%arg0: i32) -> (i32, i32, i32, i32) {
    %c0_i32 = arith.constant 0 : i32
    %c0_i32_0 = arith.constant 0 : i32
    %c0_i32_1 = arith.constant 0 : i32
    %c0_i32_2 = arith.constant 0 : i32
    return %arg0, %c0_i32, %c0_i32_0, %c0_i32_1 : i32, i32, i32, i32
  }
  func.func @transform_1(%arg0: i32) -> (i32, i32, i32) {
    %c0_i32 = arith.constant 0 : i32
    %c0_i32_0 = arith.constant 0 : i32
    %c0_i32_1 = arith.constant 0 : i32
    %c0_i32_2 = arith.constant 0 : i32
    return %c0_i32, %c0_i32_0, %c0_i32_1 : i32, i32, i32
  }
  func.func @transform_2(%arg0: i32) -> (i32, i32, i32, i32) {
    %c0_i32 = arith.constant 0 : i32
    %c0_i32_0 = arith.constant 0 : i32
    %c0_i32_1 = arith.constant 0 : i32
    %c0_i32_2 = arith.constant 0 : i32
    return %arg0, %c0_i32, %c0_i32_0, %c0_i32_1 : i32, i32, i32, i32
  }
}

module attributes {stable_mosaic.version = 11 : i64} {
  func.func @_up_inorm_kernel(%arg0: i32, %arg1: memref<1x4x16x256xbf16, #tpu.memory_space<vmem>>, %arg2: memref<4x256x128xbf16, #tpu.memory_space<vmem>>, %arg3: memref<1x4x16x128xbf16, #tpu.memory_space<vmem>>) attributes {dimension_semantics = [#tpu.dimension_semantics<parallel>], iteration_bounds = array<i64: 2>, scalar_prefetch = 0 : i64, scratch_operands = 0 : i64, tpu.core_type = #tpu.core_type<tc>, window_params = [{transform_indices = @transform_0, window_bounds = array<i64: 1, 4, 16, 256>}, {pipeline_mode = #tpu.pipeline_mode<synchronous>, transform_indices = @transform_1, window_bounds = array<i64: 4, 256, 128>}, {transform_indices = @transform_2, window_bounds = array<i64: 1, 4, 16, 128>}]} {
    %c0 = arith.constant 0 : index
    %c0_0 = arith.constant 0 : index
    %c0_1 = arith.constant 0 : index
    %c0_2 = arith.constant 0 : index
    %0 = vector.load %arg1[%c0, %c0_0, %c0_1, %c0_2] : memref<1x4x16x256xbf16, #tpu.memory_space<vmem>>, vector<1x1x16x256xbf16>
    %1 = vector.shape_cast %0 : vector<1x1x16x256xbf16> to vector<16x256xbf16>
    %c0_3 = arith.constant 0 : index
    %c0_4 = arith.constant 0 : index
    %c0_5 = arith.constant 0 : index
    %2 = vector.load %arg2[%c0_3, %c0_4, %c0_5] : memref<4x256x128xbf16, #tpu.memory_space<vmem>>, vector<1x256x128xbf16>
    %3 = vector.shape_cast %2 : vector<1x256x128xbf16> to vector<256x128xbf16>
    %cst = arith.constant dense<0.000000e+00> : vector<16x128xf32>
    %4 = tpu.matmul %1, %3, %cst {dimension_numbers = #tpu.dot_dimension_numbers<[1], [0], [0], [1], [0, 0, 1, 1], [], []>} : vector<16x256xbf16>, vector<256x128xbf16>, vector<16x128xf32> -> vector<16x128xf32>
    %c0_6 = arith.constant 0 : index
    %c1 = arith.constant 1 : index
    %c0_7 = arith.constant 0 : index
    %c0_8 = arith.constant 0 : index
    %5 = vector.load %arg1[%c0_6, %c1, %c0_7, %c0_8] : memref<1x4x16x256xbf16, #tpu.memory_space<vmem>>, vector<1x1x16x256xbf16>
    %6 = vector.shape_cast %5 : vector<1x1x16x256xbf16> to vector<16x256xbf16>
    %c1_9 = arith.constant 1 : index
    %c0_10 = arith.constant 0 : index
    %c0_11 = arith.constant 0 : index
    %7 = vector.load %arg2[%c1_9, %c0_10, %c0_11] : memref<4x256x128xbf16, #tpu.memory_space<vmem>>, vector<1x256x128xbf16>
    %8 = vector.shape_cast %7 : vector<1x256x128xbf16> to vector<256x128xbf16>
    %cst_12 = arith.constant dense<0.000000e+00> : vector<16x128xf32>
    %9 = tpu.matmul %6, %8, %cst_12 {dimension_numbers = #tpu.dot_dimension_numbers<[1], [0], [0], [1], [0, 0, 1, 1], [], []>} : vector<16x256xbf16>, vector<256x128xbf16>, vector<16x128xf32> -> vector<16x128xf32>
    %c0_13 = arith.constant 0 : index
    %c2 = arith.constant 2 : index
    %c0_14 = arith.constant 0 : index
    %c0_15 = arith.constant 0 : index
    %10 = vector.load %arg1[%c0_13, %c2, %c0_14, %c0_15] : memref<1x4x16x256xbf16, #tpu.memory_space<vmem>>, vector<1x1x16x256xbf16>
    %11 = vector.shape_cast %10 : vector<1x1x16x256xbf16> to vector<16x256xbf16>
    %c2_16 = arith.constant 2 : index
    %c0_17 = arith.constant 0 : index
    %c0_18 = arith.constant 0 : index
    %12 = vector.load %arg2[%c2_16, %c0_17, %c0_18] : memref<4x256x128xbf16, #tpu.memory_space<vmem>>, vector<1x256x128xbf16>
    %13 = vector.shape_cast %12 : vector<1x256x128xbf16> to vector<256x128xbf16>
    %cst_19 = arith.constant dense<0.000000e+00> : vector<16x128xf32>
    %14 = tpu.matmul %11, %13, %cst_19 {dimension_numbers = #tpu.dot_dimension_numbers<[1], [0], [0], [1], [0, 0, 1, 1], [], []>} : vector<16x256xbf16>, vector<256x128xbf16>, vector<16x128xf32> -> vector<16x128xf32>
    %c0_20 = arith.constant 0 : index
    %c3 = arith.constant 3 : index
    %c0_21 = arith.constant 0 : index
    %c0_22 = arith.constant 0 : index
    %15 = vector.load %arg1[%c0_20, %c3, %c0_21, %c0_22] : memref<1x4x16x256xbf16, #tpu.memory_space<vmem>>, vector<1x1x16x256xbf16>
    %16 = vector.shape_cast %15 : vector<1x1x16x256xbf16> to vector<16x256xbf16>
    %c3_23 = arith.constant 3 : index
    %c0_24 = arith.constant 0 : index
    %c0_25 = arith.constant 0 : index
    %17 = vector.load %arg2[%c3_23, %c0_24, %c0_25] : memref<4x256x128xbf16, #tpu.memory_space<vmem>>, vector<1x256x128xbf16>
    %18 = vector.shape_cast %17 : vector<1x256x128xbf16> to vector<256x128xbf16>
    %cst_26 = arith.constant dense<0.000000e+00> : vector<16x128xf32>
    %19 = tpu.matmul %16, %18, %cst_26 {dimension_numbers = #tpu.dot_dimension_numbers<[1], [0], [0], [1], [0, 0, 1, 1], [], []>} : vector<16x256xbf16>, vector<256x128xbf16>, vector<16x128xf32> -> vector<16x128xf32>
    %cst_27 = arith.constant dense<0.000000e+00> : vector<128xf32>
    %20 = vector.multi_reduction <add>, %4, %cst_27 [0] : vector<16x128xf32> to vector<128xf32>
    %21 = vector.shape_cast %20 : vector<128xf32> to vector<1x128xf32>
    %cst_28 = arith.constant 0.000000e+00 : f32
    %22 = vector.broadcast %cst_28 : f32 to vector<1x128xf32>
    %23 = arith.addf %22, %21 : vector<1x128xf32>
    %cst_29 = arith.constant dense<0.000000e+00> : vector<128xf32>
    %24 = vector.multi_reduction <add>, %9, %cst_29 [0] : vector<16x128xf32> to vector<128xf32>
    %25 = vector.shape_cast %24 : vector<128xf32> to vector<1x128xf32>
    %26 = arith.addf %23, %25 : vector<1x128xf32>
    %cst_30 = arith.constant dense<0.000000e+00> : vector<128xf32>
    %27 = vector.multi_reduction <add>, %14, %cst_30 [0] : vector<16x128xf32> to vector<128xf32>
    %28 = vector.shape_cast %27 : vector<128xf32> to vector<1x128xf32>
    %29 = arith.addf %26, %28 : vector<1x128xf32>
    %cst_31 = arith.constant dense<0.000000e+00> : vector<128xf32>
    %30 = vector.multi_reduction <add>, %19, %cst_31 [0] : vector<16x128xf32> to vector<128xf32>
    %31 = vector.shape_cast %30 : vector<128xf32> to vector<1x128xf32>
    %32 = arith.addf %29, %31 : vector<1x128xf32>
    %cst_32 = arith.constant 6.400000e+01 : f32
    %33 = vector.broadcast %cst_32 : f32 to vector<1x128xf32>
    %34 = arith.divf %32, %33 : vector<1x128xf32>
    %35 = vector.broadcast %34 : vector<1x128xf32> to vector<16x128xf32>
    %36 = arith.subf %4, %35 : vector<16x128xf32>
    %37 = arith.mulf %36, %36 : vector<16x128xf32>
    %cst_33 = arith.constant dense<0.000000e+00> : vector<128xf32>
    %38 = vector.multi_reduction <add>, %37, %cst_33 [0] : vector<16x128xf32> to vector<128xf32>
    %39 = vector.shape_cast %38 : vector<128xf32> to vector<1x128xf32>
    %cst_34 = arith.constant 0.000000e+00 : f32
    %40 = vector.broadcast %cst_34 : f32 to vector<1x128xf32>
    %41 = arith.addf %40, %39 : vector<1x128xf32>
    %42 = vector.broadcast %34 : vector<1x128xf32> to vector<16x128xf32>
    %43 = arith.subf %9, %42 : vector<16x128xf32>
    %44 = arith.mulf %43, %43 : vector<16x128xf32>
    %cst_35 = arith.constant dense<0.000000e+00> : vector<128xf32>
    %45 = vector.multi_reduction <add>, %44, %cst_35 [0] : vector<16x128xf32> to vector<128xf32>
    %46 = vector.shape_cast %45 : vector<128xf32> to vector<1x128xf32>
    %47 = arith.addf %41, %46 : vector<1x128xf32>
    %48 = vector.broadcast %34 : vector<1x128xf32> to vector<16x128xf32>
    %49 = arith.subf %14, %48 : vector<16x128xf32>
    %50 = arith.mulf %49, %49 : vector<16x128xf32>
    %cst_36 = arith.constant dense<0.000000e+00> : vector<128xf32>
    %51 = vector.multi_reduction <add>, %50, %cst_36 [0] : vector<16x128xf32> to vector<128xf32>
    %52 = vector.shape_cast %51 : vector<128xf32> to vector<1x128xf32>
    %53 = arith.addf %47, %52 : vector<1x128xf32>
    %54 = vector.broadcast %34 : vector<1x128xf32> to vector<16x128xf32>
    %55 = arith.subf %19, %54 : vector<16x128xf32>
    %56 = arith.mulf %55, %55 : vector<16x128xf32>
    %cst_37 = arith.constant dense<0.000000e+00> : vector<128xf32>
    %57 = vector.multi_reduction <add>, %56, %cst_37 [0] : vector<16x128xf32> to vector<128xf32>
    %58 = vector.shape_cast %57 : vector<128xf32> to vector<1x128xf32>
    %59 = arith.addf %53, %58 : vector<1x128xf32>
    %cst_38 = arith.constant 6.400000e+01 : f32
    %60 = vector.broadcast %cst_38 : f32 to vector<1x128xf32>
    %61 = arith.divf %59, %60 : vector<1x128xf32>
    %cst_39 = arith.constant 9.99999974E-6 : f32
    %62 = vector.broadcast %cst_39 : f32 to vector<1x128xf32>
    %63 = arith.addf %61, %62 : vector<1x128xf32>
    %64 = math.rsqrt %63 : vector<1x128xf32>
    %65 = vector.broadcast %34 : vector<1x128xf32> to vector<16x128xf32>
    %66 = arith.subf %4, %65 : vector<16x128xf32>
    %67 = vector.broadcast %64 : vector<1x128xf32> to vector<16x128xf32>
    %68 = arith.mulf %66, %67 : vector<16x128xf32>
    %69 = arith.truncf %68 : vector<16x128xf32> to vector<16x128xbf16>
    %c0_40 = arith.constant 0 : index
    %c0_41 = arith.constant 0 : index
    %c0_42 = arith.constant 0 : index
    %c0_43 = arith.constant 0 : index
    %70 = vector.load %arg3[%c0_40, %c0_41, %c0_42, %c0_43] : memref<1x4x16x128xbf16, #tpu.memory_space<vmem>>, vector<1x1x16x128xbf16>
    %71 = vector.shape_cast %70 : vector<1x1x16x128xbf16> to vector<16x128xbf16>
    %72 = vector.shape_cast %69 : vector<16x128xbf16> to vector<1x1x16x128xbf16>
    tpu.vector_store %arg3[%c0_40, %c0_41, %c0_42, %c0_43], %72 {strides = array<i32>} : memref<1x4x16x128xbf16, #tpu.memory_space<vmem>>, vector<1x1x16x128xbf16>,
    %73 = vector.broadcast %34 : vector<1x128xf32> to vector<16x128xf32>
    %74 = arith.subf %9, %73 : vector<16x128xf32>
    %75 = vector.broadcast %64 : vector<1x128xf32> to vector<16x128xf32>
    %76 = arith.mulf %74, %75 : vector<16x128xf32>
    %77 = arith.truncf %76 : vector<16x128xf32> to vector<16x128xbf16>
    %c0_44 = arith.constant 0 : index
    %c1_45 = arith.constant 1 : index
    %c0_46 = arith.constant 0 : index
    %c0_47 = arith.constant 0 : index
    %78 = vector.load %arg3[%c0_44, %c1_45, %c0_46, %c0_47] : memref<1x4x16x128xbf16, #tpu.memory_space<vmem>>, vector<1x1x16x128xbf16>
    %79 = vector.shape_cast %78 : vector<1x1x16x128xbf16> to vector<16x128xbf16>
    %80 = vector.shape_cast %77 : vector<16x128xbf16> to vector<1x1x16x128xbf16>
    tpu.vector_store %arg3[%c0_44, %c1_45, %c0_46, %c0_47], %80 {strides = array<i32>} : memref<1x4x16x128xbf16, #tpu.memory_space<vmem>>, vector<1x1x16x128xbf16>,
    %81 = vector.broadcast %34 : vector<1x128xf32> to vector<16x128xf32>
    %82 = arith.subf %14, %81 : vector<16x128xf32>
    %83 = vector.broadcast %64 : vector<1x128xf32> to vector<16x128xf32>
    %84 = arith.mulf %82, %83 : vector<16x128xf32>
    %85 = arith.truncf %84 : vector<16x128xf32> to vector<16x128xbf16>
    %c0_48 = arith.constant 0 : index
    %c2_49 = arith.constant 2 : index
    %c0_50 = arith.constant 0 : index
    %c0_51 = arith.constant 0 : index
    %86 = vector.load %arg3[%c0_48, %c2_49, %c0_50, %c0_51] : memref<1x4x16x128xbf16, #tpu.memory_space<vmem>>, vector<1x1x16x128xbf16>
    %87 = vector.shape_cast %86 : vector<1x1x16x128xbf16> to vector<16x128xbf16>
    %88 = vector.shape_cast %85 : vector<16x128xbf16> to vector<1x1x16x128xbf16>
    tpu.vector_store %arg3[%c0_48, %c2_49, %c0_50, %c0_51], %88 {strides = array<i32>} : memref<1x4x16x128xbf16, #tpu.memory_space<vmem>>, vector<1x1x16x128xbf16>,
    %89 = vector.broadcast %34 : vector<1x128xf32> to vector<16x128xf32>
    %90 = arith.subf %19, %89 : vector<16x128xf32>
    %91 = vector.broadcast %64 : vector<1x128xf32> to vector<16x128xf32>
    %92 = arith.mulf %90, %91 : vector<16x128xf32>
    %93 = arith.truncf %92 : vector<16x128xf32> to vector<16x128xbf16>
    %c0_52 = arith.constant 0 : index
    %c3_53 = arith.constant 3 : index
    %c0_54 = arith.constant 0 : index
    %c0_55 = arith.constant 0 : index
    %94 = vector.load %arg3[%c0_52, %c3_53, %c0_54, %c0_55] : memref<1x4x16x128xbf16, #tpu.memory_space<vmem>>, vector<1x1x16x128xbf16>
    %95 = vector.shape_cast %94 : vector<1x1x16x128xbf16> to vector<16x128xbf16>
    %96 = vector.shape_cast %93 : vector<16x128xbf16> to vector<1x1x16x128xbf16>
    tpu.vector_store %arg3[%c0_52, %c3_53, %c0_54, %c0_55], %96 {strides = array<i32>} : memref<1x4x16x128xbf16, #tpu.memory_space<vmem>>, vector<1x1x16x128xbf16>,
    return
  }
  func.func @transform_0(%arg0: i32) -> (i32, i32, i32, i32) {
    %c0_i32 = arith.constant 0 : i32
    %c0_i32_0 = arith.constant 0 : i32
    %c0_i32_1 = arith.constant 0 : i32
    %c0_i32_2 = arith.constant 0 : i32
    return %arg0, %c0_i32, %c0_i32_0, %c0_i32_1 : i32, i32, i32, i32
  }
  func.func @transform_1(%arg0: i32) -> (i32, i32, i32) {
    %c0_i32 = arith.constant 0 : i32
    %c0_i32_0 = arith.constant 0 : i32
    %c0_i32_1 = arith.constant 0 : i32
    %c0_i32_2 = arith.constant 0 : i32
    return %c0_i32, %c0_i32_0, %c0_i32_1 : i32, i32, i32
  }
  func.func @transform_2(%arg0: i32) -> (i32, i32, i32, i32) {
    %c0_i32 = arith.constant 0 : i32
    %c0_i32_0 = arith.constant 0 : i32
    %c0_i32_1 = arith.constant 0 : i32
    %c0_i32_2 = arith.constant 0 : i32
    return %arg0, %c0_i32, %c0_i32_0, %c0_i32_1 : i32, i32, i32, i32
  }
}

module attributes {stable_mosaic.version = 11 : i64} {
  func.func @_up_bias_kernel(%arg0: i32, %arg1: memref<1x4x64x128xbf16, #tpu.memory_space<vmem>>, %arg2: memref<4x128x128xbf16, #tpu.memory_space<vmem>>, %arg3: memref<1x128xf32, #tpu.memory_space<vmem>>, %arg4: memref<1x4x64x128xf32, #tpu.memory_space<vmem>>) attributes {dimension_semantics = [#tpu.dimension_semantics<parallel>], iteration_bounds = array<i64: 2>, scalar_prefetch = 0 : i64, scratch_operands = 0 : i64, tpu.core_type = #tpu.core_type<tc>, window_params = [{transform_indices = @transform_0, window_bounds = array<i64: 1, 4, 64, 128>}, {pipeline_mode = #tpu.pipeline_mode<synchronous>, transform_indices = @transform_1, window_bounds = array<i64: 4, 128, 128>}, {pipeline_mode = #tpu.pipeline_mode<synchronous>, transform_indices = @transform_2, window_bounds = array<i64: 1, 128>}, {transform_indices = @transform_3, window_bounds = array<i64: 1, 4, 64, 128>}]} {
    %c0 = arith.constant 0 : index
    %c0_0 = arith.constant 0 : index
    %c0_1 = arith.constant 0 : index
    %c0_2 = arith.constant 0 : index
    %0 = vector.load %arg1[%c0, %c0_0, %c0_1, %c0_2] : memref<1x4x64x128xbf16, #tpu.memory_space<vmem>>, vector<1x1x64x128xbf16>
    %1 = vector.shape_cast %0 : vector<1x1x64x128xbf16> to vector<64x128xbf16>
    %c0_3 = arith.constant 0 : index
    %c0_4 = arith.constant 0 : index
    %c0_5 = arith.constant 0 : index
    %2 = vector.load %arg2[%c0_3, %c0_4, %c0_5] : memref<4x128x128xbf16, #tpu.memory_space<vmem>>, vector<1x128x128xbf16>
    %3 = vector.shape_cast %2 : vector<1x128x128xbf16> to vector<128x128xbf16>
    %cst = arith.constant dense<0.000000e+00> : vector<64x128xf32>
    %4 = tpu.matmul %1, %3, %cst {dimension_numbers = #tpu.dot_dimension_numbers<[1], [0], [0], [1], [0, 0, 1, 1], [], []>} : vector<64x128xbf16>, vector<128x128xbf16>, vector<64x128xf32> -> vector<64x128xf32>
    %c0_6 = arith.constant 0 : index
    %c0_7 = arith.constant 0 : index
    %5 = vector.load %arg3[%c0_6, %c0_7] : memref<1x128xf32, #tpu.memory_space<vmem>>, vector<1x128xf32>
    %6 = vector.broadcast %5 : vector<1x128xf32> to vector<64x128xf32>
    %7 = arith.addf %4, %6 : vector<64x128xf32>
    %c0_8 = arith.constant 0 : index
    %c0_9 = arith.constant 0 : index
    %c0_10 = arith.constant 0 : index
    %c0_11 = arith.constant 0 : index
    %8 = vector.load %arg4[%c0_8, %c0_9, %c0_10, %c0_11] : memref<1x4x64x128xf32, #tpu.memory_space<vmem>>, vector<1x1x64x128xf32>
    %9 = vector.shape_cast %8 : vector<1x1x64x128xf32> to vector<64x128xf32>
    %10 = vector.shape_cast %7 : vector<64x128xf32> to vector<1x1x64x128xf32>
    tpu.vector_store %arg4[%c0_8, %c0_9, %c0_10, %c0_11], %10 {strides = array<i32>} : memref<1x4x64x128xf32, #tpu.memory_space<vmem>>, vector<1x1x64x128xf32>,
    %c0_12 = arith.constant 0 : index
    %c1 = arith.constant 1 : index
    %c0_13 = arith.constant 0 : index
    %c0_14 = arith.constant 0 : index
    %11 = vector.load %arg1[%c0_12, %c1, %c0_13, %c0_14] : memref<1x4x64x128xbf16, #tpu.memory_space<vmem>>, vector<1x1x64x128xbf16>
    %12 = vector.shape_cast %11 : vector<1x1x64x128xbf16> to vector<64x128xbf16>
    %c1_15 = arith.constant 1 : index
    %c0_16 = arith.constant 0 : index
    %c0_17 = arith.constant 0 : index
    %13 = vector.load %arg2[%c1_15, %c0_16, %c0_17] : memref<4x128x128xbf16, #tpu.memory_space<vmem>>, vector<1x128x128xbf16>
    %14 = vector.shape_cast %13 : vector<1x128x128xbf16> to vector<128x128xbf16>
    %cst_18 = arith.constant dense<0.000000e+00> : vector<64x128xf32>
    %15 = tpu.matmul %12, %14, %cst_18 {dimension_numbers = #tpu.dot_dimension_numbers<[1], [0], [0], [1], [0, 0, 1, 1], [], []>} : vector<64x128xbf16>, vector<128x128xbf16>, vector<64x128xf32> -> vector<64x128xf32>
    %c0_19 = arith.constant 0 : index
    %c0_20 = arith.constant 0 : index
    %16 = vector.load %arg3[%c0_19, %c0_20] : memref<1x128xf32, #tpu.memory_space<vmem>>, vector<1x128xf32>
    %17 = vector.broadcast %16 : vector<1x128xf32> to vector<64x128xf32>
    %18 = arith.addf %15, %17 : vector<64x128xf32>
    %c0_21 = arith.constant 0 : index
    %c1_22 = arith.constant 1 : index
    %c0_23 = arith.constant 0 : index
    %c0_24 = arith.constant 0 : index
    %19 = vector.load %arg4[%c0_21, %c1_22, %c0_23, %c0_24] : memref<1x4x64x128xf32, #tpu.memory_space<vmem>>, vector<1x1x64x128xf32>
    %20 = vector.shape_cast %19 : vector<1x1x64x128xf32> to vector<64x128xf32>
    %21 = vector.shape_cast %18 : vector<64x128xf32> to vector<1x1x64x128xf32>
    tpu.vector_store %arg4[%c0_21, %c1_22, %c0_23, %c0_24], %21 {strides = array<i32>} : memref<1x4x64x128xf32, #tpu.memory_space<vmem>>, vector<1x1x64x128xf32>,
    %c0_25 = arith.constant 0 : index
    %c2 = arith.constant 2 : index
    %c0_26 = arith.constant 0 : index
    %c0_27 = arith.constant 0 : index
    %22 = vector.load %arg1[%c0_25, %c2, %c0_26, %c0_27] : memref<1x4x64x128xbf16, #tpu.memory_space<vmem>>, vector<1x1x64x128xbf16>
    %23 = vector.shape_cast %22 : vector<1x1x64x128xbf16> to vector<64x128xbf16>
    %c2_28 = arith.constant 2 : index
    %c0_29 = arith.constant 0 : index
    %c0_30 = arith.constant 0 : index
    %24 = vector.load %arg2[%c2_28, %c0_29, %c0_30] : memref<4x128x128xbf16, #tpu.memory_space<vmem>>, vector<1x128x128xbf16>
    %25 = vector.shape_cast %24 : vector<1x128x128xbf16> to vector<128x128xbf16>
    %cst_31 = arith.constant dense<0.000000e+00> : vector<64x128xf32>
    %26 = tpu.matmul %23, %25, %cst_31 {dimension_numbers = #tpu.dot_dimension_numbers<[1], [0], [0], [1], [0, 0, 1, 1], [], []>} : vector<64x128xbf16>, vector<128x128xbf16>, vector<64x128xf32> -> vector<64x128xf32>
    %c0_32 = arith.constant 0 : index
    %c0_33 = arith.constant 0 : index
    %27 = vector.load %arg3[%c0_32, %c0_33] : memref<1x128xf32, #tpu.memory_space<vmem>>, vector<1x128xf32>
    %28 = vector.broadcast %27 : vector<1x128xf32> to vector<64x128xf32>
    %29 = arith.addf %26, %28 : vector<64x128xf32>
    %c0_34 = arith.constant 0 : index
    %c2_35 = arith.constant 2 : index
    %c0_36 = arith.constant 0 : index
    %c0_37 = arith.constant 0 : index
    %30 = vector.load %arg4[%c0_34, %c2_35, %c0_36, %c0_37] : memref<1x4x64x128xf32, #tpu.memory_space<vmem>>, vector<1x1x64x128xf32>
    %31 = vector.shape_cast %30 : vector<1x1x64x128xf32> to vector<64x128xf32>
    %32 = vector.shape_cast %29 : vector<64x128xf32> to vector<1x1x64x128xf32>
    tpu.vector_store %arg4[%c0_34, %c2_35, %c0_36, %c0_37], %32 {strides = array<i32>} : memref<1x4x64x128xf32, #tpu.memory_space<vmem>>, vector<1x1x64x128xf32>,
    %c0_38 = arith.constant 0 : index
    %c3 = arith.constant 3 : index
    %c0_39 = arith.constant 0 : index
    %c0_40 = arith.constant 0 : index
    %33 = vector.load %arg1[%c0_38, %c3, %c0_39, %c0_40] : memref<1x4x64x128xbf16, #tpu.memory_space<vmem>>, vector<1x1x64x128xbf16>
    %34 = vector.shape_cast %33 : vector<1x1x64x128xbf16> to vector<64x128xbf16>
    %c3_41 = arith.constant 3 : index
    %c0_42 = arith.constant 0 : index
    %c0_43 = arith.constant 0 : index
    %35 = vector.load %arg2[%c3_41, %c0_42, %c0_43] : memref<4x128x128xbf16, #tpu.memory_space<vmem>>, vector<1x128x128xbf16>
    %36 = vector.shape_cast %35 : vector<1x128x128xbf16> to vector<128x128xbf16>
    %cst_44 = arith.constant dense<0.000000e+00> : vector<64x128xf32>
    %37 = tpu.matmul %34, %36, %cst_44 {dimension_numbers = #tpu.dot_dimension_numbers<[1], [0], [0], [1], [0, 0, 1, 1], [], []>} : vector<64x128xbf16>, vector<128x128xbf16>, vector<64x128xf32> -> vector<64x128xf32>
    %c0_45 = arith.constant 0 : index
    %c0_46 = arith.constant 0 : index
    %38 = vector.load %arg3[%c0_45, %c0_46] : memref<1x128xf32, #tpu.memory_space<vmem>>, vector<1x128xf32>
    %39 = vector.broadcast %38 : vector<1x128xf32> to vector<64x128xf32>
    %40 = arith.addf %37, %39 : vector<64x128xf32>
    %c0_47 = arith.constant 0 : index
    %c3_48 = arith.constant 3 : index
    %c0_49 = arith.constant 0 : index
    %c0_50 = arith.constant 0 : index
    %41 = vector.load %arg4[%c0_47, %c3_48, %c0_49, %c0_50] : memref<1x4x64x128xf32, #tpu.memory_space<vmem>>, vector<1x1x64x128xf32>
    %42 = vector.shape_cast %41 : vector<1x1x64x128xf32> to vector<64x128xf32>
    %43 = vector.shape_cast %40 : vector<64x128xf32> to vector<1x1x64x128xf32>
    tpu.vector_store %arg4[%c0_47, %c3_48, %c0_49, %c0_50], %43 {strides = array<i32>} : memref<1x4x64x128xf32, #tpu.memory_space<vmem>>, vector<1x1x64x128xf32>,
    return
  }
  func.func @transform_0(%arg0: i32) -> (i32, i32, i32, i32) {
    %c0_i32 = arith.constant 0 : i32
    %c0_i32_0 = arith.constant 0 : i32
    %c0_i32_1 = arith.constant 0 : i32
    %c0_i32_2 = arith.constant 0 : i32
    return %arg0, %c0_i32, %c0_i32_0, %c0_i32_1 : i32, i32, i32, i32
  }
  func.func @transform_1(%arg0: i32) -> (i32, i32, i32) {
    %c0_i32 = arith.constant 0 : i32
    %c0_i32_0 = arith.constant 0 : i32
    %c0_i32_1 = arith.constant 0 : i32
    %c0_i32_2 = arith.constant 0 : i32
    return %c0_i32, %c0_i32_0, %c0_i32_1 : i32, i32, i32
  }
  func.func @transform_2(%arg0: i32) -> (i32, i32) {
    %c0_i32 = arith.constant 0 : i32
    %c0_i32_0 = arith.constant 0 : i32
    %c0_i32_1 = arith.constant 0 : i32
    return %c0_i32, %c0_i32_0 : i32, i32
  }
  func.func @transform_3(%arg0: i32) -> (i32, i32, i32, i32) {
    %c0_i32 = arith.constant 0 : i32
    %c0_i32_0 = arith.constant 0 : i32
    %c0_i32_1 = arith.constant 0 : i32
    %c0_i32_2 = arith.constant 0 : i32
    return %arg0, %c0_i32, %c0_i32_0, %c0_i32_1 : i32, i32, i32, i32
  }
}

</mosaic_0001>

<llo_original>
// kernel: _lambda_.8
$region0: #{_lambda_.8}
  #allocation0 [shape = 'u32[]', space=smem, size = 0x4, offset = 0x4, fixed_abs, tag = 'smem constant byte address 0x4 - core index']
  #allocation1 [shape = 'u32[144,128]{1,0:T(1,128)}', space=vmem, size = 0x12000, scoped, tag = 'internal scratch']
  %s0 = inlined_call_operand.vmem [shape: bf16[2,64,128], index: 0, kind: input, shape index: {}]
  %s1 = inlined_call_operand.vmem [shape: bf16[128,128], index: 1, kind: input, shape index: {}]
  %s2 = inlined_call_operand.vmem [shape: f32[1,128], index: 2, kind: input, shape index: {}]
  %s3 = inlined_call_operand.vmem [shape: bf16[2,64,128], index: 3, kind: output, shape index: {}]
  %s4 = sld [smem:[#allocation0]]
  $region45: #{_lambda_.8} parent=0
    _
  %s6 = ssub.s32 1, %s4
  %s7 = scalar_select 0, %s6, %s4
  loop: start=0, step=1, limit=4
  $region2: #{_lambda_.8} parent=0 // loop_pre_header
    _
  $region3: #{_lambda_.8} parent=0 // loop_header
    %s9 = sphi 0, %s13
    %p10 = scmp.ge.s32.totalorder %s9, 4
    %s19 = sphi 0, %s21
    %s22 = sphi 0, %s19
    %s23 = sphi 0, %s22
    %s39 = sphi 0, %s23
    %s43 = sphi 0, %s43
    %s45 = sphi 0, %s43
    %s46 = sphi 0, %s45
    %s60 = sphi 0, %s46
    %s64 = sphi 0, %s64
    %s66 = sphi 0, %s64
    %s67 = sphi 0, %s66
    %s81 = sphi 0, %s67
    %s87 = sphi 0, %s89
    %s90 = sphi 0, %s87
    %s91 = sphi 0, %s90
    %s107 = sphi 0, %s91
  $region4: #{_lambda_.8} parent=0 // loop_header_branch
    %12 = sbr.rel (%p10) target = $region8
  $region5: #{_lambda_.8} parent=0 // loop_body
    %s14 = ssub.s32 %s9, 1
    %s15 = ssub.s32 %s9, 2
    %s16 = sadd.s32 %s9, 1
    %s17 = ssub.s32 %s9, %s16
    %p18 = scmp.eq.s32.totalorder %s17, 0
    %s20 = sadd.s32 %s19, 1
    %s21 = scalar_select %p18, %s19, %s20
    %p24 = pneg %p18
    %p25 = scmp.eq.s32.totalorder %s9, 1
    %p26 = por %p24, %p25
    %p27 = scmp.ne.s32.totalorder %s19, %s22
    %p28 = scmp.eq.s32.totalorder %s9, 0
    %p29 = por %p27, %p28
    %p30 = scmp.ne.s32.totalorder %s19, %s22
    %p31 = scmp.eq.s32.totalorder %s14, 1
    %p32 = por %p30, %p31
    %p33 = scmp.ne.s32.totalorder %s22, %s23
    %p34 = scmp.eq.s32.totalorder %s14, 0
    %p35 = por %p33, %p34
    %p36 = scmp.ne.s32.totalorder %s22, %s23
    %p37 = scmp.eq.s32.totalorder %s15, 1
    %p38 = por %p36, %p37
    %p40 = scmp.ne.s32.totalorder %s23, %s39
    %p41 = scmp.eq.s32.totalorder %s15, 0
    %p42 = por %p40, %p41
    %s44 = sadd.s32 %s43, 1
    %p47 = scmp.eq.s32.totalorder %s9, 1
    %p48 = scmp.ne.s32.totalorder %s43, %s45
    %p49 = scmp.eq.s32.totalorder %s9, 0
    %p50 = por %p48, %p49
    %p51 = scmp.ne.s32.totalorder %s43, %s45
    %p52 = scmp.eq.s32.totalorder %s14, 1
    %p53 = por %p51, %p52
    %p54 = scmp.ne.s32.totalorder %s45, %s46
    %p55 = scmp.eq.s32.totalorder %s14, 0
    %p56 = por %p54, %p55
    %p57 = scmp.ne.s32.totalorder %s45, %s46
    %p58 = scmp.eq.s32.totalorder %s15, 1
    %p59 = por %p57, %p58
    %p61 = scmp.ne.s32.totalorder %s46, %s60
    %p62 = scmp.eq.s32.totalorder %s15, 0
    %p63 = por %p61, %p62
    %s65 = sadd.s32 %s64, 1
    %p68 = scmp.eq.s32.totalorder %s9, 1
    %p69 = scmp.ne.s32.totalorder %s64, %s66
    %p70 = scmp.eq.s32.totalorder %s9, 0
    %p71 = por %p69, %p70
    %p72 = scmp.ne.s32.totalorder %s64, %s66
    %p73 = scmp.eq.s32.totalorder %s14, 1
    %p74 = por %p72, %p73
    %p75 = scmp.ne.s32.totalorder %s66, %s67
    %p76 = scmp.eq.s32.totalorder %s14, 0
    %p77 = por %p75, %p76
    %p78 = scmp.ne.s32.totalorder %s66, %s67
    %p79 = scmp.eq.s32.totalorder %s15, 1
    %p80 = por %p78, %p79
    %p82 = scmp.ne.s32.totalorder %s67, %s81
    %p83 = scmp.eq.s32.totalorder %s15, 0
    %p84 = por %p82, %p83
    %s85 = ssub.s32 %s9, %s16
    %p86 = scmp.eq.s32.totalorder %s85, 0
    %s88 = sadd.s32 %s87, 1
    %s89 = scalar_select %p86, %s87, %s88
    %p92 = pneg %p86
    %p93 = scmp.eq.s32.totalorder %s9, 1
    %p94 = por %p92, %p93
    %p95 = scmp.ne.s32.totalorder %s87, %s90
    %p96 = scmp.eq.s32.totalorder %s9, 0
    %p97 = por %p95, %p96
    %p98 = scmp.ne.s32.totalorder %s87, %s90
    %p99 = scmp.eq.s32.totalorder %s14, 1
    %p100 = por %p98, %p99
    %p101 = scmp.ne.s32.totalorder %s90, %s91
    %p102 = scmp.eq.s32.totalorder %s14, 0
    %p103 = por %p101, %p102
    %p104 = scmp.ne.s32.totalorder %s90, %s91
    %p105 = scmp.eq.s32.totalorder %s15, 1
    %p106 = por %p104, %p105
    %p108 = scmp.ne.s32.totalorder %s91, %s107
    %p109 = scmp.eq.s32.totalorder %s15, 0
    %p110 = por %p108, %p109
    %p111 = scmp.le.s32.totalorder 1, %s9
    %p112 = scmp.lt.s32.totalorder %s9, 3
    %p113 = pnand %p111, %p112
    %p114 = pneg %p113
    // Predicated region
    $region9: #{_lambda_.8} parent=5 // pred_check
      _
    $region10: #{_lambda_.8} parent=5 // pred_check_branch
      %116 = sbr.rel (%p113) target = $region12
    $region11: #{_lambda_.8} parent=5 // pred_region
      %s117 = ssub.s32 %s9, 1
      // Predicated region
      $region13: #{_lambda_.8} parent=11 // pred_check
        %p118 = pneg %p56
      $region14: #{_lambda_.8} parent=11 // pred_check_branch
        %120 = sbr.rel (%p118) target = $region16
      $region15: #{_lambda_.8} parent=11 // pred_region
        _
      $region16: #{_lambda_.8} parent=11 // pred_fallthru
        _
      // Predicated region
      $region17: #{_lambda_.8} parent=11 // pred_check
        %p121 = pneg %p77
      $region18: #{_lambda_.8} parent=11 // pred_check_branch
        %123 = sbr.rel (%p121) target = $region20
      $region19: #{_lambda_.8} parent=11 // pred_region
        _
      $region20: #{_lambda_.8} parent=11 // pred_fallthru
        _
    $region12: #{_lambda_.8} parent=5 // pred_fallthru
      _
    %p124 = scmp.lt.s32.totalorder %s9, 2
    // Predicated region
    $region21: #{_lambda_.8} parent=5 // pred_check
      %p125 = pneg %p124
    $region22: #{_lambda_.8} parent=5 // pred_check_branch
      %127 = sbr.rel (%p125) target = $region24
    $region23: #{_lambda_.8} parent=5 // pred_region
      // Predicated region
      $region25: #{_lambda_.8} parent=23 // pred_check
        %p128 = pneg %p29
      $region26: #{_lambda_.8} parent=23 // pred_check_branch
        %130 = sbr.rel (%p128) target = $region28
      $region27: #{_lambda_.8} parent=23 // pred_region
        %p131 = scmp.lt.s32.totalorder %s9, 1
        %s132 = scalar_select %p131, %s9, 1
        %s133 = smul.addr %s132, 8
        %s134 = smul.addr %s133, 4
        %s135 = scalar_lea.vmem %s0, %s134
      $region28: #{_lambda_.8} parent=23 // pred_fallthru
        _
    $region24: #{_lambda_.8} parent=5 // pred_fallthru
      _
    %p136 = scmp.le.s32.totalorder 1, %s9
    %p137 = scmp.lt.s32.totalorder %s9, 3
    %p138 = pnand %p136, %p137
    %p139 = pneg %p138
    // Predicated region
    $region29: #{_lambda_.8} parent=5 // pred_check
      _
    $region30: #{_lambda_.8} parent=5 // pred_check_branch
      %141 = sbr.rel (%p138) target = $region32
    $region31: #{_lambda_.8} parent=5 // pred_region
      %s142 = ssub.s32 %s9, 1
      %p143 = scmp.lt.s32.totalorder %s14, 1
      %s144 = scalar_select %p143, %s14, 1
      %s145 = smul.addr %s144, 8
      %s146 = smul.addr %s145, 4
      %s147 = scalar_lea.vmem %s0, %s146
      %p148 = pneg %p35
      %p149 = pneg %p32
      %p150 = pneg %p56
      %p151 = pneg %p53
      %p152 = pneg %p77
      %p153 = pneg %p74
      %p154 = pneg %p103
      %p155 = pneg %p100
      %p156 = scmp.lt.s32.totalorder %s14, 1
      %s157 = scalar_select %p156, %s14, 1
      %s158 = smul.addr %s157, 8
      %s159 = smul.addr %s158, 4
      %s160 = scalar_lea.vmem %s3, %s159
      %p161 = scmp.lt.s32.totalorder %s14, 1
      %s162 = scalar_select %p161, %s14, 1
      %s163 = smul.addr %s162, 8
      %s164 = smul.addr %s163, 4
      %s165 = scalar_lea.vmem %s0, %s164
      %p166 = scmp.lt.s32.totalorder %s14, 1
      %s167 = scalar_select %p166, %s14, 1
      %s168 = smul.addr %s167, 8
      %s169 = smul.addr %s168, 4
      %s170 = scalar_lea.vmem %s3, %s169
      %v172 = vld [vmem:[%s165] sm:$0xf]
      %v173 = vld [vmem:[%s165 + $0x4] sm:$0xf]
      %v174 = vld [vmem:[%s165 + $0x8] sm:$0xf]
      %v175 = vld [vmem:[%s165 + $0xc] sm:$0xf]
      %v176 = vld [vmem:[%s165 + $0x10] sm:$0xf]
      %v177 = vld [vmem:[%s165 + $0x14] sm:$0xf]
      %v178 = vld [vmem:[%s165 + $0x18] sm:$0xf]
      %v179 = vld [vmem:[%s165 + $0x1c] sm:$0xf]
      %v180 = vld [vmem:[%s1] sm:$0xf]
      %v181 = vld [vmem:[%s1 + $0x4] sm:$0xf]
      %v182 = vld [vmem:[%s1 + $0x8] sm:$0xf]
      %v183 = vld [vmem:[%s1 + $0xc] sm:$0xf]
      %v184 = vld [vmem:[%s1 + $0x10] sm:$0xf]
      %v185 = vld [vmem:[%s1 + $0x14] sm:$0xf]
      %v186 = vld [vmem:[%s1 + $0x18] sm:$0xf]
      %v187 = vld [vmem:[%s1 + $0x1c] sm:$0xf]
      %v188 = vld [vmem:[%s1 + $0x20] sm:$0xf]
      %v189 = vld [vmem:[%s1 + $0x24] sm:$0xf]
      %v190 = vld [vmem:[%s1 + $0x28] sm:$0xf]
      %v191 = vld [vmem:[%s1 + $0x2c] sm:$0xf]
      %v192 = vld [vmem:[%s1 + $0x30] sm:$0xf]
      %v193 = vld [vmem:[%s1 + $0x34] sm:$0xf]
      %v194 = vld [vmem:[%s1 + $0x38] sm:$0xf]
      %v195 = vld [vmem:[%s1 + $0x3c] sm:$0xf]
      %v196 = vld [vmem:[%s2] sm:$0x1]
      %v198 = vlaneseq
      %v199 = vshrl.u32 %v198, 7
      %v200 = vsub.s32 0, %v199
      %v201 = vrot.slane %v196, %v200
      %v211 = vunpack.c.l.b16 %v172
      %v212 = vunpack.c.l.b16 %v173
      %v213 = vunpack.c.l.b16 %v174
      %v214 = vunpack.c.l.b16 %v175
      %v215 = vunpack.c.l.b16 %v176
      %v216 = vunpack.c.l.b16 %v177
      %v217 = vunpack.c.l.b16 %v178
      %v218 = vunpack.c.l.b16 %v179
      %v219 = vpack.c.b16 %v212, %v211
      %v220 = vpack.c.b16 %v214, %v213
      %v221 = vpack.c.b16 %v216, %v215
      %v222 = vpack.c.b16 %v218, %v217
      %v243 = vunpack.c.l.b16 %v180
      %v244 = vunpack.c.l.b16 %v181
      %v245 = vunpack.c.l.b16 %v182
      %v246 = vunpack.c.l.b16 %v183
      %v247 = vunpack.c.l.b16 %v184
      %v248 = vunpack.c.l.b16 %v185
      %v249 = vunpack.c.l.b16 %v186
      %v250 = vunpack.c.l.b16 %v187
      %v251 = vunpack.c.l.b16 %v188
      %v252 = vunpack.c.l.b16 %v189
      %v253 = vunpack.c.l.b16 %v190
      %v254 = vunpack.c.l.b16 %v191
      %v255 = vunpack.c.l.b16 %v192
      %v256 = vunpack.c.l.b16 %v193
      %v257 = vunpack.c.l.b16 %v194
      %v258 = vunpack.c.l.b16 %v195
      %v259 = vpack.c.b16 %v244, %v243
      %v260 = vpack.c.b16 %v246, %v245
      %v261 = vpack.c.b16 %v248, %v247
      %v262 = vpack.c.b16 %v250, %v249
      %v263 = vpack.c.b16 %v252, %v251
      %v264 = vpack.c.b16 %v254, %v253
      %v265 = vpack.c.b16 %v256, %v255
      %v266 = vpack.c.b16 %v258, %v257
      %275 = vmatprep.subr.bf16.mxu0 0
      %276 = vmatpush1.bf16.msra.mxu0 %v266
      %277 = vmatprep.subr.bf16.mxu0 0
      %278 = vmatpush1.bf16.msra.mxu0 %v265
      %279 = vmatprep.subr.bf16.mxu0 0
      %280 = vmatpush1.bf16.msra.mxu0 %v264
      %281 = vmatprep.subr.bf16.mxu0 0
      %282 = vmatpush1.bf16.msra.mxu0 %v263
      %283 = vmatprep.subr.bf16.mxu0 0
      %284 = vmatpush1.bf16.msra.mxu0 %v262
      %285 = vmatprep.subr.bf16.mxu0 0
      %286 = vmatpush1.bf16.msra.mxu0 %v261
      %287 = vmatprep.subr.bf16.mxu0 0
      %288 = vmatpush1.bf16.msra.mxu0 %v260
      %289 = vmatprep.subr.bf16.mxu0 0
      %290 = vmatpush1.bf16.msra.mxu0 %v259
      %291 = vmatprep.subr.bf16.mxu0 0
      %292 = vmatpush2.bf16.msra.mxu0 0
      %293 = vmatprep.subr.bf16.mxu0 0
      %294 = vmatpush2.bf16.msra.mxu0 0
      %295 = vmatprep.subr.bf16.mxu0 0
      %296 = vmatpush2.bf16.msra.mxu0 0
      %297 = vmatprep.subr.bf16.mxu0 0
      %298 = vmatpush2.bf16.msra.mxu0 0
      %299 = vmatprep.subr.bf16.mxu0 0
      %300 = vmatpush2.bf16.msra.mxu0 0
      %301 = vmatprep.subr.bf16.mxu0 0
      %302 = vmatpush2.bf16.msra.mxu0 0
      %303 = vmatprep.subr.bf16.mxu0 0
      %304 = vmatpush2.bf16.msra.mxu0 0
      %305 = vmatprep.subr.bf16.mxu0 0
      %306 = vmatpush2.bf16.msra.mxu0 0
      %307 = vmatprep.mubr.bf16.mxu0 0
      %308 = vmatmul.mubr.bf16.gmra.mxu0 %v219
      %v309 = vpop.f32.mrf.mxu0
      %v310 = vadd.f32 %v201, %v309
      %v311 = vpop.f32.mrf.mxu0
      %v312 = vpop.f32.mrf.mxu0
      %v313 = vadd.f32 %v201, %v312
      %v314 = vpop.f32.mrf.mxu0
      %315 = vmatprep.mubr.bf16.mxu0 0
      %316 = vmatmul.mubr.bf16.gmra.mxu0 %v220
      %v317 = vpop.f32.mrf.mxu0
      %v318 = vadd.f32 %v201, %v317
      %v319 = vpop.f32.mrf.mxu0
      %v320 = vpop.f32.mrf.mxu0
      %v321 = vadd.f32 %v201, %v320
      %v322 = vpop.f32.mrf.mxu0
      %323 = vmatprep.mubr.bf16.mxu0 0
      %324 = vmatmul.mubr.bf16.gmra.mxu0 %v221
      %v325 = vpop.f32.mrf.mxu0
      %v326 = vadd.f32 %v201, %v325
      %v327 = vpop.f32.mrf.mxu0
      %v328 = vpop.f32.mrf.mxu0
      %v329 = vadd.f32 %v201, %v328
      %v330 = vpop.f32.mrf.mxu0
      %331 = vmatprep.mubr.bf16.mxu0 0
      %332 = vmatmul.mubr.bf16.gmra.mxu0 %v222
      %v333 = vpop.f32.mrf.mxu0
      %v334 = vadd.f32 %v201, %v333
      %v335 = vpop.f32.mrf.mxu0
      %v336 = vpop.f32.mrf.mxu0
      %v337 = vadd.f32 %v201, %v336
      %v338 = vpop.f32.mrf.mxu0
      %339 = vdwg.mxu0
      %v340 = vpack.c.bf16 %v313, %v310
      %v341 = vpack.c.bf16 %v321, %v318
      %v342 = vpack.c.bf16 %v329, %v326
      %v343 = vpack.c.bf16 %v337, %v334
      %v348 = vunpack.c.l.b16 %v340
      %v349 = vunpack.c.h.b16 %v340
      %v350 = vunpack.c.l.b16 %v341
      %v351 = vunpack.c.h.b16 %v341
      %v352 = vunpack.c.l.b16 %v342
      %v353 = vunpack.c.h.b16 %v342
      %v354 = vunpack.c.l.b16 %v343
      %v355 = vunpack.c.h.b16 %v343
      %v356 = vpack.c.b16 %v348, %v348
      %v357 = vpack.c.b16 %v349, %v349
      %v358 = vpack.c.b16 %v350, %v350
      %v359 = vpack.c.b16 %v351, %v351
      %v360 = vpack.c.b16 %v352, %v352
      %v361 = vpack.c.b16 %v353, %v353
      %v362 = vpack.c.b16 %v354, %v354
      %v363 = vpack.c.b16 %v355, %v355
      %372 = vst [vmem:[%s170] sm:$0xf] %v356
      %373 = vst [vmem:[%s170 + $0x4] sm:$0xf] %v357
      %374 = vst [vmem:[%s170 + $0x8] sm:$0xf] %v358
      %375 = vst [vmem:[%s170 + $0xc] sm:$0xf] %v359
      %376 = vst [vmem:[%s170 + $0x10] sm:$0xf] %v360
      %377 = vst [vmem:[%s170 + $0x14] sm:$0xf] %v361
      %378 = vst [vmem:[%s170 + $0x18] sm:$0xf] %v362
      %379 = vst [vmem:[%s170 + $0x1c] sm:$0xf] %v363
      %p380 = scmp.lt.s32.totalorder %s14, 1
      %s381 = scalar_select %p380, %s14, 1
      %s382 = smul.addr %s381, 8
      %s383 = smul.addr %s382, 4
      %s384 = scalar_lea.vmem %s3, %s383
      // Predicated region
      $region33: #{_lambda_.8} parent=31 // pred_check
        %p385 = pneg %p100
      $region34: #{_lambda_.8} parent=31 // pred_check_branch
        %387 = sbr.rel (%p385) target = $region36
      $region35: #{_lambda_.8} parent=31 // pred_region
        _
      $region36: #{_lambda_.8} parent=31 // pred_fallthru
        _
    $region32: #{_lambda_.8} parent=5 // pred_fallthru
      _
    %p388 = scmp.le.s32.totalorder 2, %s9
    // Predicated region
    $region37: #{_lambda_.8} parent=5 // pred_check
      %p389 = pneg %p388
    $region38: #{_lambda_.8} parent=5 // pred_check_branch
      %391 = sbr.rel (%p389) target = $region40
    $region39: #{_lambda_.8} parent=5 // pred_region
      %s392 = ssub.s32 %s9, 2
      // Predicated region
      $region41: #{_lambda_.8} parent=39 // pred_check
        %p393 = pneg %p106
      $region42: #{_lambda_.8} parent=39 // pred_check_branch
        %395 = sbr.rel (%p393) target = $region44
      $region43: #{_lambda_.8} parent=39 // pred_region
        %p396 = scmp.lt.s32.totalorder %s15, 1
        %s397 = scalar_select %p396, %s15, 1
        %s398 = smul.addr %s397, 8
        %s399 = smul.addr %s398, 4
        %s400 = scalar_lea.vmem %s3, %s399
      $region44: #{_lambda_.8} parent=39 // pred_fallthru
        _
    $region40: #{_lambda_.8} parent=5 // pred_fallthru
      _
  $region6: #{_lambda_.8} parent=0 // loop_footer
    %s13 = sadd.s32 1, %s9
  $region7: #{_lambda_.8} parent=0 // loop_footer_branch
    %8 = sbr.rel target = $region3
  $region8: #{_lambda_.8} parent=0 // loop_exit
    _

// kernel: _lambda_.9
$region0: #{_lambda_.9}
  #allocation0 [shape = 'u32[]', space=smem, size = 0x4, offset = 0x4, fixed_abs, tag = 'smem constant byte address 0x4 - core index']
  #allocation1 [shape = 'u32[144,128]{1,0:T(1,128)}', space=vmem, size = 0x12000, scoped, tag = 'internal scratch']
  %s0 = inlined_call_operand.vmem [shape: bf16[2,16,256], index: 0, kind: input, shape index: {}]
  %s1 = inlined_call_operand.vmem [shape: bf16[256,128], index: 1, kind: input, shape index: {}]
  %s2 = inlined_call_operand.vmem [shape: bf16[2,16,128], index: 2, kind: output, shape index: {}]
  %s3 = sld [smem:[#allocation0]]
  $region41: #{_lambda_.9} parent=0
    _
  %s5 = ssub.s32 1, %s3
  %s6 = scalar_select 0, %s5, %s3
  loop: start=0, step=1, limit=4
  $region2: #{_lambda_.9} parent=0 // loop_pre_header
    _
  $region3: #{_lambda_.9} parent=0 // loop_header
    %s8 = sphi 0, %s12
    %p9 = scmp.ge.s32.totalorder %s8, 4
    %s18 = sphi 0, %s20
    %s21 = sphi 0, %s18
    %s22 = sphi 0, %s21
    %s38 = sphi 0, %s22
    %s42 = sphi 0, %s42
    %s44 = sphi 0, %s42
    %s45 = sphi 0, %s44
    %s59 = sphi 0, %s45
    %s65 = sphi 0, %s67
    %s68 = sphi 0, %s65
    %s69 = sphi 0, %s68
    %s85 = sphi 0, %s69
  $region4: #{_lambda_.9} parent=0 // loop_header_branch
    %11 = sbr.rel (%p9) target = $region8
  $region5: #{_lambda_.9} parent=0 // loop_body
    %s13 = ssub.s32 %s8, 1
    %s14 = ssub.s32 %s8, 2
    %s15 = sadd.s32 %s8, 1
    %s16 = ssub.s32 %s8, %s15
    %p17 = scmp.eq.s32.totalorder %s16, 0
    %s19 = sadd.s32 %s18, 1
    %s20 = scalar_select %p17, %s18, %s19
    %p23 = pneg %p17
    %p24 = scmp.eq.s32.totalorder %s8, 1
    %p25 = por %p23, %p24
    %p26 = scmp.ne.s32.totalorder %s18, %s21
    %p27 = scmp.eq.s32.totalorder %s8, 0
    %p28 = por %p26, %p27
    %p29 = scmp.ne.s32.totalorder %s18, %s21
    %p30 = scmp.eq.s32.totalorder %s13, 1
    %p31 = por %p29, %p30
    %p32 = scmp.ne.s32.totalorder %s21, %s22
    %p33 = scmp.eq.s32.totalorder %s13, 0
    %p34 = por %p32, %p33
    %p35 = scmp.ne.s32.totalorder %s21, %s22
    %p36 = scmp.eq.s32.totalorder %s14, 1
    %p37 = por %p35, %p36
    %p39 = scmp.ne.s32.totalorder %s22, %s38
    %p40 = scmp.eq.s32.totalorder %s14, 0
    %p41 = por %p39, %p40
    %s43 = sadd.s32 %s42, 1
    %p46 = scmp.eq.s32.totalorder %s8, 1
    %p47 = scmp.ne.s32.totalorder %s42, %s44
    %p48 = scmp.eq.s32.totalorder %s8, 0
    %p49 = por %p47, %p48
    %p50 = scmp.ne.s32.totalorder %s42, %s44
    %p51 = scmp.eq.s32.totalorder %s13, 1
    %p52 = por %p50, %p51
    %p53 = scmp.ne.s32.totalorder %s44, %s45
    %p54 = scmp.eq.s32.totalorder %s13, 0
    %p55 = por %p53, %p54
    %p56 = scmp.ne.s32.totalorder %s44, %s45
    %p57 = scmp.eq.s32.totalorder %s14, 1
    %p58 = por %p56, %p57
    %p60 = scmp.ne.s32.totalorder %s45, %s59
    %p61 = scmp.eq.s32.totalorder %s14, 0
    %p62 = por %p60, %p61
    %s63 = ssub.s32 %s8, %s15
    %p64 = scmp.eq.s32.totalorder %s63, 0
    %s66 = sadd.s32 %s65, 1
    %s67 = scalar_select %p64, %s65, %s66
    %p70 = pneg %p64
    %p71 = scmp.eq.s32.totalorder %s8, 1
    %p72 = por %p70, %p71
    %p73 = scmp.ne.s32.totalorder %s65, %s68
    %p74 = scmp.eq.s32.totalorder %s8, 0
    %p75 = por %p73, %p74
    %p76 = scmp.ne.s32.totalorder %s65, %s68
    %p77 = scmp.eq.s32.totalorder %s13, 1
    %p78 = por %p76, %p77
    %p79 = scmp.ne.s32.totalorder %s68, %s69
    %p80 = scmp.eq.s32.totalorder %s13, 0
    %p81 = por %p79, %p80
    %p82 = scmp.ne.s32.totalorder %s68, %s69
    %p83 = scmp.eq.s32.totalorder %s14, 1
    %p84 = por %p82, %p83
    %p86 = scmp.ne.s32.totalorder %s69, %s85
    %p87 = scmp.eq.s32.totalorder %s14, 0
    %p88 = por %p86, %p87
    %p89 = scmp.le.s32.totalorder 1, %s8
    %p90 = scmp.lt.s32.totalorder %s8, 3
    %p91 = pnand %p89, %p90
    %p92 = pneg %p91
    // Predicated region
    $region9: #{_lambda_.9} parent=5 // pred_check
      _
    $region10: #{_lambda_.9} parent=5 // pred_check_branch
      %94 = sbr.rel (%p91) target = $region12
    $region11: #{_lambda_.9} parent=5 // pred_region
      %s95 = ssub.s32 %s8, 1
      // Predicated region
      $region13: #{_lambda_.9} parent=11 // pred_check
        %p96 = pneg %p55
      $region14: #{_lambda_.9} parent=11 // pred_check_branch
        %98 = sbr.rel (%p96) target = $region16
      $region15: #{_lambda_.9} parent=11 // pred_region
        _
      $region16: #{_lambda_.9} parent=11 // pred_fallthru
        _
    $region12: #{_lambda_.9} parent=5 // pred_fallthru
      _
    %p99 = scmp.lt.s32.totalorder %s8, 2
    // Predicated region
    $region17: #{_lambda_.9} parent=5 // pred_check
      %p100 = pneg %p99
    $region18: #{_lambda_.9} parent=5 // pred_check_branch
      %102 = sbr.rel (%p100) target = $region20
    $region19: #{_lambda_.9} parent=5 // pred_region
      // Predicated region
      $region21: #{_lambda_.9} parent=19 // pred_check
        %p103 = pneg %p28
      $region22: #{_lambda_.9} parent=19 // pred_check_branch
        %105 = sbr.rel (%p103) target = $region24
      $region23: #{_lambda_.9} parent=19 // pred_region
        %p106 = scmp.lt.s32.totalorder %s8, 1
        %s107 = scalar_select %p106, %s8, 1
        %s108 = smul.addr %s107, 4
        %s109 = smul.addr %s108, 4
        %s110 = scalar_lea.vmem %s0, %s109
      $region24: #{_lambda_.9} parent=19 // pred_fallthru
        _
    $region20: #{_lambda_.9} parent=5 // pred_fallthru
      _
    %p111 = scmp.le.s32.totalorder 1, %s8
    %p112 = scmp.lt.s32.totalorder %s8, 3
    %p113 = pnand %p111, %p112
    %p114 = pneg %p113
    // Predicated region
    $region25: #{_lambda_.9} parent=5 // pred_check
      _
    $region26: #{_lambda_.9} parent=5 // pred_check_branch
      %116 = sbr.rel (%p113) target = $region28
    $region27: #{_lambda_.9} parent=5 // pred_region
      %s117 = ssub.s32 %s8, 1
      %p118 = scmp.lt.s32.totalorder %s13, 1
      %s119 = scalar_select %p118, %s13, 1
      %s120 = smul.addr %s119, 4
      %s121 = smul.addr %s120, 4
      %s122 = scalar_lea.vmem %s0, %s121
      %p123 = pneg %p34
      %p124 = pneg %p31
      %p125 = pneg %p55
      %p126 = pneg %p52
      %p127 = pneg %p81
      %p128 = pneg %p78
      %p129 = scmp.lt.s32.totalorder %s13, 1
      %s130 = scalar_select %p129, %s13, 1
      %s131 = smul.addr %s130, 2
      %s132 = smul.addr %s131, 4
      %s133 = scalar_lea.vmem %s2, %s132
      %p134 = scmp.lt.s32.totalorder %s13, 1
      %s135 = scalar_select %p134, %s13, 1
      %s136 = smul.addr %s135, 4
      %s137 = smul.addr %s136, 4
      %s138 = scalar_lea.vmem %s0, %s137
      %p139 = scmp.lt.s32.totalorder %s13, 1
      %s140 = scalar_select %p139, %s13, 1
      %s141 = smul.addr %s140, 2
      %s142 = smul.addr %s141, 4
      %s143 = scalar_lea.vmem %s2, %s142
      %v145 = vld [vmem:[%s138] sm:$0xff]
      %v146 = vld [vmem:[%s138 + $0x8] sm:$0xff]
      %v147 = vld [vmem:[%s1] sm:$0xf]
      %v148 = vld [vmem:[%s1 + $0x4] sm:$0xf]
      %v149 = vld [vmem:[%s1 + $0x8] sm:$0xf]
      %v150 = vld [vmem:[%s1 + $0xc] sm:$0xf]
      %v151 = vld [vmem:[%s1 + $0x10] sm:$0xf]
      %v152 = vld [vmem:[%s1 + $0x14] sm:$0xf]
      %v153 = vld [vmem:[%s1 + $0x18] sm:$0xf]
      %v154 = vld [vmem:[%s1 + $0x1c] sm:$0xf]
      %v155 = vld [vmem:[%s1 + $0x20] sm:$0xf]
      %v156 = vld [vmem:[%s1 + $0x24] sm:$0xf]
      %v157 = vld [vmem:[%s1 + $0x28] sm:$0xf]
      %v158 = vld [vmem:[%s1 + $0x2c] sm:$0xf]
      %v159 = vld [vmem:[%s1 + $0x30] sm:$0xf]
      %v160 = vld [vmem:[%s1 + $0x34] sm:$0xf]
      %v161 = vld [vmem:[%s1 + $0x38] sm:$0xf]
      %v162 = vld [vmem:[%s1 + $0x3c] sm:$0xf]
      %v163 = vld [vmem:[%s1 + $0x40] sm:$0xf]
      %v164 = vld [vmem:[%s1 + $0x44] sm:$0xf]
      %v165 = vld [vmem:[%s1 + $0x48] sm:$0xf]
      %v166 = vld [vmem:[%s1 + $0x4c] sm:$0xf]
      %v167 = vld [vmem:[%s1 + $0x50] sm:$0xf]
      %v168 = vld [vmem:[%s1 + $0x54] sm:$0xf]
      %v169 = vld [vmem:[%s1 + $0x58] sm:$0xf]
      %v170 = vld [vmem:[%s1 + $0x5c] sm:$0xf]
      %v171 = vld [vmem:[%s1 + $0x60] sm:$0xf]
      %v172 = vld [vmem:[%s1 + $0x64] sm:$0xf]
      %v173 = vld [vmem:[%s1 + $0x68] sm:$0xf]
      %v174 = vld [vmem:[%s1 + $0x6c] sm:$0xf]
      %v175 = vld [vmem:[%s1 + $0x70] sm:$0xf]
      %v176 = vld [vmem:[%s1 + $0x74] sm:$0xf]
      %v177 = vld [vmem:[%s1 + $0x78] sm:$0xf]
      %v178 = vld [vmem:[%s1 + $0x7c] sm:$0xf]
      %v181 = vunpack.c.l.b16 %v145
      %v182 = vunpack.c.h.b16 %v145
      %v183 = vunpack.c.l.b16 %v146
      %v184 = vunpack.c.h.b16 %v146
      %v185 = vpack.c.b16 %v183, %v181
      %v186 = vpack.c.b16 %v184, %v182
      %v221 = vunpack.c.l.b16 %v147
      %v222 = vunpack.c.l.b16 %v148
      %v223 = vunpack.c.l.b16 %v149
      %v224 = vunpack.c.l.b16 %v150
      %v225 = vunpack.c.l.b16 %v151
      %v226 = vunpack.c.l.b16 %v152
      %v227 = vunpack.c.l.b16 %v153
      %v228 = vunpack.c.l.b16 %v154
      %v229 = vunpack.c.l.b16 %v155
      %v230 = vunpack.c.l.b16 %v156
      %v231 = vunpack.c.l.b16 %v157
      %v232 = vunpack.c.l.b16 %v158
      %v233 = vunpack.c.l.b16 %v159
      %v234 = vunpack.c.l.b16 %v160
      %v235 = vunpack.c.l.b16 %v161
      %v236 = vunpack.c.l.b16 %v162
      %v237 = vunpack.c.l.b16 %v163
      %v238 = vunpack.c.l.b16 %v164
      %v239 = vunpack.c.l.b16 %v165
      %v240 = vunpack.c.l.b16 %v166
      %v241 = vunpack.c.l.b16 %v167
      %v242 = vunpack.c.l.b16 %v168
      %v243 = vunpack.c.l.b16 %v169
      %v244 = vunpack.c.l.b16 %v170
      %v245 = vunpack.c.l.b16 %v171
      %v246 = vunpack.c.l.b16 %v172
      %v247 = vunpack.c.l.b16 %v173
      %v248 = vunpack.c.l.b16 %v174
      %v249 = vunpack.c.l.b16 %v175
      %v250 = vunpack.c.l.b16 %v176
      %v251 = vunpack.c.l.b16 %v177
      %v252 = vunpack.c.l.b16 %v178
      %v253 = vpack.c.b16 %v222, %v221
      %v254 = vpack.c.b16 %v224, %v223
      %v255 = vpack.c.b16 %v226, %v225
      %v256 = vpack.c.b16 %v228, %v227
      %v257 = vpack.c.b16 %v230, %v229
      %v258 = vpack.c.b16 %v232, %v231
      %v259 = vpack.c.b16 %v234, %v233
      %v260 = vpack.c.b16 %v236, %v235
      %v261 = vpack.c.b16 %v238, %v237
      %v262 = vpack.c.b16 %v240, %v239
      %v263 = vpack.c.b16 %v242, %v241
      %v264 = vpack.c.b16 %v244, %v243
      %v265 = vpack.c.b16 %v246, %v245
      %v266 = vpack.c.b16 %v248, %v247
      %v267 = vpack.c.b16 %v250, %v249
      %v268 = vpack.c.b16 %v252, %v251
      %285 = vmatprep.subr.bf16.mxu0 0
      %286 = vmatpush1.bf16.msra.mxu0 %v260
      %287 = vmatprep.subr.bf16.mxu0 0
      %288 = vmatpush1.bf16.msra.mxu0 %v259
      %289 = vmatprep.subr.bf16.mxu0 0
      %290 = vmatpush1.bf16.msra.mxu0 %v258
      %291 = vmatprep.subr.bf16.mxu0 0
      %292 = vmatpush1.bf16.msra.mxu0 %v257
      %293 = vmatprep.subr.bf16.mxu0 0
      %294 = vmatpush1.bf16.msra.mxu0 %v256
      %295 = vmatprep.subr.bf16.mxu0 0
      %296 = vmatpush1.bf16.msra.mxu0 %v255
      %297 = vmatprep.subr.bf16.mxu0 0
      %298 = vmatpush1.bf16.msra.mxu0 %v254
      %299 = vmatprep.subr.bf16.mxu0 0
      %300 = vmatpush1.bf16.msra.mxu0 %v253
      %301 = vmatprep.subr.bf16.mxu0 0
      %302 = vmatpush2.bf16.msra.mxu0 %v268
      %303 = vmatprep.subr.bf16.mxu0 0
      %304 = vmatpush2.bf16.msra.mxu0 %v267
      %305 = vmatprep.subr.bf16.mxu0 0
      %306 = vmatpush2.bf16.msra.mxu0 %v266
      %307 = vmatprep.subr.bf16.mxu0 0
      %308 = vmatpush2.bf16.msra.mxu0 %v265
      %309 = vmatprep.subr.bf16.mxu0 0
      %310 = vmatpush2.bf16.msra.mxu0 %v264
      %311 = vmatprep.subr.bf16.mxu0 0
      %312 = vmatpush2.bf16.msra.mxu0 %v263
      %313 = vmatprep.subr.bf16.mxu0 0
      %314 = vmatpush2.bf16.msra.mxu0 %v262
      %315 = vmatprep.subr.bf16.mxu0 0
      %316 = vmatpush2.bf16.msra.mxu0 %v261
      %317 = vmatprep.mubr.bf16.mxu0 %v186
      %318 = vmatmul.mubr.bf16.gmra.mxu0 %v185
      %v319 = vpop.f32.mrf.mxu0
      %v320 = vadd.f32 0.0, %v319
      %v321 = vpop.f32.mrf.mxu0
      %v322 = vpop.f32.mrf.mxu0
      %v323 = vadd.f32 0.0, %v322
      %v324 = vpop.f32.mrf.mxu0
      %325 = vdwg.mxu0
      %v326 = vadd.f32 %v320, %v323
      %v327 = vrot.slane %v326, 4
      %v328 = vadd.f32 %v326, %v327
      %v329 = vrot.slane %v328, 2
      %v330 = vadd.f32 %v328, %v329
      %v331 = vrot.slane %v330, 1
      %v332 = vadd.f32 %v330, %v331
      %v333 = vrcp.pop 16.0
      %v334 = vmul.f32 %v332, %v333
      %v335 = vsub.f32 %v320, %v334
      %v336 = vsub.f32 %v323, %v334
      %v337 = vmul.f32 %v335, %v335
      %v338 = vmul.f32 %v336, %v336
      %v339 = vadd.f32 %v337, %v338
      %v340 = vrot.slane %v339, 4
      %v341 = vadd.f32 %v339, %v340
      %v342 = vrot.slane %v341, 2
      %v343 = vadd.f32 %v341, %v342
      %v344 = vrot.slane %v343, 1
      %v345 = vadd.f32 %v343, %v344
      %v346 = vmul.f32 %v345, %v333
      %v347 = vadd.f32 %v346, 1e-05
      %v348 = vrsqrt.pop %v347
      %v349 = vmul.f32 %v335, %v348
      %v350 = vmul.f32 %v336, %v348
      %v351 = vpack.c.bf16 %v350, %v349
      %v353 = vunpack.c.l.b16 %v351
      %v354 = vunpack.c.h.b16 %v351
      %v355 = vpack.c.b16 %v353, %v353
      %v356 = vpack.c.b16 %v354, %v354
      %359 = vst [vmem:[%s143] sm:$0xf] %v355
      %360 = vst [vmem:[%s143 + $0x4] sm:$0xf] %v356
      %p361 = scmp.lt.s32.totalorder %s13, 1
      %s362 = scalar_select %p361, %s13, 1
      %s363 = smul.addr %s362, 2
      %s364 = smul.addr %s363, 4
      %s365 = scalar_lea.vmem %s2, %s364
      // Predicated region
      $region29: #{_lambda_.9} parent=27 // pred_check
        %p366 = pneg %p78
      $region30: #{_lambda_.9} parent=27 // pred_check_branch
        %368 = sbr.rel (%p366) target = $region32
      $region31: #{_lambda_.9} parent=27 // pred_region
        _
      $region32: #{_lambda_.9} parent=27 // pred_fallthru
        _
    $region28: #{_lambda_.9} parent=5 // pred_fallthru
      _
    %p369 = scmp.le.s32.totalorder 2, %s8
    // Predicated region
    $region33: #{_lambda_.9} parent=5 // pred_check
      %p370 = pneg %p369
    $region34: #{_lambda_.9} parent=5 // pred_check_branch
      %372 = sbr.rel (%p370) target = $region36
    $region35: #{_lambda_.9} parent=5 // pred_region
      %s373 = ssub.s32 %s8, 2
      // Predicated region
      $region37: #{_lambda_.9} parent=35 // pred_check
        %p374 = pneg %p84
      $region38: #{_lambda_.9} parent=35 // pred_check_branch
        %376 = sbr.rel (%p374) target = $region40
      $region39: #{_lambda_.9} parent=35 // pred_region
        %p377 = scmp.lt.s32.totalorder %s14, 1
        %s378 = scalar_select %p377, %s14, 1
        %s379 = smul.addr %s378, 2
        %s380 = smul.addr %s379, 4
        %s381 = scalar_lea.vmem %s2, %s380
      $region40: #{_lambda_.9} parent=35 // pred_fallthru
        _
    $region36: #{_lambda_.9} parent=5 // pred_fallthru
      _
  $region6: #{_lambda_.9} parent=0 // loop_footer
    %s12 = sadd.s32 1, %s8
  $region7: #{_lambda_.9} parent=0 // loop_footer_branch
    %7 = sbr.rel target = $region3
  $region8: #{_lambda_.9} parent=0 // loop_exit
    _

// kernel: _lambda_.10
$region0: #{_lambda_.10}
  #allocation0 [shape = 'u32[]', space=smem, size = 0x4, offset = 0x4, fixed_abs, tag = 'smem constant byte address 0x4 - core index']
  #allocation1 [shape = 'u32[144,128]{1,0:T(1,128)}', space=vmem, size = 0x12000, scoped, tag = 'internal scratch']
  %s0 = inlined_call_operand.vmem [shape: bf16[2,4,512], index: 0, kind: input, shape index: {}]
  %s1 = inlined_call_operand.vmem [shape: bf16[512,128], index: 1, kind: input, shape index: {}]
  %s2 = inlined_call_operand.vmem [shape: bf16[2,4,128], index: 2, kind: output, shape index: {}]
  %s3 = sld [smem:[#allocation0]]
  $region41: #{_lambda_.10} parent=0
    _
  %s5 = ssub.s32 1, %s3
  %s6 = scalar_select 0, %s5, %s3
  loop: start=0, step=1, limit=4
  $region2: #{_lambda_.10} parent=0 // loop_pre_header
    _
  $region3: #{_lambda_.10} parent=0 // loop_header
    %s8 = sphi 0, %s12
    %p9 = scmp.ge.s32.totalorder %s8, 4
    %s18 = sphi 0, %s20
    %s21 = sphi 0, %s18
    %s22 = sphi 0, %s21
    %s38 = sphi 0, %s22
    %s42 = sphi 0, %s42
    %s44 = sphi 0, %s42
    %s45 = sphi 0, %s44
    %s59 = sphi 0, %s45
    %s65 = sphi 0, %s67
    %s68 = sphi 0, %s65
    %s69 = sphi 0, %s68
    %s85 = sphi 0, %s69
  $region4: #{_lambda_.10} parent=0 // loop_header_branch
    %11 = sbr.rel (%p9) target = $region8
  $region5: #{_lambda_.10} parent=0 // loop_body
    %s13 = ssub.s32 %s8, 1
    %s14 = ssub.s32 %s8, 2
    %s15 = sadd.s32 %s8, 1
    %s16 = ssub.s32 %s8, %s15
    %p17 = scmp.eq.s32.totalorder %s16, 0
    %s19 = sadd.s32 %s18, 1
    %s20 = scalar_select %p17, %s18, %s19
    %p23 = pneg %p17
    %p24 = scmp.eq.s32.totalorder %s8, 1
    %p25 = por %p23, %p24
    %p26 = scmp.ne.s32.totalorder %s18, %s21
    %p27 = scmp.eq.s32.totalorder %s8, 0
    %p28 = por %p26, %p27
    %p29 = scmp.ne.s32.totalorder %s18, %s21
    %p30 = scmp.eq.s32.totalorder %s13, 1
    %p31 = por %p29, %p30
    %p32 = scmp.ne.s32.totalorder %s21, %s22
    %p33 = scmp.eq.s32.totalorder %s13, 0
    %p34 = por %p32, %p33
    %p35 = scmp.ne.s32.totalorder %s21, %s22
    %p36 = scmp.eq.s32.totalorder %s14, 1
    %p37 = por %p35, %p36
    %p39 = scmp.ne.s32.totalorder %s22, %s38
    %p40 = scmp.eq.s32.totalorder %s14, 0
    %p41 = por %p39, %p40
    %s43 = sadd.s32 %s42, 1
    %p46 = scmp.eq.s32.totalorder %s8, 1
    %p47 = scmp.ne.s32.totalorder %s42, %s44
    %p48 = scmp.eq.s32.totalorder %s8, 0
    %p49 = por %p47, %p48
    %p50 = scmp.ne.s32.totalorder %s42, %s44
    %p51 = scmp.eq.s32.totalorder %s13, 1
    %p52 = por %p50, %p51
    %p53 = scmp.ne.s32.totalorder %s44, %s45
    %p54 = scmp.eq.s32.totalorder %s13, 0
    %p55 = por %p53, %p54
    %p56 = scmp.ne.s32.totalorder %s44, %s45
    %p57 = scmp.eq.s32.totalorder %s14, 1
    %p58 = por %p56, %p57
    %p60 = scmp.ne.s32.totalorder %s45, %s59
    %p61 = scmp.eq.s32.totalorder %s14, 0
    %p62 = por %p60, %p61
    %s63 = ssub.s32 %s8, %s15
    %p64 = scmp.eq.s32.totalorder %s63, 0
    %s66 = sadd.s32 %s65, 1
    %s67 = scalar_select %p64, %s65, %s66
    %p70 = pneg %p64
    %p71 = scmp.eq.s32.totalorder %s8, 1
    %p72 = por %p70, %p71
    %p73 = scmp.ne.s32.totalorder %s65, %s68
    %p74 = scmp.eq.s32.totalorder %s8, 0
    %p75 = por %p73, %p74
    %p76 = scmp.ne.s32.totalorder %s65, %s68
    %p77 = scmp.eq.s32.totalorder %s13, 1
    %p78 = por %p76, %p77
    %p79 = scmp.ne.s32.totalorder %s68, %s69
    %p80 = scmp.eq.s32.totalorder %s13, 0
    %p81 = por %p79, %p80
    %p82 = scmp.ne.s32.totalorder %s68, %s69
    %p83 = scmp.eq.s32.totalorder %s14, 1
    %p84 = por %p82, %p83
    %p86 = scmp.ne.s32.totalorder %s69, %s85
    %p87 = scmp.eq.s32.totalorder %s14, 0
    %p88 = por %p86, %p87
    %p89 = scmp.le.s32.totalorder 1, %s8
    %p90 = scmp.lt.s32.totalorder %s8, 3
    %p91 = pnand %p89, %p90
    %p92 = pneg %p91
    // Predicated region
    $region9: #{_lambda_.10} parent=5 // pred_check
      _
    $region10: #{_lambda_.10} parent=5 // pred_check_branch
      %94 = sbr.rel (%p91) target = $region12
    $region11: #{_lambda_.10} parent=5 // pred_region
      %s95 = ssub.s32 %s8, 1
      // Predicated region
      $region13: #{_lambda_.10} parent=11 // pred_check
        %p96 = pneg %p55
      $region14: #{_lambda_.10} parent=11 // pred_check_branch
        %98 = sbr.rel (%p96) target = $region16
      $region15: #{_lambda_.10} parent=11 // pred_region
        _
      $region16: #{_lambda_.10} parent=11 // pred_fallthru
        _
    $region12: #{_lambda_.10} parent=5 // pred_fallthru
      _
    %p99 = scmp.lt.s32.totalorder %s8, 2
    // Predicated region
    $region17: #{_lambda_.10} parent=5 // pred_check
      %p100 = pneg %p99
    $region18: #{_lambda_.10} parent=5 // pred_check_branch
      %102 = sbr.rel (%p100) target = $region20
    $region19: #{_lambda_.10} parent=5 // pred_region
      // Predicated region
      $region21: #{_lambda_.10} parent=19 // pred_check
        %p103 = pneg %p28
      $region22: #{_lambda_.10} parent=19 // pred_check_branch
        %105 = sbr.rel (%p103) target = $region24
      $region23: #{_lambda_.10} parent=19 // pred_region
        %p106 = scmp.lt.s32.totalorder %s8, 1
        %s107 = scalar_select %p106, %s8, 1
        %s108 = smul.addr %s107, 4
        %s109 = smul.addr %s108, 2
        %s110 = scalar_lea.vmem %s0, %s109
      $region24: #{_lambda_.10} parent=19 // pred_fallthru
        _
    $region20: #{_lambda_.10} parent=5 // pred_fallthru
      _
    %p111 = scmp.le.s32.totalorder 1, %s8
    %p112 = scmp.lt.s32.totalorder %s8, 3
    %p113 = pnand %p111, %p112
    %p114 = pneg %p113
    // Predicated region
    $region25: #{_lambda_.10} parent=5 // pred_check
      _
    $region26: #{_lambda_.10} parent=5 // pred_check_branch
      %116 = sbr.rel (%p113) target = $region28
    $region27: #{_lambda_.10} parent=5 // pred_region
      %s117 = ssub.s32 %s8, 1
      %p118 = scmp.lt.s32.totalorder %s13, 1
      %s119 = scalar_select %p118, %s13, 1
      %s120 = smul.addr %s119, 4
      %s121 = smul.addr %s120, 2
      %s122 = scalar_lea.vmem %s0, %s121
      %p123 = pneg %p34
      %p124 = pneg %p31
      %p125 = pneg %p55
      %p126 = pneg %p52
      %p127 = pneg %p81
      %p128 = pneg %p78
      %p129 = scmp.lt.s32.totalorder %s13, 1
      %s130 = scalar_select %p129, %s13, 1
      %s131 = smul.addr %s130, 2
      %s132 = scalar_lea.vmem %s2, %s131
      %p133 = scmp.lt.s32.totalorder %s13, 1
      %s134 = scalar_select %p133, %s13, 1
      %s135 = smul.addr %s134, 4
      %s136 = smul.addr %s135, 2
      %s137 = scalar_lea.vmem %s0, %s136
      %p138 = scmp.lt.s32.totalorder %s13, 1
      %s139 = scalar_select %p138, %s13, 1
      %s140 = smul.addr %s139, 2
      %s141 = scalar_lea.vmem %s2, %s140
      %v143 = vld [vmem:[%s137] sm:$0xff]
      %v144 = vld [vmem:[%s1] sm:$0xf]
      %v145 = vld [vmem:[%s1 + $0x4] sm:$0xf]
      %v146 = vld [vmem:[%s1 + $0x8] sm:$0xf]
      %v147 = vld [vmem:[%s1 + $0xc] sm:$0xf]
      %v148 = vld [vmem:[%s1 + $0x10] sm:$0xf]
      %v149 = vld [vmem:[%s1 + $0x14] sm:$0xf]
      %v150 = vld [vmem:[%s1 + $0x18] sm:$0xf]
      %v151 = vld [vmem:[%s1 + $0x1c] sm:$0xf]
      %v152 = vld [vmem:[%s1 + $0x20] sm:$0xf]
      %v153 = vld [vmem:[%s1 + $0x24] sm:$0xf]
      %v154 = vld [vmem:[%s1 + $0x28] sm:$0xf]
      %v155 = vld [vmem:[%s1 + $0x2c] sm:$0xf]
      %v156 = vld [vmem:[%s1 + $0x30] sm:$0xf]
      %v157 = vld [vmem:[%s1 + $0x34] sm:$0xf]
      %v158 = vld [vmem:[%s1 + $0x38] sm:$0xf]
      %v159 = vld [vmem:[%s1 + $0x3c] sm:$0xf]
      %v160 = vld [vmem:[%s1 + $0x40] sm:$0xf]
      %v161 = vld [vmem:[%s1 + $0x44] sm:$0xf]
      %v162 = vld [vmem:[%s1 + $0x48] sm:$0xf]
      %v163 = vld [vmem:[%s1 + $0x4c] sm:$0xf]
      %v164 = vld [vmem:[%s1 + $0x50] sm:$0xf]
      %v165 = vld [vmem:[%s1 + $0x54] sm:$0xf]
      %v166 = vld [vmem:[%s1 + $0x58] sm:$0xf]
      %v167 = vld [vmem:[%s1 + $0x5c] sm:$0xf]
      %v168 = vld [vmem:[%s1 + $0x60] sm:$0xf]
      %v169 = vld [vmem:[%s1 + $0x64] sm:$0xf]
      %v170 = vld [vmem:[%s1 + $0x68] sm:$0xf]
      %v171 = vld [vmem:[%s1 + $0x6c] sm:$0xf]
      %v172 = vld [vmem:[%s1 + $0x70] sm:$0xf]
      %v173 = vld [vmem:[%s1 + $0x74] sm:$0xf]
      %v174 = vld [vmem:[%s1 + $0x78] sm:$0xf]
      %v175 = vld [vmem:[%s1 + $0x7c] sm:$0xf]
      %v176 = vld [vmem:[%s1 + $0x80] sm:$0xf]
      %v177 = vld [vmem:[%s1 + $0x84] sm:$0xf]
      %v178 = vld [vmem:[%s1 + $0x88] sm:$0xf]
      %v179 = vld [vmem:[%s1 + $0x8c] sm:$0xf]
      %v180 = vld [vmem:[%s1 + $0x90] sm:$0xf]
      %v181 = vld [vmem:[%s1 + $0x94] sm:$0xf]
      %v182 = vld [vmem:[%s1 + $0x98] sm:$0xf]
      %v183 = vld [vmem:[%s1 + $0x9c] sm:$0xf]
      %v184 = vld [vmem:[%s1 + $0xa0] sm:$0xf]
      %v185 = vld [vmem:[%s1 + $0xa4] sm:$0xf]
      %v186 = vld [vmem:[%s1 + $0xa8] sm:$0xf]
      %v187 = vld [vmem:[%s1 + $0xac] sm:$0xf]
      %v188 = vld [vmem:[%s1 + $0xb0] sm:$0xf]
      %v189 = vld [vmem:[%s1 + $0xb4] sm:$0xf]
      %v190 = vld [vmem:[%s1 + $0xb8] sm:$0xf]
      %v191 = vld [vmem:[%s1 + $0xbc] sm:$0xf]
      %v192 = vld [vmem:[%s1 + $0xc0] sm:$0xf]
      %v193 = vld [vmem:[%s1 + $0xc4] sm:$0xf]
      %v194 = vld [vmem:[%s1 + $0xc8] sm:$0xf]
      %v195 = vld [vmem:[%s1 + $0xcc] sm:$0xf]
      %v196 = vld [vmem:[%s1 + $0xd0] sm:$0xf]
      %v197 = vld [vmem:[%s1 + $0xd4] sm:$0xf]
      %v198 = vld [vmem:[%s1 + $0xd8] sm:$0xf]
      %v199 = vld [vmem:[%s1 + $0xdc] sm:$0xf]
      %v200 = vld [vmem:[%s1 + $0xe0] sm:$0xf]
      %v201 = vld [vmem:[%s1 + $0xe4] sm:$0xf]
      %v202 = vld [vmem:[%s1 + $0xe8] sm:$0xf]
      %v203 = vld [vmem:[%s1 + $0xec] sm:$0xf]
      %v204 = vld [vmem:[%s1 + $0xf0] sm:$0xf]
      %v205 = vld [vmem:[%s1 + $0xf4] sm:$0xf]
      %v206 = vld [vmem:[%s1 + $0xf8] sm:$0xf]
      %v207 = vld [vmem:[%s1 + $0xfc] sm:$0xf]
      %v209 = vcombine.high %v143, %v143
      %v211 = vunpack.c.l.s4 1983009808
      %v212 = vunpack.c.0.s8 %v211
      %v213 = vlaneseq
      %v214 = vshrl.u32 %v213, 7
      %v215 = vsub.s32 %v212, %v214
      %v216 = vrot.slane %v143, %v215
      %v218 = vunpack.c.l.s4 1983009808
      %v219 = vunpack.c.0.s8 %v218
      %v220 = vlaneseq
      %v221 = vshrl.u32 %v220, 7
      %v222 = vsub.s32 %v219, %v221
      %v223 = vrot.slane %v209, %v222
      %v224 = vcombine.high %v216, %v216
      %v225 = vcombine.high %v223, %v223
      %v294 = vunpack.c.l.b16 %v144
      %v295 = vunpack.c.l.b16 %v145
      %v296 = vunpack.c.l.b16 %v146
      %v297 = vunpack.c.l.b16 %v147
      %v298 = vunpack.c.l.b16 %v148
      %v299 = vunpack.c.l.b16 %v149
      %v300 = vunpack.c.l.b16 %v150
      %v301 = vunpack.c.l.b16 %v151
      %v302 = vunpack.c.l.b16 %v152
      %v303 = vunpack.c.l.b16 %v153
      %v304 = vunpack.c.l.b16 %v154
      %v305 = vunpack.c.l.b16 %v155
      %v306 = vunpack.c.l.b16 %v156
      %v307 = vunpack.c.l.b16 %v157
      %v308 = vunpack.c.l.b16 %v158
      %v309 = vunpack.c.l.b16 %v159
      %v310 = vunpack.c.l.b16 %v160
      %v311 = vunpack.c.l.b16 %v161
      %v312 = vunpack.c.l.b16 %v162
      %v313 = vunpack.c.l.b16 %v163
      %v314 = vunpack.c.l.b16 %v164
      %v315 = vunpack.c.l.b16 %v165
      %v316 = vunpack.c.l.b16 %v166
      %v317 = vunpack.c.l.b16 %v167
      %v318 = vunpack.c.l.b16 %v168
      %v319 = vunpack.c.l.b16 %v169
      %v320 = vunpack.c.l.b16 %v170
      %v321 = vunpack.c.l.b16 %v171
      %v322 = vunpack.c.l.b16 %v172
      %v323 = vunpack.c.l.b16 %v173
      %v324 = vunpack.c.l.b16 %v174
      %v325 = vunpack.c.l.b16 %v175
      %v326 = vunpack.c.l.b16 %v176
      %v327 = vunpack.c.l.b16 %v177
      %v328 = vunpack.c.l.b16 %v178
      %v329 = vunpack.c.l.b16 %v179
      %v330 = vunpack.c.l.b16 %v180
      %v331 = vunpack.c.l.b16 %v181
      %v332 = vunpack.c.l.b16 %v182
      %v333 = vunpack.c.l.b16 %v183
      %v334 = vunpack.c.l.b16 %v184
      %v335 = vunpack.c.l.b16 %v185
      %v336 = vunpack.c.l.b16 %v186
      %v337 = vunpack.c.l.b16 %v187
      %v338 = vunpack.c.l.b16 %v188
      %v339 = vunpack.c.l.b16 %v189
      %v340 = vunpack.c.l.b16 %v190
      %v341 = vunpack.c.l.b16 %v191
      %v342 = vunpack.c.l.b16 %v192
      %v343 = vunpack.c.l.b16 %v193
      %v344 = vunpack.c.l.b16 %v194
      %v345 = vunpack.c.l.b16 %v195
      %v346 = vunpack.c.l.b16 %v196
      %v347 = vunpack.c.l.b16 %v197
      %v348 = vunpack.c.l.b16 %v198
      %v349 = vunpack.c.l.b16 %v199
      %v350 = vunpack.c.l.b16 %v200
      %v351 = vunpack.c.l.b16 %v201
      %v352 = vunpack.c.l.b16 %v202
      %v353 = vunpack.c.l.b16 %v203
      %v354 = vunpack.c.l.b16 %v204
      %v355 = vunpack.c.l.b16 %v205
      %v356 = vunpack.c.l.b16 %v206
      %v357 = vunpack.c.l.b16 %v207
      %v358 = vpack.c.b16 %v295, %v294
      %v359 = vpack.c.b16 %v297, %v296
      %v360 = vpack.c.b16 %v299, %v298
      %v361 = vpack.c.b16 %v301, %v300
      %v362 = vpack.c.b16 %v303, %v302
      %v363 = vpack.c.b16 %v305, %v304
      %v364 = vpack.c.b16 %v307, %v306
      %v365 = vpack.c.b16 %v309, %v308
      %v366 = vpack.c.b16 %v311, %v310
      %v367 = vpack.c.b16 %v313, %v312
      %v368 = vpack.c.b16 %v315, %v314
      %v369 = vpack.c.b16 %v317, %v316
      %v370 = vpack.c.b16 %v319, %v318
      %v371 = vpack.c.b16 %v321, %v320
      %v372 = vpack.c.b16 %v323, %v322
      %v373 = vpack.c.b16 %v325, %v324
      %v374 = vpack.c.b16 %v327, %v326
      %v375 = vpack.c.b16 %v329, %v328
      %v376 = vpack.c.b16 %v331, %v330
      %v377 = vpack.c.b16 %v333, %v332
      %v378 = vpack.c.b16 %v335, %v334
      %v379 = vpack.c.b16 %v337, %v336
      %v380 = vpack.c.b16 %v339, %v338
      %v381 = vpack.c.b16 %v341, %v340
      %v382 = vpack.c.b16 %v343, %v342
      %v383 = vpack.c.b16 %v345, %v344
      %v384 = vpack.c.b16 %v347, %v346
      %v385 = vpack.c.b16 %v349, %v348
      %v386 = vpack.c.b16 %v351, %v350
      %v387 = vpack.c.b16 %v353, %v352
      %v388 = vpack.c.b16 %v355, %v354
      %v389 = vpack.c.b16 %v357, %v356
      %422 = vmatprep.subr.bf16.mxu0 0
      %423 = vmatpush1.bf16.msra.mxu0 %v365
      %424 = vmatprep.subr.bf16.mxu0 0
      %425 = vmatpush1.bf16.msra.mxu0 %v364
      %426 = vmatprep.subr.bf16.mxu0 0
      %427 = vmatpush1.bf16.msra.mxu0 %v363
      %428 = vmatprep.subr.bf16.mxu0 0
      %429 = vmatpush1.bf16.msra.mxu0 %v362
      %430 = vmatprep.subr.bf16.mxu0 0
      %431 = vmatpush1.bf16.msra.mxu0 %v361
      %432 = vmatprep.subr.bf16.mxu0 0
      %433 = vmatpush1.bf16.msra.mxu0 %v360
      %434 = vmatprep.subr.bf16.mxu0 0
      %435 = vmatpush1.bf16.msra.mxu0 %v359
      %436 = vmatprep.subr.bf16.mxu0 0
      %437 = vmatpush1.bf16.msra.mxu0 %v358
      %438 = vmatprep.subr.bf16.mxu0 0
      %439 = vmatpush2.bf16.msra.mxu0 %v373
      %440 = vmatprep.subr.bf16.mxu0 0
      %441 = vmatpush2.bf16.msra.mxu0 %v372
      %442 = vmatprep.subr.bf16.mxu0 0
      %443 = vmatpush2.bf16.msra.mxu0 %v371
      %444 = vmatprep.subr.bf16.mxu0 0
      %445 = vmatpush2.bf16.msra.mxu0 %v370
      %446 = vmatprep.subr.bf16.mxu0 0
      %447 = vmatpush2.bf16.msra.mxu0 %v369
      %448 = vmatprep.subr.bf16.mxu0 0
      %449 = vmatpush2.bf16.msra.mxu0 %v368
      %450 = vmatprep.subr.bf16.mxu0 0
      %451 = vmatpush2.bf16.msra.mxu0 %v367
      %452 = vmatprep.subr.bf16.mxu0 0
      %453 = vmatpush2.bf16.msra.mxu0 %v366
      %454 = vmatprep.mubr.bf16.mxu0 %v224
      %455 = vmatmul.mubr.bf16.gmra.mxu0 %v216
      %v456 = vpop.f32.mrf.mxu0
      %v457 = vadd.f32 0.0, %v456
      %v458 = vpop.f32.mrf.mxu0
      %v459 = vpop.f32.mrf.mxu0
      %v460 = vpop.f32.mrf.mxu0
      %461 = vdwg.mxu0
      %462 = vmatprep.subr.bf16.mxu0 0
      %463 = vmatpush1.bf16.msra.mxu0 %v381
      %464 = vmatprep.subr.bf16.mxu0 0
      %465 = vmatpush1.bf16.msra.mxu0 %v380
      %466 = vmatprep.subr.bf16.mxu0 0
      %467 = vmatpush1.bf16.msra.mxu0 %v379
      %468 = vmatprep.subr.bf16.mxu0 0
      %469 = vmatpush1.bf16.msra.mxu0 %v378
      %470 = vmatprep.subr.bf16.mxu0 0
      %471 = vmatpush1.bf16.msra.mxu0 %v377
      %472 = vmatprep.subr.bf16.mxu0 0
      %473 = vmatpush1.bf16.msra.mxu0 %v376
      %474 = vmatprep.subr.bf16.mxu0 0
      %475 = vmatpush1.bf16.msra.mxu0 %v375
      %476 = vmatprep.subr.bf16.mxu0 0
      %477 = vmatpush1.bf16.msra.mxu0 %v374
      %478 = vmatprep.subr.bf16.mxu0 0
      %479 = vmatpush2.bf16.msra.mxu0 %v389
      %480 = vmatprep.subr.bf16.mxu0 0
      %481 = vmatpush2.bf16.msra.mxu0 %v388
      %482 = vmatprep.subr.bf16.mxu0 0
      %483 = vmatpush2.bf16.msra.mxu0 %v387
      %484 = vmatprep.subr.bf16.mxu0 0
      %485 = vmatpush2.bf16.msra.mxu0 %v386
      %486 = vmatprep.subr.bf16.mxu0 0
      %487 = vmatpush2.bf16.msra.mxu0 %v385
      %488 = vmatprep.subr.bf16.mxu0 0
      %489 = vmatpush2.bf16.msra.mxu0 %v384
      %490 = vmatprep.subr.bf16.mxu0 0
      %491 = vmatpush2.bf16.msra.mxu0 %v383
      %492 = vmatprep.subr.bf16.mxu0 0
      %493 = vmatpush2.bf16.msra.mxu0 %v382
      %494 = vmatprep.mubr.bf16.mxu0 %v225
      %495 = vmatmul.mubr.bf16.gmra.mxu0 %v223
      %v496 = vpop.f32.mrf.mxu0
      %v497 = vadd.f32 %v457, %v496
      %v498 = vpop.f32.mrf.mxu0
      %v499 = vpop.f32.mrf.mxu0
      %v500 = vpop.f32.mrf.mxu0
      %501 = vdwg.mxu0
      %vm502 = vcmask 1043456
      %v503 = vsel %vm502, %v497, 0.0
      %v504 = vrot.slane %v503, 4
      %v505 = vadd.f32 %v503, %v504
      %v506 = vrot.slane %v505, 2
      %v507 = vadd.f32 %v505, %v506
      %v508 = vrot.slane %v507, 1
      %v509 = vadd.f32 %v507, %v508
      %v510 = vrcp.pop 4.0
      %v511 = vmul.f32 %v509, %v510
      %v512 = vsub.f32 %v497, %v511
      %v513 = vmul.f32 %v512, %v512
      %v514 = vsel %vm502, %v513, 0.0
      %v515 = vrot.slane %v514, 4
      %v516 = vadd.f32 %v514, %v515
      %v517 = vrot.slane %v516, 2
      %v518 = vadd.f32 %v516, %v517
      %v519 = vrot.slane %v518, 1
      %v520 = vadd.f32 %v518, %v519
      %v521 = vmul.f32 %v520, %v510
      %v522 = vadd.f32 %v521, 1e-05
      %v523 = vrsqrt.pop %v522
      %v524 = vmul.f32 %v512, %v523
      %v525 = vpack.c.bf16 %v524, %v524
      %526 = vst [vmem:[%s141] sm:$0x3] %v525
      %p527 = scmp.lt.s32.totalorder %s13, 1
      %s528 = scalar_select %p527, %s13, 1
      %s529 = smul.addr %s528, 2
      %s530 = scalar_lea.vmem %s2, %s529
      // Predicated region
      $region29: #{_lambda_.10} parent=27 // pred_check
        %p531 = pneg %p78
      $region30: #{_lambda_.10} parent=27 // pred_check_branch
        %533 = sbr.rel (%p531) target = $region32
      $region31: #{_lambda_.10} parent=27 // pred_region
        _
      $region32: #{_lambda_.10} parent=27 // pred_fallthru
        _
    $region28: #{_lambda_.10} parent=5 // pred_fallthru
      _
    %p534 = scmp.le.s32.totalorder 2, %s8
    // Predicated region
    $region33: #{_lambda_.10} parent=5 // pred_check
      %p535 = pneg %p534
    $region34: #{_lambda_.10} parent=5 // pred_check_branch
      %537 = sbr.rel (%p535) target = $region36
    $region35: #{_lambda_.10} parent=5 // pred_region
      %s538 = ssub.s32 %s8, 2
      // Predicated region
      $region37: #{_lambda_.10} parent=35 // pred_check
        %p539 = pneg %p84
      $region38: #{_lambda_.10} parent=35 // pred_check_branch
        %541 = sbr.rel (%p539) target = $region40
      $region39: #{_lambda_.10} parent=35 // pred_region
        %p542 = scmp.lt.s32.totalorder %s14, 1
        %s543 = scalar_select %p542, %s14, 1
        %s544 = smul.addr %s543, 2
        %s545 = scalar_lea.vmem %s2, %s544
      $region40: #{_lambda_.10} parent=35 // pred_fallthru
        _
    $region36: #{_lambda_.10} parent=5 // pred_fallthru
      _
  $region6: #{_lambda_.10} parent=0 // loop_footer
    %s12 = sadd.s32 1, %s8
  $region7: #{_lambda_.10} parent=0 // loop_footer_branch
    %7 = sbr.rel target = $region3
  $region8: #{_lambda_.10} parent=0 // loop_exit
    _

// kernel: _lambda_.11
$region0: #{_lambda_.11}
  #allocation0 [shape = 'u32[]', space=smem, size = 0x4, offset = 0x4, fixed_abs, tag = 'smem constant byte address 0x4 - core index']
  #allocation1 [shape = 'u32[144,128]{1,0:T(1,128)}', space=vmem, size = 0x12000, scoped, tag = 'internal scratch']
  %s0 = inlined_call_operand.vmem [shape: bf16[2,1,1024], index: 0, kind: input, shape index: {}]
  %s1 = inlined_call_operand.vmem [shape: bf16[1024,128], index: 1, kind: input, shape index: {}]
  %s2 = inlined_call_operand.vmem [shape: f32[1,128], index: 2, kind: input, shape index: {}]
  %s3 = inlined_call_operand.vmem [shape: bf16[2,1,128], index: 3, kind: output, shape index: {}]
  %s4 = sld [smem:[#allocation0]]
  $region45: #{_lambda_.11} parent=0
    _
  %s6 = ssub.s32 1, %s4
  %s7 = scalar_select 0, %s6, %s4
  loop: start=0, step=1, limit=4
  $region2: #{_lambda_.11} parent=0 // loop_pre_header
    _
  $region3: #{_lambda_.11} parent=0 // loop_header
    %s9 = sphi 0, %s13
    %p10 = scmp.ge.s32.totalorder %s9, 4
    %s19 = sphi 0, %s21
    %s22 = sphi 0, %s19
    %s23 = sphi 0, %s22
    %s39 = sphi 0, %s23
    %s43 = sphi 0, %s43
    %s45 = sphi 0, %s43
    %s46 = sphi 0, %s45
    %s60 = sphi 0, %s46
    %s64 = sphi 0, %s64
    %s66 = sphi 0, %s64
    %s67 = sphi 0, %s66
    %s81 = sphi 0, %s67
    %s87 = sphi 0, %s89
    %s90 = sphi 0, %s87
    %s91 = sphi 0, %s90
    %s107 = sphi 0, %s91
  $region4: #{_lambda_.11} parent=0 // loop_header_branch
    %12 = sbr.rel (%p10) target = $region8
  $region5: #{_lambda_.11} parent=0 // loop_body
    %s14 = ssub.s32 %s9, 1
    %s15 = ssub.s32 %s9, 2
    %s16 = sadd.s32 %s9, 1
    %s17 = ssub.s32 %s9, %s16
    %p18 = scmp.eq.s32.totalorder %s17, 0
    %s20 = sadd.s32 %s19, 1
    %s21 = scalar_select %p18, %s19, %s20
    %p24 = pneg %p18
    %p25 = scmp.eq.s32.totalorder %s9, 1
    %p26 = por %p24, %p25
    %p27 = scmp.ne.s32.totalorder %s19, %s22
    %p28 = scmp.eq.s32.totalorder %s9, 0
    %p29 = por %p27, %p28
    %p30 = scmp.ne.s32.totalorder %s19, %s22
    %p31 = scmp.eq.s32.totalorder %s14, 1
    %p32 = por %p30, %p31
    %p33 = scmp.ne.s32.totalorder %s22, %s23
    %p34 = scmp.eq.s32.totalorder %s14, 0
    %p35 = por %p33, %p34
    %p36 = scmp.ne.s32.totalorder %s22, %s23
    %p37 = scmp.eq.s32.totalorder %s15, 1
    %p38 = por %p36, %p37
    %p40 = scmp.ne.s32.totalorder %s23, %s39
    %p41 = scmp.eq.s32.totalorder %s15, 0
    %p42 = por %p40, %p41
    %s44 = sadd.s32 %s43, 1
    %p47 = scmp.eq.s32.totalorder %s9, 1
    %p48 = scmp.ne.s32.totalorder %s43, %s45
    %p49 = scmp.eq.s32.totalorder %s9, 0
    %p50 = por %p48, %p49
    %p51 = scmp.ne.s32.totalorder %s43, %s45
    %p52 = scmp.eq.s32.totalorder %s14, 1
    %p53 = por %p51, %p52
    %p54 = scmp.ne.s32.totalorder %s45, %s46
    %p55 = scmp.eq.s32.totalorder %s14, 0
    %p56 = por %p54, %p55
    %p57 = scmp.ne.s32.totalorder %s45, %s46
    %p58 = scmp.eq.s32.totalorder %s15, 1
    %p59 = por %p57, %p58
    %p61 = scmp.ne.s32.totalorder %s46, %s60
    %p62 = scmp.eq.s32.totalorder %s15, 0
    %p63 = por %p61, %p62
    %s65 = sadd.s32 %s64, 1
    %p68 = scmp.eq.s32.totalorder %s9, 1
    %p69 = scmp.ne.s32.totalorder %s64, %s66
    %p70 = scmp.eq.s32.totalorder %s9, 0
    %p71 = por %p69, %p70
    %p72 = scmp.ne.s32.totalorder %s64, %s66
    %p73 = scmp.eq.s32.totalorder %s14, 1
    %p74 = por %p72, %p73
    %p75 = scmp.ne.s32.totalorder %s66, %s67
    %p76 = scmp.eq.s32.totalorder %s14, 0
    %p77 = por %p75, %p76
    %p78 = scmp.ne.s32.totalorder %s66, %s67
    %p79 = scmp.eq.s32.totalorder %s15, 1
    %p80 = por %p78, %p79
    %p82 = scmp.ne.s32.totalorder %s67, %s81
    %p83 = scmp.eq.s32.totalorder %s15, 0
    %p84 = por %p82, %p83
    %s85 = ssub.s32 %s9, %s16
    %p86 = scmp.eq.s32.totalorder %s85, 0
    %s88 = sadd.s32 %s87, 1
    %s89 = scalar_select %p86, %s87, %s88
    %p92 = pneg %p86
    %p93 = scmp.eq.s32.totalorder %s9, 1
    %p94 = por %p92, %p93
    %p95 = scmp.ne.s32.totalorder %s87, %s90
    %p96 = scmp.eq.s32.totalorder %s9, 0
    %p97 = por %p95, %p96
    %p98 = scmp.ne.s32.totalorder %s87, %s90
    %p99 = scmp.eq.s32.totalorder %s14, 1
    %p100 = por %p98, %p99
    %p101 = scmp.ne.s32.totalorder %s90, %s91
    %p102 = scmp.eq.s32.totalorder %s14, 0
    %p103 = por %p101, %p102
    %p104 = scmp.ne.s32.totalorder %s90, %s91
    %p105 = scmp.eq.s32.totalorder %s15, 1
    %p106 = por %p104, %p105
    %p108 = scmp.ne.s32.totalorder %s91, %s107
    %p109 = scmp.eq.s32.totalorder %s15, 0
    %p110 = por %p108, %p109
    %p111 = scmp.le.s32.totalorder 1, %s9
    %p112 = scmp.lt.s32.totalorder %s9, 3
    %p113 = pnand %p111, %p112
    %p114 = pneg %p113
    // Predicated region
    $region9: #{_lambda_.11} parent=5 // pred_check
      _
    $region10: #{_lambda_.11} parent=5 // pred_check_branch
      %116 = sbr.rel (%p113) target = $region12
    $region11: #{_lambda_.11} parent=5 // pred_region
      %s117 = ssub.s32 %s9, 1
      // Predicated region
      $region13: #{_lambda_.11} parent=11 // pred_check
        %p118 = pneg %p56
      $region14: #{_lambda_.11} parent=11 // pred_check_branch
        %120 = sbr.rel (%p118) target = $region16
      $region15: #{_lambda_.11} parent=11 // pred_region
        _
      $region16: #{_lambda_.11} parent=11 // pred_fallthru
        _
      // Predicated region
      $region17: #{_lambda_.11} parent=11 // pred_check
        %p121 = pneg %p77
      $region18: #{_lambda_.11} parent=11 // pred_check_branch
        %123 = sbr.rel (%p121) target = $region20
      $region19: #{_lambda_.11} parent=11 // pred_region
        _
      $region20: #{_lambda_.11} parent=11 // pred_fallthru
        _
    $region12: #{_lambda_.11} parent=5 // pred_fallthru
      _
    %p124 = scmp.lt.s32.totalorder %s9, 2
    // Predicated region
    $region21: #{_lambda_.11} parent=5 // pred_check
      %p125 = pneg %p124
    $region22: #{_lambda_.11} parent=5 // pred_check_branch
      %127 = sbr.rel (%p125) target = $region24
    $region23: #{_lambda_.11} parent=5 // pred_region
      // Predicated region
      $region25: #{_lambda_.11} parent=23 // pred_check
        %p128 = pneg %p29
      $region26: #{_lambda_.11} parent=23 // pred_check_branch
        %130 = sbr.rel (%p128) target = $region28
      $region27: #{_lambda_.11} parent=23 // pred_region
        %p131 = scmp.lt.s32.totalorder %s9, 1
        %s132 = scalar_select %p131, %s9, 1
        %s133 = smul.addr %s132, 8
        %s134 = scalar_lea.vmem %s0, %s133
      $region28: #{_lambda_.11} parent=23 // pred_fallthru
        _
    $region24: #{_lambda_.11} parent=5 // pred_fallthru
      _
    %p135 = scmp.le.s32.totalorder 1, %s9
    %p136 = scmp.lt.s32.totalorder %s9, 3
    %p137 = pnand %p135, %p136
    %p138 = pneg %p137
    // Predicated region
    $region29: #{_lambda_.11} parent=5 // pred_check
      _
    $region30: #{_lambda_.11} parent=5 // pred_check_branch
      %140 = sbr.rel (%p137) target = $region32
    $region31: #{_lambda_.11} parent=5 // pred_region
      %s141 = ssub.s32 %s9, 1
      %p142 = scmp.lt.s32.totalorder %s14, 1
      %s143 = scalar_select %p142, %s14, 1
      %s144 = smul.addr %s143, 8
      %s145 = scalar_lea.vmem %s0, %s144
      %p146 = pneg %p35
      %p147 = pneg %p32
      %p148 = pneg %p56
      %p149 = pneg %p53
      %p150 = pneg %p77
      %p151 = pneg %p74
      %p152 = pneg %p103
      %p153 = pneg %p100
      %p154 = scmp.lt.s32.totalorder %s14, 1
      %s155 = scalar_select %p154, %s14, 1
      %s156 = scalar_lea.vmem %s3, %s155
      %p157 = scmp.lt.s32.totalorder %s14, 1
      %s158 = scalar_select %p157, %s14, 1
      %s159 = smul.addr %s158, 8
      %s160 = scalar_lea.vmem %s0, %s159
      %p161 = scmp.lt.s32.totalorder %s14, 1
      %s162 = scalar_select %p161, %s14, 1
      %s163 = scalar_lea.vmem %s3, %s162
      %v165 = vld [vmem:[%s160] sm:$0xff]
      %v166 = vld [vmem:[%s1] sm:$0xf]
      %v167 = vld [vmem:[%s1 + $0x4] sm:$0xf]
      %v168 = vld [vmem:[%s1 + $0x8] sm:$0xf]
      %v169 = vld [vmem:[%s1 + $0xc] sm:$0xf]
      %v170 = vld [vmem:[%s1 + $0x10] sm:$0xf]
      %v171 = vld [vmem:[%s1 + $0x14] sm:$0xf]
      %v172 = vld [vmem:[%s1 + $0x18] sm:$0xf]
      %v173 = vld [vmem:[%s1 + $0x1c] sm:$0xf]
      %v174 = vld [vmem:[%s1 + $0x20] sm:$0xf]
      %v175 = vld [vmem:[%s1 + $0x24] sm:$0xf]
      %v176 = vld [vmem:[%s1 + $0x28] sm:$0xf]
      %v177 = vld [vmem:[%s1 + $0x2c] sm:$0xf]
      %v178 = vld [vmem:[%s1 + $0x30] sm:$0xf]
      %v179 = vld [vmem:[%s1 + $0x34] sm:$0xf]
      %v180 = vld [vmem:[%s1 + $0x38] sm:$0xf]
      %v181 = vld [vmem:[%s1 + $0x3c] sm:$0xf]
      %v182 = vld [vmem:[%s1 + $0x40] sm:$0xf]
      %v183 = vld [vmem:[%s1 + $0x44] sm:$0xf]
      %v184 = vld [vmem:[%s1 + $0x48] sm:$0xf]
      %v185 = vld [vmem:[%s1 + $0x4c] sm:$0xf]
      %v186 = vld [vmem:[%s1 + $0x50] sm:$0xf]
      %v187 = vld [vmem:[%s1 + $0x54] sm:$0xf]
      %v188 = vld [vmem:[%s1 + $0x58] sm:$0xf]
      %v189 = vld [vmem:[%s1 + $0x5c] sm:$0xf]
      %v190 = vld [vmem:[%s1 + $0x60] sm:$0xf]
      %v191 = vld [vmem:[%s1 + $0x64] sm:$0xf]
      %v192 = vld [vmem:[%s1 + $0x68] sm:$0xf]
      %v193 = vld [vmem:[%s1 + $0x6c] sm:$0xf]
      %v194 = vld [vmem:[%s1 + $0x70] sm:$0xf]
      %v195 = vld [vmem:[%s1 + $0x74] sm:$0xf]
      %v196 = vld [vmem:[%s1 + $0x78] sm:$0xf]
      %v197 = vld [vmem:[%s1 + $0x7c] sm:$0xf]
      %v198 = vld [vmem:[%s1 + $0x80] sm:$0xf]
      %v199 = vld [vmem:[%s1 + $0x84] sm:$0xf]
      %v200 = vld [vmem:[%s1 + $0x88] sm:$0xf]
      %v201 = vld [vmem:[%s1 + $0x8c] sm:$0xf]
      %v202 = vld [vmem:[%s1 + $0x90] sm:$0xf]
      %v203 = vld [vmem:[%s1 + $0x94] sm:$0xf]
      %v204 = vld [vmem:[%s1 + $0x98] sm:$0xf]
      %v205 = vld [vmem:[%s1 + $0x9c] sm:$0xf]
      %v206 = vld [vmem:[%s1 + $0xa0] sm:$0xf]
      %v207 = vld [vmem:[%s1 + $0xa4] sm:$0xf]
      %v208 = vld [vmem:[%s1 + $0xa8] sm:$0xf]
      %v209 = vld [vmem:[%s1 + $0xac] sm:$0xf]
      %v210 = vld [vmem:[%s1 + $0xb0] sm:$0xf]
      %v211 = vld [vmem:[%s1 + $0xb4] sm:$0xf]
      %v212 = vld [vmem:[%s1 + $0xb8] sm:$0xf]
      %v213 = vld [vmem:[%s1 + $0xbc] sm:$0xf]
      %v214 = vld [vmem:[%s1 + $0xc0] sm:$0xf]
      %v215 = vld [vmem:[%s1 + $0xc4] sm:$0xf]
      %v216 = vld [vmem:[%s1 + $0xc8] sm:$0xf]
      %v217 = vld [vmem:[%s1 + $0xcc] sm:$0xf]
      %v218 = vld [vmem:[%s1 + $0xd0] sm:$0xf]
      %v219 = vld [vmem:[%s1 + $0xd4] sm:$0xf]
      %v220 = vld [vmem:[%s1 + $0xd8] sm:$0xf]
      %v221 = vld [vmem:[%s1 + $0xdc] sm:$0xf]
      %v222 = vld [vmem:[%s1 + $0xe0] sm:$0xf]
      %v223 = vld [vmem:[%s1 + $0xe4] sm:$0xf]
      %v224 = vld [vmem:[%s1 + $0xe8] sm:$0xf]
      %v225 = vld [vmem:[%s1 + $0xec] sm:$0xf]
      %v226 = vld [vmem:[%s1 + $0xf0] sm:$0xf]
      %v227 = vld [vmem:[%s1 + $0xf4] sm:$0xf]
      %v228 = vld [vmem:[%s1 + $0xf8] sm:$0xf]
      %v229 = vld [vmem:[%s1 + $0xfc] sm:$0xf]
      %v230 = vld [vmem:[%s1 + $0x100] sm:$0xf]
      %v231 = vld [vmem:[%s1 + $0x104] sm:$0xf]
      %v232 = vld [vmem:[%s1 + $0x108] sm:$0xf]
      %v233 = vld [vmem:[%s1 + $0x10c] sm:$0xf]
      %v234 = vld [vmem:[%s1 + $0x110] sm:$0xf]
      %v235 = vld [vmem:[%s1 + $0x114] sm:$0xf]
      %v236 = vld [vmem:[%s1 + $0x118] sm:$0xf]
      %v237 = vld [vmem:[%s1 + $0x11c] sm:$0xf]
      %v238 = vld [vmem:[%s1 + $0x120] sm:$0xf]
      %v239 = vld [vmem:[%s1 + $0x124] sm:$0xf]
      %v240 = vld [vmem:[%s1 + $0x128] sm:$0xf]
      %v241 = vld [vmem:[%s1 + $0x12c] sm:$0xf]
      %v242 = vld [vmem:[%s1 + $0x130] sm:$0xf]
      %v243 = vld [vmem:[%s1 + $0x134] sm:$0xf]
      %v244 = vld [vmem:[%s1 + $0x138] sm:$0xf]
      %v245 = vld [vmem:[%s1 + $0x13c] sm:$0xf]
      %v246 = vld [vmem:[%s1 + $0x140] sm:$0xf]
      %v247 = vld [vmem:[%s1 + $0x144] sm:$0xf]
      %v248 = vld [vmem:[%s1 + $0x148] sm:$0xf]
      %v249 = vld [vmem:[%s1 + $0x14c] sm:$0xf]
      %v250 = vld [vmem:[%s1 + $0x150] sm:$0xf]
      %v251 = vld [vmem:[%s1 + $0x154] sm:$0xf]
      %v252 = vld [vmem:[%s1 + $0x158] sm:$0xf]
      %v253 = vld [vmem:[%s1 + $0x15c] sm:$0xf]
      %v254 = vld [vmem:[%s1 + $0x160] sm:$0xf]
      %v255 = vld [vmem:[%s1 + $0x164] sm:$0xf]
      %v256 = vld [vmem:[%s1 + $0x168] sm:$0xf]
      %v257 = vld [vmem:[%s1 + $0x16c] sm:$0xf]
      %v258 = vld [vmem:[%s1 + $0x170] sm:$0xf]
      %v259 = vld [vmem:[%s1 + $0x174] sm:$0xf]
      %v260 = vld [vmem:[%s1 + $0x178] sm:$0xf]
      %v261 = vld [vmem:[%s1 + $0x17c] sm:$0xf]
      %v262 = vld [vmem:[%s1 + $0x180] sm:$0xf]
      %v263 = vld [vmem:[%s1 + $0x184] sm:$0xf]
      %v264 = vld [vmem:[%s1 + $0x188] sm:$0xf]
      %v265 = vld [vmem:[%s1 + $0x18c] sm:$0xf]
      %v266 = vld [vmem:[%s1 + $0x190] sm:$0xf]
      %v267 = vld [vmem:[%s1 + $0x194] sm:$0xf]
      %v268 = vld [vmem:[%s1 + $0x198] sm:$0xf]
      %v269 = vld [vmem:[%s1 + $0x19c] sm:$0xf]
      %v270 = vld [vmem:[%s1 + $0x1a0] sm:$0xf]
      %v271 = vld [vmem:[%s1 + $0x1a4] sm:$0xf]
      %v272 = vld [vmem:[%s1 + $0x1a8] sm:$0xf]
      %v273 = vld [vmem:[%s1 + $0x1ac] sm:$0xf]
      %v274 = vld [vmem:[%s1 + $0x1b0] sm:$0xf]
      %v275 = vld [vmem:[%s1 + $0x1b4] sm:$0xf]
      %v276 = vld [vmem:[%s1 + $0x1b8] sm:$0xf]
      %v277 = vld [vmem:[%s1 + $0x1bc] sm:$0xf]
      %v278 = vld [vmem:[%s1 + $0x1c0] sm:$0xf]
      %v279 = vld [vmem:[%s1 + $0x1c4] sm:$0xf]
      %v280 = vld [vmem:[%s1 + $0x1c8] sm:$0xf]
      %v281 = vld [vmem:[%s1 + $0x1cc] sm:$0xf]
      %v282 = vld [vmem:[%s1 + $0x1d0] sm:$0xf]
      %v283 = vld [vmem:[%s1 + $0x1d4] sm:$0xf]
      %v284 = vld [vmem:[%s1 + $0x1d8] sm:$0xf]
      %v285 = vld [vmem:[%s1 + $0x1dc] sm:$0xf]
      %v286 = vld [vmem:[%s1 + $0x1e0] sm:$0xf]
      %v287 = vld [vmem:[%s1 + $0x1e4] sm:$0xf]
      %v288 = vld [vmem:[%s1 + $0x1e8] sm:$0xf]
      %v289 = vld [vmem:[%s1 + $0x1ec] sm:$0xf]
      %v290 = vld [vmem:[%s1 + $0x1f0] sm:$0xf]
      %v291 = vld [vmem:[%s1 + $0x1f4] sm:$0xf]
      %v292 = vld [vmem:[%s1 + $0x1f8] sm:$0xf]
      %v293 = vld [vmem:[%s1 + $0x1fc] sm:$0xf]
      %v294 = vld [vmem:[%s2] sm:$0x1]
      %v296 = vcombine.high %v165, %v165
      %v298 = vunpack.c.l.s4 1966171168
      %v299 = vunpack.c.0.s8 %v298
      %v300 = vlaneseq
      %v301 = vshrl.u32 %v300, 7
      %v302 = vsub.s32 %v299, %v301
      %v303 = vrot.slane %v165, %v302
      %v305 = vunpack.c.l.s4 1966171168
      %v306 = vunpack.c.0.s8 %v305
      %v307 = vlaneseq
      %v308 = vshrl.u32 %v307, 7
      %v309 = vsub.s32 %v306, %v308
      %v310 = vrot.slane %v296, %v309
      %v311 = vcombine.high %v303, %v303
      %v312 = vcombine.high %v310, %v310
      %v314 = vunpack.c.l.s4 1966171168
      %v315 = vunpack.c.0.s8 %v314
      %v316 = vlaneseq
      %v317 = vshrl.u32 %v316, 7
      %v318 = vsub.s32 %v315, %v317
      %v319 = vrot.slane %v303, %v318
      %v321 = vunpack.c.l.s4 1966171168
      %v322 = vunpack.c.0.s8 %v321
      %v323 = vlaneseq
      %v324 = vshrl.u32 %v323, 7
      %v325 = vsub.s32 %v322, %v324
      %v326 = vrot.slane %v310, %v325
      %v328 = vunpack.c.l.s4 1966171168
      %v329 = vunpack.c.0.s8 %v328
      %v330 = vlaneseq
      %v331 = vshrl.u32 %v330, 7
      %v332 = vsub.s32 %v329, %v331
      %v333 = vrot.slane %v311, %v332
      %v335 = vunpack.c.l.s4 1966171168
      %v336 = vunpack.c.0.s8 %v335
      %v337 = vlaneseq
      %v338 = vshrl.u32 %v337, 7
      %v339 = vsub.s32 %v336, %v338
      %v340 = vrot.slane %v312, %v339
      %v341 = vcombine.high %v319, %v319
      %v342 = vcombine.high %v326, %v326
      %v343 = vcombine.high %v333, %v333
      %v344 = vcombine.high %v340, %v340
      %v481 = vunpack.c.l.b16 %v166
      %v482 = vunpack.c.l.b16 %v167
      %v483 = vunpack.c.l.b16 %v168
      %v484 = vunpack.c.l.b16 %v169
      %v485 = vunpack.c.l.b16 %v170
      %v486 = vunpack.c.l.b16 %v171
      %v487 = vunpack.c.l.b16 %v172
      %v488 = vunpack.c.l.b16 %v173
      %v489 = vunpack.c.l.b16 %v174
      %v490 = vunpack.c.l.b16 %v175
      %v491 = vunpack.c.l.b16 %v176
      %v492 = vunpack.c.l.b16 %v177
      %v493 = vunpack.c.l.b16 %v178
      %v494 = vunpack.c.l.b16 %v179
      %v495 = vunpack.c.l.b16 %v180
      %v496 = vunpack.c.l.b16 %v181
      %v497 = vunpack.c.l.b16 %v182
      %v498 = vunpack.c.l.b16 %v183
      %v499 = vunpack.c.l.b16 %v184
      %v500 = vunpack.c.l.b16 %v185
      %v501 = vunpack.c.l.b16 %v186
      %v502 = vunpack.c.l.b16 %v187
      %v503 = vunpack.c.l.b16 %v188
      %v504 = vunpack.c.l.b16 %v189
      %v505 = vunpack.c.l.b16 %v190
      %v506 = vunpack.c.l.b16 %v191
      %v507 = vunpack.c.l.b16 %v192
      %v508 = vunpack.c.l.b16 %v193
      %v509 = vunpack.c.l.b16 %v194
      %v510 = vunpack.c.l.b16 %v195
      %v511 = vunpack.c.l.b16 %v196
      %v512 = vunpack.c.l.b16 %v197
      %v513 = vunpack.c.l.b16 %v198
      %v514 = vunpack.c.l.b16 %v199
      %v515 = vunpack.c.l.b16 %v200
      %v516 = vunpack.c.l.b16 %v201
      %v517 = vunpack.c.l.b16 %v202
      %v518 = vunpack.c.l.b16 %v203
      %v519 = vunpack.c.l.b16 %v204
      %v520 = vunpack.c.l.b16 %v205
      %v521 = vunpack.c.l.b16 %v206
      %v522 = vunpack.c.l.b16 %v207
      %v523 = vunpack.c.l.b16 %v208
      %v524 = vunpack.c.l.b16 %v209
      %v525 = vunpack.c.l.b16 %v210
      %v526 = vunpack.c.l.b16 %v211
      %v527 = vunpack.c.l.b16 %v212
      %v528 = vunpack.c.l.b16 %v213
      %v529 = vunpack.c.l.b16 %v214
      %v530 = vunpack.c.l.b16 %v215
      %v531 = vunpack.c.l.b16 %v216
      %v532 = vunpack.c.l.b16 %v217
      %v533 = vunpack.c.l.b16 %v218
      %v534 = vunpack.c.l.b16 %v219
      %v535 = vunpack.c.l.b16 %v220
      %v536 = vunpack.c.l.b16 %v221
      %v537 = vunpack.c.l.b16 %v222
      %v538 = vunpack.c.l.b16 %v223
      %v539 = vunpack.c.l.b16 %v224
      %v540 = vunpack.c.l.b16 %v225
      %v541 = vunpack.c.l.b16 %v226
      %v542 = vunpack.c.l.b16 %v227
      %v543 = vunpack.c.l.b16 %v228
      %v544 = vunpack.c.l.b16 %v229
      %v545 = vunpack.c.l.b16 %v230
      %v546 = vunpack.c.l.b16 %v231
      %v547 = vunpack.c.l.b16 %v232
      %v548 = vunpack.c.l.b16 %v233
      %v549 = vunpack.c.l.b16 %v234
      %v550 = vunpack.c.l.b16 %v235
      %v551 = vunpack.c.l.b16 %v236
      %v552 = vunpack.c.l.b16 %v237
      %v553 = vunpack.c.l.b16 %v238
      %v554 = vunpack.c.l.b16 %v239
      %v555 = vunpack.c.l.b16 %v240
      %v556 = vunpack.c.l.b16 %v241
      %v557 = vunpack.c.l.b16 %v242
      %v558 = vunpack.c.l.b16 %v243
      %v559 = vunpack.c.l.b16 %v244
      %v560 = vunpack.c.l.b16 %v245
      %v561 = vunpack.c.l.b16 %v246
      %v562 = vunpack.c.l.b16 %v247
      %v563 = vunpack.c.l.b16 %v248
      %v564 = vunpack.c.l.b16 %v249
      %v565 = vunpack.c.l.b16 %v250
      %v566 = vunpack.c.l.b16 %v251
      %v567 = vunpack.c.l.b16 %v252
      %v568 = vunpack.c.l.b16 %v253
      %v569 = vunpack.c.l.b16 %v254
      %v570 = vunpack.c.l.b16 %v255
      %v571 = vunpack.c.l.b16 %v256
      %v572 = vunpack.c.l.b16 %v257
      %v573 = vunpack.c.l.b16 %v258
      %v574 = vunpack.c.l.b16 %v259
      %v575 = vunpack.c.l.b16 %v260
      %v576 = vunpack.c.l.b16 %v261
      %v577 = vunpack.c.l.b16 %v262
      %v578 = vunpack.c.l.b16 %v263
      %v579 = vunpack.c.l.b16 %v264
      %v580 = vunpack.c.l.b16 %v265
      %v581 = vunpack.c.l.b16 %v266
      %v582 = vunpack.c.l.b16 %v267
      %v583 = vunpack.c.l.b16 %v268
      %v584 = vunpack.c.l.b16 %v269
      %v585 = vunpack.c.l.b16 %v270
      %v586 = vunpack.c.l.b16 %v271
      %v587 = vunpack.c.l.b16 %v272
      %v588 = vunpack.c.l.b16 %v273
      %v589 = vunpack.c.l.b16 %v274
      %v590 = vunpack.c.l.b16 %v275
      %v591 = vunpack.c.l.b16 %v276
      %v592 = vunpack.c.l.b16 %v277
      %v593 = vunpack.c.l.b16 %v278
      %v594 = vunpack.c.l.b16 %v279
      %v595 = vunpack.c.l.b16 %v280
      %v596 = vunpack.c.l.b16 %v281
      %v597 = vunpack.c.l.b16 %v282
      %v598 = vunpack.c.l.b16 %v283
      %v599 = vunpack.c.l.b16 %v284
      %v600 = vunpack.c.l.b16 %v285
      %v601 = vunpack.c.l.b16 %v286
      %v602 = vunpack.c.l.b16 %v287
      %v603 = vunpack.c.l.b16 %v288
      %v604 = vunpack.c.l.b16 %v289
      %v605 = vunpack.c.l.b16 %v290
      %v606 = vunpack.c.l.b16 %v291
      %v607 = vunpack.c.l.b16 %v292
      %v608 = vunpack.c.l.b16 %v293
      %v609 = vpack.c.b16 %v482, %v481
      %v610 = vpack.c.b16 %v484, %v483
      %v611 = vpack.c.b16 %v486, %v485
      %v612 = vpack.c.b16 %v488, %v487
      %v613 = vpack.c.b16 %v490, %v489
      %v614 = vpack.c.b16 %v492, %v491
      %v615 = vpack.c.b16 %v494, %v493
      %v616 = vpack.c.b16 %v496, %v495
      %v617 = vpack.c.b16 %v498, %v497
      %v618 = vpack.c.b16 %v500, %v499
      %v619 = vpack.c.b16 %v502, %v501
      %v620 = vpack.c.b16 %v504, %v503
      %v621 = vpack.c.b16 %v506, %v505
      %v622 = vpack.c.b16 %v508, %v507
      %v623 = vpack.c.b16 %v510, %v509
      %v624 = vpack.c.b16 %v512, %v511
      %v625 = vpack.c.b16 %v514, %v513
      %v626 = vpack.c.b16 %v516, %v515
      %v627 = vpack.c.b16 %v518, %v517
      %v628 = vpack.c.b16 %v520, %v519
      %v629 = vpack.c.b16 %v522, %v521
      %v630 = vpack.c.b16 %v524, %v523
      %v631 = vpack.c.b16 %v526, %v525
      %v632 = vpack.c.b16 %v528, %v527
      %v633 = vpack.c.b16 %v530, %v529
      %v634 = vpack.c.b16 %v532, %v531
      %v635 = vpack.c.b16 %v534, %v533
      %v636 = vpack.c.b16 %v536, %v535
      %v637 = vpack.c.b16 %v538, %v537
      %v638 = vpack.c.b16 %v540, %v539
      %v639 = vpack.c.b16 %v542, %v541
      %v640 = vpack.c.b16 %v544, %v543
      %v641 = vpack.c.b16 %v546, %v545
      %v642 = vpack.c.b16 %v548, %v547
      %v643 = vpack.c.b16 %v550, %v549
      %v644 = vpack.c.b16 %v552, %v551
      %v645 = vpack.c.b16 %v554, %v553
      %v646 = vpack.c.b16 %v556, %v555
      %v647 = vpack.c.b16 %v558, %v557
      %v648 = vpack.c.b16 %v560, %v559
      %v649 = vpack.c.b16 %v562, %v561
      %v650 = vpack.c.b16 %v564, %v563
      %v651 = vpack.c.b16 %v566, %v565
      %v652 = vpack.c.b16 %v568, %v567
      %v653 = vpack.c.b16 %v570, %v569
      %v654 = vpack.c.b16 %v572, %v571
      %v655 = vpack.c.b16 %v574, %v573
      %v656 = vpack.c.b16 %v576, %v575
      %v657 = vpack.c.b16 %v578, %v577
      %v658 = vpack.c.b16 %v580, %v579
      %v659 = vpack.c.b16 %v582, %v581
      %v660 = vpack.c.b16 %v584, %v583
      %v661 = vpack.c.b16 %v586, %v585
      %v662 = vpack.c.b16 %v588, %v587
      %v663 = vpack.c.b16 %v590, %v589
      %v664 = vpack.c.b16 %v592, %v591
      %v665 = vpack.c.b16 %v594, %v593
      %v666 = vpack.c.b16 %v596, %v595
      %v667 = vpack.c.b16 %v598, %v597
      %v668 = vpack.c.b16 %v600, %v599
      %v669 = vpack.c.b16 %v602, %v601
      %v670 = vpack.c.b16 %v604, %v603
      %v671 = vpack.c.b16 %v606, %v605
      %v672 = vpack.c.b16 %v608, %v607
      %737 = vmatprep.subr.bf16.mxu0 0
      %738 = vmatpush1.bf16.msra.mxu0 %v616
      %739 = vmatprep.subr.bf16.mxu0 0
      %740 = vmatpush1.bf16.msra.mxu0 %v615
      %741 = vmatprep.subr.bf16.mxu0 0
      %742 = vmatpush1.bf16.msra.mxu0 %v614
      %743 = vmatprep.subr.bf16.mxu0 0
      %744 = vmatpush1.bf16.msra.mxu0 %v613
      %745 = vmatprep.subr.bf16.mxu0 0
      %746 = vmatpush1.bf16.msra.mxu0 %v612
      %747 = vmatprep.subr.bf16.mxu0 0
      %748 = vmatpush1.bf16.msra.mxu0 %v611
      %749 = vmatprep.subr.bf16.mxu0 0
      %750 = vmatpush1.bf16.msra.mxu0 %v610
      %751 = vmatprep.subr.bf16.mxu0 0
      %752 = vmatpush1.bf16.msra.mxu0 %v609
      %753 = vmatprep.subr.bf16.mxu0 0
      %754 = vmatpush2.bf16.msra.mxu0 %v624
      %755 = vmatprep.subr.bf16.mxu0 0
      %756 = vmatpush2.bf16.msra.mxu0 %v623
      %757 = vmatprep.subr.bf16.mxu0 0
      %758 = vmatpush2.bf16.msra.mxu0 %v622
      %759 = vmatprep.subr.bf16.mxu0 0
      %760 = vmatpush2.bf16.msra.mxu0 %v621
      %761 = vmatprep.subr.bf16.mxu0 0
      %762 = vmatpush2.bf16.msra.mxu0 %v620
      %763 = vmatprep.subr.bf16.mxu0 0
      %764 = vmatpush2.bf16.msra.mxu0 %v619
      %765 = vmatprep.subr.bf16.mxu0 0
      %766 = vmatpush2.bf16.msra.mxu0 %v618
      %767 = vmatprep.subr.bf16.mxu0 0
      %768 = vmatpush2.bf16.msra.mxu0 %v617
      %769 = vmatprep.mubr.bf16.mxu0 %v333
      %770 = vmatmul.mubr.bf16.gmra.mxu0 %v319
      %v771 = vpop.f32.mrf.mxu0
      %v772 = vadd.f32 %v294, %v771
      %v773 = vpop.f32.mrf.mxu0
      %v774 = vpop.f32.mrf.mxu0
      %v775 = vpop.f32.mrf.mxu0
      %776 = vdwg.mxu0
      %777 = vmatprep.subr.bf16.mxu0 0
      %778 = vmatpush1.bf16.msra.mxu0 %v632
      %779 = vmatprep.subr.bf16.mxu0 0
      %780 = vmatpush1.bf16.msra.mxu0 %v631
      %781 = vmatprep.subr.bf16.mxu0 0
      %782 = vmatpush1.bf16.msra.mxu0 %v630
      %783 = vmatprep.subr.bf16.mxu0 0
      %784 = vmatpush1.bf16.msra.mxu0 %v629
      %785 = vmatprep.subr.bf16.mxu0 0
      %786 = vmatpush1.bf16.msra.mxu0 %v628
      %787 = vmatprep.subr.bf16.mxu0 0
      %788 = vmatpush1.bf16.msra.mxu0 %v627
      %789 = vmatprep.subr.bf16.mxu0 0
      %790 = vmatpush1.bf16.msra.mxu0 %v626
      %791 = vmatprep.subr.bf16.mxu0 0
      %792 = vmatpush1.bf16.msra.mxu0 %v625
      %793 = vmatprep.subr.bf16.mxu0 0
      %794 = vmatpush2.bf16.msra.mxu0 %v640
      %795 = vmatprep.subr.bf16.mxu0 0
      %796 = vmatpush2.bf16.msra.mxu0 %v639
      %797 = vmatprep.subr.bf16.mxu0 0
      %798 = vmatpush2.bf16.msra.mxu0 %v638
      %799 = vmatprep.subr.bf16.mxu0 0
      %800 = vmatpush2.bf16.msra.mxu0 %v637
      %801 = vmatprep.subr.bf16.mxu0 0
      %802 = vmatpush2.bf16.msra.mxu0 %v636
      %803 = vmatprep.subr.bf16.mxu0 0
      %804 = vmatpush2.bf16.msra.mxu0 %v635
      %805 = vmatprep.subr.bf16.mxu0 0
      %806 = vmatpush2.bf16.msra.mxu0 %v634
      %807 = vmatprep.subr.bf16.mxu0 0
      %808 = vmatpush2.bf16.msra.mxu0 %v633
      %809 = vmatprep.mubr.bf16.mxu0 %v343
      %810 = vmatmul.mubr.bf16.gmra.mxu0 %v341
      %v811 = vpop.f32.mrf.mxu0
      %v812 = vadd.f32 %v772, %v811
      %v813 = vpop.f32.mrf.mxu0
      %v814 = vpop.f32.mrf.mxu0
      %v815 = vpop.f32.mrf.mxu0
      %816 = vdwg.mxu0
      %817 = vmatprep.subr.bf16.mxu0 0
      %818 = vmatpush1.bf16.msra.mxu0 %v648
      %819 = vmatprep.subr.bf16.mxu0 0
      %820 = vmatpush1.bf16.msra.mxu0 %v647
      %821 = vmatprep.subr.bf16.mxu0 0
      %822 = vmatpush1.bf16.msra.mxu0 %v646
      %823 = vmatprep.subr.bf16.mxu0 0
      %824 = vmatpush1.bf16.msra.mxu0 %v645
      %825 = vmatprep.subr.bf16.mxu0 0
      %826 = vmatpush1.bf16.msra.mxu0 %v644
      %827 = vmatprep.subr.bf16.mxu0 0
      %828 = vmatpush1.bf16.msra.mxu0 %v643
      %829 = vmatprep.subr.bf16.mxu0 0
      %830 = vmatpush1.bf16.msra.mxu0 %v642
      %831 = vmatprep.subr.bf16.mxu0 0
      %832 = vmatpush1.bf16.msra.mxu0 %v641
      %833 = vmatprep.subr.bf16.mxu0 0
      %834 = vmatpush2.bf16.msra.mxu0 %v656
      %835 = vmatprep.subr.bf16.mxu0 0
      %836 = vmatpush2.bf16.msra.mxu0 %v655
      %837 = vmatprep.subr.bf16.mxu0 0
      %838 = vmatpush2.bf16.msra.mxu0 %v654
      %839 = vmatprep.subr.bf16.mxu0 0
      %840 = vmatpush2.bf16.msra.mxu0 %v653
      %841 = vmatprep.subr.bf16.mxu0 0
      %842 = vmatpush2.bf16.msra.mxu0 %v652
      %843 = vmatprep.subr.bf16.mxu0 0
      %844 = vmatpush2.bf16.msra.mxu0 %v651
      %845 = vmatprep.subr.bf16.mxu0 0
      %846 = vmatpush2.bf16.msra.mxu0 %v650
      %847 = vmatprep.subr.bf16.mxu0 0
      %848 = vmatpush2.bf16.msra.mxu0 %v649
      %849 = vmatprep.mubr.bf16.mxu0 %v340
      %850 = vmatmul.mubr.bf16.gmra.mxu0 %v326
      %v851 = vpop.f32.mrf.mxu0
      %v852 = vadd.f32 %v812, %v851
      %v853 = vpop.f32.mrf.mxu0
      %v854 = vpop.f32.mrf.mxu0
      %v855 = vpop.f32.mrf.mxu0
      %856 = vdwg.mxu0
      %857 = vmatprep.subr.bf16.mxu0 0
      %858 = vmatpush1.bf16.msra.mxu0 %v664
      %859 = vmatprep.subr.bf16.mxu0 0
      %860 = vmatpush1.bf16.msra.mxu0 %v663
      %861 = vmatprep.subr.bf16.mxu0 0
      %862 = vmatpush1.bf16.msra.mxu0 %v662
      %863 = vmatprep.subr.bf16.mxu0 0
      %864 = vmatpush1.bf16.msra.mxu0 %v661
      %865 = vmatprep.subr.bf16.mxu0 0
      %866 = vmatpush1.bf16.msra.mxu0 %v660
      %867 = vmatprep.subr.bf16.mxu0 0
      %868 = vmatpush1.bf16.msra.mxu0 %v659
      %869 = vmatprep.subr.bf16.mxu0 0
      %870 = vmatpush1.bf16.msra.mxu0 %v658
      %871 = vmatprep.subr.bf16.mxu0 0
      %872 = vmatpush1.bf16.msra.mxu0 %v657
      %873 = vmatprep.subr.bf16.mxu0 0
      %874 = vmatpush2.bf16.msra.mxu0 %v672
      %875 = vmatprep.subr.bf16.mxu0 0
      %876 = vmatpush2.bf16.msra.mxu0 %v671
      %877 = vmatprep.subr.bf16.mxu0 0
      %878 = vmatpush2.bf16.msra.mxu0 %v670
      %879 = vmatprep.subr.bf16.mxu0 0
      %880 = vmatpush2.bf16.msra.mxu0 %v669
      %881 = vmatprep.subr.bf16.mxu0 0
      %882 = vmatpush2.bf16.msra.mxu0 %v668
      %883 = vmatprep.subr.bf16.mxu0 0
      %884 = vmatpush2.bf16.msra.mxu0 %v667
      %885 = vmatprep.subr.bf16.mxu0 0
      %886 = vmatpush2.bf16.msra.mxu0 %v666
      %887 = vmatprep.subr.bf16.mxu0 0
      %888 = vmatpush2.bf16.msra.mxu0 %v665
      %889 = vmatprep.mubr.bf16.mxu0 %v344
      %890 = vmatmul.mubr.bf16.gmra.mxu0 %v342
      %v891 = vpop.f32.mrf.mxu0
      %v892 = vadd.f32 %v852, %v891
      %v893 = vpop.f32.mrf.mxu0
      %v894 = vpop.f32.mrf.mxu0
      %v895 = vpop.f32.mrf.mxu0
      %896 = vdwg.mxu0
      %v897 = vpack.c.bf16 %v892, %v892
      %vm898 = vcmask 1040384
      %vm899 = vsmask.f32 256
      %vm900 = vmand %vm898, %vm899
      %v901 = vld [vmem:[%s163] sm:$0x1]
      %v902 = vsel %vm900, %v897, %v901
      %903 = vst [vmem:[%s163] sm:$0x1] %v902
      %p904 = scmp.lt.s32.totalorder %s14, 1
      %s905 = scalar_select %p904, %s14, 1
      %s906 = scalar_lea.vmem %s3, %s905
      // Predicated region
      $region33: #{_lambda_.11} parent=31 // pred_check
        %p907 = pneg %p100
      $region34: #{_lambda_.11} parent=31 // pred_check_branch
        %909 = sbr.rel (%p907) target = $region36
      $region35: #{_lambda_.11} parent=31 // pred_region
        _
      $region36: #{_lambda_.11} parent=31 // pred_fallthru
        _
    $region32: #{_lambda_.11} parent=5 // pred_fallthru
      _
    %p910 = scmp.le.s32.totalorder 2, %s9
    // Predicated region
    $region37: #{_lambda_.11} parent=5 // pred_check
      %p911 = pneg %p910
    $region38: #{_lambda_.11} parent=5 // pred_check_branch
      %913 = sbr.rel (%p911) target = $region40
    $region39: #{_lambda_.11} parent=5 // pred_region
      %s914 = ssub.s32 %s9, 2
      // Predicated region
      $region41: #{_lambda_.11} parent=39 // pred_check
        %p915 = pneg %p106
      $region42: #{_lambda_.11} parent=39 // pred_check_branch
        %917 = sbr.rel (%p915) target = $region44
      $region43: #{_lambda_.11} parent=39 // pred_region
        %p918 = scmp.lt.s32.totalorder %s15, 1
        %s919 = scalar_select %p918, %s15, 1
        %s920 = scalar_lea.vmem %s3, %s919
      $region44: #{_lambda_.11} parent=39 // pred_fallthru
        _
    $region40: #{_lambda_.11} parent=5 // pred_fallthru
      _
  $region6: #{_lambda_.11} parent=0 // loop_footer
    %s13 = sadd.s32 1, %s9
  $region7: #{_lambda_.11} parent=0 // loop_footer_branch
    %8 = sbr.rel target = $region3
  $region8: #{_lambda_.11} parent=0 // loop_exit
    _

// kernel: _lambda_.12
$region0: #{_lambda_.12}
  #allocation0 [shape = 'u32[]', space=smem, size = 0x4, offset = 0x4, fixed_abs, tag = 'smem constant byte address 0x4 - core index']
  #allocation1 [shape = 'u32[144,128]{1,0:T(1,128)}', space=vmem, size = 0x12000, scoped, tag = 'internal scratch']
  %s0 = inlined_call_operand.vmem [shape: bf16[2,4,1,256], index: 0, kind: input, shape index: {}]
  %s1 = inlined_call_operand.vmem [shape: bf16[4,256,128], index: 1, kind: input, shape index: {}]
  %s2 = inlined_call_operand.vmem [shape: bf16[2,4,1,128], index: 2, kind: output, shape index: {}]
  %s3 = sld [smem:[#allocation0]]
  $region41: #{_lambda_.12} parent=0
    _
  %s5 = ssub.s32 1, %s3
  %s6 = scalar_select 0, %s5, %s3
  loop: start=0, step=1, limit=4
  $region2: #{_lambda_.12} parent=0 // loop_pre_header
    _
  $region3: #{_lambda_.12} parent=0 // loop_header
    %s8 = sphi 0, %s12
    %p9 = scmp.ge.s32.totalorder %s8, 4
    %s18 = sphi 0, %s20
    %s21 = sphi 0, %s18
    %s22 = sphi 0, %s21
    %s38 = sphi 0, %s22
    %s42 = sphi 0, %s42
    %s44 = sphi 0, %s42
    %s45 = sphi 0, %s44
    %s59 = sphi 0, %s45
    %s65 = sphi 0, %s67
    %s68 = sphi 0, %s65
    %s69 = sphi 0, %s68
    %s85 = sphi 0, %s69
  $region4: #{_lambda_.12} parent=0 // loop_header_branch
    %11 = sbr.rel (%p9) target = $region8
  $region5: #{_lambda_.12} parent=0 // loop_body
    %s13 = ssub.s32 %s8, 1
    %s14 = ssub.s32 %s8, 2
    %s15 = sadd.s32 %s8, 1
    %s16 = ssub.s32 %s8, %s15
    %p17 = scmp.eq.s32.totalorder %s16, 0
    %s19 = sadd.s32 %s18, 1
    %s20 = scalar_select %p17, %s18, %s19
    %p23 = pneg %p17
    %p24 = scmp.eq.s32.totalorder %s8, 1
    %p25 = por %p23, %p24
    %p26 = scmp.ne.s32.totalorder %s18, %s21
    %p27 = scmp.eq.s32.totalorder %s8, 0
    %p28 = por %p26, %p27
    %p29 = scmp.ne.s32.totalorder %s18, %s21
    %p30 = scmp.eq.s32.totalorder %s13, 1
    %p31 = por %p29, %p30
    %p32 = scmp.ne.s32.totalorder %s21, %s22
    %p33 = scmp.eq.s32.totalorder %s13, 0
    %p34 = por %p32, %p33
    %p35 = scmp.ne.s32.totalorder %s21, %s22
    %p36 = scmp.eq.s32.totalorder %s14, 1
    %p37 = por %p35, %p36
    %p39 = scmp.ne.s32.totalorder %s22, %s38
    %p40 = scmp.eq.s32.totalorder %s14, 0
    %p41 = por %p39, %p40
    %s43 = sadd.s32 %s42, 1
    %p46 = scmp.eq.s32.totalorder %s8, 1
    %p47 = scmp.ne.s32.totalorder %s42, %s44
    %p48 = scmp.eq.s32.totalorder %s8, 0
    %p49 = por %p47, %p48
    %p50 = scmp.ne.s32.totalorder %s42, %s44
    %p51 = scmp.eq.s32.totalorder %s13, 1
    %p52 = por %p50, %p51
    %p53 = scmp.ne.s32.totalorder %s44, %s45
    %p54 = scmp.eq.s32.totalorder %s13, 0
    %p55 = por %p53, %p54
    %p56 = scmp.ne.s32.totalorder %s44, %s45
    %p57 = scmp.eq.s32.totalorder %s14, 1
    %p58 = por %p56, %p57
    %p60 = scmp.ne.s32.totalorder %s45, %s59
    %p61 = scmp.eq.s32.totalorder %s14, 0
    %p62 = por %p60, %p61
    %s63 = ssub.s32 %s8, %s15
    %p64 = scmp.eq.s32.totalorder %s63, 0
    %s66 = sadd.s32 %s65, 1
    %s67 = scalar_select %p64, %s65, %s66
    %p70 = pneg %p64
    %p71 = scmp.eq.s32.totalorder %s8, 1
    %p72 = por %p70, %p71
    %p73 = scmp.ne.s32.totalorder %s65, %s68
    %p74 = scmp.eq.s32.totalorder %s8, 0
    %p75 = por %p73, %p74
    %p76 = scmp.ne.s32.totalorder %s65, %s68
    %p77 = scmp.eq.s32.totalorder %s13, 1
    %p78 = por %p76, %p77
    %p79 = scmp.ne.s32.totalorder %s68, %s69
    %p80 = scmp.eq.s32.totalorder %s13, 0
    %p81 = por %p79, %p80
    %p82 = scmp.ne.s32.totalorder %s68, %s69
    %p83 = scmp.eq.s32.totalorder %s14, 1
    %p84 = por %p82, %p83
    %p86 = scmp.ne.s32.totalorder %s69, %s85
    %p87 = scmp.eq.s32.totalorder %s14, 0
    %p88 = por %p86, %p87
    %p89 = scmp.le.s32.totalorder 1, %s8
    %p90 = scmp.lt.s32.totalorder %s8, 3
    %p91 = pnand %p89, %p90
    %p92 = pneg %p91
    // Predicated region
    $region9: #{_lambda_.12} parent=5 // pred_check
      _
    $region10: #{_lambda_.12} parent=5 // pred_check_branch
      %94 = sbr.rel (%p91) target = $region12
    $region11: #{_lambda_.12} parent=5 // pred_region
      %s95 = ssub.s32 %s8, 1
      // Predicated region
      $region13: #{_lambda_.12} parent=11 // pred_check
        %p96 = pneg %p55
      $region14: #{_lambda_.12} parent=11 // pred_check_branch
        %98 = sbr.rel (%p96) target = $region16
      $region15: #{_lambda_.12} parent=11 // pred_region
        _
      $region16: #{_lambda_.12} parent=11 // pred_fallthru
        _
    $region12: #{_lambda_.12} parent=5 // pred_fallthru
      _
    %p99 = scmp.lt.s32.totalorder %s8, 2
    // Predicated region
    $region17: #{_lambda_.12} parent=5 // pred_check
      %p100 = pneg %p99
    $region18: #{_lambda_.12} parent=5 // pred_check_branch
      %102 = sbr.rel (%p100) target = $region20
    $region19: #{_lambda_.12} parent=5 // pred_region
      // Predicated region
      $region21: #{_lambda_.12} parent=19 // pred_check
        %p103 = pneg %p28
      $region22: #{_lambda_.12} parent=19 // pred_check_branch
        %105 = sbr.rel (%p103) target = $region24
      $region23: #{_lambda_.12} parent=19 // pred_region
        %p106 = scmp.lt.s32.totalorder %s8, 1
        %s107 = scalar_select %p106, %s8, 1
        %s108 = smul.addr %s107, 8
        %s109 = scalar_lea.vmem %s0, %s108
      $region24: #{_lambda_.12} parent=19 // pred_fallthru
        _
    $region20: #{_lambda_.12} parent=5 // pred_fallthru
      _
    %p110 = scmp.le.s32.totalorder 1, %s8
    %p111 = scmp.lt.s32.totalorder %s8, 3
    %p112 = pnand %p110, %p111
    %p113 = pneg %p112
    // Predicated region
    $region25: #{_lambda_.12} parent=5 // pred_check
      _
    $region26: #{_lambda_.12} parent=5 // pred_check_branch
      %115 = sbr.rel (%p112) target = $region28
    $region27: #{_lambda_.12} parent=5 // pred_region
      %s116 = ssub.s32 %s8, 1
      %p117 = scmp.lt.s32.totalorder %s13, 1
      %s118 = scalar_select %p117, %s13, 1
      %s119 = smul.addr %s118, 8
      %s120 = scalar_lea.vmem %s0, %s119
      %p121 = pneg %p34
      %p122 = pneg %p31
      %p123 = pneg %p55
      %p124 = pneg %p52
      %p125 = pneg %p81
      %p126 = pneg %p78
      %p127 = scmp.lt.s32.totalorder %s13, 1
      %s128 = scalar_select %p127, %s13, 1
      %s129 = smul.addr %s128, 4
      %s130 = scalar_lea.vmem %s2, %s129
      %p131 = scmp.lt.s32.totalorder %s13, 1
      %s132 = scalar_select %p131, %s13, 1
      %s133 = smul.addr %s132, 8
      %s134 = scalar_lea.vmem %s0, %s133
      %p135 = scmp.lt.s32.totalorder %s13, 1
      %s136 = scalar_select %p135, %s13, 1
      %s137 = smul.addr %s136, 4
      %s138 = scalar_lea.vmem %s2, %s137
      %v140 = vld [vmem:[%s134] sm:$0x3]
      %v141 = vld [vmem:[%s1] sm:$0xf]
      %v142 = vld [vmem:[%s1 + $0x4] sm:$0xf]
      %v143 = vld [vmem:[%s1 + $0x8] sm:$0xf]
      %v144 = vld [vmem:[%s1 + $0xc] sm:$0xf]
      %v145 = vld [vmem:[%s1 + $0x10] sm:$0xf]
      %v146 = vld [vmem:[%s1 + $0x14] sm:$0xf]
      %v147 = vld [vmem:[%s1 + $0x18] sm:$0xf]
      %v148 = vld [vmem:[%s1 + $0x1c] sm:$0xf]
      %v149 = vld [vmem:[%s1 + $0x20] sm:$0xf]
      %v150 = vld [vmem:[%s1 + $0x24] sm:$0xf]
      %v151 = vld [vmem:[%s1 + $0x28] sm:$0xf]
      %v152 = vld [vmem:[%s1 + $0x2c] sm:$0xf]
      %v153 = vld [vmem:[%s1 + $0x30] sm:$0xf]
      %v154 = vld [vmem:[%s1 + $0x34] sm:$0xf]
      %v155 = vld [vmem:[%s1 + $0x38] sm:$0xf]
      %v156 = vld [vmem:[%s1 + $0x3c] sm:$0xf]
      %v157 = vld [vmem:[%s1 + $0x40] sm:$0xf]
      %v158 = vld [vmem:[%s1 + $0x44] sm:$0xf]
      %v159 = vld [vmem:[%s1 + $0x48] sm:$0xf]
      %v160 = vld [vmem:[%s1 + $0x4c] sm:$0xf]
      %v161 = vld [vmem:[%s1 + $0x50] sm:$0xf]
      %v162 = vld [vmem:[%s1 + $0x54] sm:$0xf]
      %v163 = vld [vmem:[%s1 + $0x58] sm:$0xf]
      %v164 = vld [vmem:[%s1 + $0x5c] sm:$0xf]
      %v165 = vld [vmem:[%s1 + $0x60] sm:$0xf]
      %v166 = vld [vmem:[%s1 + $0x64] sm:$0xf]
      %v167 = vld [vmem:[%s1 + $0x68] sm:$0xf]
      %v168 = vld [vmem:[%s1 + $0x6c] sm:$0xf]
      %v169 = vld [vmem:[%s1 + $0x70] sm:$0xf]
      %v170 = vld [vmem:[%s1 + $0x74] sm:$0xf]
      %v171 = vld [vmem:[%s1 + $0x78] sm:$0xf]
      %v172 = vld [vmem:[%s1 + $0x7c] sm:$0xf]
      %v175 = vunpack.c.l.s4 1966171168
      %v176 = vunpack.c.0.s8 %v175
      %v177 = vlaneseq
      %v178 = vshrl.u32 %v177, 7
      %v179 = vsub.s32 %v176, %v178
      %v180 = vrot.slane %v140, %v179
      %v181 = vcombine.high %v180, %v180
      %v183 = vunpack.c.l.s4 1966171168
      %v184 = vunpack.c.0.s8 %v183
      %v185 = vlaneseq
      %v186 = vshrl.u32 %v185, 7
      %v187 = vsub.s32 %v184, %v186
      %v188 = vrot.slane %v180, %v187
      %v190 = vunpack.c.l.s4 1966171168
      %v191 = vunpack.c.0.s8 %v190
      %v192 = vlaneseq
      %v193 = vshrl.u32 %v192, 7
      %v194 = vsub.s32 %v191, %v193
      %v195 = vrot.slane %v181, %v194
      %v230 = vunpack.c.l.b16 %v141
      %v231 = vunpack.c.l.b16 %v142
      %v232 = vunpack.c.l.b16 %v143
      %v233 = vunpack.c.l.b16 %v144
      %v234 = vunpack.c.l.b16 %v145
      %v235 = vunpack.c.l.b16 %v146
      %v236 = vunpack.c.l.b16 %v147
      %v237 = vunpack.c.l.b16 %v148
      %v238 = vunpack.c.l.b16 %v149
      %v239 = vunpack.c.l.b16 %v150
      %v240 = vunpack.c.l.b16 %v151
      %v241 = vunpack.c.l.b16 %v152
      %v242 = vunpack.c.l.b16 %v153
      %v243 = vunpack.c.l.b16 %v154
      %v244 = vunpack.c.l.b16 %v155
      %v245 = vunpack.c.l.b16 %v156
      %v246 = vunpack.c.l.b16 %v157
      %v247 = vunpack.c.l.b16 %v158
      %v248 = vunpack.c.l.b16 %v159
      %v249 = vunpack.c.l.b16 %v160
      %v250 = vunpack.c.l.b16 %v161
      %v251 = vunpack.c.l.b16 %v162
      %v252 = vunpack.c.l.b16 %v163
      %v253 = vunpack.c.l.b16 %v164
      %v254 = vunpack.c.l.b16 %v165
      %v255 = vunpack.c.l.b16 %v166
      %v256 = vunpack.c.l.b16 %v167
      %v257 = vunpack.c.l.b16 %v168
      %v258 = vunpack.c.l.b16 %v169
      %v259 = vunpack.c.l.b16 %v170
      %v260 = vunpack.c.l.b16 %v171
      %v261 = vunpack.c.l.b16 %v172
      %v262 = vpack.c.b16 %v231, %v230
      %v263 = vpack.c.b16 %v233, %v232
      %v264 = vpack.c.b16 %v235, %v234
      %v265 = vpack.c.b16 %v237, %v236
      %v266 = vpack.c.b16 %v239, %v238
      %v267 = vpack.c.b16 %v241, %v240
      %v268 = vpack.c.b16 %v243, %v242
      %v269 = vpack.c.b16 %v245, %v244
      %v270 = vpack.c.b16 %v247, %v246
      %v271 = vpack.c.b16 %v249, %v248
      %v272 = vpack.c.b16 %v251, %v250
      %v273 = vpack.c.b16 %v253, %v252
      %v274 = vpack.c.b16 %v255, %v254
      %v275 = vpack.c.b16 %v257, %v256
      %v276 = vpack.c.b16 %v259, %v258
      %v277 = vpack.c.b16 %v261, %v260
      %294 = vmatprep.subr.bf16.mxu0 0
      %295 = vmatpush1.bf16.msra.mxu0 %v269
      %296 = vmatprep.subr.bf16.mxu0 0
      %297 = vmatpush1.bf16.msra.mxu0 %v268
      %298 = vmatprep.subr.bf16.mxu0 0
      %299 = vmatpush1.bf16.msra.mxu0 %v267
      %300 = vmatprep.subr.bf16.mxu0 0
      %301 = vmatpush1.bf16.msra.mxu0 %v266
      %302 = vmatprep.subr.bf16.mxu0 0
      %303 = vmatpush1.bf16.msra.mxu0 %v265
      %304 = vmatprep.subr.bf16.mxu0 0
      %305 = vmatpush1.bf16.msra.mxu0 %v264
      %306 = vmatprep.subr.bf16.mxu0 0
      %307 = vmatpush1.bf16.msra.mxu0 %v263
      %308 = vmatprep.subr.bf16.mxu0 0
      %309 = vmatpush1.bf16.msra.mxu0 %v262
      %310 = vmatprep.subr.bf16.mxu0 0
      %311 = vmatpush2.bf16.msra.mxu0 %v277
      %312 = vmatprep.subr.bf16.mxu0 0
      %313 = vmatpush2.bf16.msra.mxu0 %v276
      %314 = vmatprep.subr.bf16.mxu0 0
      %315 = vmatpush2.bf16.msra.mxu0 %v275
      %316 = vmatprep.subr.bf16.mxu0 0
      %317 = vmatpush2.bf16.msra.mxu0 %v274
      %318 = vmatprep.subr.bf16.mxu0 0
      %319 = vmatpush2.bf16.msra.mxu0 %v273
      %320 = vmatprep.subr.bf16.mxu0 0
      %321 = vmatpush2.bf16.msra.mxu0 %v272
      %322 = vmatprep.subr.bf16.mxu0 0
      %323 = vmatpush2.bf16.msra.mxu0 %v271
      %324 = vmatprep.subr.bf16.mxu0 0
      %325 = vmatpush2.bf16.msra.mxu0 %v270
      %326 = vmatprep.mubr.bf16.mxu0 %v195
      %327 = vmatmul.mubr.bf16.gmra.mxu0 %v188
      %v328 = vpop.f32.mrf.mxu0
      %v329 = vadd.f32 0.0, %v328
      %v330 = vpop.f32.mrf.mxu0
      %v331 = vpop.f32.mrf.mxu0
      %v332 = vpop.f32.mrf.mxu0
      %333 = vdwg.mxu0
      %s334 = scalar_lea.vmem %s134, 2
      %v335 = vld [vmem:[%s334] sm:$0x3]
      %s336 = scalar_lea.vmem %s1, 128
      %v337 = vld [vmem:[%s336] sm:$0xf]
      %v338 = vld [vmem:[%s336 + $0x4] sm:$0xf]
      %v339 = vld [vmem:[%s336 + $0x8] sm:$0xf]
      %v340 = vld [vmem:[%s336 + $0xc] sm:$0xf]
      %v341 = vld [vmem:[%s336 + $0x10] sm:$0xf]
      %v342 = vld [vmem:[%s336 + $0x14] sm:$0xf]
      %v343 = vld [vmem:[%s336 + $0x18] sm:$0xf]
      %v344 = vld [vmem:[%s336 + $0x1c] sm:$0xf]
      %v345 = vld [vmem:[%s336 + $0x20] sm:$0xf]
      %v346 = vld [vmem:[%s336 + $0x24] sm:$0xf]
      %v347 = vld [vmem:[%s336 + $0x28] sm:$0xf]
      %v348 = vld [vmem:[%s336 + $0x2c] sm:$0xf]
      %v349 = vld [vmem:[%s336 + $0x30] sm:$0xf]
      %v350 = vld [vmem:[%s336 + $0x34] sm:$0xf]
      %v351 = vld [vmem:[%s336 + $0x38] sm:$0xf]
      %v352 = vld [vmem:[%s336 + $0x3c] sm:$0xf]
      %v353 = vld [vmem:[%s336 + $0x40] sm:$0xf]
      %v354 = vld [vmem:[%s336 + $0x44] sm:$0xf]
      %v355 = vld [vmem:[%s336 + $0x48] sm:$0xf]
      %v356 = vld [vmem:[%s336 + $0x4c] sm:$0xf]
      %v357 = vld [vmem:[%s336 + $0x50] sm:$0xf]
      %v358 = vld [vmem:[%s336 + $0x54] sm:$0xf]
      %v359 = vld [vmem:[%s336 + $0x58] sm:$0xf]
      %v360 = vld [vmem:[%s336 + $0x5c] sm:$0xf]
      %v361 = vld [vmem:[%s336 + $0x60] sm:$0xf]
      %v362 = vld [vmem:[%s336 + $0x64] sm:$0xf]
      %v363 = vld [vmem:[%s336 + $0x68] sm:$0xf]
      %v364 = vld [vmem:[%s336 + $0x6c] sm:$0xf]
      %v365 = vld [vmem:[%s336 + $0x70] sm:$0xf]
      %v366 = vld [vmem:[%s336 + $0x74] sm:$0xf]
      %v367 = vld [vmem:[%s336 + $0x78] sm:$0xf]
      %v368 = vld [vmem:[%s336 + $0x7c] sm:$0xf]
      %v371 = vunpack.c.l.s4 1966171168
      %v372 = vunpack.c.0.s8 %v371
      %v373 = vlaneseq
      %v374 = vshrl.u32 %v373, 7
      %v375 = vsub.s32 %v372, %v374
      %v376 = vrot.slane %v335, %v375
      %v377 = vcombine.high %v376, %v376
      %v379 = vunpack.c.l.s4 1966171168
      %v380 = vunpack.c.0.s8 %v379
      %v381 = vlaneseq
      %v382 = vshrl.u32 %v381, 7
      %v383 = vsub.s32 %v380, %v382
      %v384 = vrot.slane %v376, %v383
      %v386 = vunpack.c.l.s4 1966171168
      %v387 = vunpack.c.0.s8 %v386
      %v388 = vlaneseq
      %v389 = vshrl.u32 %v388, 7
      %v390 = vsub.s32 %v387, %v389
      %v391 = vrot.slane %v377, %v390
      %v426 = vunpack.c.l.b16 %v337
      %v427 = vunpack.c.l.b16 %v338
      %v428 = vunpack.c.l.b16 %v339
      %v429 = vunpack.c.l.b16 %v340
      %v430 = vunpack.c.l.b16 %v341
      %v431 = vunpack.c.l.b16 %v342
      %v432 = vunpack.c.l.b16 %v343
      %v433 = vunpack.c.l.b16 %v344
      %v434 = vunpack.c.l.b16 %v345
      %v435 = vunpack.c.l.b16 %v346
      %v436 = vunpack.c.l.b16 %v347
      %v437 = vunpack.c.l.b16 %v348
      %v438 = vunpack.c.l.b16 %v349
      %v439 = vunpack.c.l.b16 %v350
      %v440 = vunpack.c.l.b16 %v351
      %v441 = vunpack.c.l.b16 %v352
      %v442 = vunpack.c.l.b16 %v353
      %v443 = vunpack.c.l.b16 %v354
      %v444 = vunpack.c.l.b16 %v355
      %v445 = vunpack.c.l.b16 %v356
      %v446 = vunpack.c.l.b16 %v357
      %v447 = vunpack.c.l.b16 %v358
      %v448 = vunpack.c.l.b16 %v359
      %v449 = vunpack.c.l.b16 %v360
      %v450 = vunpack.c.l.b16 %v361
      %v451 = vunpack.c.l.b16 %v362
      %v452 = vunpack.c.l.b16 %v363
      %v453 = vunpack.c.l.b16 %v364
      %v454 = vunpack.c.l.b16 %v365
      %v455 = vunpack.c.l.b16 %v366
      %v456 = vunpack.c.l.b16 %v367
      %v457 = vunpack.c.l.b16 %v368
      %v458 = vpack.c.b16 %v427, %v426
      %v459 = vpack.c.b16 %v429, %v428
      %v460 = vpack.c.b16 %v431, %v430
      %v461 = vpack.c.b16 %v433, %v432
      %v462 = vpack.c.b16 %v435, %v434
      %v463 = vpack.c.b16 %v437, %v436
      %v464 = vpack.c.b16 %v439, %v438
      %v465 = vpack.c.b16 %v441, %v440
      %v466 = vpack.c.b16 %v443, %v442
      %v467 = vpack.c.b16 %v445, %v444
      %v468 = vpack.c.b16 %v447, %v446
      %v469 = vpack.c.b16 %v449, %v448
      %v470 = vpack.c.b16 %v451, %v450
      %v471 = vpack.c.b16 %v453, %v452
      %v472 = vpack.c.b16 %v455, %v454
      %v473 = vpack.c.b16 %v457, %v456
      %490 = vmatprep.subr.bf16.mxu0 0
      %491 = vmatpush1.bf16.msra.mxu0 %v465
      %492 = vmatprep.subr.bf16.mxu0 0
      %493 = vmatpush1.bf16.msra.mxu0 %v464
      %494 = vmatprep.subr.bf16.mxu0 0
      %495 = vmatpush1.bf16.msra.mxu0 %v463
      %496 = vmatprep.subr.bf16.mxu0 0
      %497 = vmatpush1.bf16.msra.mxu0 %v462
      %498 = vmatprep.subr.bf16.mxu0 0
      %499 = vmatpush1.bf16.msra.mxu0 %v461
      %500 = vmatprep.subr.bf16.mxu0 0
      %501 = vmatpush1.bf16.msra.mxu0 %v460
      %502 = vmatprep.subr.bf16.mxu0 0
      %503 = vmatpush1.bf16.msra.mxu0 %v459
      %504 = vmatprep.subr.bf16.mxu0 0
      %505 = vmatpush1.bf16.msra.mxu0 %v458
      %506 = vmatprep.subr.bf16.mxu0 0
      %507 = vmatpush2.bf16.msra.mxu0 %v473
      %508 = vmatprep.subr.bf16.mxu0 0
      %509 = vmatpush2.bf16.msra.mxu0 %v472
      %510 = vmatprep.subr.bf16.mxu0 0
      %511 = vmatpush2.bf16.msra.mxu0 %v471
      %512 = vmatprep.subr.bf16.mxu0 0
      %513 = vmatpush2.bf16.msra.mxu0 %v470
      %514 = vmatprep.subr.bf16.mxu0 0
      %515 = vmatpush2.bf16.msra.mxu0 %v469
      %516 = vmatprep.subr.bf16.mxu0 0
      %517 = vmatpush2.bf16.msra.mxu0 %v468
      %518 = vmatprep.subr.bf16.mxu0 0
      %519 = vmatpush2.bf16.msra.mxu0 %v467
      %520 = vmatprep.subr.bf16.mxu0 0
      %521 = vmatpush2.bf16.msra.mxu0 %v466
      %522 = vmatprep.mubr.bf16.mxu0 %v391
      %523 = vmatmul.mubr.bf16.gmra.mxu0 %v384
      %v524 = vpop.f32.mrf.mxu0
      %v525 = vadd.f32 0.0, %v524
      %v526 = vpop.f32.mrf.mxu0
      %v527 = vpop.f32.mrf.mxu0
      %v528 = vpop.f32.mrf.mxu0
      %529 = vdwg.mxu0
      %s530 = scalar_lea.vmem %s134, 4
      %v531 = vld [vmem:[%s530] sm:$0x3]
      %s532 = scalar_lea.vmem %s1, 256
      %v533 = vld [vmem:[%s532] sm:$0xf]
      %v534 = vld [vmem:[%s532 + $0x4] sm:$0xf]
      %v535 = vld [vmem:[%s532 + $0x8] sm:$0xf]
      %v536 = vld [vmem:[%s532 + $0xc] sm:$0xf]
      %v537 = vld [vmem:[%s532 + $0x10] sm:$0xf]
      %v538 = vld [vmem:[%s532 + $0x14] sm:$0xf]
      %v539 = vld [vmem:[%s532 + $0x18] sm:$0xf]
      %v540 = vld [vmem:[%s532 + $0x1c] sm:$0xf]
      %v541 = vld [vmem:[%s532 + $0x20] sm:$0xf]
      %v542 = vld [vmem:[%s532 + $0x24] sm:$0xf]
      %v543 = vld [vmem:[%s532 + $0x28] sm:$0xf]
      %v544 = vld [vmem:[%s532 + $0x2c] sm:$0xf]
      %v545 = vld [vmem:[%s532 + $0x30] sm:$0xf]
      %v546 = vld [vmem:[%s532 + $0x34] sm:$0xf]
      %v547 = vld [vmem:[%s532 + $0x38] sm:$0xf]
      %v548 = vld [vmem:[%s532 + $0x3c] sm:$0xf]
      %v549 = vld [vmem:[%s532 + $0x40] sm:$0xf]
      %v550 = vld [vmem:[%s532 + $0x44] sm:$0xf]
      %v551 = vld [vmem:[%s532 + $0x48] sm:$0xf]
      %v552 = vld [vmem:[%s532 + $0x4c] sm:$0xf]
      %v553 = vld [vmem:[%s532 + $0x50] sm:$0xf]
      %v554 = vld [vmem:[%s532 + $0x54] sm:$0xf]
      %v555 = vld [vmem:[%s532 + $0x58] sm:$0xf]
      %v556 = vld [vmem:[%s532 + $0x5c] sm:$0xf]
      %v557 = vld [vmem:[%s532 + $0x60] sm:$0xf]
      %v558 = vld [vmem:[%s532 + $0x64] sm:$0xf]
      %v559 = vld [vmem:[%s532 + $0x68] sm:$0xf]
      %v560 = vld [vmem:[%s532 + $0x6c] sm:$0xf]
      %v561 = vld [vmem:[%s532 + $0x70] sm:$0xf]
      %v562 = vld [vmem:[%s532 + $0x74] sm:$0xf]
      %v563 = vld [vmem:[%s532 + $0x78] sm:$0xf]
      %v564 = vld [vmem:[%s532 + $0x7c] sm:$0xf]
      %v567 = vunpack.c.l.s4 1966171168
      %v568 = vunpack.c.0.s8 %v567
      %v569 = vlaneseq
      %v570 = vshrl.u32 %v569, 7
      %v571 = vsub.s32 %v568, %v570
      %v572 = vrot.slane %v531, %v571
      %v573 = vcombine.high %v572, %v572
      %v575 = vunpack.c.l.s4 1966171168
      %v576 = vunpack.c.0.s8 %v575
      %v577 = vlaneseq
      %v578 = vshrl.u32 %v577, 7
      %v579 = vsub.s32 %v576, %v578
      %v580 = vrot.slane %v572, %v579
      %v582 = vunpack.c.l.s4 1966171168
      %v583 = vunpack.c.0.s8 %v582
      %v584 = vlaneseq
      %v585 = vshrl.u32 %v584, 7
      %v586 = vsub.s32 %v583, %v585
      %v587 = vrot.slane %v573, %v586
      %v622 = vunpack.c.l.b16 %v533
      %v623 = vunpack.c.l.b16 %v534
      %v624 = vunpack.c.l.b16 %v535
      %v625 = vunpack.c.l.b16 %v536
      %v626 = vunpack.c.l.b16 %v537
      %v627 = vunpack.c.l.b16 %v538
      %v628 = vunpack.c.l.b16 %v539
      %v629 = vunpack.c.l.b16 %v540
      %v630 = vunpack.c.l.b16 %v541
      %v631 = vunpack.c.l.b16 %v542
      %v632 = vunpack.c.l.b16 %v543
      %v633 = vunpack.c.l.b16 %v544
      %v634 = vunpack.c.l.b16 %v545
      %v635 = vunpack.c.l.b16 %v546
      %v636 = vunpack.c.l.b16 %v547
      %v637 = vunpack.c.l.b16 %v548
      %v638 = vunpack.c.l.b16 %v549
      %v639 = vunpack.c.l.b16 %v550
      %v640 = vunpack.c.l.b16 %v551
      %v641 = vunpack.c.l.b16 %v552
      %v642 = vunpack.c.l.b16 %v553
      %v643 = vunpack.c.l.b16 %v554
      %v644 = vunpack.c.l.b16 %v555
      %v645 = vunpack.c.l.b16 %v556
      %v646 = vunpack.c.l.b16 %v557
      %v647 = vunpack.c.l.b16 %v558
      %v648 = vunpack.c.l.b16 %v559
      %v649 = vunpack.c.l.b16 %v560
      %v650 = vunpack.c.l.b16 %v561
      %v651 = vunpack.c.l.b16 %v562
      %v652 = vunpack.c.l.b16 %v563
      %v653 = vunpack.c.l.b16 %v564
      %v654 = vpack.c.b16 %v623, %v622
      %v655 = vpack.c.b16 %v625, %v624
      %v656 = vpack.c.b16 %v627, %v626
      %v657 = vpack.c.b16 %v629, %v628
      %v658 = vpack.c.b16 %v631, %v630
      %v659 = vpack.c.b16 %v633, %v632
      %v660 = vpack.c.b16 %v635, %v634
      %v661 = vpack.c.b16 %v637, %v636
      %v662 = vpack.c.b16 %v639, %v638
      %v663 = vpack.c.b16 %v641, %v640
      %v664 = vpack.c.b16 %v643, %v642
      %v665 = vpack.c.b16 %v645, %v644
      %v666 = vpack.c.b16 %v647, %v646
      %v667 = vpack.c.b16 %v649, %v648
      %v668 = vpack.c.b16 %v651, %v650
      %v669 = vpack.c.b16 %v653, %v652
      %686 = vmatprep.subr.bf16.mxu0 0
      %687 = vmatpush1.bf16.msra.mxu0 %v661
      %688 = vmatprep.subr.bf16.mxu0 0
      %689 = vmatpush1.bf16.msra.mxu0 %v660
      %690 = vmatprep.subr.bf16.mxu0 0
      %691 = vmatpush1.bf16.msra.mxu0 %v659
      %692 = vmatprep.subr.bf16.mxu0 0
      %693 = vmatpush1.bf16.msra.mxu0 %v658
      %694 = vmatprep.subr.bf16.mxu0 0
      %695 = vmatpush1.bf16.msra.mxu0 %v657
      %696 = vmatprep.subr.bf16.mxu0 0
      %697 = vmatpush1.bf16.msra.mxu0 %v656
      %698 = vmatprep.subr.bf16.mxu0 0
      %699 = vmatpush1.bf16.msra.mxu0 %v655
      %700 = vmatprep.subr.bf16.mxu0 0
      %701 = vmatpush1.bf16.msra.mxu0 %v654
      %702 = vmatprep.subr.bf16.mxu0 0
      %703 = vmatpush2.bf16.msra.mxu0 %v669
      %704 = vmatprep.subr.bf16.mxu0 0
      %705 = vmatpush2.bf16.msra.mxu0 %v668
      %706 = vmatprep.subr.bf16.mxu0 0
      %707 = vmatpush2.bf16.msra.mxu0 %v667
      %708 = vmatprep.subr.bf16.mxu0 0
      %709 = vmatpush2.bf16.msra.mxu0 %v666
      %710 = vmatprep.subr.bf16.mxu0 0
      %711 = vmatpush2.bf16.msra.mxu0 %v665
      %712 = vmatprep.subr.bf16.mxu0 0
      %713 = vmatpush2.bf16.msra.mxu0 %v664
      %714 = vmatprep.subr.bf16.mxu0 0
      %715 = vmatpush2.bf16.msra.mxu0 %v663
      %716 = vmatprep.subr.bf16.mxu0 0
      %717 = vmatpush2.bf16.msra.mxu0 %v662
      %718 = vmatprep.mubr.bf16.mxu0 %v587
      %719 = vmatmul.mubr.bf16.gmra.mxu0 %v580
      %v720 = vpop.f32.mrf.mxu0
      %v721 = vadd.f32 0.0, %v720
      %v722 = vpop.f32.mrf.mxu0
      %v723 = vpop.f32.mrf.mxu0
      %v724 = vpop.f32.mrf.mxu0
      %725 = vdwg.mxu0
      %s726 = scalar_lea.vmem %s134, 6
      %v727 = vld [vmem:[%s726] sm:$0x3]
      %s728 = scalar_lea.vmem %s1, 384
      %v729 = vld [vmem:[%s728] sm:$0xf]
      %v730 = vld [vmem:[%s728 + $0x4] sm:$0xf]
      %v731 = vld [vmem:[%s728 + $0x8] sm:$0xf]
      %v732 = vld [vmem:[%s728 + $0xc] sm:$0xf]
      %v733 = vld [vmem:[%s728 + $0x10] sm:$0xf]
      %v734 = vld [vmem:[%s728 + $0x14] sm:$0xf]
      %v735 = vld [vmem:[%s728 + $0x18] sm:$0xf]
      %v736 = vld [vmem:[%s728 + $0x1c] sm:$0xf]
      %v737 = vld [vmem:[%s728 + $0x20] sm:$0xf]
      %v738 = vld [vmem:[%s728 + $0x24] sm:$0xf]
      %v739 = vld [vmem:[%s728 + $0x28] sm:$0xf]
      %v740 = vld [vmem:[%s728 + $0x2c] sm:$0xf]
      %v741 = vld [vmem:[%s728 + $0x30] sm:$0xf]
      %v742 = vld [vmem:[%s728 + $0x34] sm:$0xf]
      %v743 = vld [vmem:[%s728 + $0x38] sm:$0xf]
      %v744 = vld [vmem:[%s728 + $0x3c] sm:$0xf]
      %v745 = vld [vmem:[%s728 + $0x40] sm:$0xf]
      %v746 = vld [vmem:[%s728 + $0x44] sm:$0xf]
      %v747 = vld [vmem:[%s728 + $0x48] sm:$0xf]
      %v748 = vld [vmem:[%s728 + $0x4c] sm:$0xf]
      %v749 = vld [vmem:[%s728 + $0x50] sm:$0xf]
      %v750 = vld [vmem:[%s728 + $0x54] sm:$0xf]
      %v751 = vld [vmem:[%s728 + $0x58] sm:$0xf]
      %v752 = vld [vmem:[%s728 + $0x5c] sm:$0xf]
      %v753 = vld [vmem:[%s728 + $0x60] sm:$0xf]
      %v754 = vld [vmem:[%s728 + $0x64] sm:$0xf]
      %v755 = vld [vmem:[%s728 + $0x68] sm:$0xf]
      %v756 = vld [vmem:[%s728 + $0x6c] sm:$0xf]
      %v757 = vld [vmem:[%s728 + $0x70] sm:$0xf]
      %v758 = vld [vmem:[%s728 + $0x74] sm:$0xf]
      %v759 = vld [vmem:[%s728 + $0x78] sm:$0xf]
      %v760 = vld [vmem:[%s728 + $0x7c] sm:$0xf]
      %v763 = vunpack.c.l.s4 1966171168
      %v764 = vunpack.c.0.s8 %v763
      %v765 = vlaneseq
      %v766 = vshrl.u32 %v765, 7
      %v767 = vsub.s32 %v764, %v766
      %v768 = vrot.slane %v727, %v767
      %v769 = vcombine.high %v768, %v768
      %v771 = vunpack.c.l.s4 1966171168
      %v772 = vunpack.c.0.s8 %v771
      %v773 = vlaneseq
      %v774 = vshrl.u32 %v773, 7
      %v775 = vsub.s32 %v772, %v774
      %v776 = vrot.slane %v768, %v775
      %v778 = vunpack.c.l.s4 1966171168
      %v779 = vunpack.c.0.s8 %v778
      %v780 = vlaneseq
      %v781 = vshrl.u32 %v780, 7
      %v782 = vsub.s32 %v779, %v781
      %v783 = vrot.slane %v769, %v782
      %v818 = vunpack.c.l.b16 %v729
      %v819 = vunpack.c.l.b16 %v730
      %v820 = vunpack.c.l.b16 %v731
      %v821 = vunpack.c.l.b16 %v732
      %v822 = vunpack.c.l.b16 %v733
      %v823 = vunpack.c.l.b16 %v734
      %v824 = vunpack.c.l.b16 %v735
      %v825 = vunpack.c.l.b16 %v736
      %v826 = vunpack.c.l.b16 %v737
      %v827 = vunpack.c.l.b16 %v738
      %v828 = vunpack.c.l.b16 %v739
      %v829 = vunpack.c.l.b16 %v740
      %v830 = vunpack.c.l.b16 %v741
      %v831 = vunpack.c.l.b16 %v742
      %v832 = vunpack.c.l.b16 %v743
      %v833 = vunpack.c.l.b16 %v744
      %v834 = vunpack.c.l.b16 %v745
      %v835 = vunpack.c.l.b16 %v746
      %v836 = vunpack.c.l.b16 %v747
      %v837 = vunpack.c.l.b16 %v748
      %v838 = vunpack.c.l.b16 %v749
      %v839 = vunpack.c.l.b16 %v750
      %v840 = vunpack.c.l.b16 %v751
      %v841 = vunpack.c.l.b16 %v752
      %v842 = vunpack.c.l.b16 %v753
      %v843 = vunpack.c.l.b16 %v754
      %v844 = vunpack.c.l.b16 %v755
      %v845 = vunpack.c.l.b16 %v756
      %v846 = vunpack.c.l.b16 %v757
      %v847 = vunpack.c.l.b16 %v758
      %v848 = vunpack.c.l.b16 %v759
      %v849 = vunpack.c.l.b16 %v760
      %v850 = vpack.c.b16 %v819, %v818
      %v851 = vpack.c.b16 %v821, %v820
      %v852 = vpack.c.b16 %v823, %v822
      %v853 = vpack.c.b16 %v825, %v824
      %v854 = vpack.c.b16 %v827, %v826
      %v855 = vpack.c.b16 %v829, %v828
      %v856 = vpack.c.b16 %v831, %v830
      %v857 = vpack.c.b16 %v833, %v832
      %v858 = vpack.c.b16 %v835, %v834
      %v859 = vpack.c.b16 %v837, %v836
      %v860 = vpack.c.b16 %v839, %v838
      %v861 = vpack.c.b16 %v841, %v840
      %v862 = vpack.c.b16 %v843, %v842
      %v863 = vpack.c.b16 %v845, %v844
      %v864 = vpack.c.b16 %v847, %v846
      %v865 = vpack.c.b16 %v849, %v848
      %882 = vmatprep.subr.bf16.mxu0 0
      %883 = vmatpush1.bf16.msra.mxu0 %v857
      %884 = vmatprep.subr.bf16.mxu0 0
      %885 = vmatpush1.bf16.msra.mxu0 %v856
      %886 = vmatprep.subr.bf16.mxu0 0
      %887 = vmatpush1.bf16.msra.mxu0 %v855
      %888 = vmatprep.subr.bf16.mxu0 0
      %889 = vmatpush1.bf16.msra.mxu0 %v854
      %890 = vmatprep.subr.bf16.mxu0 0
      %891 = vmatpush1.bf16.msra.mxu0 %v853
      %892 = vmatprep.subr.bf16.mxu0 0
      %893 = vmatpush1.bf16.msra.mxu0 %v852
      %894 = vmatprep.subr.bf16.mxu0 0
      %895 = vmatpush1.bf16.msra.mxu0 %v851
      %896 = vmatprep.subr.bf16.mxu0 0
      %897 = vmatpush1.bf16.msra.mxu0 %v850
      %898 = vmatprep.subr.bf16.mxu0 0
      %899 = vmatpush2.bf16.msra.mxu0 %v865
      %900 = vmatprep.subr.bf16.mxu0 0
      %901 = vmatpush2.bf16.msra.mxu0 %v864
      %902 = vmatprep.subr.bf16.mxu0 0
      %903 = vmatpush2.bf16.msra.mxu0 %v863
      %904 = vmatprep.subr.bf16.mxu0 0
      %905 = vmatpush2.bf16.msra.mxu0 %v862
      %906 = vmatprep.subr.bf16.mxu0 0
      %907 = vmatpush2.bf16.msra.mxu0 %v861
      %908 = vmatprep.subr.bf16.mxu0 0
      %909 = vmatpush2.bf16.msra.mxu0 %v860
      %910 = vmatprep.subr.bf16.mxu0 0
      %911 = vmatpush2.bf16.msra.mxu0 %v859
      %912 = vmatprep.subr.bf16.mxu0 0
      %913 = vmatpush2.bf16.msra.mxu0 %v858
      %914 = vmatprep.mubr.bf16.mxu0 %v783
      %915 = vmatmul.mubr.bf16.gmra.mxu0 %v776
      %v916 = vpop.f32.mrf.mxu0
      %v917 = vadd.f32 0.0, %v916
      %v918 = vpop.f32.mrf.mxu0
      %v919 = vpop.f32.mrf.mxu0
      %v920 = vpop.f32.mrf.mxu0
      %921 = vdwg.mxu0
      %v922 = vadd.f32 %v329, 0.0
      %v923 = vadd.f32 %v922, 0.0
      %v924 = vadd.f32 %v525, 0.0
      %v925 = vadd.f32 %v923, %v924
      %v926 = vadd.f32 %v721, 0.0
      %v927 = vadd.f32 %v925, %v926
      %v928 = vadd.f32 %v917, 0.0
      %v929 = vadd.f32 %v927, %v928
      %v930 = vrcp.pop 4.0
      %v931 = vmul.f32 %v929, %v930
      %v932 = vsub.f32 %v329, %v931
      %v933 = vmul.f32 %v932, %v932
      %v934 = vadd.f32 %v933, 0.0
      %v935 = vadd.f32 %v934, 0.0
      %v936 = vsub.f32 %v525, %v931
      %v937 = vmul.f32 %v936, %v936
      %v938 = vadd.f32 %v937, 0.0
      %v939 = vadd.f32 %v935, %v938
      %v940 = vsub.f32 %v721, %v931
      %v941 = vmul.f32 %v940, %v940
      %v942 = vadd.f32 %v941, 0.0
      %v943 = vadd.f32 %v939, %v942
      %v944 = vsub.f32 %v917, %v931
      %v945 = vmul.f32 %v944, %v944
      %v946 = vadd.f32 %v945, 0.0
      %v947 = vadd.f32 %v943, %v946
      %v948 = vmul.f32 %v947, %v930
      %v949 = vadd.f32 %v948, 1e-05
      %v950 = vrsqrt.pop %v949
      %v951 = vmul.f32 %v932, %v950
      %v952 = vpack.c.bf16 %v951, %v951
      %vm953 = vcmask 1040384
      %vm954 = vsmask.f32 256
      %vm955 = vmand %vm953, %vm954
      %v956 = vld [vmem:[%s138] sm:$0x1]
      %v957 = vsel %vm955, %v952, %v956
      %958 = vst [vmem:[%s138] sm:$0x1] %v957
      %v959 = vmul.f32 %v936, %v950
      %v960 = vpack.c.bf16 %v959, %v959
      %s961 = scalar_lea.vmem %s138, 1
      %v962 = vld [vmem:[%s961] sm:$0x1]
      %v963 = vsel %vm955, %v960, %v962
      %964 = vst [vmem:[%s961] sm:$0x1] %v963
      %v965 = vmul.f32 %v940, %v950
      %v966 = vpack.c.bf16 %v965, %v965
      %s967 = scalar_lea.vmem %s138, 2
      %v968 = vld [vmem:[%s967] sm:$0x1]
      %v969 = vsel %vm955, %v966, %v968
      %970 = vst [vmem:[%s967] sm:$0x1] %v969
      %v971 = vmul.f32 %v944, %v950
      %v972 = vpack.c.bf16 %v971, %v971
      %s973 = scalar_lea.vmem %s138, 3
      %v974 = vld [vmem:[%s973] sm:$0x1]
      %v975 = vsel %vm955, %v972, %v974
      %976 = vst [vmem:[%s973] sm:$0x1] %v975
      %p977 = scmp.lt.s32.totalorder %s13, 1
      %s978 = scalar_select %p977, %s13, 1
      %s979 = smul.addr %s978, 4
      %s980 = scalar_lea.vmem %s2, %s979
      // Predicated region
      $region29: #{_lambda_.12} parent=27 // pred_check
        %p981 = pneg %p78
      $region30: #{_lambda_.12} parent=27 // pred_check_branch
        %983 = sbr.rel (%p981) target = $region32
      $region31: #{_lambda_.12} parent=27 // pred_region
        _
      $region32: #{_lambda_.12} parent=27 // pred_fallthru
        _
    $region28: #{_lambda_.12} parent=5 // pred_fallthru
      _
    %p984 = scmp.le.s32.totalorder 2, %s8
    // Predicated region
    $region33: #{_lambda_.12} parent=5 // pred_check
      %p985 = pneg %p984
    $region34: #{_lambda_.12} parent=5 // pred_check_branch
      %987 = sbr.rel (%p985) target = $region36
    $region35: #{_lambda_.12} parent=5 // pred_region
      %s988 = ssub.s32 %s8, 2
      // Predicated region
      $region37: #{_lambda_.12} parent=35 // pred_check
        %p989 = pneg %p84
      $region38: #{_lambda_.12} parent=35 // pred_check_branch
        %991 = sbr.rel (%p989) target = $region40
      $region39: #{_lambda_.12} parent=35 // pred_region
        %p992 = scmp.lt.s32.totalorder %s14, 1
        %s993 = scalar_select %p992, %s14, 1
        %s994 = smul.addr %s993, 4
        %s995 = scalar_lea.vmem %s2, %s994
      $region40: #{_lambda_.12} parent=35 // pred_fallthru
        _
    $region36: #{_lambda_.12} parent=5 // pred_fallthru
      _
  $region6: #{_lambda_.12} parent=0 // loop_footer
    %s12 = sadd.s32 1, %s8
  $region7: #{_lambda_.12} parent=0 // loop_footer_branch
    %7 = sbr.rel target = $region3
  $region8: #{_lambda_.12} parent=0 // loop_exit
    _

// kernel: _lambda_.13
$region0: #{_lambda_.13}
  #allocation0 [shape = 'u32[]', space=smem, size = 0x4, offset = 0x4, fixed_abs, tag = 'smem constant byte address 0x4 - core index']
  #allocation1 [shape = 'u32[144,128]{1,0:T(1,128)}', space=vmem, size = 0x12000, scoped, tag = 'internal scratch']
  %s0 = inlined_call_operand.vmem [shape: bf16[2,4,4,512], index: 0, kind: input, shape index: {}]
  %s1 = inlined_call_operand.vmem [shape: bf16[4,512,128], index: 1, kind: input, shape index: {}]
  %s2 = inlined_call_operand.vmem [shape: bf16[2,4,4,128], index: 2, kind: output, shape index: {}]
  %s3 = sld [smem:[#allocation0]]
  $region41: #{_lambda_.13} parent=0
    _
  %s5 = ssub.s32 1, %s3
  %s6 = scalar_select 0, %s5, %s3
  loop: start=0, step=1, limit=4
  $region2: #{_lambda_.13} parent=0 // loop_pre_header
    _
  $region3: #{_lambda_.13} parent=0 // loop_header
    %s8 = sphi 0, %s12
    %p9 = scmp.ge.s32.totalorder %s8, 4
    %s18 = sphi 0, %s20
    %s21 = sphi 0, %s18
    %s22 = sphi 0, %s21
    %s38 = sphi 0, %s22
    %s42 = sphi 0, %s42
    %s44 = sphi 0, %s42
    %s45 = sphi 0, %s44
    %s59 = sphi 0, %s45
    %s65 = sphi 0, %s67
    %s68 = sphi 0, %s65
    %s69 = sphi 0, %s68
    %s85 = sphi 0, %s69
  $region4: #{_lambda_.13} parent=0 // loop_header_branch
    %11 = sbr.rel (%p9) target = $region8
  $region5: #{_lambda_.13} parent=0 // loop_body
    %s13 = ssub.s32 %s8, 1
    %s14 = ssub.s32 %s8, 2
    %s15 = sadd.s32 %s8, 1
    %s16 = ssub.s32 %s8, %s15
    %p17 = scmp.eq.s32.totalorder %s16, 0
    %s19 = sadd.s32 %s18, 1
    %s20 = scalar_select %p17, %s18, %s19
    %p23 = pneg %p17
    %p24 = scmp.eq.s32.totalorder %s8, 1
    %p25 = por %p23, %p24
    %p26 = scmp.ne.s32.totalorder %s18, %s21
    %p27 = scmp.eq.s32.totalorder %s8, 0
    %p28 = por %p26, %p27
    %p29 = scmp.ne.s32.totalorder %s18, %s21
    %p30 = scmp.eq.s32.totalorder %s13, 1
    %p31 = por %p29, %p30
    %p32 = scmp.ne.s32.totalorder %s21, %s22
    %p33 = scmp.eq.s32.totalorder %s13, 0
    %p34 = por %p32, %p33
    %p35 = scmp.ne.s32.totalorder %s21, %s22
    %p36 = scmp.eq.s32.totalorder %s14, 1
    %p37 = por %p35, %p36
    %p39 = scmp.ne.s32.totalorder %s22, %s38
    %p40 = scmp.eq.s32.totalorder %s14, 0
    %p41 = por %p39, %p40
    %s43 = sadd.s32 %s42, 1
    %p46 = scmp.eq.s32.totalorder %s8, 1
    %p47 = scmp.ne.s32.totalorder %s42, %s44
    %p48 = scmp.eq.s32.totalorder %s8, 0
    %p49 = por %p47, %p48
    %p50 = scmp.ne.s32.totalorder %s42, %s44
    %p51 = scmp.eq.s32.totalorder %s13, 1
    %p52 = por %p50, %p51
    %p53 = scmp.ne.s32.totalorder %s44, %s45
    %p54 = scmp.eq.s32.totalorder %s13, 0
    %p55 = por %p53, %p54
    %p56 = scmp.ne.s32.totalorder %s44, %s45
    %p57 = scmp.eq.s32.totalorder %s14, 1
    %p58 = por %p56, %p57
    %p60 = scmp.ne.s32.totalorder %s45, %s59
    %p61 = scmp.eq.s32.totalorder %s14, 0
    %p62 = por %p60, %p61
    %s63 = ssub.s32 %s8, %s15
    %p64 = scmp.eq.s32.totalorder %s63, 0
    %s66 = sadd.s32 %s65, 1
    %s67 = scalar_select %p64, %s65, %s66
    %p70 = pneg %p64
    %p71 = scmp.eq.s32.totalorder %s8, 1
    %p72 = por %p70, %p71
    %p73 = scmp.ne.s32.totalorder %s65, %s68
    %p74 = scmp.eq.s32.totalorder %s8, 0
    %p75 = por %p73, %p74
    %p76 = scmp.ne.s32.totalorder %s65, %s68
    %p77 = scmp.eq.s32.totalorder %s13, 1
    %p78 = por %p76, %p77
    %p79 = scmp.ne.s32.totalorder %s68, %s69
    %p80 = scmp.eq.s32.totalorder %s13, 0
    %p81 = por %p79, %p80
    %p82 = scmp.ne.s32.totalorder %s68, %s69
    %p83 = scmp.eq.s32.totalorder %s14, 1
    %p84 = por %p82, %p83
    %p86 = scmp.ne.s32.totalorder %s69, %s85
    %p87 = scmp.eq.s32.totalorder %s14, 0
    %p88 = por %p86, %p87
    %p89 = scmp.le.s32.totalorder 1, %s8
    %p90 = scmp.lt.s32.totalorder %s8, 3
    %p91 = pnand %p89, %p90
    %p92 = pneg %p91
    // Predicated region
    $region9: #{_lambda_.13} parent=5 // pred_check
      _
    $region10: #{_lambda_.13} parent=5 // pred_check_branch
      %94 = sbr.rel (%p91) target = $region12
    $region11: #{_lambda_.13} parent=5 // pred_region
      %s95 = ssub.s32 %s8, 1
      // Predicated region
      $region13: #{_lambda_.13} parent=11 // pred_check
        %p96 = pneg %p55
      $region14: #{_lambda_.13} parent=11 // pred_check_branch
        %98 = sbr.rel (%p96) target = $region16
      $region15: #{_lambda_.13} parent=11 // pred_region
        _
      $region16: #{_lambda_.13} parent=11 // pred_fallthru
        _
    $region12: #{_lambda_.13} parent=5 // pred_fallthru
      _
    %p99 = scmp.lt.s32.totalorder %s8, 2
    // Predicated region
    $region17: #{_lambda_.13} parent=5 // pred_check
      %p100 = pneg %p99
    $region18: #{_lambda_.13} parent=5 // pred_check_branch
      %102 = sbr.rel (%p100) target = $region20
    $region19: #{_lambda_.13} parent=5 // pred_region
      // Predicated region
      $region21: #{_lambda_.13} parent=19 // pred_check
        %p103 = pneg %p28
      $region22: #{_lambda_.13} parent=19 // pred_check_branch
        %105 = sbr.rel (%p103) target = $region24
      $region23: #{_lambda_.13} parent=19 // pred_region
        %p106 = scmp.lt.s32.totalorder %s8, 1
        %s107 = scalar_select %p106, %s8, 1
        %s108 = smul.addr %s107, 16
        %s109 = smul.addr %s108, 2
        %s110 = scalar_lea.vmem %s0, %s109
      $region24: #{_lambda_.13} parent=19 // pred_fallthru
        _
    $region20: #{_lambda_.13} parent=5 // pred_fallthru
      _
    %p111 = scmp.le.s32.totalorder 1, %s8
    %p112 = scmp.lt.s32.totalorder %s8, 3
    %p113 = pnand %p111, %p112
    %p114 = pneg %p113
    // Predicated region
    $region25: #{_lambda_.13} parent=5 // pred_check
      _
    $region26: #{_lambda_.13} parent=5 // pred_check_branch
      %116 = sbr.rel (%p113) target = $region28
    $region27: #{_lambda_.13} parent=5 // pred_region
      %s117 = ssub.s32 %s8, 1
      %p118 = scmp.lt.s32.totalorder %s13, 1
      %s119 = scalar_select %p118, %s13, 1
      %s120 = smul.addr %s119, 16
      %s121 = smul.addr %s120, 2
      %s122 = scalar_lea.vmem %s0, %s121
      %p123 = pneg %p34
      %p124 = pneg %p31
      %p125 = pneg %p55
      %p126 = pneg %p52
      %p127 = pneg %p81
      %p128 = pneg %p78
      %p129 = scmp.lt.s32.totalorder %s13, 1
      %s130 = scalar_select %p129, %s13, 1
      %s131 = smul.addr %s130, 4
      %s132 = smul.addr %s131, 2
      %s133 = scalar_lea.vmem %s2, %s132
      %p134 = scmp.lt.s32.totalorder %s13, 1
      %s135 = scalar_select %p134, %s13, 1
      %s136 = smul.addr %s135, 16
      %s137 = smul.addr %s136, 2
      %s138 = scalar_lea.vmem %s0, %s137
      %p139 = scmp.lt.s32.totalorder %s13, 1
      %s140 = scalar_select %p139, %s13, 1
      %s141 = smul.addr %s140, 4
      %s142 = smul.addr %s141, 2
      %s143 = scalar_lea.vmem %s2, %s142
      %v145 = vld [vmem:[%s138] sm:$0xff]
      %v146 = vld [vmem:[%s1] sm:$0xf]
      %v147 = vld [vmem:[%s1 + $0x4] sm:$0xf]
      %v148 = vld [vmem:[%s1 + $0x8] sm:$0xf]
      %v149 = vld [vmem:[%s1 + $0xc] sm:$0xf]
      %v150 = vld [vmem:[%s1 + $0x10] sm:$0xf]
      %v151 = vld [vmem:[%s1 + $0x14] sm:$0xf]
      %v152 = vld [vmem:[%s1 + $0x18] sm:$0xf]
      %v153 = vld [vmem:[%s1 + $0x1c] sm:$0xf]
      %v154 = vld [vmem:[%s1 + $0x20] sm:$0xf]
      %v155 = vld [vmem:[%s1 + $0x24] sm:$0xf]
      %v156 = vld [vmem:[%s1 + $0x28] sm:$0xf]
      %v157 = vld [vmem:[%s1 + $0x2c] sm:$0xf]
      %v158 = vld [vmem:[%s1 + $0x30] sm:$0xf]
      %v159 = vld [vmem:[%s1 + $0x34] sm:$0xf]
      %v160 = vld [vmem:[%s1 + $0x38] sm:$0xf]
      %v161 = vld [vmem:[%s1 + $0x3c] sm:$0xf]
      %v162 = vld [vmem:[%s1 + $0x40] sm:$0xf]
      %v163 = vld [vmem:[%s1 + $0x44] sm:$0xf]
      %v164 = vld [vmem:[%s1 + $0x48] sm:$0xf]
      %v165 = vld [vmem:[%s1 + $0x4c] sm:$0xf]
      %v166 = vld [vmem:[%s1 + $0x50] sm:$0xf]
      %v167 = vld [vmem:[%s1 + $0x54] sm:$0xf]
      %v168 = vld [vmem:[%s1 + $0x58] sm:$0xf]
      %v169 = vld [vmem:[%s1 + $0x5c] sm:$0xf]
      %v170 = vld [vmem:[%s1 + $0x60] sm:$0xf]
      %v171 = vld [vmem:[%s1 + $0x64] sm:$0xf]
      %v172 = vld [vmem:[%s1 + $0x68] sm:$0xf]
      %v173 = vld [vmem:[%s1 + $0x6c] sm:$0xf]
      %v174 = vld [vmem:[%s1 + $0x70] sm:$0xf]
      %v175 = vld [vmem:[%s1 + $0x74] sm:$0xf]
      %v176 = vld [vmem:[%s1 + $0x78] sm:$0xf]
      %v177 = vld [vmem:[%s1 + $0x7c] sm:$0xf]
      %v178 = vld [vmem:[%s1 + $0x80] sm:$0xf]
      %v179 = vld [vmem:[%s1 + $0x84] sm:$0xf]
      %v180 = vld [vmem:[%s1 + $0x88] sm:$0xf]
      %v181 = vld [vmem:[%s1 + $0x8c] sm:$0xf]
      %v182 = vld [vmem:[%s1 + $0x90] sm:$0xf]
      %v183 = vld [vmem:[%s1 + $0x94] sm:$0xf]
      %v184 = vld [vmem:[%s1 + $0x98] sm:$0xf]
      %v185 = vld [vmem:[%s1 + $0x9c] sm:$0xf]
      %v186 = vld [vmem:[%s1 + $0xa0] sm:$0xf]
      %v187 = vld [vmem:[%s1 + $0xa4] sm:$0xf]
      %v188 = vld [vmem:[%s1 + $0xa8] sm:$0xf]
      %v189 = vld [vmem:[%s1 + $0xac] sm:$0xf]
      %v190 = vld [vmem:[%s1 + $0xb0] sm:$0xf]
      %v191 = vld [vmem:[%s1 + $0xb4] sm:$0xf]
      %v192 = vld [vmem:[%s1 + $0xb8] sm:$0xf]
      %v193 = vld [vmem:[%s1 + $0xbc] sm:$0xf]
      %v194 = vld [vmem:[%s1 + $0xc0] sm:$0xf]
      %v195 = vld [vmem:[%s1 + $0xc4] sm:$0xf]
      %v196 = vld [vmem:[%s1 + $0xc8] sm:$0xf]
      %v197 = vld [vmem:[%s1 + $0xcc] sm:$0xf]
      %v198 = vld [vmem:[%s1 + $0xd0] sm:$0xf]
      %v199 = vld [vmem:[%s1 + $0xd4] sm:$0xf]
      %v200 = vld [vmem:[%s1 + $0xd8] sm:$0xf]
      %v201 = vld [vmem:[%s1 + $0xdc] sm:$0xf]
      %v202 = vld [vmem:[%s1 + $0xe0] sm:$0xf]
      %v203 = vld [vmem:[%s1 + $0xe4] sm:$0xf]
      %v204 = vld [vmem:[%s1 + $0xe8] sm:$0xf]
      %v205 = vld [vmem:[%s1 + $0xec] sm:$0xf]
      %v206 = vld [vmem:[%s1 + $0xf0] sm:$0xf]
      %v207 = vld [vmem:[%s1 + $0xf4] sm:$0xf]
      %v208 = vld [vmem:[%s1 + $0xf8] sm:$0xf]
      %v209 = vld [vmem:[%s1 + $0xfc] sm:$0xf]
      %v211 = vcombine.high %v145, %v145
      %v213 = vunpack.c.l.s4 1983009808
      %v214 = vunpack.c.0.s8 %v213
      %v215 = vlaneseq
      %v216 = vshrl.u32 %v215, 7
      %v217 = vsub.s32 %v214, %v216
      %v218 = vrot.slane %v145, %v217
      %v220 = vunpack.c.l.s4 1983009808
      %v221 = vunpack.c.0.s8 %v220
      %v222 = vlaneseq
      %v223 = vshrl.u32 %v222, 7
      %v224 = vsub.s32 %v221, %v223
      %v225 = vrot.slane %v211, %v224
      %v226 = vcombine.high %v218, %v218
      %v227 = vcombine.high %v225, %v225
      %v296 = vunpack.c.l.b16 %v146
      %v297 = vunpack.c.l.b16 %v147
      %v298 = vunpack.c.l.b16 %v148
      %v299 = vunpack.c.l.b16 %v149
      %v300 = vunpack.c.l.b16 %v150
      %v301 = vunpack.c.l.b16 %v151
      %v302 = vunpack.c.l.b16 %v152
      %v303 = vunpack.c.l.b16 %v153
      %v304 = vunpack.c.l.b16 %v154
      %v305 = vunpack.c.l.b16 %v155
      %v306 = vunpack.c.l.b16 %v156
      %v307 = vunpack.c.l.b16 %v157
      %v308 = vunpack.c.l.b16 %v158
      %v309 = vunpack.c.l.b16 %v159
      %v310 = vunpack.c.l.b16 %v160
      %v311 = vunpack.c.l.b16 %v161
      %v312 = vunpack.c.l.b16 %v162
      %v313 = vunpack.c.l.b16 %v163
      %v314 = vunpack.c.l.b16 %v164
      %v315 = vunpack.c.l.b16 %v165
      %v316 = vunpack.c.l.b16 %v166
      %v317 = vunpack.c.l.b16 %v167
      %v318 = vunpack.c.l.b16 %v168
      %v319 = vunpack.c.l.b16 %v169
      %v320 = vunpack.c.l.b16 %v170
      %v321 = vunpack.c.l.b16 %v171
      %v322 = vunpack.c.l.b16 %v172
      %v323 = vunpack.c.l.b16 %v173
      %v324 = vunpack.c.l.b16 %v174
      %v325 = vunpack.c.l.b16 %v175
      %v326 = vunpack.c.l.b16 %v176
      %v327 = vunpack.c.l.b16 %v177
      %v328 = vunpack.c.l.b16 %v178
      %v329 = vunpack.c.l.b16 %v179
      %v330 = vunpack.c.l.b16 %v180
      %v331 = vunpack.c.l.b16 %v181
      %v332 = vunpack.c.l.b16 %v182
      %v333 = vunpack.c.l.b16 %v183
      %v334 = vunpack.c.l.b16 %v184
      %v335 = vunpack.c.l.b16 %v185
      %v336 = vunpack.c.l.b16 %v186
      %v337 = vunpack.c.l.b16 %v187
      %v338 = vunpack.c.l.b16 %v188
      %v339 = vunpack.c.l.b16 %v189
      %v340 = vunpack.c.l.b16 %v190
      %v341 = vunpack.c.l.b16 %v191
      %v342 = vunpack.c.l.b16 %v192
      %v343 = vunpack.c.l.b16 %v193
      %v344 = vunpack.c.l.b16 %v194
      %v345 = vunpack.c.l.b16 %v195
      %v346 = vunpack.c.l.b16 %v196
      %v347 = vunpack.c.l.b16 %v197
      %v348 = vunpack.c.l.b16 %v198
      %v349 = vunpack.c.l.b16 %v199
      %v350 = vunpack.c.l.b16 %v200
      %v351 = vunpack.c.l.b16 %v201
      %v352 = vunpack.c.l.b16 %v202
      %v353 = vunpack.c.l.b16 %v203
      %v354 = vunpack.c.l.b16 %v204
      %v355 = vunpack.c.l.b16 %v205
      %v356 = vunpack.c.l.b16 %v206
      %v357 = vunpack.c.l.b16 %v207
      %v358 = vunpack.c.l.b16 %v208
      %v359 = vunpack.c.l.b16 %v209
      %v360 = vpack.c.b16 %v297, %v296
      %v361 = vpack.c.b16 %v299, %v298
      %v362 = vpack.c.b16 %v301, %v300
      %v363 = vpack.c.b16 %v303, %v302
      %v364 = vpack.c.b16 %v305, %v304
      %v365 = vpack.c.b16 %v307, %v306
      %v366 = vpack.c.b16 %v309, %v308
      %v367 = vpack.c.b16 %v311, %v310
      %v368 = vpack.c.b16 %v313, %v312
      %v369 = vpack.c.b16 %v315, %v314
      %v370 = vpack.c.b16 %v317, %v316
      %v371 = vpack.c.b16 %v319, %v318
      %v372 = vpack.c.b16 %v321, %v320
      %v373 = vpack.c.b16 %v323, %v322
      %v374 = vpack.c.b16 %v325, %v324
      %v375 = vpack.c.b16 %v327, %v326
      %v376 = vpack.c.b16 %v329, %v328
      %v377 = vpack.c.b16 %v331, %v330
      %v378 = vpack.c.b16 %v333, %v332
      %v379 = vpack.c.b16 %v335, %v334
      %v380 = vpack.c.b16 %v337, %v336
      %v381 = vpack.c.b16 %v339, %v338
      %v382 = vpack.c.b16 %v341, %v340
      %v383 = vpack.c.b16 %v343, %v342
      %v384 = vpack.c.b16 %v345, %v344
      %v385 = vpack.c.b16 %v347, %v346
      %v386 = vpack.c.b16 %v349, %v348
      %v387 = vpack.c.b16 %v351, %v350
      %v388 = vpack.c.b16 %v353, %v352
      %v389 = vpack.c.b16 %v355, %v354
      %v390 = vpack.c.b16 %v357, %v356
      %v391 = vpack.c.b16 %v359, %v358
      %424 = vmatprep.subr.bf16.mxu0 0
      %425 = vmatpush1.bf16.msra.mxu0 %v367
      %426 = vmatprep.subr.bf16.mxu0 0
      %427 = vmatpush1.bf16.msra.mxu0 %v366
      %428 = vmatprep.subr.bf16.mxu0 0
      %429 = vmatpush1.bf16.msra.mxu0 %v365
      %430 = vmatprep.subr.bf16.mxu0 0
      %431 = vmatpush1.bf16.msra.mxu0 %v364
      %432 = vmatprep.subr.bf16.mxu0 0
      %433 = vmatpush1.bf16.msra.mxu0 %v363
      %434 = vmatprep.subr.bf16.mxu0 0
      %435 = vmatpush1.bf16.msra.mxu0 %v362
      %436 = vmatprep.subr.bf16.mxu0 0
      %437 = vmatpush1.bf16.msra.mxu0 %v361
      %438 = vmatprep.subr.bf16.mxu0 0
      %439 = vmatpush1.bf16.msra.mxu0 %v360
      %440 = vmatprep.subr.bf16.mxu0 0
      %441 = vmatpush2.bf16.msra.mxu0 %v375
      %442 = vmatprep.subr.bf16.mxu0 0
      %443 = vmatpush2.bf16.msra.mxu0 %v374
      %444 = vmatprep.subr.bf16.mxu0 0
      %445 = vmatpush2.bf16.msra.mxu0 %v373
      %446 = vmatprep.subr.bf16.mxu0 0
      %447 = vmatpush2.bf16.msra.mxu0 %v372
      %448 = vmatprep.subr.bf16.mxu0 0
      %449 = vmatpush2.bf16.msra.mxu0 %v371
      %450 = vmatprep.subr.bf16.mxu0 0
      %451 = vmatpush2.bf16.msra.mxu0 %v370
      %452 = vmatprep.subr.bf16.mxu0 0
      %453 = vmatpush2.bf16.msra.mxu0 %v369
      %454 = vmatprep.subr.bf16.mxu0 0
      %455 = vmatpush2.bf16.msra.mxu0 %v368
      %456 = vmatprep.mubr.bf16.mxu0 %v226
      %457 = vmatmul.mubr.bf16.gmra.mxu0 %v218
      %v458 = vpop.f32.mrf.mxu0
      %v459 = vadd.f32 0.0, %v458
      %v460 = vpop.f32.mrf.mxu0
      %v461 = vpop.f32.mrf.mxu0
      %v462 = vpop.f32.mrf.mxu0
      %463 = vdwg.mxu0
      %464 = vmatprep.subr.bf16.mxu0 0
      %465 = vmatpush1.bf16.msra.mxu0 %v383
      %466 = vmatprep.subr.bf16.mxu0 0
      %467 = vmatpush1.bf16.msra.mxu0 %v382
      %468 = vmatprep.subr.bf16.mxu0 0
      %469 = vmatpush1.bf16.msra.mxu0 %v381
      %470 = vmatprep.subr.bf16.mxu0 0
      %471 = vmatpush1.bf16.msra.mxu0 %v380
      %472 = vmatprep.subr.bf16.mxu0 0
      %473 = vmatpush1.bf16.msra.mxu0 %v379
      %474 = vmatprep.subr.bf16.mxu0 0
      %475 = vmatpush1.bf16.msra.mxu0 %v378
      %476 = vmatprep.subr.bf16.mxu0 0
      %477 = vmatpush1.bf16.msra.mxu0 %v377
      %478 = vmatprep.subr.bf16.mxu0 0
      %479 = vmatpush1.bf16.msra.mxu0 %v376
      %480 = vmatprep.subr.bf16.mxu0 0
      %481 = vmatpush2.bf16.msra.mxu0 %v391
      %482 = vmatprep.subr.bf16.mxu0 0
      %483 = vmatpush2.bf16.msra.mxu0 %v390
      %484 = vmatprep.subr.bf16.mxu0 0
      %485 = vmatpush2.bf16.msra.mxu0 %v389
      %486 = vmatprep.subr.bf16.mxu0 0
      %487 = vmatpush2.bf16.msra.mxu0 %v388
      %488 = vmatprep.subr.bf16.mxu0 0
      %489 = vmatpush2.bf16.msra.mxu0 %v387
      %490 = vmatprep.subr.bf16.mxu0 0
      %491 = vmatpush2.bf16.msra.mxu0 %v386
      %492 = vmatprep.subr.bf16.mxu0 0
      %493 = vmatpush2.bf16.msra.mxu0 %v385
      %494 = vmatprep.subr.bf16.mxu0 0
      %495 = vmatpush2.bf16.msra.mxu0 %v384
      %496 = vmatprep.mubr.bf16.mxu0 %v227
      %497 = vmatmul.mubr.bf16.gmra.mxu0 %v225
      %v498 = vpop.f32.mrf.mxu0
      %v499 = vadd.f32 %v459, %v498
      %v500 = vpop.f32.mrf.mxu0
      %v501 = vpop.f32.mrf.mxu0
      %v502 = vpop.f32.mrf.mxu0
      %503 = vdwg.mxu0
      %s504 = scalar_lea.vmem %s138, 8
      %v505 = vld [vmem:[%s504] sm:$0xff]
      %s506 = scalar_lea.vmem %s1, 256
      %v507 = vld [vmem:[%s506] sm:$0xf]
      %v508 = vld [vmem:[%s506 + $0x4] sm:$0xf]
      %v509 = vld [vmem:[%s506 + $0x8] sm:$0xf]
      %v510 = vld [vmem:[%s506 + $0xc] sm:$0xf]
      %v511 = vld [vmem:[%s506 + $0x10] sm:$0xf]
      %v512 = vld [vmem:[%s506 + $0x14] sm:$0xf]
      %v513 = vld [vmem:[%s506 + $0x18] sm:$0xf]
      %v514 = vld [vmem:[%s506 + $0x1c] sm:$0xf]
      %v515 = vld [vmem:[%s506 + $0x20] sm:$0xf]
      %v516 = vld [vmem:[%s506 + $0x24] sm:$0xf]
      %v517 = vld [vmem:[%s506 + $0x28] sm:$0xf]
      %v518 = vld [vmem:[%s506 + $0x2c] sm:$0xf]
      %v519 = vld [vmem:[%s506 + $0x30] sm:$0xf]
      %v520 = vld [vmem:[%s506 + $0x34] sm:$0xf]
      %v521 = vld [vmem:[%s506 + $0x38] sm:$0xf]
      %v522 = vld [vmem:[%s506 + $0x3c] sm:$0xf]
      %v523 = vld [vmem:[%s506 + $0x40] sm:$0xf]
      %v524 = vld [vmem:[%s506 + $0x44] sm:$0xf]
      %v525 = vld [vmem:[%s506 + $0x48] sm:$0xf]
      %v526 = vld [vmem:[%s506 + $0x4c] sm:$0xf]
      %v527 = vld [vmem:[%s506 + $0x50] sm:$0xf]
      %v528 = vld [vmem:[%s506 + $0x54] sm:$0xf]
      %v529 = vld [vmem:[%s506 + $0x58] sm:$0xf]
      %v530 = vld [vmem:[%s506 + $0x5c] sm:$0xf]
      %v531 = vld [vmem:[%s506 + $0x60] sm:$0xf]
      %v532 = vld [vmem:[%s506 + $0x64] sm:$0xf]
      %v533 = vld [vmem:[%s506 + $0x68] sm:$0xf]
      %v534 = vld [vmem:[%s506 + $0x6c] sm:$0xf]
      %v535 = vld [vmem:[%s506 + $0x70] sm:$0xf]
      %v536 = vld [vmem:[%s506 + $0x74] sm:$0xf]
      %v537 = vld [vmem:[%s506 + $0x78] sm:$0xf]
      %v538 = vld [vmem:[%s506 + $0x7c] sm:$0xf]
      %v539 = vld [vmem:[%s506 + $0x80] sm:$0xf]
      %v540 = vld [vmem:[%s506 + $0x84] sm:$0xf]
      %v541 = vld [vmem:[%s506 + $0x88] sm:$0xf]
      %v542 = vld [vmem:[%s506 + $0x8c] sm:$0xf]
      %v543 = vld [vmem:[%s506 + $0x90] sm:$0xf]
      %v544 = vld [vmem:[%s506 + $0x94] sm:$0xf]
      %v545 = vld [vmem:[%s506 + $0x98] sm:$0xf]
      %v546 = vld [vmem:[%s506 + $0x9c] sm:$0xf]
      %v547 = vld [vmem:[%s506 + $0xa0] sm:$0xf]
      %v548 = vld [vmem:[%s506 + $0xa4] sm:$0xf]
      %v549 = vld [vmem:[%s506 + $0xa8] sm:$0xf]
      %v550 = vld [vmem:[%s506 + $0xac] sm:$0xf]
      %v551 = vld [vmem:[%s506 + $0xb0] sm:$0xf]
      %v552 = vld [vmem:[%s506 + $0xb4] sm:$0xf]
      %v553 = vld [vmem:[%s506 + $0xb8] sm:$0xf]
      %v554 = vld [vmem:[%s506 + $0xbc] sm:$0xf]
      %v555 = vld [vmem:[%s506 + $0xc0] sm:$0xf]
      %v556 = vld [vmem:[%s506 + $0xc4] sm:$0xf]
      %v557 = vld [vmem:[%s506 + $0xc8] sm:$0xf]
      %v558 = vld [vmem:[%s506 + $0xcc] sm:$0xf]
      %v559 = vld [vmem:[%s506 + $0xd0] sm:$0xf]
      %v560 = vld [vmem:[%s506 + $0xd4] sm:$0xf]
      %v561 = vld [vmem:[%s506 + $0xd8] sm:$0xf]
      %v562 = vld [vmem:[%s506 + $0xdc] sm:$0xf]
      %v563 = vld [vmem:[%s506 + $0xe0] sm:$0xf]
      %v564 = vld [vmem:[%s506 + $0xe4] sm:$0xf]
      %v565 = vld [vmem:[%s506 + $0xe8] sm:$0xf]
      %v566 = vld [vmem:[%s506 + $0xec] sm:$0xf]
      %v567 = vld [vmem:[%s506 + $0xf0] sm:$0xf]
      %v568 = vld [vmem:[%s506 + $0xf4] sm:$0xf]
      %v569 = vld [vmem:[%s506 + $0xf8] sm:$0xf]
      %v570 = vld [vmem:[%s506 + $0xfc] sm:$0xf]
      %v572 = vcombine.high %v505, %v505
      %v574 = vunpack.c.l.s4 1983009808
      %v575 = vunpack.c.0.s8 %v574
      %v576 = vlaneseq
      %v577 = vshrl.u32 %v576, 7
      %v578 = vsub.s32 %v575, %v577
      %v579 = vrot.slane %v505, %v578
      %v581 = vunpack.c.l.s4 1983009808
      %v582 = vunpack.c.0.s8 %v581
      %v583 = vlaneseq
      %v584 = vshrl.u32 %v583, 7
      %v585 = vsub.s32 %v582, %v584
      %v586 = vrot.slane %v572, %v585
      %v587 = vcombine.high %v579, %v579
      %v588 = vcombine.high %v586, %v586
      %v657 = vunpack.c.l.b16 %v507
      %v658 = vunpack.c.l.b16 %v508
      %v659 = vunpack.c.l.b16 %v509
      %v660 = vunpack.c.l.b16 %v510
      %v661 = vunpack.c.l.b16 %v511
      %v662 = vunpack.c.l.b16 %v512
      %v663 = vunpack.c.l.b16 %v513
      %v664 = vunpack.c.l.b16 %v514
      %v665 = vunpack.c.l.b16 %v515
      %v666 = vunpack.c.l.b16 %v516
      %v667 = vunpack.c.l.b16 %v517
      %v668 = vunpack.c.l.b16 %v518
      %v669 = vunpack.c.l.b16 %v519
      %v670 = vunpack.c.l.b16 %v520
      %v671 = vunpack.c.l.b16 %v521
      %v672 = vunpack.c.l.b16 %v522
      %v673 = vunpack.c.l.b16 %v523
      %v674 = vunpack.c.l.b16 %v524
      %v675 = vunpack.c.l.b16 %v525
      %v676 = vunpack.c.l.b16 %v526
      %v677 = vunpack.c.l.b16 %v527
      %v678 = vunpack.c.l.b16 %v528
      %v679 = vunpack.c.l.b16 %v529
      %v680 = vunpack.c.l.b16 %v530
      %v681 = vunpack.c.l.b16 %v531
      %v682 = vunpack.c.l.b16 %v532
      %v683 = vunpack.c.l.b16 %v533
      %v684 = vunpack.c.l.b16 %v534
      %v685 = vunpack.c.l.b16 %v535
      %v686 = vunpack.c.l.b16 %v536
      %v687 = vunpack.c.l.b16 %v537
      %v688 = vunpack.c.l.b16 %v538
      %v689 = vunpack.c.l.b16 %v539
      %v690 = vunpack.c.l.b16 %v540
      %v691 = vunpack.c.l.b16 %v541
      %v692 = vunpack.c.l.b16 %v542
      %v693 = vunpack.c.l.b16 %v543
      %v694 = vunpack.c.l.b16 %v544
      %v695 = vunpack.c.l.b16 %v545
      %v696 = vunpack.c.l.b16 %v546
      %v697 = vunpack.c.l.b16 %v547
      %v698 = vunpack.c.l.b16 %v548
      %v699 = vunpack.c.l.b16 %v549
      %v700 = vunpack.c.l.b16 %v550
      %v701 = vunpack.c.l.b16 %v551
      %v702 = vunpack.c.l.b16 %v552
      %v703 = vunpack.c.l.b16 %v553
      %v704 = vunpack.c.l.b16 %v554
      %v705 = vunpack.c.l.b16 %v555
      %v706 = vunpack.c.l.b16 %v556
      %v707 = vunpack.c.l.b16 %v557
      %v708 = vunpack.c.l.b16 %v558
      %v709 = vunpack.c.l.b16 %v559
      %v710 = vunpack.c.l.b16 %v560
      %v711 = vunpack.c.l.b16 %v561
      %v712 = vunpack.c.l.b16 %v562
      %v713 = vunpack.c.l.b16 %v563
      %v714 = vunpack.c.l.b16 %v564
      %v715 = vunpack.c.l.b16 %v565
      %v716 = vunpack.c.l.b16 %v566
      %v717 = vunpack.c.l.b16 %v567
      %v718 = vunpack.c.l.b16 %v568
      %v719 = vunpack.c.l.b16 %v569
      %v720 = vunpack.c.l.b16 %v570
      %v721 = vpack.c.b16 %v658, %v657
      %v722 = vpack.c.b16 %v660, %v659
      %v723 = vpack.c.b16 %v662, %v661
      %v724 = vpack.c.b16 %v664, %v663
      %v725 = vpack.c.b16 %v666, %v665
      %v726 = vpack.c.b16 %v668, %v667
      %v727 = vpack.c.b16 %v670, %v669
      %v728 = vpack.c.b16 %v672, %v671
      %v729 = vpack.c.b16 %v674, %v673
      %v730 = vpack.c.b16 %v676, %v675
      %v731 = vpack.c.b16 %v678, %v677
      %v732 = vpack.c.b16 %v680, %v679
      %v733 = vpack.c.b16 %v682, %v681
      %v734 = vpack.c.b16 %v684, %v683
      %v735 = vpack.c.b16 %v686, %v685
      %v736 = vpack.c.b16 %v688, %v687
      %v737 = vpack.c.b16 %v690, %v689
      %v738 = vpack.c.b16 %v692, %v691
      %v739 = vpack.c.b16 %v694, %v693
      %v740 = vpack.c.b16 %v696, %v695
      %v741 = vpack.c.b16 %v698, %v697
      %v742 = vpack.c.b16 %v700, %v699
      %v743 = vpack.c.b16 %v702, %v701
      %v744 = vpack.c.b16 %v704, %v703
      %v745 = vpack.c.b16 %v706, %v705
      %v746 = vpack.c.b16 %v708, %v707
      %v747 = vpack.c.b16 %v710, %v709
      %v748 = vpack.c.b16 %v712, %v711
      %v749 = vpack.c.b16 %v714, %v713
      %v750 = vpack.c.b16 %v716, %v715
      %v751 = vpack.c.b16 %v718, %v717
      %v752 = vpack.c.b16 %v720, %v719
      %785 = vmatprep.subr.bf16.mxu0 0
      %786 = vmatpush1.bf16.msra.mxu0 %v728
      %787 = vmatprep.subr.bf16.mxu0 0
      %788 = vmatpush1.bf16.msra.mxu0 %v727
      %789 = vmatprep.subr.bf16.mxu0 0
      %790 = vmatpush1.bf16.msra.mxu0 %v726
      %791 = vmatprep.subr.bf16.mxu0 0
      %792 = vmatpush1.bf16.msra.mxu0 %v725
      %793 = vmatprep.subr.bf16.mxu0 0
      %794 = vmatpush1.bf16.msra.mxu0 %v724
      %795 = vmatprep.subr.bf16.mxu0 0
      %796 = vmatpush1.bf16.msra.mxu0 %v723
      %797 = vmatprep.subr.bf16.mxu0 0
      %798 = vmatpush1.bf16.msra.mxu0 %v722
      %799 = vmatprep.subr.bf16.mxu0 0
      %800 = vmatpush1.bf16.msra.mxu0 %v721
      %801 = vmatprep.subr.bf16.mxu0 0
      %802 = vmatpush2.bf16.msra.mxu0 %v736
      %803 = vmatprep.subr.bf16.mxu0 0
      %804 = vmatpush2.bf16.msra.mxu0 %v735
      %805 = vmatprep.subr.bf16.mxu0 0
      %806 = vmatpush2.bf16.msra.mxu0 %v734
      %807 = vmatprep.subr.bf16.mxu0 0
      %808 = vmatpush2.bf16.msra.mxu0 %v733
      %809 = vmatprep.subr.bf16.mxu0 0
      %810 = vmatpush2.bf16.msra.mxu0 %v732
      %811 = vmatprep.subr.bf16.mxu0 0
      %812 = vmatpush2.bf16.msra.mxu0 %v731
      %813 = vmatprep.subr.bf16.mxu0 0
      %814 = vmatpush2.bf16.msra.mxu0 %v730
      %815 = vmatprep.subr.bf16.mxu0 0
      %816 = vmatpush2.bf16.msra.mxu0 %v729
      %817 = vmatprep.mubr.bf16.mxu0 %v587
      %818 = vmatmul.mubr.bf16.gmra.mxu0 %v579
      %v819 = vpop.f32.mrf.mxu0
      %v820 = vadd.f32 0.0, %v819
      %v821 = vpop.f32.mrf.mxu0
      %v822 = vpop.f32.mrf.mxu0
      %v823 = vpop.f32.mrf.mxu0
      %824 = vdwg.mxu0
      %825 = vmatprep.subr.bf16.mxu0 0
      %826 = vmatpush1.bf16.msra.mxu0 %v744
      %827 = vmatprep.subr.bf16.mxu0 0
      %828 = vmatpush1.bf16.msra.mxu0 %v743
      %829 = vmatprep.subr.bf16.mxu0 0
      %830 = vmatpush1.bf16.msra.mxu0 %v742
      %831 = vmatprep.subr.bf16.mxu0 0
      %832 = vmatpush1.bf16.msra.mxu0 %v741
      %833 = vmatprep.subr.bf16.mxu0 0
      %834 = vmatpush1.bf16.msra.mxu0 %v740
      %835 = vmatprep.subr.bf16.mxu0 0
      %836 = vmatpush1.bf16.msra.mxu0 %v739
      %837 = vmatprep.subr.bf16.mxu0 0
      %838 = vmatpush1.bf16.msra.mxu0 %v738
      %839 = vmatprep.subr.bf16.mxu0 0
      %840 = vmatpush1.bf16.msra.mxu0 %v737
      %841 = vmatprep.subr.bf16.mxu0 0
      %842 = vmatpush2.bf16.msra.mxu0 %v752
      %843 = vmatprep.subr.bf16.mxu0 0
      %844 = vmatpush2.bf16.msra.mxu0 %v751
      %845 = vmatprep.subr.bf16.mxu0 0
      %846 = vmatpush2.bf16.msra.mxu0 %v750
      %847 = vmatprep.subr.bf16.mxu0 0
      %848 = vmatpush2.bf16.msra.mxu0 %v749
      %849 = vmatprep.subr.bf16.mxu0 0
      %850 = vmatpush2.bf16.msra.mxu0 %v748
      %851 = vmatprep.subr.bf16.mxu0 0
      %852 = vmatpush2.bf16.msra.mxu0 %v747
      %853 = vmatprep.subr.bf16.mxu0 0
      %854 = vmatpush2.bf16.msra.mxu0 %v746
      %855 = vmatprep.subr.bf16.mxu0 0
      %856 = vmatpush2.bf16.msra.mxu0 %v745
      %857 = vmatprep.mubr.bf16.mxu0 %v588
      %858 = vmatmul.mubr.bf16.gmra.mxu0 %v586
      %v859 = vpop.f32.mrf.mxu0
      %v860 = vadd.f32 %v820, %v859
      %v861 = vpop.f32.mrf.mxu0
      %v862 = vpop.f32.mrf.mxu0
      %v863 = vpop.f32.mrf.mxu0
      %864 = vdwg.mxu0
      %s865 = scalar_lea.vmem %s138, 16
      %v866 = vld [vmem:[%s865] sm:$0xff]
      %s867 = scalar_lea.vmem %s1, 512
      %v868 = vld [vmem:[%s867] sm:$0xf]
      %v869 = vld [vmem:[%s867 + $0x4] sm:$0xf]
      %v870 = vld [vmem:[%s867 + $0x8] sm:$0xf]
      %v871 = vld [vmem:[%s867 + $0xc] sm:$0xf]
      %v872 = vld [vmem:[%s867 + $0x10] sm:$0xf]
      %v873 = vld [vmem:[%s867 + $0x14] sm:$0xf]
      %v874 = vld [vmem:[%s867 + $0x18] sm:$0xf]
      %v875 = vld [vmem:[%s867 + $0x1c] sm:$0xf]
      %v876 = vld [vmem:[%s867 + $0x20] sm:$0xf]
      %v877 = vld [vmem:[%s867 + $0x24] sm:$0xf]
      %v878 = vld [vmem:[%s867 + $0x28] sm:$0xf]
      %v879 = vld [vmem:[%s867 + $0x2c] sm:$0xf]
      %v880 = vld [vmem:[%s867 + $0x30] sm:$0xf]
      %v881 = vld [vmem:[%s867 + $0x34] sm:$0xf]
      %v882 = vld [vmem:[%s867 + $0x38] sm:$0xf]
      %v883 = vld [vmem:[%s867 + $0x3c] sm:$0xf]
      %v884 = vld [vmem:[%s867 + $0x40] sm:$0xf]
      %v885 = vld [vmem:[%s867 + $0x44] sm:$0xf]
      %v886 = vld [vmem:[%s867 + $0x48] sm:$0xf]
      %v887 = vld [vmem:[%s867 + $0x4c] sm:$0xf]
      %v888 = vld [vmem:[%s867 + $0x50] sm:$0xf]
      %v889 = vld [vmem:[%s867 + $0x54] sm:$0xf]
      %v890 = vld [vmem:[%s867 + $0x58] sm:$0xf]
      %v891 = vld [vmem:[%s867 + $0x5c] sm:$0xf]
      %v892 = vld [vmem:[%s867 + $0x60] sm:$0xf]
      %v893 = vld [vmem:[%s867 + $0x64] sm:$0xf]
      %v894 = vld [vmem:[%s867 + $0x68] sm:$0xf]
      %v895 = vld [vmem:[%s867 + $0x6c] sm:$0xf]
      %v896 = vld [vmem:[%s867 + $0x70] sm:$0xf]
      %v897 = vld [vmem:[%s867 + $0x74] sm:$0xf]
      %v898 = vld [vmem:[%s867 + $0x78] sm:$0xf]
      %v899 = vld [vmem:[%s867 + $0x7c] sm:$0xf]
      %v900 = vld [vmem:[%s867 + $0x80] sm:$0xf]
      %v901 = vld [vmem:[%s867 + $0x84] sm:$0xf]
      %v902 = vld [vmem:[%s867 + $0x88] sm:$0xf]
      %v903 = vld [vmem:[%s867 + $0x8c] sm:$0xf]
      %v904 = vld [vmem:[%s867 + $0x90] sm:$0xf]
      %v905 = vld [vmem:[%s867 + $0x94] sm:$0xf]
      %v906 = vld [vmem:[%s867 + $0x98] sm:$0xf]
      %v907 = vld [vmem:[%s867 + $0x9c] sm:$0xf]
      %v908 = vld [vmem:[%s867 + $0xa0] sm:$0xf]
      %v909 = vld [vmem:[%s867 + $0xa4] sm:$0xf]
      %v910 = vld [vmem:[%s867 + $0xa8] sm:$0xf]
      %v911 = vld [vmem:[%s867 + $0xac] sm:$0xf]
      %v912 = vld [vmem:[%s867 + $0xb0] sm:$0xf]
      %v913 = vld [vmem:[%s867 + $0xb4] sm:$0xf]
      %v914 = vld [vmem:[%s867 + $0xb8] sm:$0xf]
      %v915 = vld [vmem:[%s867 + $0xbc] sm:$0xf]
      %v916 = vld [vmem:[%s867 + $0xc0] sm:$0xf]
      %v917 = vld [vmem:[%s867 + $0xc4] sm:$0xf]
      %v918 = vld [vmem:[%s867 + $0xc8] sm:$0xf]
      %v919 = vld [vmem:[%s867 + $0xcc] sm:$0xf]
      %v920 = vld [vmem:[%s867 + $0xd0] sm:$0xf]
      %v921 = vld [vmem:[%s867 + $0xd4] sm:$0xf]
      %v922 = vld [vmem:[%s867 + $0xd8] sm:$0xf]
      %v923 = vld [vmem:[%s867 + $0xdc] sm:$0xf]
      %v924 = vld [vmem:[%s867 + $0xe0] sm:$0xf]
      %v925 = vld [vmem:[%s867 + $0xe4] sm:$0xf]
      %v926 = vld [vmem:[%s867 + $0xe8] sm:$0xf]
      %v927 = vld [vmem:[%s867 + $0xec] sm:$0xf]
      %v928 = vld [vmem:[%s867 + $0xf0] sm:$0xf]
      %v929 = vld [vmem:[%s867 + $0xf4] sm:$0xf]
      %v930 = vld [vmem:[%s867 + $0xf8] sm:$0xf]
      %v931 = vld [vmem:[%s867 + $0xfc] sm:$0xf]
      %v933 = vcombine.high %v866, %v866
      %v935 = vunpack.c.l.s4 1983009808
      %v936 = vunpack.c.0.s8 %v935
      %v937 = vlaneseq
      %v938 = vshrl.u32 %v937, 7
      %v939 = vsub.s32 %v936, %v938
      %v940 = vrot.slane %v866, %v939
      %v942 = vunpack.c.l.s4 1983009808
      %v943 = vunpack.c.0.s8 %v942
      %v944 = vlaneseq
      %v945 = vshrl.u32 %v944, 7
      %v946 = vsub.s32 %v943, %v945
      %v947 = vrot.slane %v933, %v946
      %v948 = vcombine.high %v940, %v940
      %v949 = vcombine.high %v947, %v947
      %v1018 = vunpack.c.l.b16 %v868
      %v1019 = vunpack.c.l.b16 %v869
      %v1020 = vunpack.c.l.b16 %v870
      %v1021 = vunpack.c.l.b16 %v871
      %v1022 = vunpack.c.l.b16 %v872
      %v1023 = vunpack.c.l.b16 %v873
      %v1024 = vunpack.c.l.b16 %v874
      %v1025 = vunpack.c.l.b16 %v875
      %v1026 = vunpack.c.l.b16 %v876
      %v1027 = vunpack.c.l.b16 %v877
      %v1028 = vunpack.c.l.b16 %v878
      %v1029 = vunpack.c.l.b16 %v879
      %v1030 = vunpack.c.l.b16 %v880
      %v1031 = vunpack.c.l.b16 %v881
      %v1032 = vunpack.c.l.b16 %v882
      %v1033 = vunpack.c.l.b16 %v883
      %v1034 = vunpack.c.l.b16 %v884
      %v1035 = vunpack.c.l.b16 %v885
      %v1036 = vunpack.c.l.b16 %v886
      %v1037 = vunpack.c.l.b16 %v887
      %v1038 = vunpack.c.l.b16 %v888
      %v1039 = vunpack.c.l.b16 %v889
      %v1040 = vunpack.c.l.b16 %v890
      %v1041 = vunpack.c.l.b16 %v891
      %v1042 = vunpack.c.l.b16 %v892
      %v1043 = vunpack.c.l.b16 %v893
      %v1044 = vunpack.c.l.b16 %v894
      %v1045 = vunpack.c.l.b16 %v895
      %v1046 = vunpack.c.l.b16 %v896
      %v1047 = vunpack.c.l.b16 %v897
      %v1048 = vunpack.c.l.b16 %v898
      %v1049 = vunpack.c.l.b16 %v899
      %v1050 = vunpack.c.l.b16 %v900
      %v1051 = vunpack.c.l.b16 %v901
      %v1052 = vunpack.c.l.b16 %v902
      %v1053 = vunpack.c.l.b16 %v903
      %v1054 = vunpack.c.l.b16 %v904
      %v1055 = vunpack.c.l.b16 %v905
      %v1056 = vunpack.c.l.b16 %v906
      %v1057 = vunpack.c.l.b16 %v907
      %v1058 = vunpack.c.l.b16 %v908
      %v1059 = vunpack.c.l.b16 %v909
      %v1060 = vunpack.c.l.b16 %v910
      %v1061 = vunpack.c.l.b16 %v911
      %v1062 = vunpack.c.l.b16 %v912
      %v1063 = vunpack.c.l.b16 %v913
      %v1064 = vunpack.c.l.b16 %v914
      %v1065 = vunpack.c.l.b16 %v915
      %v1066 = vunpack.c.l.b16 %v916
      %v1067 = vunpack.c.l.b16 %v917
      %v1068 = vunpack.c.l.b16 %v918
      %v1069 = vunpack.c.l.b16 %v919
      %v1070 = vunpack.c.l.b16 %v920
      %v1071 = vunpack.c.l.b16 %v921
      %v1072 = vunpack.c.l.b16 %v922
      %v1073 = vunpack.c.l.b16 %v923
      %v1074 = vunpack.c.l.b16 %v924
      %v1075 = vunpack.c.l.b16 %v925
      %v1076 = vunpack.c.l.b16 %v926
      %v1077 = vunpack.c.l.b16 %v927
      %v1078 = vunpack.c.l.b16 %v928
      %v1079 = vunpack.c.l.b16 %v929
      %v1080 = vunpack.c.l.b16 %v930
      %v1081 = vunpack.c.l.b16 %v931
      %v1082 = vpack.c.b16 %v1019, %v1018
      %v1083 = vpack.c.b16 %v1021, %v1020
      %v1084 = vpack.c.b16 %v1023, %v1022
      %v1085 = vpack.c.b16 %v1025, %v1024
      %v1086 = vpack.c.b16 %v1027, %v1026
      %v1087 = vpack.c.b16 %v1029, %v1028
      %v1088 = vpack.c.b16 %v1031, %v1030
      %v1089 = vpack.c.b16 %v1033, %v1032
      %v1090 = vpack.c.b16 %v1035, %v1034
      %v1091 = vpack.c.b16 %v1037, %v1036
      %v1092 = vpack.c.b16 %v1039, %v1038
      %v1093 = vpack.c.b16 %v1041, %v1040
      %v1094 = vpack.c.b16 %v1043, %v1042
      %v1095 = vpack.c.b16 %v1045, %v1044
      %v1096 = vpack.c.b16 %v1047, %v1046
      %v1097 = vpack.c.b16 %v1049, %v1048
      %v1098 = vpack.c.b16 %v1051, %v1050
      %v1099 = vpack.c.b16 %v1053, %v1052
      %v1100 = vpack.c.b16 %v1055, %v1054
      %v1101 = vpack.c.b16 %v1057, %v1056
      %v1102 = vpack.c.b16 %v1059, %v1058
      %v1103 = vpack.c.b16 %v1061, %v1060
      %v1104 = vpack.c.b16 %v1063, %v1062
      %v1105 = vpack.c.b16 %v1065, %v1064
      %v1106 = vpack.c.b16 %v1067, %v1066
      %v1107 = vpack.c.b16 %v1069, %v1068
      %v1108 = vpack.c.b16 %v1071, %v1070
      %v1109 = vpack.c.b16 %v1073, %v1072
      %v1110 = vpack.c.b16 %v1075, %v1074
      %v1111 = vpack.c.b16 %v1077, %v1076
      %v1112 = vpack.c.b16 %v1079, %v1078
      %v1113 = vpack.c.b16 %v1081, %v1080
      %1146 = vmatprep.subr.bf16.mxu0 0
      %1147 = vmatpush1.bf16.msra.mxu0 %v1089
      %1148 = vmatprep.subr.bf16.mxu0 0
      %1149 = vmatpush1.bf16.msra.mxu0 %v1088
      %1150 = vmatprep.subr.bf16.mxu0 0
      %1151 = vmatpush1.bf16.msra.mxu0 %v1087
      %1152 = vmatprep.subr.bf16.mxu0 0
      %1153 = vmatpush1.bf16.msra.mxu0 %v1086
      %1154 = vmatprep.subr.bf16.mxu0 0
      %1155 = vmatpush1.bf16.msra.mxu0 %v1085
      %1156 = vmatprep.subr.bf16.mxu0 0
      %1157 = vmatpush1.bf16.msra.mxu0 %v1084
      %1158 = vmatprep.subr.bf16.mxu0 0
      %1159 = vmatpush1.bf16.msra.mxu0 %v1083
      %1160 = vmatprep.subr.bf16.mxu0 0
      %1161 = vmatpush1.bf16.msra.mxu0 %v1082
      %1162 = vmatprep.subr.bf16.mxu0 0
      %1163 = vmatpush2.bf16.msra.mxu0 %v1097
      %1164 = vmatprep.subr.bf16.mxu0 0
      %1165 = vmatpush2.bf16.msra.mxu0 %v1096
      %1166 = vmatprep.subr.bf16.mxu0 0
      %1167 = vmatpush2.bf16.msra.mxu0 %v1095
      %1168 = vmatprep.subr.bf16.mxu0 0
      %1169 = vmatpush2.bf16.msra.mxu0 %v1094
      %1170 = vmatprep.subr.bf16.mxu0 0
      %1171 = vmatpush2.bf16.msra.mxu0 %v1093
      %1172 = vmatprep.subr.bf16.mxu0 0
      %1173 = vmatpush2.bf16.msra.mxu0 %v1092
      %1174 = vmatprep.subr.bf16.mxu0 0
      %1175 = vmatpush2.bf16.msra.mxu0 %v1091
      %1176 = vmatprep.subr.bf16.mxu0 0
      %1177 = vmatpush2.bf16.msra.mxu0 %v1090
      %1178 = vmatprep.mubr.bf16.mxu0 %v948
      %1179 = vmatmul.mubr.bf16.gmra.mxu0 %v940
      %v1180 = vpop.f32.mrf.mxu0
      %v1181 = vadd.f32 0.0, %v1180
      %v1182 = vpop.f32.mrf.mxu0
      %v1183 = vpop.f32.mrf.mxu0
      %v1184 = vpop.f32.mrf.mxu0
      %1185 = vdwg.mxu0
      %1186 = vmatprep.subr.bf16.mxu0 0
      %1187 = vmatpush1.bf16.msra.mxu0 %v1105
      %1188 = vmatprep.subr.bf16.mxu0 0
      %1189 = vmatpush1.bf16.msra.mxu0 %v1104
      %1190 = vmatprep.subr.bf16.mxu0 0
      %1191 = vmatpush1.bf16.msra.mxu0 %v1103
      %1192 = vmatprep.subr.bf16.mxu0 0
      %1193 = vmatpush1.bf16.msra.mxu0 %v1102
      %1194 = vmatprep.subr.bf16.mxu0 0
      %1195 = vmatpush1.bf16.msra.mxu0 %v1101
      %1196 = vmatprep.subr.bf16.mxu0 0
      %1197 = vmatpush1.bf16.msra.mxu0 %v1100
      %1198 = vmatprep.subr.bf16.mxu0 0
      %1199 = vmatpush1.bf16.msra.mxu0 %v1099
      %1200 = vmatprep.subr.bf16.mxu0 0
      %1201 = vmatpush1.bf16.msra.mxu0 %v1098
      %1202 = vmatprep.subr.bf16.mxu0 0
      %1203 = vmatpush2.bf16.msra.mxu0 %v1113
      %1204 = vmatprep.subr.bf16.mxu0 0
      %1205 = vmatpush2.bf16.msra.mxu0 %v1112
      %1206 = vmatprep.subr.bf16.mxu0 0
      %1207 = vmatpush2.bf16.msra.mxu0 %v1111
      %1208 = vmatprep.subr.bf16.mxu0 0
      %1209 = vmatpush2.bf16.msra.mxu0 %v1110
      %1210 = vmatprep.subr.bf16.mxu0 0
      %1211 = vmatpush2.bf16.msra.mxu0 %v1109
      %1212 = vmatprep.subr.bf16.mxu0 0
      %1213 = vmatpush2.bf16.msra.mxu0 %v1108
      %1214 = vmatprep.subr.bf16.mxu0 0
      %1215 = vmatpush2.bf16.msra.mxu0 %v1107
      %1216 = vmatprep.subr.bf16.mxu0 0
      %1217 = vmatpush2.bf16.msra.mxu0 %v1106
      %1218 = vmatprep.mubr.bf16.mxu0 %v949
      %1219 = vmatmul.mubr.bf16.gmra.mxu0 %v947
      %v1220 = vpop.f32.mrf.mxu0
      %v1221 = vadd.f32 %v1181, %v1220
      %v1222 = vpop.f32.mrf.mxu0
      %v1223 = vpop.f32.mrf.mxu0
      %v1224 = vpop.f32.mrf.mxu0
      %1225 = vdwg.mxu0
      %s1226 = scalar_lea.vmem %s138, 24
      %v1227 = vld [vmem:[%s1226] sm:$0xff]
      %s1228 = scalar_lea.vmem %s1, 768
      %v1229 = vld [vmem:[%s1228] sm:$0xf]
      %v1230 = vld [vmem:[%s1228 + $0x4] sm:$0xf]
      %v1231 = vld [vmem:[%s1228 + $0x8] sm:$0xf]
      %v1232 = vld [vmem:[%s1228 + $0xc] sm:$0xf]
      %v1233 = vld [vmem:[%s1228 + $0x10] sm:$0xf]
      %v1234 = vld [vmem:[%s1228 + $0x14] sm:$0xf]
      %v1235 = vld [vmem:[%s1228 + $0x18] sm:$0xf]
      %v1236 = vld [vmem:[%s1228 + $0x1c] sm:$0xf]
      %v1237 = vld [vmem:[%s1228 + $0x20] sm:$0xf]
      %v1238 = vld [vmem:[%s1228 + $0x24] sm:$0xf]
      %v1239 = vld [vmem:[%s1228 + $0x28] sm:$0xf]
      %v1240 = vld [vmem:[%s1228 + $0x2c] sm:$0xf]
      %v1241 = vld [vmem:[%s1228 + $0x30] sm:$0xf]
      %v1242 = vld [vmem:[%s1228 + $0x34] sm:$0xf]
      %v1243 = vld [vmem:[%s1228 + $0x38] sm:$0xf]
      %v1244 = vld [vmem:[%s1228 + $0x3c] sm:$0xf]
      %v1245 = vld [vmem:[%s1228 + $0x40] sm:$0xf]
      %v1246 = vld [vmem:[%s1228 + $0x44] sm:$0xf]
      %v1247 = vld [vmem:[%s1228 + $0x48] sm:$0xf]
      %v1248 = vld [vmem:[%s1228 + $0x4c] sm:$0xf]
      %v1249 = vld [vmem:[%s1228 + $0x50] sm:$0xf]
      %v1250 = vld [vmem:[%s1228 + $0x54] sm:$0xf]
      %v1251 = vld [vmem:[%s1228 + $0x58] sm:$0xf]
      %v1252 = vld [vmem:[%s1228 + $0x5c] sm:$0xf]
      %v1253 = vld [vmem:[%s1228 + $0x60] sm:$0xf]
      %v1254 = vld [vmem:[%s1228 + $0x64] sm:$0xf]
      %v1255 = vld [vmem:[%s1228 + $0x68] sm:$0xf]
      %v1256 = vld [vmem:[%s1228 + $0x6c] sm:$0xf]
      %v1257 = vld [vmem:[%s1228 + $0x70] sm:$0xf]
      %v1258 = vld [vmem:[%s1228 + $0x74] sm:$0xf]
      %v1259 = vld [vmem:[%s1228 + $0x78] sm:$0xf]
      %v1260 = vld [vmem:[%s1228 + $0x7c] sm:$0xf]
      %v1261 = vld [vmem:[%s1228 + $0x80] sm:$0xf]
      %v1262 = vld [vmem:[%s1228 + $0x84] sm:$0xf]
      %v1263 = vld [vmem:[%s1228 + $0x88] sm:$0xf]
      %v1264 = vld [vmem:[%s1228 + $0x8c] sm:$0xf]
      %v1265 = vld [vmem:[%s1228 + $0x90] sm:$0xf]
      %v1266 = vld [vmem:[%s1228 + $0x94] sm:$0xf]
      %v1267 = vld [vmem:[%s1228 + $0x98] sm:$0xf]
      %v1268 = vld [vmem:[%s1228 + $0x9c] sm:$0xf]
      %v1269 = vld [vmem:[%s1228 + $0xa0] sm:$0xf]
      %v1270 = vld [vmem:[%s1228 + $0xa4] sm:$0xf]
      %v1271 = vld [vmem:[%s1228 + $0xa8] sm:$0xf]
      %v1272 = vld [vmem:[%s1228 + $0xac] sm:$0xf]
      %v1273 = vld [vmem:[%s1228 + $0xb0] sm:$0xf]
      %v1274 = vld [vmem:[%s1228 + $0xb4] sm:$0xf]
      %v1275 = vld [vmem:[%s1228 + $0xb8] sm:$0xf]
      %v1276 = vld [vmem:[%s1228 + $0xbc] sm:$0xf]
      %v1277 = vld [vmem:[%s1228 + $0xc0] sm:$0xf]
      %v1278 = vld [vmem:[%s1228 + $0xc4] sm:$0xf]
      %v1279 = vld [vmem:[%s1228 + $0xc8] sm:$0xf]
      %v1280 = vld [vmem:[%s1228 + $0xcc] sm:$0xf]
      %v1281 = vld [vmem:[%s1228 + $0xd0] sm:$0xf]
      %v1282 = vld [vmem:[%s1228 + $0xd4] sm:$0xf]
      %v1283 = vld [vmem:[%s1228 + $0xd8] sm:$0xf]
      %v1284 = vld [vmem:[%s1228 + $0xdc] sm:$0xf]
      %v1285 = vld [vmem:[%s1228 + $0xe0] sm:$0xf]
      %v1286 = vld [vmem:[%s1228 + $0xe4] sm:$0xf]
      %v1287 = vld [vmem:[%s1228 + $0xe8] sm:$0xf]
      %v1288 = vld [vmem:[%s1228 + $0xec] sm:$0xf]
      %v1289 = vld [vmem:[%s1228 + $0xf0] sm:$0xf]
      %v1290 = vld [vmem:[%s1228 + $0xf4] sm:$0xf]
      %v1291 = vld [vmem:[%s1228 + $0xf8] sm:$0xf]
      %v1292 = vld [vmem:[%s1228 + $0xfc] sm:$0xf]
      %v1294 = vcombine.high %v1227, %v1227
      %v1296 = vunpack.c.l.s4 1983009808
      %v1297 = vunpack.c.0.s8 %v1296
      %v1298 = vlaneseq
      %v1299 = vshrl.u32 %v1298, 7
      %v1300 = vsub.s32 %v1297, %v1299
      %v1301 = vrot.slane %v1227, %v1300
      %v1303 = vunpack.c.l.s4 1983009808
      %v1304 = vunpack.c.0.s8 %v1303
      %v1305 = vlaneseq
      %v1306 = vshrl.u32 %v1305, 7
      %v1307 = vsub.s32 %v1304, %v1306
      %v1308 = vrot.slane %v1294, %v1307
      %v1309 = vcombine.high %v1301, %v1301
      %v1310 = vcombine.high %v1308, %v1308
      %v1379 = vunpack.c.l.b16 %v1229
      %v1380 = vunpack.c.l.b16 %v1230
      %v1381 = vunpack.c.l.b16 %v1231
      %v1382 = vunpack.c.l.b16 %v1232
      %v1383 = vunpack.c.l.b16 %v1233
      %v1384 = vunpack.c.l.b16 %v1234
      %v1385 = vunpack.c.l.b16 %v1235
      %v1386 = vunpack.c.l.b16 %v1236
      %v1387 = vunpack.c.l.b16 %v1237
      %v1388 = vunpack.c.l.b16 %v1238
      %v1389 = vunpack.c.l.b16 %v1239
      %v1390 = vunpack.c.l.b16 %v1240
      %v1391 = vunpack.c.l.b16 %v1241
      %v1392 = vunpack.c.l.b16 %v1242
      %v1393 = vunpack.c.l.b16 %v1243
      %v1394 = vunpack.c.l.b16 %v1244
      %v1395 = vunpack.c.l.b16 %v1245
      %v1396 = vunpack.c.l.b16 %v1246
      %v1397 = vunpack.c.l.b16 %v1247
      %v1398 = vunpack.c.l.b16 %v1248
      %v1399 = vunpack.c.l.b16 %v1249
      %v1400 = vunpack.c.l.b16 %v1250
      %v1401 = vunpack.c.l.b16 %v1251
      %v1402 = vunpack.c.l.b16 %v1252
      %v1403 = vunpack.c.l.b16 %v1253
      %v1404 = vunpack.c.l.b16 %v1254
      %v1405 = vunpack.c.l.b16 %v1255
      %v1406 = vunpack.c.l.b16 %v1256
      %v1407 = vunpack.c.l.b16 %v1257
      %v1408 = vunpack.c.l.b16 %v1258
      %v1409 = vunpack.c.l.b16 %v1259
      %v1410 = vunpack.c.l.b16 %v1260
      %v1411 = vunpack.c.l.b16 %v1261
      %v1412 = vunpack.c.l.b16 %v1262
      %v1413 = vunpack.c.l.b16 %v1263
      %v1414 = vunpack.c.l.b16 %v1264
      %v1415 = vunpack.c.l.b16 %v1265
      %v1416 = vunpack.c.l.b16 %v1266
      %v1417 = vunpack.c.l.b16 %v1267
      %v1418 = vunpack.c.l.b16 %v1268
      %v1419 = vunpack.c.l.b16 %v1269
      %v1420 = vunpack.c.l.b16 %v1270
      %v1421 = vunpack.c.l.b16 %v1271
      %v1422 = vunpack.c.l.b16 %v1272
      %v1423 = vunpack.c.l.b16 %v1273
      %v1424 = vunpack.c.l.b16 %v1274
      %v1425 = vunpack.c.l.b16 %v1275
      %v1426 = vunpack.c.l.b16 %v1276
      %v1427 = vunpack.c.l.b16 %v1277
      %v1428 = vunpack.c.l.b16 %v1278
      %v1429 = vunpack.c.l.b16 %v1279
      %v1430 = vunpack.c.l.b16 %v1280
      %v1431 = vunpack.c.l.b16 %v1281
      %v1432 = vunpack.c.l.b16 %v1282
      %v1433 = vunpack.c.l.b16 %v1283
      %v1434 = vunpack.c.l.b16 %v1284
      %v1435 = vunpack.c.l.b16 %v1285
      %v1436 = vunpack.c.l.b16 %v1286
      %v1437 = vunpack.c.l.b16 %v1287
      %v1438 = vunpack.c.l.b16 %v1288
      %v1439 = vunpack.c.l.b16 %v1289
      %v1440 = vunpack.c.l.b16 %v1290
      %v1441 = vunpack.c.l.b16 %v1291
      %v1442 = vunpack.c.l.b16 %v1292
      %v1443 = vpack.c.b16 %v1380, %v1379
      %v1444 = vpack.c.b16 %v1382, %v1381
      %v1445 = vpack.c.b16 %v1384, %v1383
      %v1446 = vpack.c.b16 %v1386, %v1385
      %v1447 = vpack.c.b16 %v1388, %v1387
      %v1448 = vpack.c.b16 %v1390, %v1389
      %v1449 = vpack.c.b16 %v1392, %v1391
      %v1450 = vpack.c.b16 %v1394, %v1393
      %v1451 = vpack.c.b16 %v1396, %v1395
      %v1452 = vpack.c.b16 %v1398, %v1397
      %v1453 = vpack.c.b16 %v1400, %v1399
      %v1454 = vpack.c.b16 %v1402, %v1401
      %v1455 = vpack.c.b16 %v1404, %v1403
      %v1456 = vpack.c.b16 %v1406, %v1405
      %v1457 = vpack.c.b16 %v1408, %v1407
      %v1458 = vpack.c.b16 %v1410, %v1409
      %v1459 = vpack.c.b16 %v1412, %v1411
      %v1460 = vpack.c.b16 %v1414, %v1413
      %v1461 = vpack.c.b16 %v1416, %v1415
      %v1462 = vpack.c.b16 %v1418, %v1417
      %v1463 = vpack.c.b16 %v1420, %v1419
      %v1464 = vpack.c.b16 %v1422, %v1421
      %v1465 = vpack.c.b16 %v1424, %v1423
      %v1466 = vpack.c.b16 %v1426, %v1425
      %v1467 = vpack.c.b16 %v1428, %v1427
      %v1468 = vpack.c.b16 %v1430, %v1429
      %v1469 = vpack.c.b16 %v1432, %v1431
      %v1470 = vpack.c.b16 %v1434, %v1433
      %v1471 = vpack.c.b16 %v1436, %v1435
      %v1472 = vpack.c.b16 %v1438, %v1437
      %v1473 = vpack.c.b16 %v1440, %v1439
      %v1474 = vpack.c.b16 %v1442, %v1441
      %1507 = vmatprep.subr.bf16.mxu0 0
      %1508 = vmatpush1.bf16.msra.mxu0 %v1450
      %1509 = vmatprep.subr.bf16.mxu0 0
      %1510 = vmatpush1.bf16.msra.mxu0 %v1449
      %1511 = vmatprep.subr.bf16.mxu0 0
      %1512 = vmatpush1.bf16.msra.mxu0 %v1448
      %1513 = vmatprep.subr.bf16.mxu0 0
      %1514 = vmatpush1.bf16.msra.mxu0 %v1447
      %1515 = vmatprep.subr.bf16.mxu0 0
      %1516 = vmatpush1.bf16.msra.mxu0 %v1446
      %1517 = vmatprep.subr.bf16.mxu0 0
      %1518 = vmatpush1.bf16.msra.mxu0 %v1445
      %1519 = vmatprep.subr.bf16.mxu0 0
      %1520 = vmatpush1.bf16.msra.mxu0 %v1444
      %1521 = vmatprep.subr.bf16.mxu0 0
      %1522 = vmatpush1.bf16.msra.mxu0 %v1443
      %1523 = vmatprep.subr.bf16.mxu0 0
      %1524 = vmatpush2.bf16.msra.mxu0 %v1458
      %1525 = vmatprep.subr.bf16.mxu0 0
      %1526 = vmatpush2.bf16.msra.mxu0 %v1457
      %1527 = vmatprep.subr.bf16.mxu0 0
      %1528 = vmatpush2.bf16.msra.mxu0 %v1456
      %1529 = vmatprep.subr.bf16.mxu0 0
      %1530 = vmatpush2.bf16.msra.mxu0 %v1455
      %1531 = vmatprep.subr.bf16.mxu0 0
      %1532 = vmatpush2.bf16.msra.mxu0 %v1454
      %1533 = vmatprep.subr.bf16.mxu0 0
      %1534 = vmatpush2.bf16.msra.mxu0 %v1453
      %1535 = vmatprep.subr.bf16.mxu0 0
      %1536 = vmatpush2.bf16.msra.mxu0 %v1452
      %1537 = vmatprep.subr.bf16.mxu0 0
      %1538 = vmatpush2.bf16.msra.mxu0 %v1451
      %1539 = vmatprep.mubr.bf16.mxu0 %v1309
      %1540 = vmatmul.mubr.bf16.gmra.mxu0 %v1301
      %v1541 = vpop.f32.mrf.mxu0
      %v1542 = vadd.f32 0.0, %v1541
      %v1543 = vpop.f32.mrf.mxu0
      %v1544 = vpop.f32.mrf.mxu0
      %v1545 = vpop.f32.mrf.mxu0
      %1546 = vdwg.mxu0
      %1547 = vmatprep.subr.bf16.mxu0 0
      %1548 = vmatpush1.bf16.msra.mxu0 %v1466
      %1549 = vmatprep.subr.bf16.mxu0 0
      %1550 = vmatpush1.bf16.msra.mxu0 %v1465
      %1551 = vmatprep.subr.bf16.mxu0 0
      %1552 = vmatpush1.bf16.msra.mxu0 %v1464
      %1553 = vmatprep.subr.bf16.mxu0 0
      %1554 = vmatpush1.bf16.msra.mxu0 %v1463
      %1555 = vmatprep.subr.bf16.mxu0 0
      %1556 = vmatpush1.bf16.msra.mxu0 %v1462
      %1557 = vmatprep.subr.bf16.mxu0 0
      %1558 = vmatpush1.bf16.msra.mxu0 %v1461
      %1559 = vmatprep.subr.bf16.mxu0 0
      %1560 = vmatpush1.bf16.msra.mxu0 %v1460
      %1561 = vmatprep.subr.bf16.mxu0 0
      %1562 = vmatpush1.bf16.msra.mxu0 %v1459
      %1563 = vmatprep.subr.bf16.mxu0 0
      %1564 = vmatpush2.bf16.msra.mxu0 %v1474
      %1565 = vmatprep.subr.bf16.mxu0 0
      %1566 = vmatpush2.bf16.msra.mxu0 %v1473
      %1567 = vmatprep.subr.bf16.mxu0 0
      %1568 = vmatpush2.bf16.msra.mxu0 %v1472
      %1569 = vmatprep.subr.bf16.mxu0 0
      %1570 = vmatpush2.bf16.msra.mxu0 %v1471
      %1571 = vmatprep.subr.bf16.mxu0 0
      %1572 = vmatpush2.bf16.msra.mxu0 %v1470
      %1573 = vmatprep.subr.bf16.mxu0 0
      %1574 = vmatpush2.bf16.msra.mxu0 %v1469
      %1575 = vmatprep.subr.bf16.mxu0 0
      %1576 = vmatpush2.bf16.msra.mxu0 %v1468
      %1577 = vmatprep.subr.bf16.mxu0 0
      %1578 = vmatpush2.bf16.msra.mxu0 %v1467
      %1579 = vmatprep.mubr.bf16.mxu0 %v1310
      %1580 = vmatmul.mubr.bf16.gmra.mxu0 %v1308
      %v1581 = vpop.f32.mrf.mxu0
      %v1582 = vadd.f32 %v1542, %v1581
      %v1583 = vpop.f32.mrf.mxu0
      %v1584 = vpop.f32.mrf.mxu0
      %v1585 = vpop.f32.mrf.mxu0
      %1586 = vdwg.mxu0
      %vm1587 = vcmask 1043456
      %v1588 = vsel %vm1587, %v499, 0.0
      %v1589 = vrot.slane %v1588, 4
      %v1590 = vadd.f32 %v1588, %v1589
      %v1591 = vrot.slane %v1590, 2
      %v1592 = vadd.f32 %v1590, %v1591
      %v1593 = vrot.slane %v1592, 1
      %v1594 = vadd.f32 %v1592, %v1593
      %v1595 = vadd.f32 %v1594, 0.0
      %v1596 = vsel %vm1587, %v860, 0.0
      %v1597 = vrot.slane %v1596, 4
      %v1598 = vadd.f32 %v1596, %v1597
      %v1599 = vrot.slane %v1598, 2
      %v1600 = vadd.f32 %v1598, %v1599
      %v1601 = vrot.slane %v1600, 1
      %v1602 = vadd.f32 %v1600, %v1601
      %v1603 = vadd.f32 %v1595, %v1602
      %v1604 = vsel %vm1587, %v1221, 0.0
      %v1605 = vrot.slane %v1604, 4
      %v1606 = vadd.f32 %v1604, %v1605
      %v1607 = vrot.slane %v1606, 2
      %v1608 = vadd.f32 %v1606, %v1607
      %v1609 = vrot.slane %v1608, 1
      %v1610 = vadd.f32 %v1608, %v1609
      %v1611 = vadd.f32 %v1603, %v1610
      %v1612 = vsel %vm1587, %v1582, 0.0
      %v1613 = vrot.slane %v1612, 4
      %v1614 = vadd.f32 %v1612, %v1613
      %v1615 = vrot.slane %v1614, 2
      %v1616 = vadd.f32 %v1614, %v1615
      %v1617 = vrot.slane %v1616, 1
      %v1618 = vadd.f32 %v1616, %v1617
      %v1619 = vadd.f32 %v1611, %v1618
      %v1620 = vrcp.pop 16.0
      %v1621 = vmul.f32 %v1619, %v1620
      %v1622 = vsub.f32 %v499, %v1621
      %v1623 = vmul.f32 %v1622, %v1622
      %v1624 = vsel %vm1587, %v1623, 0.0
      %v1625 = vrot.slane %v1624, 4
      %v1626 = vadd.f32 %v1624, %v1625
      %v1627 = vrot.slane %v1626, 2
      %v1628 = vadd.f32 %v1626, %v1627
      %v1629 = vrot.slane %v1628, 1
      %v1630 = vadd.f32 %v1628, %v1629
      %v1631 = vadd.f32 %v1630, 0.0
      %v1632 = vsub.f32 %v860, %v1621
      %v1633 = vmul.f32 %v1632, %v1632
      %v1634 = vsel %vm1587, %v1633, 0.0
      %v1635 = vrot.slane %v1634, 4
      %v1636 = vadd.f32 %v1634, %v1635
      %v1637 = vrot.slane %v1636, 2
      %v1638 = vadd.f32 %v1636, %v1637
      %v1639 = vrot.slane %v1638, 1
      %v1640 = vadd.f32 %v1638, %v1639
      %v1641 = vadd.f32 %v1631, %v1640
      %v1642 = vsub.f32 %v1221, %v1621
      %v1643 = vmul.f32 %v1642, %v1642
      %v1644 = vsel %vm1587, %v1643, 0.0
      %v1645 = vrot.slane %v1644, 4
      %v1646 = vadd.f32 %v1644, %v1645
      %v1647 = vrot.slane %v1646, 2
      %v1648 = vadd.f32 %v1646, %v1647
      %v1649 = vrot.slane %v1648, 1
      %v1650 = vadd.f32 %v1648, %v1649
      %v1651 = vadd.f32 %v1641, %v1650
      %v1652 = vsub.f32 %v1582, %v1621
      %v1653 = vmul.f32 %v1652, %v1652
      %v1654 = vsel %vm1587, %v1653, 0.0
      %v1655 = vrot.slane %v1654, 4
      %v1656 = vadd.f32 %v1654, %v1655
      %v1657 = vrot.slane %v1656, 2
      %v1658 = vadd.f32 %v1656, %v1657
      %v1659 = vrot.slane %v1658, 1
      %v1660 = vadd.f32 %v1658, %v1659
      %v1661 = vadd.f32 %v1651, %v1660
      %v1662 = vmul.f32 %v1661, %v1620
      %v1663 = vadd.f32 %v1662, 1e-05
      %v1664 = vrsqrt.pop %v1663
      %v1665 = vmul.f32 %v1622, %v1664
      %v1666 = vpack.c.bf16 %v1665, %v1665
      %1667 = vst [vmem:[%s143] sm:$0x3] %v1666
      %v1668 = vmul.f32 %v1632, %v1664
      %v1669 = vpack.c.bf16 %v1668, %v1668
      %s1670 = scalar_lea.vmem %s143, 2
      %1671 = vst [vmem:[%s1670] sm:$0x3] %v1669
      %v1672 = vmul.f32 %v1642, %v1664
      %v1673 = vpack.c.bf16 %v1672, %v1672
      %s1674 = scalar_lea.vmem %s143, 4
      %1675 = vst [vmem:[%s1674] sm:$0x3] %v1673
      %v1676 = vmul.f32 %v1652, %v1664
      %v1677 = vpack.c.bf16 %v1676, %v1676
      %s1678 = scalar_lea.vmem %s143, 6
      %1679 = vst [vmem:[%s1678] sm:$0x3] %v1677
      %p1680 = scmp.lt.s32.totalorder %s13, 1
      %s1681 = scalar_select %p1680, %s13, 1
      %s1682 = smul.addr %s1681, 4
      %s1683 = smul.addr %s1682, 2
      %s1684 = scalar_lea.vmem %s2, %s1683
      // Predicated region
      $region29: #{_lambda_.13} parent=27 // pred_check
        %p1685 = pneg %p78
      $region30: #{_lambda_.13} parent=27 // pred_check_branch
        %1687 = sbr.rel (%p1685) target = $region32
      $region31: #{_lambda_.13} parent=27 // pred_region
        _
      $region32: #{_lambda_.13} parent=27 // pred_fallthru
        _
    $region28: #{_lambda_.13} parent=5 // pred_fallthru
      _
    %p1688 = scmp.le.s32.totalorder 2, %s8
    // Predicated region
    $region33: #{_lambda_.13} parent=5 // pred_check
      %p1689 = pneg %p1688
    $region34: #{_lambda_.13} parent=5 // pred_check_branch
      %1691 = sbr.rel (%p1689) target = $region36
    $region35: #{_lambda_.13} parent=5 // pred_region
      %s1692 = ssub.s32 %s8, 2
      // Predicated region
      $region37: #{_lambda_.13} parent=35 // pred_check
        %p1693 = pneg %p84
      $region38: #{_lambda_.13} parent=35 // pred_check_branch
        %1695 = sbr.rel (%p1693) target = $region40
      $region39: #{_lambda_.13} parent=35 // pred_region
        %p1696 = scmp.lt.s32.totalorder %s14, 1
        %s1697 = scalar_select %p1696, %s14, 1
        %s1698 = smul.addr %s1697, 4
        %s1699 = smul.addr %s1698, 2
        %s1700 = scalar_lea.vmem %s2, %s1699
      $region40: #{_lambda_.13} parent=35 // pred_fallthru
        _
    $region36: #{_lambda_.13} parent=5 // pred_fallthru
      _
  $region6: #{_lambda_.13} parent=0 // loop_footer
    %s12 = sadd.s32 1, %s8
  $region7: #{_lambda_.13} parent=0 // loop_footer_branch
    %7 = sbr.rel target = $region3
  $region8: #{_lambda_.13} parent=0 // loop_exit
    _

// kernel: _lambda_.14
$region0: #{_lambda_.14}
  #allocation0 [shape = 'u32[]', space=smem, size = 0x4, offset = 0x4, fixed_abs, tag = 'smem constant byte address 0x4 - core index']
  #allocation1 [shape = 'u32[144,128]{1,0:T(1,128)}', space=vmem, size = 0x12000, scoped, tag = 'internal scratch']
  %s0 = inlined_call_operand.vmem [shape: bf16[2,4,16,256], index: 0, kind: input, shape index: {}]
  %s1 = inlined_call_operand.vmem [shape: bf16[4,256,128], index: 1, kind: input, shape index: {}]
  %s2 = inlined_call_operand.vmem [shape: bf16[2,4,16,128], index: 2, kind: output, shape index: {}]
  %s3 = sld [smem:[#allocation0]]
  $region41: #{_lambda_.14} parent=0
    _
  %s5 = ssub.s32 1, %s3
  %s6 = scalar_select 0, %s5, %s3
  loop: start=0, step=1, limit=4
  $region2: #{_lambda_.14} parent=0 // loop_pre_header
    _
  $region3: #{_lambda_.14} parent=0 // loop_header
    %s8 = sphi 0, %s12
    %p9 = scmp.ge.s32.totalorder %s8, 4
    %s18 = sphi 0, %s20
    %s21 = sphi 0, %s18
    %s22 = sphi 0, %s21
    %s38 = sphi 0, %s22
    %s42 = sphi 0, %s42
    %s44 = sphi 0, %s42
    %s45 = sphi 0, %s44
    %s59 = sphi 0, %s45
    %s65 = sphi 0, %s67
    %s68 = sphi 0, %s65
    %s69 = sphi 0, %s68
    %s85 = sphi 0, %s69
  $region4: #{_lambda_.14} parent=0 // loop_header_branch
    %11 = sbr.rel (%p9) target = $region8
  $region5: #{_lambda_.14} parent=0 // loop_body
    %s13 = ssub.s32 %s8, 1
    %s14 = ssub.s32 %s8, 2
    %s15 = sadd.s32 %s8, 1
    %s16 = ssub.s32 %s8, %s15
    %p17 = scmp.eq.s32.totalorder %s16, 0
    %s19 = sadd.s32 %s18, 1
    %s20 = scalar_select %p17, %s18, %s19
    %p23 = pneg %p17
    %p24 = scmp.eq.s32.totalorder %s8, 1
    %p25 = por %p23, %p24
    %p26 = scmp.ne.s32.totalorder %s18, %s21
    %p27 = scmp.eq.s32.totalorder %s8, 0
    %p28 = por %p26, %p27
    %p29 = scmp.ne.s32.totalorder %s18, %s21
    %p30 = scmp.eq.s32.totalorder %s13, 1
    %p31 = por %p29, %p30
    %p32 = scmp.ne.s32.totalorder %s21, %s22
    %p33 = scmp.eq.s32.totalorder %s13, 0
    %p34 = por %p32, %p33
    %p35 = scmp.ne.s32.totalorder %s21, %s22
    %p36 = scmp.eq.s32.totalorder %s14, 1
    %p37 = por %p35, %p36
    %p39 = scmp.ne.s32.totalorder %s22, %s38
    %p40 = scmp.eq.s32.totalorder %s14, 0
    %p41 = por %p39, %p40
    %s43 = sadd.s32 %s42, 1
    %p46 = scmp.eq.s32.totalorder %s8, 1
    %p47 = scmp.ne.s32.totalorder %s42, %s44
    %p48 = scmp.eq.s32.totalorder %s8, 0
    %p49 = por %p47, %p48
    %p50 = scmp.ne.s32.totalorder %s42, %s44
    %p51 = scmp.eq.s32.totalorder %s13, 1
    %p52 = por %p50, %p51
    %p53 = scmp.ne.s32.totalorder %s44, %s45
    %p54 = scmp.eq.s32.totalorder %s13, 0
    %p55 = por %p53, %p54
    %p56 = scmp.ne.s32.totalorder %s44, %s45
    %p57 = scmp.eq.s32.totalorder %s14, 1
    %p58 = por %p56, %p57
    %p60 = scmp.ne.s32.totalorder %s45, %s59
    %p61 = scmp.eq.s32.totalorder %s14, 0
    %p62 = por %p60, %p61
    %s63 = ssub.s32 %s8, %s15
    %p64 = scmp.eq.s32.totalorder %s63, 0
    %s66 = sadd.s32 %s65, 1
    %s67 = scalar_select %p64, %s65, %s66
    %p70 = pneg %p64
    %p71 = scmp.eq.s32.totalorder %s8, 1
    %p72 = por %p70, %p71
    %p73 = scmp.ne.s32.totalorder %s65, %s68
    %p74 = scmp.eq.s32.totalorder %s8, 0
    %p75 = por %p73, %p74
    %p76 = scmp.ne.s32.totalorder %s65, %s68
    %p77 = scmp.eq.s32.totalorder %s13, 1
    %p78 = por %p76, %p77
    %p79 = scmp.ne.s32.totalorder %s68, %s69
    %p80 = scmp.eq.s32.totalorder %s13, 0
    %p81 = por %p79, %p80
    %p82 = scmp.ne.s32.totalorder %s68, %s69
    %p83 = scmp.eq.s32.totalorder %s14, 1
    %p84 = por %p82, %p83
    %p86 = scmp.ne.s32.totalorder %s69, %s85
    %p87 = scmp.eq.s32.totalorder %s14, 0
    %p88 = por %p86, %p87
    %p89 = scmp.le.s32.totalorder 1, %s8
    %p90 = scmp.lt.s32.totalorder %s8, 3
    %p91 = pnand %p89, %p90
    %p92 = pneg %p91
    // Predicated region
    $region9: #{_lambda_.14} parent=5 // pred_check
      _
    $region10: #{_lambda_.14} parent=5 // pred_check_branch
      %94 = sbr.rel (%p91) target = $region12
    $region11: #{_lambda_.14} parent=5 // pred_region
      %s95 = ssub.s32 %s8, 1
      // Predicated region
      $region13: #{_lambda_.14} parent=11 // pred_check
        %p96 = pneg %p55
      $region14: #{_lambda_.14} parent=11 // pred_check_branch
        %98 = sbr.rel (%p96) target = $region16
      $region15: #{_lambda_.14} parent=11 // pred_region
        _
      $region16: #{_lambda_.14} parent=11 // pred_fallthru
        _
    $region12: #{_lambda_.14} parent=5 // pred_fallthru
      _
    %p99 = scmp.lt.s32.totalorder %s8, 2
    // Predicated region
    $region17: #{_lambda_.14} parent=5 // pred_check
      %p100 = pneg %p99
    $region18: #{_lambda_.14} parent=5 // pred_check_branch
      %102 = sbr.rel (%p100) target = $region20
    $region19: #{_lambda_.14} parent=5 // pred_region
      // Predicated region
      $region21: #{_lambda_.14} parent=19 // pred_check
        %p103 = pneg %p28
      $region22: #{_lambda_.14} parent=19 // pred_check_branch
        %105 = sbr.rel (%p103) target = $region24
      $region23: #{_lambda_.14} parent=19 // pred_region
        %p106 = scmp.lt.s32.totalorder %s8, 1
        %s107 = scalar_select %p106, %s8, 1
        %s108 = smul.addr %s107, 16
        %s109 = smul.addr %s108, 4
        %s110 = scalar_lea.vmem %s0, %s109
      $region24: #{_lambda_.14} parent=19 // pred_fallthru
        _
    $region20: #{_lambda_.14} parent=5 // pred_fallthru
      _
    %p111 = scmp.le.s32.totalorder 1, %s8
    %p112 = scmp.lt.s32.totalorder %s8, 3
    %p113 = pnand %p111, %p112
    %p114 = pneg %p113
    // Predicated region
    $region25: #{_lambda_.14} parent=5 // pred_check
      _
    $region26: #{_lambda_.14} parent=5 // pred_check_branch
      %116 = sbr.rel (%p113) target = $region28
    $region27: #{_lambda_.14} parent=5 // pred_region
      %s117 = ssub.s32 %s8, 1
      %p118 = scmp.lt.s32.totalorder %s13, 1
      %s119 = scalar_select %p118, %s13, 1
      %s120 = smul.addr %s119, 16
      %s121 = smul.addr %s120, 4
      %s122 = scalar_lea.vmem %s0, %s121
      %p123 = pneg %p34
      %p124 = pneg %p31
      %p125 = pneg %p55
      %p126 = pneg %p52
      %p127 = pneg %p81
      %p128 = pneg %p78
      %p129 = scmp.lt.s32.totalorder %s13, 1
      %s130 = scalar_select %p129, %s13, 1
      %s131 = smul.addr %s130, 8
      %s132 = smul.addr %s131, 4
      %s133 = scalar_lea.vmem %s2, %s132
      %p134 = scmp.lt.s32.totalorder %s13, 1
      %s135 = scalar_select %p134, %s13, 1
      %s136 = smul.addr %s135, 16
      %s137 = smul.addr %s136, 4
      %s138 = scalar_lea.vmem %s0, %s137
      %p139 = scmp.lt.s32.totalorder %s13, 1
      %s140 = scalar_select %p139, %s13, 1
      %s141 = smul.addr %s140, 8
      %s142 = smul.addr %s141, 4
      %s143 = scalar_lea.vmem %s2, %s142
      %v145 = vld [vmem:[%s138] sm:$0xff]
      %v146 = vld [vmem:[%s138 + $0x8] sm:$0xff]
      %v147 = vld [vmem:[%s1] sm:$0xf]
      %v148 = vld [vmem:[%s1 + $0x4] sm:$0xf]
      %v149 = vld [vmem:[%s1 + $0x8] sm:$0xf]
      %v150 = vld [vmem:[%s1 + $0xc] sm:$0xf]
      %v151 = vld [vmem:[%s1 + $0x10] sm:$0xf]
      %v152 = vld [vmem:[%s1 + $0x14] sm:$0xf]
      %v153 = vld [vmem:[%s1 + $0x18] sm:$0xf]
      %v154 = vld [vmem:[%s1 + $0x1c] sm:$0xf]
      %v155 = vld [vmem:[%s1 + $0x20] sm:$0xf]
      %v156 = vld [vmem:[%s1 + $0x24] sm:$0xf]
      %v157 = vld [vmem:[%s1 + $0x28] sm:$0xf]
      %v158 = vld [vmem:[%s1 + $0x2c] sm:$0xf]
      %v159 = vld [vmem:[%s1 + $0x30] sm:$0xf]
      %v160 = vld [vmem:[%s1 + $0x34] sm:$0xf]
      %v161 = vld [vmem:[%s1 + $0x38] sm:$0xf]
      %v162 = vld [vmem:[%s1 + $0x3c] sm:$0xf]
      %v163 = vld [vmem:[%s1 + $0x40] sm:$0xf]
      %v164 = vld [vmem:[%s1 + $0x44] sm:$0xf]
      %v165 = vld [vmem:[%s1 + $0x48] sm:$0xf]
      %v166 = vld [vmem:[%s1 + $0x4c] sm:$0xf]
      %v167 = vld [vmem:[%s1 + $0x50] sm:$0xf]
      %v168 = vld [vmem:[%s1 + $0x54] sm:$0xf]
      %v169 = vld [vmem:[%s1 + $0x58] sm:$0xf]
      %v170 = vld [vmem:[%s1 + $0x5c] sm:$0xf]
      %v171 = vld [vmem:[%s1 + $0x60] sm:$0xf]
      %v172 = vld [vmem:[%s1 + $0x64] sm:$0xf]
      %v173 = vld [vmem:[%s1 + $0x68] sm:$0xf]
      %v174 = vld [vmem:[%s1 + $0x6c] sm:$0xf]
      %v175 = vld [vmem:[%s1 + $0x70] sm:$0xf]
      %v176 = vld [vmem:[%s1 + $0x74] sm:$0xf]
      %v177 = vld [vmem:[%s1 + $0x78] sm:$0xf]
      %v178 = vld [vmem:[%s1 + $0x7c] sm:$0xf]
      %v181 = vunpack.c.l.b16 %v145
      %v182 = vunpack.c.h.b16 %v145
      %v183 = vunpack.c.l.b16 %v146
      %v184 = vunpack.c.h.b16 %v146
      %v185 = vpack.c.b16 %v183, %v181
      %v186 = vpack.c.b16 %v184, %v182
      %v221 = vunpack.c.l.b16 %v147
      %v222 = vunpack.c.l.b16 %v148
      %v223 = vunpack.c.l.b16 %v149
      %v224 = vunpack.c.l.b16 %v150
      %v225 = vunpack.c.l.b16 %v151
      %v226 = vunpack.c.l.b16 %v152
      %v227 = vunpack.c.l.b16 %v153
      %v228 = vunpack.c.l.b16 %v154
      %v229 = vunpack.c.l.b16 %v155
      %v230 = vunpack.c.l.b16 %v156
      %v231 = vunpack.c.l.b16 %v157
      %v232 = vunpack.c.l.b16 %v158
      %v233 = vunpack.c.l.b16 %v159
      %v234 = vunpack.c.l.b16 %v160
      %v235 = vunpack.c.l.b16 %v161
      %v236 = vunpack.c.l.b16 %v162
      %v237 = vunpack.c.l.b16 %v163
      %v238 = vunpack.c.l.b16 %v164
      %v239 = vunpack.c.l.b16 %v165
      %v240 = vunpack.c.l.b16 %v166
      %v241 = vunpack.c.l.b16 %v167
      %v242 = vunpack.c.l.b16 %v168
      %v243 = vunpack.c.l.b16 %v169
      %v244 = vunpack.c.l.b16 %v170
      %v245 = vunpack.c.l.b16 %v171
      %v246 = vunpack.c.l.b16 %v172
      %v247 = vunpack.c.l.b16 %v173
      %v248 = vunpack.c.l.b16 %v174
      %v249 = vunpack.c.l.b16 %v175
      %v250 = vunpack.c.l.b16 %v176
      %v251 = vunpack.c.l.b16 %v177
      %v252 = vunpack.c.l.b16 %v178
      %v253 = vpack.c.b16 %v222, %v221
      %v254 = vpack.c.b16 %v224, %v223
      %v255 = vpack.c.b16 %v226, %v225
      %v256 = vpack.c.b16 %v228, %v227
      %v257 = vpack.c.b16 %v230, %v229
      %v258 = vpack.c.b16 %v232, %v231
      %v259 = vpack.c.b16 %v234, %v233
      %v260 = vpack.c.b16 %v236, %v235
      %v261 = vpack.c.b16 %v238, %v237
      %v262 = vpack.c.b16 %v240, %v239
      %v263 = vpack.c.b16 %v242, %v241
      %v264 = vpack.c.b16 %v244, %v243
      %v265 = vpack.c.b16 %v246, %v245
      %v266 = vpack.c.b16 %v248, %v247
      %v267 = vpack.c.b16 %v250, %v249
      %v268 = vpack.c.b16 %v252, %v251
      %285 = vmatprep.subr.bf16.mxu0 0
      %286 = vmatpush1.bf16.msra.mxu0 %v260
      %287 = vmatprep.subr.bf16.mxu0 0
      %288 = vmatpush1.bf16.msra.mxu0 %v259
      %289 = vmatprep.subr.bf16.mxu0 0
      %290 = vmatpush1.bf16.msra.mxu0 %v258
      %291 = vmatprep.subr.bf16.mxu0 0
      %292 = vmatpush1.bf16.msra.mxu0 %v257
      %293 = vmatprep.subr.bf16.mxu0 0
      %294 = vmatpush1.bf16.msra.mxu0 %v256
      %295 = vmatprep.subr.bf16.mxu0 0
      %296 = vmatpush1.bf16.msra.mxu0 %v255
      %297 = vmatprep.subr.bf16.mxu0 0
      %298 = vmatpush1.bf16.msra.mxu0 %v254
      %299 = vmatprep.subr.bf16.mxu0 0
      %300 = vmatpush1.bf16.msra.mxu0 %v253
      %301 = vmatprep.subr.bf16.mxu0 0
      %302 = vmatpush2.bf16.msra.mxu0 %v268
      %303 = vmatprep.subr.bf16.mxu0 0
      %304 = vmatpush2.bf16.msra.mxu0 %v267
      %305 = vmatprep.subr.bf16.mxu0 0
      %306 = vmatpush2.bf16.msra.mxu0 %v266
      %307 = vmatprep.subr.bf16.mxu0 0
      %308 = vmatpush2.bf16.msra.mxu0 %v265
      %309 = vmatprep.subr.bf16.mxu0 0
      %310 = vmatpush2.bf16.msra.mxu0 %v264
      %311 = vmatprep.subr.bf16.mxu0 0
      %312 = vmatpush2.bf16.msra.mxu0 %v263
      %313 = vmatprep.subr.bf16.mxu0 0
      %314 = vmatpush2.bf16.msra.mxu0 %v262
      %315 = vmatprep.subr.bf16.mxu0 0
      %316 = vmatpush2.bf16.msra.mxu0 %v261
      %317 = vmatprep.mubr.bf16.mxu0 %v186
      %318 = vmatmul.mubr.bf16.gmra.mxu0 %v185
      %v319 = vpop.f32.mrf.mxu0
      %v320 = vadd.f32 0.0, %v319
      %v321 = vpop.f32.mrf.mxu0
      %v322 = vpop.f32.mrf.mxu0
      %v323 = vadd.f32 0.0, %v322
      %v324 = vpop.f32.mrf.mxu0
      %325 = vdwg.mxu0
      %s326 = scalar_lea.vmem %s138, 16
      %v327 = vld [vmem:[%s326] sm:$0xff]
      %v328 = vld [vmem:[%s326 + $0x8] sm:$0xff]
      %s329 = scalar_lea.vmem %s1, 128
      %v330 = vld [vmem:[%s329] sm:$0xf]
      %v331 = vld [vmem:[%s329 + $0x4] sm:$0xf]
      %v332 = vld [vmem:[%s329 + $0x8] sm:$0xf]
      %v333 = vld [vmem:[%s329 + $0xc] sm:$0xf]
      %v334 = vld [vmem:[%s329 + $0x10] sm:$0xf]
      %v335 = vld [vmem:[%s329 + $0x14] sm:$0xf]
      %v336 = vld [vmem:[%s329 + $0x18] sm:$0xf]
      %v337 = vld [vmem:[%s329 + $0x1c] sm:$0xf]
      %v338 = vld [vmem:[%s329 + $0x20] sm:$0xf]
      %v339 = vld [vmem:[%s329 + $0x24] sm:$0xf]
      %v340 = vld [vmem:[%s329 + $0x28] sm:$0xf]
      %v341 = vld [vmem:[%s329 + $0x2c] sm:$0xf]
      %v342 = vld [vmem:[%s329 + $0x30] sm:$0xf]
      %v343 = vld [vmem:[%s329 + $0x34] sm:$0xf]
      %v344 = vld [vmem:[%s329 + $0x38] sm:$0xf]
      %v345 = vld [vmem:[%s329 + $0x3c] sm:$0xf]
      %v346 = vld [vmem:[%s329 + $0x40] sm:$0xf]
      %v347 = vld [vmem:[%s329 + $0x44] sm:$0xf]
      %v348 = vld [vmem:[%s329 + $0x48] sm:$0xf]
      %v349 = vld [vmem:[%s329 + $0x4c] sm:$0xf]
      %v350 = vld [vmem:[%s329 + $0x50] sm:$0xf]
      %v351 = vld [vmem:[%s329 + $0x54] sm:$0xf]
      %v352 = vld [vmem:[%s329 + $0x58] sm:$0xf]
      %v353 = vld [vmem:[%s329 + $0x5c] sm:$0xf]
      %v354 = vld [vmem:[%s329 + $0x60] sm:$0xf]
      %v355 = vld [vmem:[%s329 + $0x64] sm:$0xf]
      %v356 = vld [vmem:[%s329 + $0x68] sm:$0xf]
      %v357 = vld [vmem:[%s329 + $0x6c] sm:$0xf]
      %v358 = vld [vmem:[%s329 + $0x70] sm:$0xf]
      %v359 = vld [vmem:[%s329 + $0x74] sm:$0xf]
      %v360 = vld [vmem:[%s329 + $0x78] sm:$0xf]
      %v361 = vld [vmem:[%s329 + $0x7c] sm:$0xf]
      %v364 = vunpack.c.l.b16 %v327
      %v365 = vunpack.c.h.b16 %v327
      %v366 = vunpack.c.l.b16 %v328
      %v367 = vunpack.c.h.b16 %v328
      %v368 = vpack.c.b16 %v366, %v364
      %v369 = vpack.c.b16 %v367, %v365
      %v404 = vunpack.c.l.b16 %v330
      %v405 = vunpack.c.l.b16 %v331
      %v406 = vunpack.c.l.b16 %v332
      %v407 = vunpack.c.l.b16 %v333
      %v408 = vunpack.c.l.b16 %v334
      %v409 = vunpack.c.l.b16 %v335
      %v410 = vunpack.c.l.b16 %v336
      %v411 = vunpack.c.l.b16 %v337
      %v412 = vunpack.c.l.b16 %v338
      %v413 = vunpack.c.l.b16 %v339
      %v414 = vunpack.c.l.b16 %v340
      %v415 = vunpack.c.l.b16 %v341
      %v416 = vunpack.c.l.b16 %v342
      %v417 = vunpack.c.l.b16 %v343
      %v418 = vunpack.c.l.b16 %v344
      %v419 = vunpack.c.l.b16 %v345
      %v420 = vunpack.c.l.b16 %v346
      %v421 = vunpack.c.l.b16 %v347
      %v422 = vunpack.c.l.b16 %v348
      %v423 = vunpack.c.l.b16 %v349
      %v424 = vunpack.c.l.b16 %v350
      %v425 = vunpack.c.l.b16 %v351
      %v426 = vunpack.c.l.b16 %v352
      %v427 = vunpack.c.l.b16 %v353
      %v428 = vunpack.c.l.b16 %v354
      %v429 = vunpack.c.l.b16 %v355
      %v430 = vunpack.c.l.b16 %v356
      %v431 = vunpack.c.l.b16 %v357
      %v432 = vunpack.c.l.b16 %v358
      %v433 = vunpack.c.l.b16 %v359
      %v434 = vunpack.c.l.b16 %v360
      %v435 = vunpack.c.l.b16 %v361
      %v436 = vpack.c.b16 %v405, %v404
      %v437 = vpack.c.b16 %v407, %v406
      %v438 = vpack.c.b16 %v409, %v408
      %v439 = vpack.c.b16 %v411, %v410
      %v440 = vpack.c.b16 %v413, %v412
      %v441 = vpack.c.b16 %v415, %v414
      %v442 = vpack.c.b16 %v417, %v416
      %v443 = vpack.c.b16 %v419, %v418
      %v444 = vpack.c.b16 %v421, %v420
      %v445 = vpack.c.b16 %v423, %v422
      %v446 = vpack.c.b16 %v425, %v424
      %v447 = vpack.c.b16 %v427, %v426
      %v448 = vpack.c.b16 %v429, %v428
      %v449 = vpack.c.b16 %v431, %v430
      %v450 = vpack.c.b16 %v433, %v432
      %v451 = vpack.c.b16 %v435, %v434
      %468 = vmatprep.subr.bf16.mxu0 0
      %469 = vmatpush1.bf16.msra.mxu0 %v443
      %470 = vmatprep.subr.bf16.mxu0 0
      %471 = vmatpush1.bf16.msra.mxu0 %v442
      %472 = vmatprep.subr.bf16.mxu0 0
      %473 = vmatpush1.bf16.msra.mxu0 %v441
      %474 = vmatprep.subr.bf16.mxu0 0
      %475 = vmatpush1.bf16.msra.mxu0 %v440
      %476 = vmatprep.subr.bf16.mxu0 0
      %477 = vmatpush1.bf16.msra.mxu0 %v439
      %478 = vmatprep.subr.bf16.mxu0 0
      %479 = vmatpush1.bf16.msra.mxu0 %v438
      %480 = vmatprep.subr.bf16.mxu0 0
      %481 = vmatpush1.bf16.msra.mxu0 %v437
      %482 = vmatprep.subr.bf16.mxu0 0
      %483 = vmatpush1.bf16.msra.mxu0 %v436
      %484 = vmatprep.subr.bf16.mxu0 0
      %485 = vmatpush2.bf16.msra.mxu0 %v451
      %486 = vmatprep.subr.bf16.mxu0 0
      %487 = vmatpush2.bf16.msra.mxu0 %v450
      %488 = vmatprep.subr.bf16.mxu0 0
      %489 = vmatpush2.bf16.msra.mxu0 %v449
      %490 = vmatprep.subr.bf16.mxu0 0
      %491 = vmatpush2.bf16.msra.mxu0 %v448
      %492 = vmatprep.subr.bf16.mxu0 0
      %493 = vmatpush2.bf16.msra.mxu0 %v447
      %494 = vmatprep.subr.bf16.mxu0 0
      %495 = vmatpush2.bf16.msra.mxu0 %v446
      %496 = vmatprep.subr.bf16.mxu0 0
      %497 = vmatpush2.bf16.msra.mxu0 %v445
      %498 = vmatprep.subr.bf16.mxu0 0
      %499 = vmatpush2.bf16.msra.mxu0 %v444
      %500 = vmatprep.mubr.bf16.mxu0 %v369
      %501 = vmatmul.mubr.bf16.gmra.mxu0 %v368
      %v502 = vpop.f32.mrf.mxu0
      %v503 = vadd.f32 0.0, %v502
      %v504 = vpop.f32.mrf.mxu0
      %v505 = vpop.f32.mrf.mxu0
      %v506 = vadd.f32 0.0, %v505
      %v507 = vpop.f32.mrf.mxu0
      %508 = vdwg.mxu0
      %s509 = scalar_lea.vmem %s138, 32
      %v510 = vld [vmem:[%s509] sm:$0xff]
      %v511 = vld [vmem:[%s509 + $0x8] sm:$0xff]
      %s512 = scalar_lea.vmem %s1, 256
      %v513 = vld [vmem:[%s512] sm:$0xf]
      %v514 = vld [vmem:[%s512 + $0x4] sm:$0xf]
      %v515 = vld [vmem:[%s512 + $0x8] sm:$0xf]
      %v516 = vld [vmem:[%s512 + $0xc] sm:$0xf]
      %v517 = vld [vmem:[%s512 + $0x10] sm:$0xf]
      %v518 = vld [vmem:[%s512 + $0x14] sm:$0xf]
      %v519 = vld [vmem:[%s512 + $0x18] sm:$0xf]
      %v520 = vld [vmem:[%s512 + $0x1c] sm:$0xf]
      %v521 = vld [vmem:[%s512 + $0x20] sm:$0xf]
      %v522 = vld [vmem:[%s512 + $0x24] sm:$0xf]
      %v523 = vld [vmem:[%s512 + $0x28] sm:$0xf]
      %v524 = vld [vmem:[%s512 + $0x2c] sm:$0xf]
      %v525 = vld [vmem:[%s512 + $0x30] sm:$0xf]
      %v526 = vld [vmem:[%s512 + $0x34] sm:$0xf]
      %v527 = vld [vmem:[%s512 + $0x38] sm:$0xf]
      %v528 = vld [vmem:[%s512 + $0x3c] sm:$0xf]
      %v529 = vld [vmem:[%s512 + $0x40] sm:$0xf]
      %v530 = vld [vmem:[%s512 + $0x44] sm:$0xf]
      %v531 = vld [vmem:[%s512 + $0x48] sm:$0xf]
      %v532 = vld [vmem:[%s512 + $0x4c] sm:$0xf]
      %v533 = vld [vmem:[%s512 + $0x50] sm:$0xf]
      %v534 = vld [vmem:[%s512 + $0x54] sm:$0xf]
      %v535 = vld [vmem:[%s512 + $0x58] sm:$0xf]
      %v536 = vld [vmem:[%s512 + $0x5c] sm:$0xf]
      %v537 = vld [vmem:[%s512 + $0x60] sm:$0xf]
      %v538 = vld [vmem:[%s512 + $0x64] sm:$0xf]
      %v539 = vld [vmem:[%s512 + $0x68] sm:$0xf]
      %v540 = vld [vmem:[%s512 + $0x6c] sm:$0xf]
      %v541 = vld [vmem:[%s512 + $0x70] sm:$0xf]
      %v542 = vld [vmem:[%s512 + $0x74] sm:$0xf]
      %v543 = vld [vmem:[%s512 + $0x78] sm:$0xf]
      %v544 = vld [vmem:[%s512 + $0x7c] sm:$0xf]
      %v547 = vunpack.c.l.b16 %v510
      %v548 = vunpack.c.h.b16 %v510
      %v549 = vunpack.c.l.b16 %v511
      %v550 = vunpack.c.h.b16 %v511
      %v551 = vpack.c.b16 %v549, %v547
      %v552 = vpack.c.b16 %v550, %v548
      %v587 = vunpack.c.l.b16 %v513
      %v588 = vunpack.c.l.b16 %v514
      %v589 = vunpack.c.l.b16 %v515
      %v590 = vunpack.c.l.b16 %v516
      %v591 = vunpack.c.l.b16 %v517
      %v592 = vunpack.c.l.b16 %v518
      %v593 = vunpack.c.l.b16 %v519
      %v594 = vunpack.c.l.b16 %v520
      %v595 = vunpack.c.l.b16 %v521
      %v596 = vunpack.c.l.b16 %v522
      %v597 = vunpack.c.l.b16 %v523
      %v598 = vunpack.c.l.b16 %v524
      %v599 = vunpack.c.l.b16 %v525
      %v600 = vunpack.c.l.b16 %v526
      %v601 = vunpack.c.l.b16 %v527
      %v602 = vunpack.c.l.b16 %v528
      %v603 = vunpack.c.l.b16 %v529
      %v604 = vunpack.c.l.b16 %v530
      %v605 = vunpack.c.l.b16 %v531
      %v606 = vunpack.c.l.b16 %v532
      %v607 = vunpack.c.l.b16 %v533
      %v608 = vunpack.c.l.b16 %v534
      %v609 = vunpack.c.l.b16 %v535
      %v610 = vunpack.c.l.b16 %v536
      %v611 = vunpack.c.l.b16 %v537
      %v612 = vunpack.c.l.b16 %v538
      %v613 = vunpack.c.l.b16 %v539
      %v614 = vunpack.c.l.b16 %v540
      %v615 = vunpack.c.l.b16 %v541
      %v616 = vunpack.c.l.b16 %v542
      %v617 = vunpack.c.l.b16 %v543
      %v618 = vunpack.c.l.b16 %v544
      %v619 = vpack.c.b16 %v588, %v587
      %v620 = vpack.c.b16 %v590, %v589
      %v621 = vpack.c.b16 %v592, %v591
      %v622 = vpack.c.b16 %v594, %v593
      %v623 = vpack.c.b16 %v596, %v595
      %v624 = vpack.c.b16 %v598, %v597
      %v625 = vpack.c.b16 %v600, %v599
      %v626 = vpack.c.b16 %v602, %v601
      %v627 = vpack.c.b16 %v604, %v603
      %v628 = vpack.c.b16 %v606, %v605
      %v629 = vpack.c.b16 %v608, %v607
      %v630 = vpack.c.b16 %v610, %v609
      %v631 = vpack.c.b16 %v612, %v611
      %v632 = vpack.c.b16 %v614, %v613
      %v633 = vpack.c.b16 %v616, %v615
      %v634 = vpack.c.b16 %v618, %v617
      %651 = vmatprep.subr.bf16.mxu0 0
      %652 = vmatpush1.bf16.msra.mxu0 %v626
      %653 = vmatprep.subr.bf16.mxu0 0
      %654 = vmatpush1.bf16.msra.mxu0 %v625
      %655 = vmatprep.subr.bf16.mxu0 0
      %656 = vmatpush1.bf16.msra.mxu0 %v624
      %657 = vmatprep.subr.bf16.mxu0 0
      %658 = vmatpush1.bf16.msra.mxu0 %v623
      %659 = vmatprep.subr.bf16.mxu0 0
      %660 = vmatpush1.bf16.msra.mxu0 %v622
      %661 = vmatprep.subr.bf16.mxu0 0
      %662 = vmatpush1.bf16.msra.mxu0 %v621
      %663 = vmatprep.subr.bf16.mxu0 0
      %664 = vmatpush1.bf16.msra.mxu0 %v620
      %665 = vmatprep.subr.bf16.mxu0 0
      %666 = vmatpush1.bf16.msra.mxu0 %v619
      %667 = vmatprep.subr.bf16.mxu0 0
      %668 = vmatpush2.bf16.msra.mxu0 %v634
      %669 = vmatprep.subr.bf16.mxu0 0
      %670 = vmatpush2.bf16.msra.mxu0 %v633
      %671 = vmatprep.subr.bf16.mxu0 0
      %672 = vmatpush2.bf16.msra.mxu0 %v632
      %673 = vmatprep.subr.bf16.mxu0 0
      %674 = vmatpush2.bf16.msra.mxu0 %v631
      %675 = vmatprep.subr.bf16.mxu0 0
      %676 = vmatpush2.bf16.msra.mxu0 %v630
      %677 = vmatprep.subr.bf16.mxu0 0
      %678 = vmatpush2.bf16.msra.mxu0 %v629
      %679 = vmatprep.subr.bf16.mxu0 0
      %680 = vmatpush2.bf16.msra.mxu0 %v628
      %681 = vmatprep.subr.bf16.mxu0 0
      %682 = vmatpush2.bf16.msra.mxu0 %v627
      %683 = vmatprep.mubr.bf16.mxu0 %v552
      %684 = vmatmul.mubr.bf16.gmra.mxu0 %v551
      %v685 = vpop.f32.mrf.mxu0
      %v686 = vadd.f32 0.0, %v685
      %v687 = vpop.f32.mrf.mxu0
      %v688 = vpop.f32.mrf.mxu0
      %v689 = vadd.f32 0.0, %v688
      %v690 = vpop.f32.mrf.mxu0
      %691 = vdwg.mxu0
      %s692 = scalar_lea.vmem %s138, 48
      %v693 = vld [vmem:[%s692] sm:$0xff]
      %v694 = vld [vmem:[%s692 + $0x8] sm:$0xff]
      %s695 = scalar_lea.vmem %s1, 384
      %v696 = vld [vmem:[%s695] sm:$0xf]
      %v697 = vld [vmem:[%s695 + $0x4] sm:$0xf]
      %v698 = vld [vmem:[%s695 + $0x8] sm:$0xf]
      %v699 = vld [vmem:[%s695 + $0xc] sm:$0xf]
      %v700 = vld [vmem:[%s695 + $0x10] sm:$0xf]
      %v701 = vld [vmem:[%s695 + $0x14] sm:$0xf]
      %v702 = vld [vmem:[%s695 + $0x18] sm:$0xf]
      %v703 = vld [vmem:[%s695 + $0x1c] sm:$0xf]
      %v704 = vld [vmem:[%s695 + $0x20] sm:$0xf]
      %v705 = vld [vmem:[%s695 + $0x24] sm:$0xf]
      %v706 = vld [vmem:[%s695 + $0x28] sm:$0xf]
      %v707 = vld [vmem:[%s695 + $0x2c] sm:$0xf]
      %v708 = vld [vmem:[%s695 + $0x30] sm:$0xf]
      %v709 = vld [vmem:[%s695 + $0x34] sm:$0xf]
      %v710 = vld [vmem:[%s695 + $0x38] sm:$0xf]
      %v711 = vld [vmem:[%s695 + $0x3c] sm:$0xf]
      %v712 = vld [vmem:[%s695 + $0x40] sm:$0xf]
      %v713 = vld [vmem:[%s695 + $0x44] sm:$0xf]
      %v714 = vld [vmem:[%s695 + $0x48] sm:$0xf]
      %v715 = vld [vmem:[%s695 + $0x4c] sm:$0xf]
      %v716 = vld [vmem:[%s695 + $0x50] sm:$0xf]
      %v717 = vld [vmem:[%s695 + $0x54] sm:$0xf]
      %v718 = vld [vmem:[%s695 + $0x58] sm:$0xf]
      %v719 = vld [vmem:[%s695 + $0x5c] sm:$0xf]
      %v720 = vld [vmem:[%s695 + $0x60] sm:$0xf]
      %v721 = vld [vmem:[%s695 + $0x64] sm:$0xf]
      %v722 = vld [vmem:[%s695 + $0x68] sm:$0xf]
      %v723 = vld [vmem:[%s695 + $0x6c] sm:$0xf]
      %v724 = vld [vmem:[%s695 + $0x70] sm:$0xf]
      %v725 = vld [vmem:[%s695 + $0x74] sm:$0xf]
      %v726 = vld [vmem:[%s695 + $0x78] sm:$0xf]
      %v727 = vld [vmem:[%s695 + $0x7c] sm:$0xf]
      %v730 = vunpack.c.l.b16 %v693
      %v731 = vunpack.c.h.b16 %v693
      %v732 = vunpack.c.l.b16 %v694
      %v733 = vunpack.c.h.b16 %v694
      %v734 = vpack.c.b16 %v732, %v730
      %v735 = vpack.c.b16 %v733, %v731
      %v770 = vunpack.c.l.b16 %v696
      %v771 = vunpack.c.l.b16 %v697
      %v772 = vunpack.c.l.b16 %v698
      %v773 = vunpack.c.l.b16 %v699
      %v774 = vunpack.c.l.b16 %v700
      %v775 = vunpack.c.l.b16 %v701
      %v776 = vunpack.c.l.b16 %v702
      %v777 = vunpack.c.l.b16 %v703
      %v778 = vunpack.c.l.b16 %v704
      %v779 = vunpack.c.l.b16 %v705
      %v780 = vunpack.c.l.b16 %v706
      %v781 = vunpack.c.l.b16 %v707
      %v782 = vunpack.c.l.b16 %v708
      %v783 = vunpack.c.l.b16 %v709
      %v784 = vunpack.c.l.b16 %v710
      %v785 = vunpack.c.l.b16 %v711
      %v786 = vunpack.c.l.b16 %v712
      %v787 = vunpack.c.l.b16 %v713
      %v788 = vunpack.c.l.b16 %v714
      %v789 = vunpack.c.l.b16 %v715
      %v790 = vunpack.c.l.b16 %v716
      %v791 = vunpack.c.l.b16 %v717
      %v792 = vunpack.c.l.b16 %v718
      %v793 = vunpack.c.l.b16 %v719
      %v794 = vunpack.c.l.b16 %v720
      %v795 = vunpack.c.l.b16 %v721
      %v796 = vunpack.c.l.b16 %v722
      %v797 = vunpack.c.l.b16 %v723
      %v798 = vunpack.c.l.b16 %v724
      %v799 = vunpack.c.l.b16 %v725
      %v800 = vunpack.c.l.b16 %v726
      %v801 = vunpack.c.l.b16 %v727
      %v802 = vpack.c.b16 %v771, %v770
      %v803 = vpack.c.b16 %v773, %v772
      %v804 = vpack.c.b16 %v775, %v774
      %v805 = vpack.c.b16 %v777, %v776
      %v806 = vpack.c.b16 %v779, %v778
      %v807 = vpack.c.b16 %v781, %v780
      %v808 = vpack.c.b16 %v783, %v782
      %v809 = vpack.c.b16 %v785, %v784
      %v810 = vpack.c.b16 %v787, %v786
      %v811 = vpack.c.b16 %v789, %v788
      %v812 = vpack.c.b16 %v791, %v790
      %v813 = vpack.c.b16 %v793, %v792
      %v814 = vpack.c.b16 %v795, %v794
      %v815 = vpack.c.b16 %v797, %v796
      %v816 = vpack.c.b16 %v799, %v798
      %v817 = vpack.c.b16 %v801, %v800
      %834 = vmatprep.subr.bf16.mxu0 0
      %835 = vmatpush1.bf16.msra.mxu0 %v809
      %836 = vmatprep.subr.bf16.mxu0 0
      %837 = vmatpush1.bf16.msra.mxu0 %v808
      %838 = vmatprep.subr.bf16.mxu0 0
      %839 = vmatpush1.bf16.msra.mxu0 %v807
      %840 = vmatprep.subr.bf16.mxu0 0
      %841 = vmatpush1.bf16.msra.mxu0 %v806
      %842 = vmatprep.subr.bf16.mxu0 0
      %843 = vmatpush1.bf16.msra.mxu0 %v805
      %844 = vmatprep.subr.bf16.mxu0 0
      %845 = vmatpush1.bf16.msra.mxu0 %v804
      %846 = vmatprep.subr.bf16.mxu0 0
      %847 = vmatpush1.bf16.msra.mxu0 %v803
      %848 = vmatprep.subr.bf16.mxu0 0
      %849 = vmatpush1.bf16.msra.mxu0 %v802
      %850 = vmatprep.subr.bf16.mxu0 0
      %851 = vmatpush2.bf16.msra.mxu0 %v817
      %852 = vmatprep.subr.bf16.mxu0 0
      %853 = vmatpush2.bf16.msra.mxu0 %v816
      %854 = vmatprep.subr.bf16.mxu0 0
      %855 = vmatpush2.bf16.msra.mxu0 %v815
      %856 = vmatprep.subr.bf16.mxu0 0
      %857 = vmatpush2.bf16.msra.mxu0 %v814
      %858 = vmatprep.subr.bf16.mxu0 0
      %859 = vmatpush2.bf16.msra.mxu0 %v813
      %860 = vmatprep.subr.bf16.mxu0 0
      %861 = vmatpush2.bf16.msra.mxu0 %v812
      %862 = vmatprep.subr.bf16.mxu0 0
      %863 = vmatpush2.bf16.msra.mxu0 %v811
      %864 = vmatprep.subr.bf16.mxu0 0
      %865 = vmatpush2.bf16.msra.mxu0 %v810
      %866 = vmatprep.mubr.bf16.mxu0 %v735
      %867 = vmatmul.mubr.bf16.gmra.mxu0 %v734
      %v868 = vpop.f32.mrf.mxu0
      %v869 = vadd.f32 0.0, %v868
      %v870 = vpop.f32.mrf.mxu0
      %v871 = vpop.f32.mrf.mxu0
      %v872 = vadd.f32 0.0, %v871
      %v873 = vpop.f32.mrf.mxu0
      %874 = vdwg.mxu0
      %v875 = vadd.f32 %v320, %v323
      %v876 = vrot.slane %v875, 4
      %v877 = vadd.f32 %v875, %v876
      %v878 = vrot.slane %v877, 2
      %v879 = vadd.f32 %v877, %v878
      %v880 = vrot.slane %v879, 1
      %v881 = vadd.f32 %v879, %v880
      %v882 = vadd.f32 %v881, 0.0
      %v883 = vadd.f32 %v503, %v506
      %v884 = vrot.slane %v883, 4
      %v885 = vadd.f32 %v883, %v884
      %v886 = vrot.slane %v885, 2
      %v887 = vadd.f32 %v885, %v886
      %v888 = vrot.slane %v887, 1
      %v889 = vadd.f32 %v887, %v888
      %v890 = vadd.f32 %v882, %v889
      %v891 = vadd.f32 %v686, %v689
      %v892 = vrot.slane %v891, 4
      %v893 = vadd.f32 %v891, %v892
      %v894 = vrot.slane %v893, 2
      %v895 = vadd.f32 %v893, %v894
      %v896 = vrot.slane %v895, 1
      %v897 = vadd.f32 %v895, %v896
      %v898 = vadd.f32 %v890, %v897
      %v899 = vadd.f32 %v869, %v872
      %v900 = vrot.slane %v899, 4
      %v901 = vadd.f32 %v899, %v900
      %v902 = vrot.slane %v901, 2
      %v903 = vadd.f32 %v901, %v902
      %v904 = vrot.slane %v903, 1
      %v905 = vadd.f32 %v903, %v904
      %v906 = vadd.f32 %v898, %v905
      %v907 = vrcp.pop 64.0
      %v908 = vmul.f32 %v906, %v907
      %v909 = vsub.f32 %v320, %v908
      %v910 = vsub.f32 %v323, %v908
      %v911 = vmul.f32 %v909, %v909
      %v912 = vmul.f32 %v910, %v910
      %v913 = vadd.f32 %v911, %v912
      %v914 = vrot.slane %v913, 4
      %v915 = vadd.f32 %v913, %v914
      %v916 = vrot.slane %v915, 2
      %v917 = vadd.f32 %v915, %v916
      %v918 = vrot.slane %v917, 1
      %v919 = vadd.f32 %v917, %v918
      %v920 = vadd.f32 %v919, 0.0
      %v921 = vsub.f32 %v503, %v908
      %v922 = vsub.f32 %v506, %v908
      %v923 = vmul.f32 %v921, %v921
      %v924 = vmul.f32 %v922, %v922
      %v925 = vadd.f32 %v923, %v924
      %v926 = vrot.slane %v925, 4
      %v927 = vadd.f32 %v925, %v926
      %v928 = vrot.slane %v927, 2
      %v929 = vadd.f32 %v927, %v928
      %v930 = vrot.slane %v929, 1
      %v931 = vadd.f32 %v929, %v930
      %v932 = vadd.f32 %v920, %v931
      %v933 = vsub.f32 %v686, %v908
      %v934 = vsub.f32 %v689, %v908
      %v935 = vmul.f32 %v933, %v933
      %v936 = vmul.f32 %v934, %v934
      %v937 = vadd.f32 %v935, %v936
      %v938 = vrot.slane %v937, 4
      %v939 = vadd.f32 %v937, %v938
      %v940 = vrot.slane %v939, 2
      %v941 = vadd.f32 %v939, %v940
      %v942 = vrot.slane %v941, 1
      %v943 = vadd.f32 %v941, %v942
      %v944 = vadd.f32 %v932, %v943
      %v945 = vsub.f32 %v869, %v908
      %v946 = vsub.f32 %v872, %v908
      %v947 = vmul.f32 %v945, %v945
      %v948 = vmul.f32 %v946, %v946
      %v949 = vadd.f32 %v947, %v948
      %v950 = vrot.slane %v949, 4
      %v951 = vadd.f32 %v949, %v950
      %v952 = vrot.slane %v951, 2
      %v953 = vadd.f32 %v951, %v952
      %v954 = vrot.slane %v953, 1
      %v955 = vadd.f32 %v953, %v954
      %v956 = vadd.f32 %v944, %v955
      %v957 = vmul.f32 %v956, %v907
      %v958 = vadd.f32 %v957, 1e-05
      %v959 = vrsqrt.pop %v958
      %v960 = vmul.f32 %v909, %v959
      %v961 = vmul.f32 %v910, %v959
      %v962 = vpack.c.bf16 %v961, %v960
      %v964 = vunpack.c.l.b16 %v962
      %v965 = vunpack.c.h.b16 %v962
      %v966 = vpack.c.b16 %v964, %v964
      %v967 = vpack.c.b16 %v965, %v965
      %970 = vst [vmem:[%s143] sm:$0xf] %v966
      %971 = vst [vmem:[%s143 + $0x4] sm:$0xf] %v967
      %v972 = vmul.f32 %v921, %v959
      %v973 = vmul.f32 %v922, %v959
      %v974 = vpack.c.bf16 %v973, %v972
      %v976 = vunpack.c.l.b16 %v974
      %v977 = vunpack.c.h.b16 %v974
      %v978 = vpack.c.b16 %v976, %v976
      %v979 = vpack.c.b16 %v977, %v977
      %s982 = scalar_lea.vmem %s143, 8
      %983 = vst [vmem:[%s982] sm:$0xf] %v978
      %984 = vst [vmem:[%s982 + $0x4] sm:$0xf] %v979
      %v985 = vmul.f32 %v933, %v959
      %v986 = vmul.f32 %v934, %v959
      %v987 = vpack.c.bf16 %v986, %v985
      %v989 = vunpack.c.l.b16 %v987
      %v990 = vunpack.c.h.b16 %v987
      %v991 = vpack.c.b16 %v989, %v989
      %v992 = vpack.c.b16 %v990, %v990
      %s995 = scalar_lea.vmem %s143, 16
      %996 = vst [vmem:[%s995] sm:$0xf] %v991
      %997 = vst [vmem:[%s995 + $0x4] sm:$0xf] %v992
      %v998 = vmul.f32 %v945, %v959
      %v999 = vmul.f32 %v946, %v959
      %v1000 = vpack.c.bf16 %v999, %v998
      %v1002 = vunpack.c.l.b16 %v1000
      %v1003 = vunpack.c.h.b16 %v1000
      %v1004 = vpack.c.b16 %v1002, %v1002
      %v1005 = vpack.c.b16 %v1003, %v1003
      %s1008 = scalar_lea.vmem %s143, 24
      %1009 = vst [vmem:[%s1008] sm:$0xf] %v1004
      %1010 = vst [vmem:[%s1008 + $0x4] sm:$0xf] %v1005
      %p1011 = scmp.lt.s32.totalorder %s13, 1
      %s1012 = scalar_select %p1011, %s13, 1
      %s1013 = smul.addr %s1012, 8
      %s1014 = smul.addr %s1013, 4
      %s1015 = scalar_lea.vmem %s2, %s1014
      // Predicated region
      $region29: #{_lambda_.14} parent=27 // pred_check
        %p1016 = pneg %p78
      $region30: #{_lambda_.14} parent=27 // pred_check_branch
        %1018 = sbr.rel (%p1016) target = $region32
      $region31: #{_lambda_.14} parent=27 // pred_region
        _
      $region32: #{_lambda_.14} parent=27 // pred_fallthru
        _
    $region28: #{_lambda_.14} parent=5 // pred_fallthru
      _
    %p1019 = scmp.le.s32.totalorder 2, %s8
    // Predicated region
    $region33: #{_lambda_.14} parent=5 // pred_check
      %p1020 = pneg %p1019
    $region34: #{_lambda_.14} parent=5 // pred_check_branch
      %1022 = sbr.rel (%p1020) target = $region36
    $region35: #{_lambda_.14} parent=5 // pred_region
      %s1023 = ssub.s32 %s8, 2
      // Predicated region
      $region37: #{_lambda_.14} parent=35 // pred_check
        %p1024 = pneg %p84
      $region38: #{_lambda_.14} parent=35 // pred_check_branch
        %1026 = sbr.rel (%p1024) target = $region40
      $region39: #{_lambda_.14} parent=35 // pred_region
        %p1027 = scmp.lt.s32.totalorder %s14, 1
        %s1028 = scalar_select %p1027, %s14, 1
        %s1029 = smul.addr %s1028, 8
        %s1030 = smul.addr %s1029, 4
        %s1031 = scalar_lea.vmem %s2, %s1030
      $region40: #{_lambda_.14} parent=35 // pred_fallthru
        _
    $region36: #{_lambda_.14} parent=5 // pred_fallthru
      _
  $region6: #{_lambda_.14} parent=0 // loop_footer
    %s12 = sadd.s32 1, %s8
  $region7: #{_lambda_.14} parent=0 // loop_footer_branch
    %7 = sbr.rel target = $region3
  $region8: #{_lambda_.14} parent=0 // loop_exit
    _

// kernel: _lambda_.15
$region0: #{_lambda_.15}
  #allocation0 [shape = 'u32[]', space=smem, size = 0x4, offset = 0x4, fixed_abs, tag = 'smem constant byte address 0x4 - core index']
  #allocation1 [shape = 'u32[144,128]{1,0:T(1,128)}', space=vmem, size = 0x12000, scoped, tag = 'internal scratch']
  %s0 = inlined_call_operand.vmem [shape: bf16[2,4,64,128], index: 0, kind: input, shape index: {}]
  %s1 = inlined_call_operand.vmem [shape: bf16[4,128,128], index: 1, kind: input, shape index: {}]
  %s2 = inlined_call_operand.vmem [shape: f32[1,128], index: 2, kind: input, shape index: {}]
  %s3 = inlined_call_operand.vmem [shape: f32[2,4,64,128], index: 3, kind: output, shape index: {}]
  %s4 = sld [smem:[#allocation0]]
  $region45: #{_lambda_.15} parent=0
    _
  %s6 = ssub.s32 1, %s4
  %s7 = scalar_select 0, %s6, %s4
  loop: start=0, step=1, limit=4
  $region2: #{_lambda_.15} parent=0 // loop_pre_header
    _
  $region3: #{_lambda_.15} parent=0 // loop_header
    %s9 = sphi 0, %s13
    %p10 = scmp.ge.s32.totalorder %s9, 4
    %s19 = sphi 0, %s21
    %s22 = sphi 0, %s19
    %s23 = sphi 0, %s22
    %s39 = sphi 0, %s23
    %s43 = sphi 0, %s43
    %s45 = sphi 0, %s43
    %s46 = sphi 0, %s45
    %s60 = sphi 0, %s46
    %s64 = sphi 0, %s64
    %s66 = sphi 0, %s64
    %s67 = sphi 0, %s66
    %s81 = sphi 0, %s67
    %s87 = sphi 0, %s89
    %s90 = sphi 0, %s87
    %s91 = sphi 0, %s90
    %s107 = sphi 0, %s91
  $region4: #{_lambda_.15} parent=0 // loop_header_branch
    %12 = sbr.rel (%p10) target = $region8
  $region5: #{_lambda_.15} parent=0 // loop_body
    %s14 = ssub.s32 %s9, 1
    %s15 = ssub.s32 %s9, 2
    %s16 = sadd.s32 %s9, 1
    %s17 = ssub.s32 %s9, %s16
    %p18 = scmp.eq.s32.totalorder %s17, 0
    %s20 = sadd.s32 %s19, 1
    %s21 = scalar_select %p18, %s19, %s20
    %p24 = pneg %p18
    %p25 = scmp.eq.s32.totalorder %s9, 1
    %p26 = por %p24, %p25
    %p27 = scmp.ne.s32.totalorder %s19, %s22
    %p28 = scmp.eq.s32.totalorder %s9, 0
    %p29 = por %p27, %p28
    %p30 = scmp.ne.s32.totalorder %s19, %s22
    %p31 = scmp.eq.s32.totalorder %s14, 1
    %p32 = por %p30, %p31
    %p33 = scmp.ne.s32.totalorder %s22, %s23
    %p34 = scmp.eq.s32.totalorder %s14, 0
    %p35 = por %p33, %p34
    %p36 = scmp.ne.s32.totalorder %s22, %s23
    %p37 = scmp.eq.s32.totalorder %s15, 1
    %p38 = por %p36, %p37
    %p40 = scmp.ne.s32.totalorder %s23, %s39
    %p41 = scmp.eq.s32.totalorder %s15, 0
    %p42 = por %p40, %p41
    %s44 = sadd.s32 %s43, 1
    %p47 = scmp.eq.s32.totalorder %s9, 1
    %p48 = scmp.ne.s32.totalorder %s43, %s45
    %p49 = scmp.eq.s32.totalorder %s9, 0
    %p50 = por %p48, %p49
    %p51 = scmp.ne.s32.totalorder %s43, %s45
    %p52 = scmp.eq.s32.totalorder %s14, 1
    %p53 = por %p51, %p52
    %p54 = scmp.ne.s32.totalorder %s45, %s46
    %p55 = scmp.eq.s32.totalorder %s14, 0
    %p56 = por %p54, %p55
    %p57 = scmp.ne.s32.totalorder %s45, %s46
    %p58 = scmp.eq.s32.totalorder %s15, 1
    %p59 = por %p57, %p58
    %p61 = scmp.ne.s32.totalorder %s46, %s60
    %p62 = scmp.eq.s32.totalorder %s15, 0
    %p63 = por %p61, %p62
    %s65 = sadd.s32 %s64, 1
    %p68 = scmp.eq.s32.totalorder %s9, 1
    %p69 = scmp.ne.s32.totalorder %s64, %s66
    %p70 = scmp.eq.s32.totalorder %s9, 0
    %p71 = por %p69, %p70
    %p72 = scmp.ne.s32.totalorder %s64, %s66
    %p73 = scmp.eq.s32.totalorder %s14, 1
    %p74 = por %p72, %p73
    %p75 = scmp.ne.s32.totalorder %s66, %s67
    %p76 = scmp.eq.s32.totalorder %s14, 0
    %p77 = por %p75, %p76
    %p78 = scmp.ne.s32.totalorder %s66, %s67
    %p79 = scmp.eq.s32.totalorder %s15, 1
    %p80 = por %p78, %p79
    %p82 = scmp.ne.s32.totalorder %s67, %s81
    %p83 = scmp.eq.s32.totalorder %s15, 0
    %p84 = por %p82, %p83
    %s85 = ssub.s32 %s9, %s16
    %p86 = scmp.eq.s32.totalorder %s85, 0
    %s88 = sadd.s32 %s87, 1
    %s89 = scalar_select %p86, %s87, %s88
    %p92 = pneg %p86
    %p93 = scmp.eq.s32.totalorder %s9, 1
    %p94 = por %p92, %p93
    %p95 = scmp.ne.s32.totalorder %s87, %s90
    %p96 = scmp.eq.s32.totalorder %s9, 0
    %p97 = por %p95, %p96
    %p98 = scmp.ne.s32.totalorder %s87, %s90
    %p99 = scmp.eq.s32.totalorder %s14, 1
    %p100 = por %p98, %p99
    %p101 = scmp.ne.s32.totalorder %s90, %s91
    %p102 = scmp.eq.s32.totalorder %s14, 0
    %p103 = por %p101, %p102
    %p104 = scmp.ne.s32.totalorder %s90, %s91
    %p105 = scmp.eq.s32.totalorder %s15, 1
    %p106 = por %p104, %p105
    %p108 = scmp.ne.s32.totalorder %s91, %s107
    %p109 = scmp.eq.s32.totalorder %s15, 0
    %p110 = por %p108, %p109
    %p111 = scmp.le.s32.totalorder 1, %s9
    %p112 = scmp.lt.s32.totalorder %s9, 3
    %p113 = pnand %p111, %p112
    %p114 = pneg %p113
    // Predicated region
    $region9: #{_lambda_.15} parent=5 // pred_check
      _
    $region10: #{_lambda_.15} parent=5 // pred_check_branch
      %116 = sbr.rel (%p113) target = $region12
    $region11: #{_lambda_.15} parent=5 // pred_region
      %s117 = ssub.s32 %s9, 1
      // Predicated region
      $region13: #{_lambda_.15} parent=11 // pred_check
        %p118 = pneg %p56
      $region14: #{_lambda_.15} parent=11 // pred_check_branch
        %120 = sbr.rel (%p118) target = $region16
      $region15: #{_lambda_.15} parent=11 // pred_region
        _
      $region16: #{_lambda_.15} parent=11 // pred_fallthru
        _
      // Predicated region
      $region17: #{_lambda_.15} parent=11 // pred_check
        %p121 = pneg %p77
      $region18: #{_lambda_.15} parent=11 // pred_check_branch
        %123 = sbr.rel (%p121) target = $region20
      $region19: #{_lambda_.15} parent=11 // pred_region
        _
      $region20: #{_lambda_.15} parent=11 // pred_fallthru
        _
    $region12: #{_lambda_.15} parent=5 // pred_fallthru
      _
    %p124 = scmp.lt.s32.totalorder %s9, 2
    // Predicated region
    $region21: #{_lambda_.15} parent=5 // pred_check
      %p125 = pneg %p124
    $region22: #{_lambda_.15} parent=5 // pred_check_branch
      %127 = sbr.rel (%p125) target = $region24
    $region23: #{_lambda_.15} parent=5 // pred_region
      // Predicated region
      $region25: #{_lambda_.15} parent=23 // pred_check
        %p128 = pneg %p29
      $region26: #{_lambda_.15} parent=23 // pred_check_branch
        %130 = sbr.rel (%p128) target = $region28
      $region27: #{_lambda_.15} parent=23 // pred_region
        %p131 = scmp.lt.s32.totalorder %s9, 1
        %s132 = scalar_select %p131, %s9, 1
        %s133 = smul.addr %s132, 32
        %s134 = smul.addr %s133, 4
        %s135 = scalar_lea.vmem %s0, %s134
      $region28: #{_lambda_.15} parent=23 // pred_fallthru
        _
    $region24: #{_lambda_.15} parent=5 // pred_fallthru
      _
    %p136 = scmp.le.s32.totalorder 1, %s9
    %p137 = scmp.lt.s32.totalorder %s9, 3
    %p138 = pnand %p136, %p137
    %p139 = pneg %p138
    // Predicated region
    $region29: #{_lambda_.15} parent=5 // pred_check
      _
    $region30: #{_lambda_.15} parent=5 // pred_check_branch
      %141 = sbr.rel (%p138) target = $region32
    $region31: #{_lambda_.15} parent=5 // pred_region
      %s142 = ssub.s32 %s9, 1
      %p143 = scmp.lt.s32.totalorder %s14, 1
      %s144 = scalar_select %p143, %s14, 1
      %s145 = smul.addr %s144, 32
      %s146 = smul.addr %s145, 4
      %s147 = scalar_lea.vmem %s0, %s146
      %p148 = pneg %p35
      %p149 = pneg %p32
      %p150 = pneg %p56
      %p151 = pneg %p53
      %p152 = pneg %p77
      %p153 = pneg %p74
      %p154 = pneg %p103
      %p155 = pneg %p100
      %p156 = scmp.lt.s32.totalorder %s14, 1
      %s157 = scalar_select %p156, %s14, 1
      %s158 = smul.addr %s157, 32
      %s159 = smul.addr %s158, 8
      %s160 = scalar_lea.vmem %s3, %s159
      %p161 = scmp.lt.s32.totalorder %s14, 1
      %s162 = scalar_select %p161, %s14, 1
      %s163 = smul.addr %s162, 32
      %s164 = smul.addr %s163, 4
      %s165 = scalar_lea.vmem %s0, %s164
      %p166 = scmp.lt.s32.totalorder %s14, 1
      %s167 = scalar_select %p166, %s14, 1
      %s168 = smul.addr %s167, 32
      %s169 = smul.addr %s168, 8
      %s170 = scalar_lea.vmem %s3, %s169
      %v172 = vld [vmem:[%s165] sm:$0xf]
      %v173 = vld [vmem:[%s165 + $0x4] sm:$0xf]
      %v174 = vld [vmem:[%s165 + $0x8] sm:$0xf]
      %v175 = vld [vmem:[%s165 + $0xc] sm:$0xf]
      %v176 = vld [vmem:[%s165 + $0x10] sm:$0xf]
      %v177 = vld [vmem:[%s165 + $0x14] sm:$0xf]
      %v178 = vld [vmem:[%s165 + $0x18] sm:$0xf]
      %v179 = vld [vmem:[%s165 + $0x1c] sm:$0xf]
      %v180 = vld [vmem:[%s1] sm:$0xf]
      %v181 = vld [vmem:[%s1 + $0x4] sm:$0xf]
      %v182 = vld [vmem:[%s1 + $0x8] sm:$0xf]
      %v183 = vld [vmem:[%s1 + $0xc] sm:$0xf]
      %v184 = vld [vmem:[%s1 + $0x10] sm:$0xf]
      %v185 = vld [vmem:[%s1 + $0x14] sm:$0xf]
      %v186 = vld [vmem:[%s1 + $0x18] sm:$0xf]
      %v187 = vld [vmem:[%s1 + $0x1c] sm:$0xf]
      %v188 = vld [vmem:[%s1 + $0x20] sm:$0xf]
      %v189 = vld [vmem:[%s1 + $0x24] sm:$0xf]
      %v190 = vld [vmem:[%s1 + $0x28] sm:$0xf]
      %v191 = vld [vmem:[%s1 + $0x2c] sm:$0xf]
      %v192 = vld [vmem:[%s1 + $0x30] sm:$0xf]
      %v193 = vld [vmem:[%s1 + $0x34] sm:$0xf]
      %v194 = vld [vmem:[%s1 + $0x38] sm:$0xf]
      %v195 = vld [vmem:[%s1 + $0x3c] sm:$0xf]
      %v196 = vld [vmem:[%s2] sm:$0x1]
      %v198 = vlaneseq
      %v199 = vshrl.u32 %v198, 7
      %v200 = vsub.s32 0, %v199
      %v201 = vrot.slane %v196, %v200
      %v211 = vunpack.c.l.b16 %v172
      %v212 = vunpack.c.l.b16 %v173
      %v213 = vunpack.c.l.b16 %v174
      %v214 = vunpack.c.l.b16 %v175
      %v215 = vunpack.c.l.b16 %v176
      %v216 = vunpack.c.l.b16 %v177
      %v217 = vunpack.c.l.b16 %v178
      %v218 = vunpack.c.l.b16 %v179
      %v219 = vpack.c.b16 %v212, %v211
      %v220 = vpack.c.b16 %v214, %v213
      %v221 = vpack.c.b16 %v216, %v215
      %v222 = vpack.c.b16 %v218, %v217
      %v243 = vunpack.c.l.b16 %v180
      %v244 = vunpack.c.l.b16 %v181
      %v245 = vunpack.c.l.b16 %v182
      %v246 = vunpack.c.l.b16 %v183
      %v247 = vunpack.c.l.b16 %v184
      %v248 = vunpack.c.l.b16 %v185
      %v249 = vunpack.c.l.b16 %v186
      %v250 = vunpack.c.l.b16 %v187
      %v251 = vunpack.c.l.b16 %v188
      %v252 = vunpack.c.l.b16 %v189
      %v253 = vunpack.c.l.b16 %v190
      %v254 = vunpack.c.l.b16 %v191
      %v255 = vunpack.c.l.b16 %v192
      %v256 = vunpack.c.l.b16 %v193
      %v257 = vunpack.c.l.b16 %v194
      %v258 = vunpack.c.l.b16 %v195
      %v259 = vpack.c.b16 %v244, %v243
      %v260 = vpack.c.b16 %v246, %v245
      %v261 = vpack.c.b16 %v248, %v247
      %v262 = vpack.c.b16 %v250, %v249
      %v263 = vpack.c.b16 %v252, %v251
      %v264 = vpack.c.b16 %v254, %v253
      %v265 = vpack.c.b16 %v256, %v255
      %v266 = vpack.c.b16 %v258, %v257
      %275 = vmatprep.subr.bf16.mxu0 0
      %276 = vmatpush1.bf16.msra.mxu0 %v266
      %277 = vmatprep.subr.bf16.mxu0 0
      %278 = vmatpush1.bf16.msra.mxu0 %v265
      %279 = vmatprep.subr.bf16.mxu0 0
      %280 = vmatpush1.bf16.msra.mxu0 %v264
      %281 = vmatprep.subr.bf16.mxu0 0
      %282 = vmatpush1.bf16.msra.mxu0 %v263
      %283 = vmatprep.subr.bf16.mxu0 0
      %284 = vmatpush1.bf16.msra.mxu0 %v262
      %285 = vmatprep.subr.bf16.mxu0 0
      %286 = vmatpush1.bf16.msra.mxu0 %v261
      %287 = vmatprep.subr.bf16.mxu0 0
      %288 = vmatpush1.bf16.msra.mxu0 %v260
      %289 = vmatprep.subr.bf16.mxu0 0
      %290 = vmatpush1.bf16.msra.mxu0 %v259
      %291 = vmatprep.subr.bf16.mxu0 0
      %292 = vmatpush2.bf16.msra.mxu0 0
      %293 = vmatprep.subr.bf16.mxu0 0
      %294 = vmatpush2.bf16.msra.mxu0 0
      %295 = vmatprep.subr.bf16.mxu0 0
      %296 = vmatpush2.bf16.msra.mxu0 0
      %297 = vmatprep.subr.bf16.mxu0 0
      %298 = vmatpush2.bf16.msra.mxu0 0
      %299 = vmatprep.subr.bf16.mxu0 0
      %300 = vmatpush2.bf16.msra.mxu0 0
      %301 = vmatprep.subr.bf16.mxu0 0
      %302 = vmatpush2.bf16.msra.mxu0 0
      %303 = vmatprep.subr.bf16.mxu0 0
      %304 = vmatpush2.bf16.msra.mxu0 0
      %305 = vmatprep.subr.bf16.mxu0 0
      %306 = vmatpush2.bf16.msra.mxu0 0
      %307 = vmatprep.mubr.bf16.mxu0 0
      %308 = vmatmul.mubr.bf16.gmra.mxu0 %v219
      %v309 = vpop.f32.mrf.mxu0
      %v310 = vadd.f32 %v201, %v309
      %v311 = vpop.f32.mrf.mxu0
      %v312 = vpop.f32.mrf.mxu0
      %v313 = vadd.f32 %v201, %v312
      %v314 = vpop.f32.mrf.mxu0
      %315 = vmatprep.mubr.bf16.mxu0 0
      %316 = vmatmul.mubr.bf16.gmra.mxu0 %v220
      %v317 = vpop.f32.mrf.mxu0
      %v318 = vadd.f32 %v201, %v317
      %v319 = vpop.f32.mrf.mxu0
      %v320 = vpop.f32.mrf.mxu0
      %v321 = vadd.f32 %v201, %v320
      %v322 = vpop.f32.mrf.mxu0
      %323 = vmatprep.mubr.bf16.mxu0 0
      %324 = vmatmul.mubr.bf16.gmra.mxu0 %v221
      %v325 = vpop.f32.mrf.mxu0
      %v326 = vadd.f32 %v201, %v325
      %v327 = vpop.f32.mrf.mxu0
      %v328 = vpop.f32.mrf.mxu0
      %v329 = vadd.f32 %v201, %v328
      %v330 = vpop.f32.mrf.mxu0
      %331 = vmatprep.mubr.bf16.mxu0 0
      %332 = vmatmul.mubr.bf16.gmra.mxu0 %v222
      %v333 = vpop.f32.mrf.mxu0
      %v334 = vadd.f32 %v201, %v333
      %v335 = vpop.f32.mrf.mxu0
      %v336 = vpop.f32.mrf.mxu0
      %v337 = vadd.f32 %v201, %v336
      %v338 = vpop.f32.mrf.mxu0
      %339 = vdwg.mxu0
      %340 = vst [vmem:[%s170] sm:$0xff] %v310
      %341 = vst [vmem:[%s170 + $0x8] sm:$0xff] %v313
      %342 = vst [vmem:[%s170 + $0x10] sm:$0xff] %v318
      %343 = vst [vmem:[%s170 + $0x18] sm:$0xff] %v321
      %344 = vst [vmem:[%s170 + $0x20] sm:$0xff] %v326
      %345 = vst [vmem:[%s170 + $0x28] sm:$0xff] %v329
      %346 = vst [vmem:[%s170 + $0x30] sm:$0xff] %v334
      %347 = vst [vmem:[%s170 + $0x38] sm:$0xff] %v337
      %s348 = scalar_lea.vmem %s165, 32
      %v349 = vld [vmem:[%s348] sm:$0xf]
      %v350 = vld [vmem:[%s348 + $0x4] sm:$0xf]
      %v351 = vld [vmem:[%s348 + $0x8] sm:$0xf]
      %v352 = vld [vmem:[%s348 + $0xc] sm:$0xf]
      %v353 = vld [vmem:[%s348 + $0x10] sm:$0xf]
      %v354 = vld [vmem:[%s348 + $0x14] sm:$0xf]
      %v355 = vld [vmem:[%s348 + $0x18] sm:$0xf]
      %v356 = vld [vmem:[%s348 + $0x1c] sm:$0xf]
      %s357 = scalar_lea.vmem %s1, 64
      %v358 = vld [vmem:[%s357] sm:$0xf]
      %v359 = vld [vmem:[%s357 + $0x4] sm:$0xf]
      %v360 = vld [vmem:[%s357 + $0x8] sm:$0xf]
      %v361 = vld [vmem:[%s357 + $0xc] sm:$0xf]
      %v362 = vld [vmem:[%s357 + $0x10] sm:$0xf]
      %v363 = vld [vmem:[%s357 + $0x14] sm:$0xf]
      %v364 = vld [vmem:[%s357 + $0x18] sm:$0xf]
      %v365 = vld [vmem:[%s357 + $0x1c] sm:$0xf]
      %v366 = vld [vmem:[%s357 + $0x20] sm:$0xf]
      %v367 = vld [vmem:[%s357 + $0x24] sm:$0xf]
      %v368 = vld [vmem:[%s357 + $0x28] sm:$0xf]
      %v369 = vld [vmem:[%s357 + $0x2c] sm:$0xf]
      %v370 = vld [vmem:[%s357 + $0x30] sm:$0xf]
      %v371 = vld [vmem:[%s357 + $0x34] sm:$0xf]
      %v372 = vld [vmem:[%s357 + $0x38] sm:$0xf]
      %v373 = vld [vmem:[%s357 + $0x3c] sm:$0xf]
      %v374 = vld [vmem:[%s2] sm:$0x1]
      %v376 = vlaneseq
      %v377 = vshrl.u32 %v376, 7
      %v378 = vsub.s32 0, %v377
      %v379 = vrot.slane %v374, %v378
      %v389 = vunpack.c.l.b16 %v349
      %v390 = vunpack.c.l.b16 %v350
      %v391 = vunpack.c.l.b16 %v351
      %v392 = vunpack.c.l.b16 %v352
      %v393 = vunpack.c.l.b16 %v353
      %v394 = vunpack.c.l.b16 %v354
      %v395 = vunpack.c.l.b16 %v355
      %v396 = vunpack.c.l.b16 %v356
      %v397 = vpack.c.b16 %v390, %v389
      %v398 = vpack.c.b16 %v392, %v391
      %v399 = vpack.c.b16 %v394, %v393
      %v400 = vpack.c.b16 %v396, %v395
      %v421 = vunpack.c.l.b16 %v358
      %v422 = vunpack.c.l.b16 %v359
      %v423 = vunpack.c.l.b16 %v360
      %v424 = vunpack.c.l.b16 %v361
      %v425 = vunpack.c.l.b16 %v362
      %v426 = vunpack.c.l.b16 %v363
      %v427 = vunpack.c.l.b16 %v364
      %v428 = vunpack.c.l.b16 %v365
      %v429 = vunpack.c.l.b16 %v366
      %v430 = vunpack.c.l.b16 %v367
      %v431 = vunpack.c.l.b16 %v368
      %v432 = vunpack.c.l.b16 %v369
      %v433 = vunpack.c.l.b16 %v370
      %v434 = vunpack.c.l.b16 %v371
      %v435 = vunpack.c.l.b16 %v372
      %v436 = vunpack.c.l.b16 %v373
      %v437 = vpack.c.b16 %v422, %v421
      %v438 = vpack.c.b16 %v424, %v423
      %v439 = vpack.c.b16 %v426, %v425
      %v440 = vpack.c.b16 %v428, %v427
      %v441 = vpack.c.b16 %v430, %v429
      %v442 = vpack.c.b16 %v432, %v431
      %v443 = vpack.c.b16 %v434, %v433
      %v444 = vpack.c.b16 %v436, %v435
      %453 = vmatprep.subr.bf16.mxu0 0
      %454 = vmatpush1.bf16.msra.mxu0 %v444
      %455 = vmatprep.subr.bf16.mxu0 0
      %456 = vmatpush1.bf16.msra.mxu0 %v443
      %457 = vmatprep.subr.bf16.mxu0 0
      %458 = vmatpush1.bf16.msra.mxu0 %v442
      %459 = vmatprep.subr.bf16.mxu0 0
      %460 = vmatpush1.bf16.msra.mxu0 %v441
      %461 = vmatprep.subr.bf16.mxu0 0
      %462 = vmatpush1.bf16.msra.mxu0 %v440
      %463 = vmatprep.subr.bf16.mxu0 0
      %464 = vmatpush1.bf16.msra.mxu0 %v439
      %465 = vmatprep.subr.bf16.mxu0 0
      %466 = vmatpush1.bf16.msra.mxu0 %v438
      %467 = vmatprep.subr.bf16.mxu0 0
      %468 = vmatpush1.bf16.msra.mxu0 %v437
      %469 = vmatprep.subr.bf16.mxu0 0
      %470 = vmatpush2.bf16.msra.mxu0 0
      %471 = vmatprep.subr.bf16.mxu0 0
      %472 = vmatpush2.bf16.msra.mxu0 0
      %473 = vmatprep.subr.bf16.mxu0 0
      %474 = vmatpush2.bf16.msra.mxu0 0
      %475 = vmatprep.subr.bf16.mxu0 0
      %476 = vmatpush2.bf16.msra.mxu0 0
      %477 = vmatprep.subr.bf16.mxu0 0
      %478 = vmatpush2.bf16.msra.mxu0 0
      %479 = vmatprep.subr.bf16.mxu0 0
      %480 = vmatpush2.bf16.msra.mxu0 0
      %481 = vmatprep.subr.bf16.mxu0 0
      %482 = vmatpush2.bf16.msra.mxu0 0
      %483 = vmatprep.subr.bf16.mxu0 0
      %484 = vmatpush2.bf16.msra.mxu0 0
      %485 = vmatprep.mubr.bf16.mxu0 0
      %486 = vmatmul.mubr.bf16.gmra.mxu0 %v397
      %v487 = vpop.f32.mrf.mxu0
      %v488 = vadd.f32 %v379, %v487
      %v489 = vpop.f32.mrf.mxu0
      %v490 = vpop.f32.mrf.mxu0
      %v491 = vadd.f32 %v379, %v490
      %v492 = vpop.f32.mrf.mxu0
      %493 = vmatprep.mubr.bf16.mxu0 0
      %494 = vmatmul.mubr.bf16.gmra.mxu0 %v398
      %v495 = vpop.f32.mrf.mxu0
      %v496 = vadd.f32 %v379, %v495
      %v497 = vpop.f32.mrf.mxu0
      %v498 = vpop.f32.mrf.mxu0
      %v499 = vadd.f32 %v379, %v498
      %v500 = vpop.f32.mrf.mxu0
      %501 = vmatprep.mubr.bf16.mxu0 0
      %502 = vmatmul.mubr.bf16.gmra.mxu0 %v399
      %v503 = vpop.f32.mrf.mxu0
      %v504 = vadd.f32 %v379, %v503
      %v505 = vpop.f32.mrf.mxu0
      %v506 = vpop.f32.mrf.mxu0
      %v507 = vadd.f32 %v379, %v506
      %v508 = vpop.f32.mrf.mxu0
      %509 = vmatprep.mubr.bf16.mxu0 0
      %510 = vmatmul.mubr.bf16.gmra.mxu0 %v400
      %v511 = vpop.f32.mrf.mxu0
      %v512 = vadd.f32 %v379, %v511
      %v513 = vpop.f32.mrf.mxu0
      %v514 = vpop.f32.mrf.mxu0
      %v515 = vadd.f32 %v379, %v514
      %v516 = vpop.f32.mrf.mxu0
      %517 = vdwg.mxu0
      %s518 = scalar_lea.vmem %s170, 64
      %519 = vst [vmem:[%s518] sm:$0xff] %v488
      %520 = vst [vmem:[%s518 + $0x8] sm:$0xff] %v491
      %521 = vst [vmem:[%s518 + $0x10] sm:$0xff] %v496
      %522 = vst [vmem:[%s518 + $0x18] sm:$0xff] %v499
      %523 = vst [vmem:[%s518 + $0x20] sm:$0xff] %v504
      %524 = vst [vmem:[%s518 + $0x28] sm:$0xff] %v507
      %525 = vst [vmem:[%s518 + $0x30] sm:$0xff] %v512
      %526 = vst [vmem:[%s518 + $0x38] sm:$0xff] %v515
      %s527 = scalar_lea.vmem %s165, 64
      %v528 = vld [vmem:[%s527] sm:$0xf]
      %v529 = vld [vmem:[%s527 + $0x4] sm:$0xf]
      %v530 = vld [vmem:[%s527 + $0x8] sm:$0xf]
      %v531 = vld [vmem:[%s527 + $0xc] sm:$0xf]
      %v532 = vld [vmem:[%s527 + $0x10] sm:$0xf]
      %v533 = vld [vmem:[%s527 + $0x14] sm:$0xf]
      %v534 = vld [vmem:[%s527 + $0x18] sm:$0xf]
      %v535 = vld [vmem:[%s527 + $0x1c] sm:$0xf]
      %s536 = scalar_lea.vmem %s1, 128
      %v537 = vld [vmem:[%s536] sm:$0xf]
      %v538 = vld [vmem:[%s536 + $0x4] sm:$0xf]
      %v539 = vld [vmem:[%s536 + $0x8] sm:$0xf]
      %v540 = vld [vmem:[%s536 + $0xc] sm:$0xf]
      %v541 = vld [vmem:[%s536 + $0x10] sm:$0xf]
      %v542 = vld [vmem:[%s536 + $0x14] sm:$0xf]
      %v543 = vld [vmem:[%s536 + $0x18] sm:$0xf]
      %v544 = vld [vmem:[%s536 + $0x1c] sm:$0xf]
      %v545 = vld [vmem:[%s536 + $0x20] sm:$0xf]
      %v546 = vld [vmem:[%s536 + $0x24] sm:$0xf]
      %v547 = vld [vmem:[%s536 + $0x28] sm:$0xf]
      %v548 = vld [vmem:[%s536 + $0x2c] sm:$0xf]
      %v549 = vld [vmem:[%s536 + $0x30] sm:$0xf]
      %v550 = vld [vmem:[%s536 + $0x34] sm:$0xf]
      %v551 = vld [vmem:[%s536 + $0x38] sm:$0xf]
      %v552 = vld [vmem:[%s536 + $0x3c] sm:$0xf]
      %v553 = vld [vmem:[%s2] sm:$0x1]
      %v555 = vlaneseq
      %v556 = vshrl.u32 %v555, 7
      %v557 = vsub.s32 0, %v556
      %v558 = vrot.slane %v553, %v557
      %v568 = vunpack.c.l.b16 %v528
      %v569 = vunpack.c.l.b16 %v529
      %v570 = vunpack.c.l.b16 %v530
      %v571 = vunpack.c.l.b16 %v531
      %v572 = vunpack.c.l.b16 %v532
      %v573 = vunpack.c.l.b16 %v533
      %v574 = vunpack.c.l.b16 %v534
      %v575 = vunpack.c.l.b16 %v535
      %v576 = vpack.c.b16 %v569, %v568
      %v577 = vpack.c.b16 %v571, %v570
      %v578 = vpack.c.b16 %v573, %v572
      %v579 = vpack.c.b16 %v575, %v574
      %v600 = vunpack.c.l.b16 %v537
      %v601 = vunpack.c.l.b16 %v538
      %v602 = vunpack.c.l.b16 %v539
      %v603 = vunpack.c.l.b16 %v540
      %v604 = vunpack.c.l.b16 %v541
      %v605 = vunpack.c.l.b16 %v542
      %v606 = vunpack.c.l.b16 %v543
      %v607 = vunpack.c.l.b16 %v544
      %v608 = vunpack.c.l.b16 %v545
      %v609 = vunpack.c.l.b16 %v546
      %v610 = vunpack.c.l.b16 %v547
      %v611 = vunpack.c.l.b16 %v548
      %v612 = vunpack.c.l.b16 %v549
      %v613 = vunpack.c.l.b16 %v550
      %v614 = vunpack.c.l.b16 %v551
      %v615 = vunpack.c.l.b16 %v552
      %v616 = vpack.c.b16 %v601, %v600
      %v617 = vpack.c.b16 %v603, %v602
      %v618 = vpack.c.b16 %v605, %v604
      %v619 = vpack.c.b16 %v607, %v606
      %v620 = vpack.c.b16 %v609, %v608
      %v621 = vpack.c.b16 %v611, %v610
      %v622 = vpack.c.b16 %v613, %v612
      %v623 = vpack.c.b16 %v615, %v614
      %632 = vmatprep.subr.bf16.mxu0 0
      %633 = vmatpush1.bf16.msra.mxu0 %v623
      %634 = vmatprep.subr.bf16.mxu0 0
      %635 = vmatpush1.bf16.msra.mxu0 %v622
      %636 = vmatprep.subr.bf16.mxu0 0
      %637 = vmatpush1.bf16.msra.mxu0 %v621
      %638 = vmatprep.subr.bf16.mxu0 0
      %639 = vmatpush1.bf16.msra.mxu0 %v620
      %640 = vmatprep.subr.bf16.mxu0 0
      %641 = vmatpush1.bf16.msra.mxu0 %v619
      %642 = vmatprep.subr.bf16.mxu0 0
      %643 = vmatpush1.bf16.msra.mxu0 %v618
      %644 = vmatprep.subr.bf16.mxu0 0
      %645 = vmatpush1.bf16.msra.mxu0 %v617
      %646 = vmatprep.subr.bf16.mxu0 0
      %647 = vmatpush1.bf16.msra.mxu0 %v616
      %648 = vmatprep.subr.bf16.mxu0 0
      %649 = vmatpush2.bf16.msra.mxu0 0
      %650 = vmatprep.subr.bf16.mxu0 0
      %651 = vmatpush2.bf16.msra.mxu0 0
      %652 = vmatprep.subr.bf16.mxu0 0
      %653 = vmatpush2.bf16.msra.mxu0 0
      %654 = vmatprep.subr.bf16.mxu0 0
      %655 = vmatpush2.bf16.msra.mxu0 0
      %656 = vmatprep.subr.bf16.mxu0 0
      %657 = vmatpush2.bf16.msra.mxu0 0
      %658 = vmatprep.subr.bf16.mxu0 0
      %659 = vmatpush2.bf16.msra.mxu0 0
      %660 = vmatprep.subr.bf16.mxu0 0
      %661 = vmatpush2.bf16.msra.mxu0 0
      %662 = vmatprep.subr.bf16.mxu0 0
      %663 = vmatpush2.bf16.msra.mxu0 0
      %664 = vmatprep.mubr.bf16.mxu0 0
      %665 = vmatmul.mubr.bf16.gmra.mxu0 %v576
      %v666 = vpop.f32.mrf.mxu0
      %v667 = vadd.f32 %v558, %v666
      %v668 = vpop.f32.mrf.mxu0
      %v669 = vpop.f32.mrf.mxu0
      %v670 = vadd.f32 %v558, %v669
      %v671 = vpop.f32.mrf.mxu0
      %672 = vmatprep.mubr.bf16.mxu0 0
      %673 = vmatmul.mubr.bf16.gmra.mxu0 %v577
      %v674 = vpop.f32.mrf.mxu0
      %v675 = vadd.f32 %v558, %v674
      %v676 = vpop.f32.mrf.mxu0
      %v677 = vpop.f32.mrf.mxu0
      %v678 = vadd.f32 %v558, %v677
      %v679 = vpop.f32.mrf.mxu0
      %680 = vmatprep.mubr.bf16.mxu0 0
      %681 = vmatmul.mubr.bf16.gmra.mxu0 %v578
      %v682 = vpop.f32.mrf.mxu0
      %v683 = vadd.f32 %v558, %v682
      %v684 = vpop.f32.mrf.mxu0
      %v685 = vpop.f32.mrf.mxu0
      %v686 = vadd.f32 %v558, %v685
      %v687 = vpop.f32.mrf.mxu0
      %688 = vmatprep.mubr.bf16.mxu0 0
      %689 = vmatmul.mubr.bf16.gmra.mxu0 %v579
      %v690 = vpop.f32.mrf.mxu0
      %v691 = vadd.f32 %v558, %v690
      %v692 = vpop.f32.mrf.mxu0
      %v693 = vpop.f32.mrf.mxu0
      %v694 = vadd.f32 %v558, %v693
      %v695 = vpop.f32.mrf.mxu0
      %696 = vdwg.mxu0
      %s697 = scalar_lea.vmem %s170, 128
      %698 = vst [vmem:[%s697] sm:$0xff] %v667
      %699 = vst [vmem:[%s697 + $0x8] sm:$0xff] %v670
      %700 = vst [vmem:[%s697 + $0x10] sm:$0xff] %v675
      %701 = vst [vmem:[%s697 + $0x18] sm:$0xff] %v678
      %702 = vst [vmem:[%s697 + $0x20] sm:$0xff] %v683
      %703 = vst [vmem:[%s697 + $0x28] sm:$0xff] %v686
      %704 = vst [vmem:[%s697 + $0x30] sm:$0xff] %v691
      %705 = vst [vmem:[%s697 + $0x38] sm:$0xff] %v694
      %s706 = scalar_lea.vmem %s165, 96
      %v707 = vld [vmem:[%s706] sm:$0xf]
      %v708 = vld [vmem:[%s706 + $0x4] sm:$0xf]
      %v709 = vld [vmem:[%s706 + $0x8] sm:$0xf]
      %v710 = vld [vmem:[%s706 + $0xc] sm:$0xf]
      %v711 = vld [vmem:[%s706 + $0x10] sm:$0xf]
      %v712 = vld [vmem:[%s706 + $0x14] sm:$0xf]
      %v713 = vld [vmem:[%s706 + $0x18] sm:$0xf]
      %v714 = vld [vmem:[%s706 + $0x1c] sm:$0xf]
      %s715 = scalar_lea.vmem %s1, 192
      %v716 = vld [vmem:[%s715] sm:$0xf]
      %v717 = vld [vmem:[%s715 + $0x4] sm:$0xf]
      %v718 = vld [vmem:[%s715 + $0x8] sm:$0xf]
      %v719 = vld [vmem:[%s715 + $0xc] sm:$0xf]
      %v720 = vld [vmem:[%s715 + $0x10] sm:$0xf]
      %v721 = vld [vmem:[%s715 + $0x14] sm:$0xf]
      %v722 = vld [vmem:[%s715 + $0x18] sm:$0xf]
      %v723 = vld [vmem:[%s715 + $0x1c] sm:$0xf]
      %v724 = vld [vmem:[%s715 + $0x20] sm:$0xf]
      %v725 = vld [vmem:[%s715 + $0x24] sm:$0xf]
      %v726 = vld [vmem:[%s715 + $0x28] sm:$0xf]
      %v727 = vld [vmem:[%s715 + $0x2c] sm:$0xf]
      %v728 = vld [vmem:[%s715 + $0x30] sm:$0xf]
      %v729 = vld [vmem:[%s715 + $0x34] sm:$0xf]
      %v730 = vld [vmem:[%s715 + $0x38] sm:$0xf]
      %v731 = vld [vmem:[%s715 + $0x3c] sm:$0xf]
      %v732 = vld [vmem:[%s2] sm:$0x1]
      %v734 = vlaneseq
      %v735 = vshrl.u32 %v734, 7
      %v736 = vsub.s32 0, %v735
      %v737 = vrot.slane %v732, %v736
      %v747 = vunpack.c.l.b16 %v707
      %v748 = vunpack.c.l.b16 %v708
      %v749 = vunpack.c.l.b16 %v709
      %v750 = vunpack.c.l.b16 %v710
      %v751 = vunpack.c.l.b16 %v711
      %v752 = vunpack.c.l.b16 %v712
      %v753 = vunpack.c.l.b16 %v713
      %v754 = vunpack.c.l.b16 %v714
      %v755 = vpack.c.b16 %v748, %v747
      %v756 = vpack.c.b16 %v750, %v749
      %v757 = vpack.c.b16 %v752, %v751
      %v758 = vpack.c.b16 %v754, %v753
      %v779 = vunpack.c.l.b16 %v716
      %v780 = vunpack.c.l.b16 %v717
      %v781 = vunpack.c.l.b16 %v718
      %v782 = vunpack.c.l.b16 %v719
      %v783 = vunpack.c.l.b16 %v720
      %v784 = vunpack.c.l.b16 %v721
      %v785 = vunpack.c.l.b16 %v722
      %v786 = vunpack.c.l.b16 %v723
      %v787 = vunpack.c.l.b16 %v724
      %v788 = vunpack.c.l.b16 %v725
      %v789 = vunpack.c.l.b16 %v726
      %v790 = vunpack.c.l.b16 %v727
      %v791 = vunpack.c.l.b16 %v728
      %v792 = vunpack.c.l.b16 %v729
      %v793 = vunpack.c.l.b16 %v730
      %v794 = vunpack.c.l.b16 %v731
      %v795 = vpack.c.b16 %v780, %v779
      %v796 = vpack.c.b16 %v782, %v781
      %v797 = vpack.c.b16 %v784, %v783
      %v798 = vpack.c.b16 %v786, %v785
      %v799 = vpack.c.b16 %v788, %v787
      %v800 = vpack.c.b16 %v790, %v789
      %v801 = vpack.c.b16 %v792, %v791
      %v802 = vpack.c.b16 %v794, %v793
      %811 = vmatprep.subr.bf16.mxu0 0
      %812 = vmatpush1.bf16.msra.mxu0 %v802
      %813 = vmatprep.subr.bf16.mxu0 0
      %814 = vmatpush1.bf16.msra.mxu0 %v801
      %815 = vmatprep.subr.bf16.mxu0 0
      %816 = vmatpush1.bf16.msra.mxu0 %v800
      %817 = vmatprep.subr.bf16.mxu0 0
      %818 = vmatpush1.bf16.msra.mxu0 %v799
      %819 = vmatprep.subr.bf16.mxu0 0
      %820 = vmatpush1.bf16.msra.mxu0 %v798
      %821 = vmatprep.subr.bf16.mxu0 0
      %822 = vmatpush1.bf16.msra.mxu0 %v797
      %823 = vmatprep.subr.bf16.mxu0 0
      %824 = vmatpush1.bf16.msra.mxu0 %v796
      %825 = vmatprep.subr.bf16.mxu0 0
      %826 = vmatpush1.bf16.msra.mxu0 %v795
      %827 = vmatprep.subr.bf16.mxu0 0
      %828 = vmatpush2.bf16.msra.mxu0 0
      %829 = vmatprep.subr.bf16.mxu0 0
      %830 = vmatpush2.bf16.msra.mxu0 0
      %831 = vmatprep.subr.bf16.mxu0 0
      %832 = vmatpush2.bf16.msra.mxu0 0
      %833 = vmatprep.subr.bf16.mxu0 0
      %834 = vmatpush2.bf16.msra.mxu0 0
      %835 = vmatprep.subr.bf16.mxu0 0
      %836 = vmatpush2.bf16.msra.mxu0 0
      %837 = vmatprep.subr.bf16.mxu0 0
      %838 = vmatpush2.bf16.msra.mxu0 0
      %839 = vmatprep.subr.bf16.mxu0 0
      %840 = vmatpush2.bf16.msra.mxu0 0
      %841 = vmatprep.subr.bf16.mxu0 0
      %842 = vmatpush2.bf16.msra.mxu0 0
      %843 = vmatprep.mubr.bf16.mxu0 0
      %844 = vmatmul.mubr.bf16.gmra.mxu0 %v755
      %v845 = vpop.f32.mrf.mxu0
      %v846 = vadd.f32 %v737, %v845
      %v847 = vpop.f32.mrf.mxu0
      %v848 = vpop.f32.mrf.mxu0
      %v849 = vadd.f32 %v737, %v848
      %v850 = vpop.f32.mrf.mxu0
      %851 = vmatprep.mubr.bf16.mxu0 0
      %852 = vmatmul.mubr.bf16.gmra.mxu0 %v756
      %v853 = vpop.f32.mrf.mxu0
      %v854 = vadd.f32 %v737, %v853
      %v855 = vpop.f32.mrf.mxu0
      %v856 = vpop.f32.mrf.mxu0
      %v857 = vadd.f32 %v737, %v856
      %v858 = vpop.f32.mrf.mxu0
      %859 = vmatprep.mubr.bf16.mxu0 0
      %860 = vmatmul.mubr.bf16.gmra.mxu0 %v757
      %v861 = vpop.f32.mrf.mxu0
      %v862 = vadd.f32 %v737, %v861
      %v863 = vpop.f32.mrf.mxu0
      %v864 = vpop.f32.mrf.mxu0
      %v865 = vadd.f32 %v737, %v864
      %v866 = vpop.f32.mrf.mxu0
      %867 = vmatprep.mubr.bf16.mxu0 0
      %868 = vmatmul.mubr.bf16.gmra.mxu0 %v758
      %v869 = vpop.f32.mrf.mxu0
      %v870 = vadd.f32 %v737, %v869
      %v871 = vpop.f32.mrf.mxu0
      %v872 = vpop.f32.mrf.mxu0
      %v873 = vadd.f32 %v737, %v872
      %v874 = vpop.f32.mrf.mxu0
      %875 = vdwg.mxu0
      %s876 = scalar_lea.vmem %s170, 192
      %877 = vst [vmem:[%s876] sm:$0xff] %v846
      %878 = vst [vmem:[%s876 + $0x8] sm:$0xff] %v849
      %879 = vst [vmem:[%s876 + $0x10] sm:$0xff] %v854
      %880 = vst [vmem:[%s876 + $0x18] sm:$0xff] %v857
      %881 = vst [vmem:[%s876 + $0x20] sm:$0xff] %v862
      %882 = vst [vmem:[%s876 + $0x28] sm:$0xff] %v865
      %883 = vst [vmem:[%s876 + $0x30] sm:$0xff] %v870
      %884 = vst [vmem:[%s876 + $0x38] sm:$0xff] %v873
      %p885 = scmp.lt.s32.totalorder %s14, 1
      %s886 = scalar_select %p885, %s14, 1
      %s887 = smul.addr %s886, 32
      %s888 = smul.addr %s887, 8
      %s889 = scalar_lea.vmem %s3, %s888
      // Predicated region
      $region33: #{_lambda_.15} parent=31 // pred_check
        %p890 = pneg %p100
      $region34: #{_lambda_.15} parent=31 // pred_check_branch
        %892 = sbr.rel (%p890) target = $region36
      $region35: #{_lambda_.15} parent=31 // pred_region
        _
      $region36: #{_lambda_.15} parent=31 // pred_fallthru
        _
    $region32: #{_lambda_.15} parent=5 // pred_fallthru
      _
    %p893 = scmp.le.s32.totalorder 2, %s9
    // Predicated region
    $region37: #{_lambda_.15} parent=5 // pred_check
      %p894 = pneg %p893
    $region38: #{_lambda_.15} parent=5 // pred_check_branch
      %896 = sbr.rel (%p894) target = $region40
    $region39: #{_lambda_.15} parent=5 // pred_region
      %s897 = ssub.s32 %s9, 2
      // Predicated region
      $region41: #{_lambda_.15} parent=39 // pred_check
        %p898 = pneg %p106
      $region42: #{_lambda_.15} parent=39 // pred_check_branch
        %900 = sbr.rel (%p898) target = $region44
      $region43: #{_lambda_.15} parent=39 // pred_region
        %p901 = scmp.lt.s32.totalorder %s15, 1
        %s902 = scalar_select %p901, %s15, 1
        %s903 = smul.addr %s902, 32
        %s904 = smul.addr %s903, 8
        %s905 = scalar_lea.vmem %s3, %s904
      $region44: #{_lambda_.15} parent=39 // pred_fallthru
        _
    $region40: #{_lambda_.15} parent=5 // pred_fallthru
      _
  $region6: #{_lambda_.15} parent=0 // loop_footer
    %s13 = sadd.s32 1, %s9
  $region7: #{_lambda_.15} parent=0 // loop_footer_branch
    %8 = sbr.rel target = $region3
  $region8: #{_lambda_.15} parent=0 // loop_exit
    _

</llo_original>
